<compile_context>
chip_gen: v5e
topology: v5e:2x2
jax: 0.10.0
libtpu: 0.0.40
codegen_flags: <defaults>
</compile_context>

<pallas_src>
import functools

import jax
import jax.numpy as jnp
from jax.experimental import pallas as pl
from jax.experimental.pallas import tpu as pltpu

PATCH = 14
EMBED_DIM = 256          # real ViT-S/14 uses 384; 256 keeps all slices 128-aligned
NUM_HEADS = 2
HEAD_DIM = EMBED_DIM // NUM_HEADS          # 128 -> lane-dense per-head tiles
MLP_DIM = 4 * EMBED_DIM
DEPTH = 2                # stands in for the 12 blocks; we return the last block
LN_EPS = 1e-6
L2_EPS = 1e-12
K_RAW = 3 * PATCH * PATCH                  # 588
K_PAD = 640                                # 128-aligned contraction depth

_PARALLEL = pltpu.CompilerParams(dimension_semantics=("parallel",))
_BLOCK_PARAMS = pltpu.CompilerParams(dimension_semantics=("parallel",),
                                     vmem_limit_bytes=64 * 1024 * 1024)


def _round_up(n, m):
    return ((n + m - 1) // m) * m


def _ln(x, g, b, eps):
    """LayerNorm over the last axis, f32 math, single-pass variance."""
    mu = jnp.mean(x, axis=-1, keepdims=True)
    ms = jnp.mean(x * x, axis=-1, keepdims=True)
    var = ms - mu * mu
    return (x - mu) * jax.lax.rsqrt(var + eps) * g + b


# ------------------------- patch embed (+ pos embed) -------------------------

def _patch_embed_kernel(p_ref, w_ref, b_ref, pos_ref, o_ref):
    x = p_ref[0].astype(jnp.bfloat16)                       # (N, K_PAD)
    acc = jnp.dot(x, w_ref[...], preferred_element_type=jnp.float32)
    o_ref[0] = (acc + b_ref[...] + pos_ref[...]).astype(o_ref.dtype)


def patch_embed(patches, w_bf16, b, pos_patch):
    B, N, K = patches.shape
    D = w_bf16.shape[1]
    return pl.pallas_call(
        _patch_embed_kernel,
        out_shape=jax.ShapeDtypeStruct((B, N, D), jnp.float32),
        grid=(B,),
        in_specs=[pl.BlockSpec((1, N, K), lambda i: (i, 0, 0)),
                  pl.BlockSpec((K, D), lambda i: (0, 0)),
                  pl.BlockSpec((1, D), lambda i: (0, 0)),
                  pl.BlockSpec((N, D), lambda i: (0, 0))],
        out_specs=pl.BlockSpec((1, N, D), lambda i: (i, 0, 0)),
        compiler_params=_PARALLEL,
    )(patches, w_bf16, b, pos_patch)


# ------------------- fused transformer block (one pallas_call) -------------------
# x_out = x + ls1 * proj(attn(LN1(x)))        (attention part)
#         then  + ls2 * mlp(LN2(.))           (MLP part)

def _block_kernel(x_ref, g1_ref, b1_ref, wqkv_ref, bqkv_ref,
                  wp_ref, bp_ref, ls1_ref,
                  g2_ref, b2_ref, w1_ref, b1m_ref, w2_ref, b2m_ref, ls2_ref,
                  o_ref, qkv_sc, att_sc,
                  *, num_heads, head_dim, scale, n_valid, eps):
    S = qkv_sc.shape[0]
    D = num_heads * head_dim
    x = x_ref[0].astype(jnp.float32)                        # (S, D) residual stream

    # ---- LN1 + fused QKV projection, result resident in VMEM scratch ----
    h = _ln(x, g1_ref[...], b1_ref[...], eps)
    qkv_sc[...] = jnp.dot(h.astype(jnp.bfloat16), wqkv_ref[...],
                          preferred_element_type=jnp.float32) + bqkv_ref[...]

    # Additive key mask: padded tokens (position >= n_valid) are never attended to.
    key_ids = jax.lax.broadcasted_iota(jnp.int32, (S, S), 1)
    key_mask = jnp.where(key_ids < n_valid, 0.0, -1e30).astype(jnp.float32)

    # ---- per-head attention; each head's output written to a 128-aligned
    #      column of att_sc so the out-projection is ONE K=D matmul ----
    for hidx in range(num_heads):                           # static unroll (2 heads)
        lo = hidx * head_dim
        q = qkv_sc[:, lo:lo + head_dim].astype(jnp.bfloat16)
        k = qkv_sc[:, D + lo:D + lo + head_dim].astype(jnp.bfloat16)
        v = qkv_sc[:, 2 * D + lo:2 * D + lo + head_dim].astype(jnp.bfloat16)
        # q.k^T as a contraction on head_dim (no explicit transpose).
        s = jax.lax.dot_general(q, k, (((1,), (1,)), ((), ())),
                                preferred_element_type=jnp.float32) * scale
        s = s + key_mask
        m = jnp.max(s, axis=-1, keepdims=True)
        p = jnp.exp(s - m)
        p = p / jnp.sum(p, axis=-1, keepdims=True)          # exact softmax divide
        att_sc[:, lo:lo + head_dim] = jnp.dot(
            p.astype(jnp.bfloat16), v, preferred_element_type=jnp.float32)

    proj = jnp.dot(att_sc[...].astype(jnp.bfloat16), wp_ref[...],
                   preferred_element_type=jnp.float32) + bp_ref[...]
    x1 = x + proj * ls1_ref[...]

    # ---- LN2 + MLP (fc1 / GELU / fc2) + LayerScale + residual ----
    h2 = _ln(x1, g2_ref[...], b2_ref[...], eps)
    m1 = jnp.dot(h2.astype(jnp.bfloat16), w1_ref[...],
                 preferred_element_type=jnp.float32) + b1m_ref[...]
    # TODO(synk): DINOv2 uses exact-erf GELU; tanh approximation used for robust Mosaic lowering.
    m1 = jax.nn.gelu(m1, approximate=True)
    m2 = jnp.dot(m1.astype(jnp.bfloat16), w2_ref[...],
                 preferred_element_type=jnp.float32) + b2m_ref[...]
    o_ref[0] = (x1 + m2 * ls2_ref[...]).astype(o_ref.dtype)


def transformer_block(xt, blk, n_valid):
    B, S, D = xt.shape
    kern = functools.partial(_block_kernel, num_heads=NUM_HEADS,
                             head_dim=HEAD_DIM, scale=HEAD_DIM ** -0.5,
                             n_valid=n_valid, eps=LN_EPS)
    return pl.pallas_call(
        kern,
        out_shape=jax.ShapeDtypeStruct((B, S, D), jnp.float32),
        grid=(B,),
        in_specs=[pl.BlockSpec((1, S, D), lambda i: (i, 0, 0)),      # x
                  pl.BlockSpec((1, D), lambda i: (0, 0)),            # ln1 gamma
                  pl.BlockSpec((1, D), lambda i: (0, 0)),            # ln1 beta
                  pl.BlockSpec((D, 3 * D), lambda i: (0, 0)),        # qkv_w (bf16)
                  pl.BlockSpec((1, 3 * D), lambda i: (0, 0)),        # qkv_b
                  pl.BlockSpec((D, D), lambda i: (0, 0)),            # proj_w (bf16)
                  pl.BlockSpec((1, D), lambda i: (0, 0)),            # proj_b
                  pl.BlockSpec((1, D), lambda i: (0, 0)),            # ls1
                  pl.BlockSpec((1, D), lambda i: (0, 0)),            # ln2 gamma
                  pl.BlockSpec((1, D), lambda i: (0, 0)),            # ln2 beta
                  pl.BlockSpec((D, MLP_DIM), lambda i: (0, 0)),      # fc1_w (bf16)
                  pl.BlockSpec((1, MLP_DIM), lambda i: (0, 0)),      # fc1_b
                  pl.BlockSpec((MLP_DIM, D), lambda i: (0, 0)),      # fc2_w (bf16)
                  pl.BlockSpec((1, D), lambda i: (0, 0)),            # fc2_b
                  pl.BlockSpec((1, D), lambda i: (0, 0))],           # ls2
        out_specs=pl.BlockSpec((1, S, D), lambda i: (i, 0, 0)),
        scratch_shapes=[pltpu.VMEM((S, 3 * D), jnp.float32),         # qkv
                        pltpu.VMEM((S, D), jnp.float32)],            # attn concat
        compiler_params=_BLOCK_PARAMS,
    )(xt,
      blk["ln1_g"], blk["ln1_b"], blk["qkv_w"], blk["qkv_b"],
      blk["proj_w"], blk["proj_b"], blk["ls1"],
      blk["ln2_g"], blk["ln2_b"], blk["fc1_w"], blk["fc1_b"],
      blk["fc2_w"], blk["fc2_b"], blk["ls2"])


# ------------- final LayerNorm + drop cls/pad + L2 normalize (fused) -------------

def _tail_kernel(x_ref, g_ref, b_ref, o_ref, *, n_patch, eps, l2eps):
    # Patch tokens are the aligned prefix [0:n_patch); cls + pad are dropped copy-free.
    x = x_ref[0, :n_patch, :].astype(jnp.float32)
    y = _ln(x, g_ref[...], b_ref[...], eps)
    n = jnp.sqrt(jnp.sum(y * y, axis=-1, keepdims=True))
    o_ref[0] = (y / jnp.maximum(n, l2eps)).astype(o_ref.dtype)


def tail(x, g, b, n_patch):
    B, S, D = x.shape
    return pl.pallas_call(
        functools.partial(_tail_kernel, n_patch=n_patch, eps=LN_EPS, l2eps=L2_EPS),
        out_shape=jax.ShapeDtypeStruct((B, n_patch, D), jnp.float32),
        grid=(B,),
        in_specs=[pl.BlockSpec((1, S, D), lambda i: (i, 0, 0)),
                  pl.BlockSpec((1, D), lambda i: (0, 0)),
                  pl.BlockSpec((1, D), lambda i: (0, 0))],
        out_specs=pl.BlockSpec((1, n_patch, D), lambda i: (i, 0, 0)),
        compiler_params=_PARALLEL,
    )(x, g, b)


# ----------------------------- model wrapper -----------------------------

def init_params(key, num_tokens):
    """Synthesized deterministic weights.  Matmul weights are pre-cast to bf16
    (and the patch-embed weight zero-padded to K_PAD rows) ONCE here, so the
    jitted forward contains no convert/pad ops."""
    def w(k, shape, scale=0.02):
        return (scale * jax.random.normal(k, shape)).astype(jnp.float32)

    keys = jax.random.split(key, 4 + DEPTH)
    patch_w = w(keys[0], (K_RAW, EMBED_DIM))
    patch_w = jnp.pad(patch_w, ((0, K_PAD - K_RAW), (0, 0)))
    params = {
        "patch_w": patch_w.astype(jnp.bfloat16),                     # (K_PAD, D)
        "patch_b": w(keys[1], (1, EMBED_DIM)),
        "cls_token": w(keys[2], (1, 1, EMBED_DIM)),
        "pos_embed": w(keys[3], (1, num_tokens, EMBED_DIM)),         # [cls, patches...]
        "norm_g": jnp.ones((1, EMBED_DIM), jnp.float32),
        "norm_b": jnp.zeros((1, EMBED_DIM), jnp.float32),
        "blocks": [],
    }
    for d in range(DEPTH):
        bk = jax.random.split(keys[4 + d], 8)
        params["blocks"].append({
            "ln1_g": jnp.ones((1, EMBED_DIM), jnp.float32),
            "ln1_b": jnp.zeros((1, EMBED_DIM), jnp.float32),
            "qkv_w": w(bk[0], (EMBED_DIM, 3 * EMBED_DIM)).astype(jnp.bfloat16),
            "qkv_b": w(bk[1], (1, 3 * EMBED_DIM)),
            "proj_w": w(bk[2], (EMBED_DIM, EMBED_DIM)).astype(jnp.bfloat16),
            "proj_b": w(bk[3], (1, EMBED_DIM)),
            "ls1": jnp.ones((1, EMBED_DIM), jnp.float32),            # LayerScale gamma
            "ln2_g": jnp.ones((1, EMBED_DIM), jnp.float32),
            "ln2_b": jnp.zeros((1, EMBED_DIM), jnp.float32),
            "fc1_w": w(bk[4], (EMBED_DIM, MLP_DIM)).astype(jnp.bfloat16),
            "fc1_b": w(bk[5], (1, MLP_DIM)),
            "fc2_w": w(bk[6], (MLP_DIM, EMBED_DIM)).astype(jnp.bfloat16),
            "fc2_b": w(bk[7], (1, EMBED_DIM)),
            "ls2": jnp.ones((1, EMBED_DIM), jnp.float32),
        })
    return params


@jax.jit
def dino_features_forward(x, params):
    B, C, H, W = x.shape
    Hp, Wp = H // PATCH, W // PATCH
    N = Hp * Wp
    D = EMBED_DIM
    n_valid = N + 1                       # patch tokens + cls token
    S = _round_up(n_valid, 8)             # pad sequence to an (8,128)-friendly size

    # Patch-embed conv (kernel=stride=14) == unfold + matmul.  The unfold stays
    # in XLA (one-time strided gather): a (3,14,14) window cannot be a BlockSpec
    # tile.  The contraction dim is zero-padded 588 -> 640 for aligned MXU loads.
    patches = (x.reshape(B, C, Hp, PATCH, Wp, PATCH)
                 .transpose(0, 2, 4, 1, 3, 5)
                 .reshape(B, N, C * PATCH * PATCH))
    patches = jnp.pad(patches, ((0, 0), (0, 0), (0, K_PAD - C * PATCH * PATCH)))

    pos = params["pos_embed"]                                   # (1, N+1, D)
    tok = patch_embed(patches, params["patch_w"], params["patch_b"],
                      pos[0, 1:, :])                            # (B, N, D) w/ pos added
    cls = jnp.broadcast_to(params["cls_token"] + pos[:, :1, :], (B, 1, D))
    pad = jnp.zeros((B, S - n_valid, D), jnp.float32)
    # Token order [patches..., cls, pad]: attention is permutation-equivariant
    # (no causal mask) so results match the reference as long as each positional
    # embedding travels with its token; it keeps patch tokens an aligned prefix
    # (copy-free cls/pad drop in the tail) and pads S to a multiple of 8.
    xt = jnp.concatenate([tok, cls, pad], axis=1)               # (B, S, D)

    # One fused pallas_call per transformer block; qkv / attention stay in VMEM.
    for blk in params["blocks"]:
        xt = transformer_block(xt, blk, n_valid)

    # get_intermediate_layers(..., norm=True, reshape=True) + L2Norm, fused:
    # final LayerNorm, drop cls/pad, L2-normalize each feature vector over D.
    feats = tail(xt, params["norm_g"], params["norm_b"], N)     # (B, N, D)
    # TODO(synk): transpose to the module's BxDxHxW layout kept in XLA (tiny,
    # one-time); skip it if the consumer accepts channels-last features.
    return feats.reshape(B, Hp, Wp, D).transpose(0, 3, 1, 2)    # (B, D, Hp, Wp)


if __name__ == "__main__":
    key = jax.random.PRNGKey(0)
    k_x, k_p = jax.random.split(key)

    B, H, W = 2, 28, 28                       # 2x2 grid of 14x14 patches
    x = jax.random.normal(k_x, (B, 3, H, W), jnp.float32)
    num_tokens = (H // PATCH) * (W // PATCH) + 1
    params = init_params(k_p, num_tokens)

    out = jax.block_until_ready(dino_features_forward(x, params))

    assert out.shape == (B, EMBED_DIM, H // PATCH, W // PATCH), out.shape
    norms = jnp.sqrt(jnp.sum(out * out, axis=1))
    assert bool(jnp.allclose(norms, 1.0, atol=1e-3)), "L2Norm over channels failed"
    assert bool(jnp.all(jnp.isfinite(out))), "non-finite features"
    print("KERNEL_OK")
</pallas_src>

<mosaic_0001>
module attributes {stable_mosaic.version = 11 : i64} {
  func.func @_patch_embed_kernel(%arg0: i32, %arg1: memref<1x4x640xf32, #tpu.memory_space<vmem>>, %arg2: memref<640x256xbf16, #tpu.memory_space<vmem>>, %arg3: memref<1x256xf32, #tpu.memory_space<vmem>>, %arg4: memref<4x256xf32, #tpu.memory_space<vmem>>, %arg5: memref<1x4x256xf32, #tpu.memory_space<vmem>>) attributes {dimension_semantics = [#tpu.dimension_semantics<parallel>], iteration_bounds = array<i64: 2>, scalar_prefetch = 0 : i64, scratch_operands = 0 : i64, tpu.core_type = #tpu.core_type<tc>, window_params = [{transform_indices = @transform_0, window_bounds = array<i64: 1, 4, 640>}, {pipeline_mode = #tpu.pipeline_mode<synchronous>, transform_indices = @transform_1, window_bounds = array<i64: 640, 256>}, {pipeline_mode = #tpu.pipeline_mode<synchronous>, transform_indices = @transform_2, window_bounds = array<i64: 1, 256>}, {pipeline_mode = #tpu.pipeline_mode<synchronous>, transform_indices = @transform_3, window_bounds = array<i64: 4, 256>}, {transform_indices = @transform_4, window_bounds = array<i64: 1, 4, 256>}]} {
    %c0 = arith.constant 0 : index
    %c0_0 = arith.constant 0 : index
    %c0_1 = arith.constant 0 : index
    %0 = vector.load %arg1[%c0, %c0_0, %c0_1] : memref<1x4x640xf32, #tpu.memory_space<vmem>>, vector<1x4x640xf32>
    %1 = vector.shape_cast %0 : vector<1x4x640xf32> to vector<4x640xf32>
    %2 = arith.truncf %1 : vector<4x640xf32> to vector<4x640xbf16>
    %c0_2 = arith.constant 0 : index
    %c0_3 = arith.constant 0 : index
    %3 = vector.load %arg2[%c0_2, %c0_3] : memref<640x256xbf16, #tpu.memory_space<vmem>>, vector<640x256xbf16>
    %cst = arith.constant dense<0.000000e+00> : vector<4x256xf32>
    %4 = tpu.matmul %2, %3, %cst {dimension_numbers = #tpu.dot_dimension_numbers<[1], [0], [0], [1], [0, 0, 1, 1], [], []>} : vector<4x640xbf16>, vector<640x256xbf16>, vector<4x256xf32> -> vector<4x256xf32>
    %c0_4 = arith.constant 0 : index
    %c0_5 = arith.constant 0 : index
    %5 = vector.load %arg3[%c0_4, %c0_5] : memref<1x256xf32, #tpu.memory_space<vmem>>, vector<1x256xf32>
    %6 = vector.broadcast %5 : vector<1x256xf32> to vector<4x256xf32>
    %7 = arith.addf %4, %6 : vector<4x256xf32>
    %c0_6 = arith.constant 0 : index
    %c0_7 = arith.constant 0 : index
    %8 = vector.load %arg4[%c0_6, %c0_7] : memref<4x256xf32, #tpu.memory_space<vmem>>, vector<4x256xf32>
    %9 = arith.addf %7, %8 : vector<4x256xf32>
    %c0_8 = arith.constant 0 : index
    %c0_9 = arith.constant 0 : index
    %c0_10 = arith.constant 0 : index
    %10 = vector.load %arg5[%c0_8, %c0_9, %c0_10] : memref<1x4x256xf32, #tpu.memory_space<vmem>>, vector<1x4x256xf32>
    %11 = vector.shape_cast %10 : vector<1x4x256xf32> to vector<4x256xf32>
    %12 = vector.shape_cast %9 : vector<4x256xf32> to vector<1x4x256xf32>
    tpu.vector_store %arg5[%c0_8, %c0_9, %c0_10], %12 {strides = array<i32>} : memref<1x4x256xf32, #tpu.memory_space<vmem>>, vector<1x4x256xf32>,
    return
  }
  func.func @transform_0(%arg0: i32) -> (i32, i32, i32) {
    %c0_i32 = arith.constant 0 : i32
    %c0_i32_0 = arith.constant 0 : i32
    %c0_i32_1 = arith.constant 0 : i32
    return %arg0, %c0_i32, %c0_i32_0 : i32, i32, i32
  }
  func.func @transform_1(%arg0: i32) -> (i32, i32) {
    %c0_i32 = arith.constant 0 : i32
    %c0_i32_0 = arith.constant 0 : i32
    %c0_i32_1 = arith.constant 0 : i32
    return %c0_i32, %c0_i32_0 : i32, i32
  }
  func.func @transform_2(%arg0: i32) -> (i32, i32) {
    %c0_i32 = arith.constant 0 : i32
    %c0_i32_0 = arith.constant 0 : i32
    %c0_i32_1 = arith.constant 0 : i32
    return %c0_i32, %c0_i32_0 : i32, i32
  }
  func.func @transform_3(%arg0: i32) -> (i32, i32) {
    %c0_i32 = arith.constant 0 : i32
    %c0_i32_0 = arith.constant 0 : i32
    %c0_i32_1 = arith.constant 0 : i32
    return %c0_i32, %c0_i32_0 : i32, i32
  }
  func.func @transform_4(%arg0: i32) -> (i32, i32, i32) {
    %c0_i32 = arith.constant 0 : i32
    %c0_i32_0 = arith.constant 0 : i32
    %c0_i32_1 = arith.constant 0 : i32
    return %arg0, %c0_i32, %c0_i32_0 : i32, i32, i32
  }
}

module attributes {stable_mosaic.version = 11 : i64} {
  func.func @_block_kernel(%arg0: i32, %arg1: memref<1x8x256xf32, #tpu.memory_space<vmem>>, %arg2: memref<1x256xf32, #tpu.memory_space<vmem>>, %arg3: memref<1x256xf32, #tpu.memory_space<vmem>>, %arg4: memref<256x768xbf16, #tpu.memory_space<vmem>>, %arg5: memref<1x768xf32, #tpu.memory_space<vmem>>, %arg6: memref<256x256xbf16, #tpu.memory_space<vmem>>, %arg7: memref<1x256xf32, #tpu.memory_space<vmem>>, %arg8: memref<1x256xf32, #tpu.memory_space<vmem>>, %arg9: memref<1x256xf32, #tpu.memory_space<vmem>>, %arg10: memref<1x256xf32, #tpu.memory_space<vmem>>, %arg11: memref<256x1024xbf16, #tpu.memory_space<vmem>>, %arg12: memref<1x1024xf32, #tpu.memory_space<vmem>>, %arg13: memref<1024x256xbf16, #tpu.memory_space<vmem>>, %arg14: memref<1x256xf32, #tpu.memory_space<vmem>>, %arg15: memref<1x256xf32, #tpu.memory_space<vmem>>, %arg16: memref<1x8x256xf32, #tpu.memory_space<vmem>>, %arg17: memref<8x768xf32, #tpu.memory_space<vmem>>, %arg18: memref<8x256xf32, #tpu.memory_space<vmem>>) attributes {dimension_semantics = [#tpu.dimension_semantics<parallel>], iteration_bounds = array<i64: 2>, scalar_prefetch = 0 : i64, scratch_operands = 2 : i64, tpu.core_type = #tpu.core_type<tc>, window_params = [{transform_indices = @transform_0, window_bounds = array<i64: 1, 8, 256>}, {pipeline_mode = #tpu.pipeline_mode<synchronous>, transform_indices = @transform_1, window_bounds = array<i64: 1, 256>}, {pipeline_mode = #tpu.pipeline_mode<synchronous>, transform_indices = @transform_2, window_bounds = array<i64: 1, 256>}, {pipeline_mode = #tpu.pipeline_mode<synchronous>, transform_indices = @transform_3, window_bounds = array<i64: 256, 768>}, {pipeline_mode = #tpu.pipeline_mode<synchronous>, transform_indices = @transform_4, window_bounds = array<i64: 1, 768>}, {pipeline_mode = #tpu.pipeline_mode<synchronous>, transform_indices = @transform_5, window_bounds = array<i64: 256, 256>}, {pipeline_mode = #tpu.pipeline_mode<synchronous>, transform_indices = @transform_6, window_bounds = array<i64: 1, 256>}, {pipeline_mode = #tpu.pipeline_mode<synchronous>, transform_indices = @transform_7, window_bounds = array<i64: 1, 256>}, {pipeline_mode = #tpu.pipeline_mode<synchronous>, transform_indices = @transform_8, window_bounds = array<i64: 1, 256>}, {pipeline_mode = #tpu.pipeline_mode<synchronous>, transform_indices = @transform_9, window_bounds = array<i64: 1, 256>}, {pipeline_mode = #tpu.pipeline_mode<synchronous>, transform_indices = @transform_10, window_bounds = array<i64: 256, 1024>}, {pipeline_mode = #tpu.pipeline_mode<synchronous>, transform_indices = @transform_11, window_bounds = array<i64: 1, 1024>}, {pipeline_mode = #tpu.pipeline_mode<synchronous>, transform_indices = @transform_12, window_bounds = array<i64: 1024, 256>}, {pipeline_mode = #tpu.pipeline_mode<synchronous>, transform_indices = @transform_13, window_bounds = array<i64: 1, 256>}, {pipeline_mode = #tpu.pipeline_mode<synchronous>, transform_indices = @transform_14, window_bounds = array<i64: 1, 256>}, {transform_indices = @transform_15, window_bounds = array<i64: 1, 8, 256>}]} {
    %c0 = arith.constant 0 : index
    %c0_0 = arith.constant 0 : index
    %c0_1 = arith.constant 0 : index
    %0 = vector.load %arg1[%c0, %c0_0, %c0_1] : memref<1x8x256xf32, #tpu.memory_space<vmem>>, vector<1x8x256xf32>
    %1 = vector.shape_cast %0 : vector<1x8x256xf32> to vector<8x256xf32>
    %c0_2 = arith.constant 0 : index
    %c0_3 = arith.constant 0 : index
    %2 = vector.load %arg2[%c0_2, %c0_3] : memref<1x256xf32, #tpu.memory_space<vmem>>, vector<1x256xf32>
    %c0_4 = arith.constant 0 : index
    %c0_5 = arith.constant 0 : index
    %3 = vector.load %arg3[%c0_4, %c0_5] : memref<1x256xf32, #tpu.memory_space<vmem>>, vector<1x256xf32>
    %cst = arith.constant dense<0.000000e+00> : vector<8xf32>
    %4 = vector.multi_reduction <add>, %1, %cst [1] : vector<8x256xf32> to vector<8xf32>
    %5 = vector.shape_cast %4 : vector<8xf32> to vector<8x1xf32>
    %cst_6 = arith.constant 2.560000e+02 : f32
    %6 = vector.broadcast %cst_6 : f32 to vector<8x1xf32>
    %7 = arith.divf %5, %6 : vector<8x1xf32>
    %8 = arith.mulf %1, %1 : vector<8x256xf32>
    %cst_7 = arith.constant dense<0.000000e+00> : vector<8xf32>
    %9 = vector.multi_reduction <add>, %8, %cst_7 [1] : vector<8x256xf32> to vector<8xf32>
    %10 = vector.shape_cast %9 : vector<8xf32> to vector<8x1xf32>
    %cst_8 = arith.constant 2.560000e+02 : f32
    %11 = vector.broadcast %cst_8 : f32 to vector<8x1xf32>
    %12 = arith.divf %10, %11 : vector<8x1xf32>
    %13 = arith.mulf %7, %7 : vector<8x1xf32>
    %14 = arith.subf %12, %13 : vector<8x1xf32>
    %15 = vector.broadcast %7 : vector<8x1xf32> to vector<8x256xf32>
    %16 = arith.subf %1, %15 : vector<8x256xf32>
    %cst_9 = arith.constant 9.99999997E-7 : f32
    %17 = vector.broadcast %cst_9 : f32 to vector<8x1xf32>
    %18 = arith.addf %14, %17 : vector<8x1xf32>
    %19 = math.rsqrt %18 : vector<8x1xf32>
    %20 = vector.broadcast %19 : vector<8x1xf32> to vector<8x256xf32>
    %21 = arith.mulf %16, %20 : vector<8x256xf32>
    %22 = vector.broadcast %2 : vector<1x256xf32> to vector<8x256xf32>
    %23 = arith.mulf %21, %22 : vector<8x256xf32>
    %24 = vector.broadcast %3 : vector<1x256xf32> to vector<8x256xf32>
    %25 = arith.addf %23, %24 : vector<8x256xf32>
    %26 = arith.truncf %25 : vector<8x256xf32> to vector<8x256xbf16>
    %c0_10 = arith.constant 0 : index
    %c0_11 = arith.constant 0 : index
    %27 = vector.load %arg4[%c0_10, %c0_11] : memref<256x768xbf16, #tpu.memory_space<vmem>>, vector<256x768xbf16>
    %cst_12 = arith.constant dense<0.000000e+00> : vector<8x768xf32>
    %28 = tpu.matmul %26, %27, %cst_12 {dimension_numbers = #tpu.dot_dimension_numbers<[1], [0], [0], [1], [0, 0, 1, 1], [], []>} : vector<8x256xbf16>, vector<256x768xbf16>, vector<8x768xf32> -> vector<8x768xf32>
    %c0_13 = arith.constant 0 : index
    %c0_14 = arith.constant 0 : index
    %29 = vector.load %arg5[%c0_13, %c0_14] : memref<1x768xf32, #tpu.memory_space<vmem>>, vector<1x768xf32>
    %30 = vector.broadcast %29 : vector<1x768xf32> to vector<8x768xf32>
    %31 = arith.addf %28, %30 : vector<8x768xf32>
    %c0_15 = arith.constant 0 : index
    %c0_16 = arith.constant 0 : index
    %32 = vector.load %arg17[%c0_15, %c0_16] : memref<8x768xf32, #tpu.memory_space<vmem>>, vector<8x768xf32>
    tpu.vector_store %arg17[%c0_15, %c0_16], %31 {strides = array<i32>} : memref<8x768xf32, #tpu.memory_space<vmem>>, vector<8x768xf32>,
    %33 = tpu.iota {dimensions = array<i32: 1>} : vector<8x8xi32>
    %c5_i32 = arith.constant 5 : i32
    %34 = vector.broadcast %c5_i32 : i32 to vector<8x8xi32>
    %35 = arith.cmpi slt, %33, %34 : vector<8x8xi32>
    %cst_17 = arith.constant 0.000000e+00 : f32
    %cst_18 = arith.constant -1.000000e+30 : f32
    %36 = vector.broadcast %cst_17 : f32 to vector<8x8xf32>
    %37 = vector.broadcast %cst_18 : f32 to vector<8x8xf32>
    %38 = arith.select %35, %36, %37 : vector<8x8xi1>, vector<8x8xf32>
    %c0_19 = arith.constant 0 : index
    %c0_20 = arith.constant 0 : index
    %39 = vector.load %arg17[%c0_19, %c0_20] : memref<8x768xf32, #tpu.memory_space<vmem>>, vector<8x128xf32>
    %40 = arith.truncf %39 : vector<8x128xf32> to vector<8x128xbf16>
    %c0_21 = arith.constant 0 : index
    %c256 = arith.constant 256 : index
    %41 = vector.load %arg17[%c0_21, %c256] : memref<8x768xf32, #tpu.memory_space<vmem>>, vector<8x128xf32>
    %42 = arith.truncf %41 : vector<8x128xf32> to vector<8x128xbf16>
    %c0_22 = arith.constant 0 : index
    %c512 = arith.constant 512 : index
    %43 = vector.load %arg17[%c0_22, %c512] : memref<8x768xf32, #tpu.memory_space<vmem>>, vector<8x128xf32>
    %44 = arith.truncf %43 : vector<8x128xf32> to vector<8x128xbf16>
    %cst_23 = arith.constant dense<0.000000e+00> : vector<8x8xf32>
    %45 = tpu.matmul %40, %42, %cst_23 {dimension_numbers = #tpu.dot_dimension_numbers<[1], [1], [0], [0], [0, 0, 1, 0], [], []>} : vector<8x128xbf16>, vector<8x128xbf16>, vector<8x8xf32> -> vector<8x8xf32>
    %cst_24 = arith.constant 0.0883883461 : f32
    %46 = vector.broadcast %cst_24 : f32 to vector<8x8xf32>
    %47 = arith.mulf %45, %46 : vector<8x8xf32>
    %48 = arith.addf %47, %38 : vector<8x8xf32>
    %cst_25 = arith.constant dense<0xFF800000> : vector<8xf32>
    %49 = vector.multi_reduction <maximumf>, %48, %cst_25 [1] : vector<8x8xf32> to vector<8xf32>
    %50 = vector.shape_cast %49 : vector<8xf32> to vector<8x1xf32>
    %51 = vector.broadcast %50 : vector<8x1xf32> to vector<8x8xf32>
    %52 = arith.subf %48, %51 : vector<8x8xf32>
    %53 = math.exp %52 : vector<8x8xf32>
    %cst_26 = arith.constant dense<0.000000e+00> : vector<8xf32>
    %54 = vector.multi_reduction <add>, %53, %cst_26 [1] : vector<8x8xf32> to vector<8xf32>
    %55 = vector.shape_cast %54 : vector<8xf32> to vector<8x1xf32>
    %56 = vector.broadcast %55 : vector<8x1xf32> to vector<8x8xf32>
    %57 = arith.divf %53, %56 : vector<8x8xf32>
    %58 = arith.truncf %57 : vector<8x8xf32> to vector<8x8xbf16>
    %cst_27 = arith.constant dense<0.000000e+00> : vector<8x128xf32>
    %59 = tpu.matmul %58, %44, %cst_27 {dimension_numbers = #tpu.dot_dimension_numbers<[1], [0], [0], [1], [0, 0, 1, 1], [], []>} : vector<8x8xbf16>, vector<8x128xbf16>, vector<8x128xf32> -> vector<8x128xf32>
    %c0_28 = arith.constant 0 : index
    %c0_29 = arith.constant 0 : index
    %60 = vector.load %arg18[%c0_28, %c0_29] : memref<8x256xf32, #tpu.memory_space<vmem>>, vector<8x128xf32>
    tpu.vector_store %arg18[%c0_28, %c0_29], %59 {strides = array<i32>} : memref<8x256xf32, #tpu.memory_space<vmem>>, vector<8x128xf32>,
    %c0_30 = arith.constant 0 : index
    %c128 = arith.constant 128 : index
    %61 = vector.load %arg17[%c0_30, %c128] : memref<8x768xf32, #tpu.memory_space<vmem>>, vector<8x128xf32>
    %62 = arith.truncf %61 : vector<8x128xf32> to vector<8x128xbf16>
    %c0_31 = arith.constant 0 : index
    %c384 = arith.constant 384 : index
    %63 = vector.load %arg17[%c0_31, %c384] : memref<8x768xf32, #tpu.memory_space<vmem>>, vector<8x128xf32>
    %64 = arith.truncf %63 : vector<8x128xf32> to vector<8x128xbf16>
    %c0_32 = arith.constant 0 : index
    %c640 = arith.constant 640 : index
    %65 = vector.load %arg17[%c0_32, %c640] : memref<8x768xf32, #tpu.memory_space<vmem>>, vector<8x128xf32>
    %66 = arith.truncf %65 : vector<8x128xf32> to vector<8x128xbf16>
    %cst_33 = arith.constant dense<0.000000e+00> : vector<8x8xf32>
    %67 = tpu.matmul %62, %64, %cst_33 {dimension_numbers = #tpu.dot_dimension_numbers<[1], [1], [0], [0], [0, 0, 1, 0], [], []>} : vector<8x128xbf16>, vector<8x128xbf16>, vector<8x8xf32> -> vector<8x8xf32>
    %cst_34 = arith.constant 0.0883883461 : f32
    %68 = vector.broadcast %cst_34 : f32 to vector<8x8xf32>
    %69 = arith.mulf %67, %68 : vector<8x8xf32>
    %70 = arith.addf %69, %38 : vector<8x8xf32>
    %cst_35 = arith.constant dense<0xFF800000> : vector<8xf32>
    %71 = vector.multi_reduction <maximumf>, %70, %cst_35 [1] : vector<8x8xf32> to vector<8xf32>
    %72 = vector.shape_cast %71 : vector<8xf32> to vector<8x1xf32>
    %73 = vector.broadcast %72 : vector<8x1xf32> to vector<8x8xf32>
    %74 = arith.subf %70, %73 : vector<8x8xf32>
    %75 = math.exp %74 : vector<8x8xf32>
    %cst_36 = arith.constant dense<0.000000e+00> : vector<8xf32>
    %76 = vector.multi_reduction <add>, %75, %cst_36 [1] : vector<8x8xf32> to vector<8xf32>
    %77 = vector.shape_cast %76 : vector<8xf32> to vector<8x1xf32>
    %78 = vector.broadcast %77 : vector<8x1xf32> to vector<8x8xf32>
    %79 = arith.divf %75, %78 : vector<8x8xf32>
    %80 = arith.truncf %79 : vector<8x8xf32> to vector<8x8xbf16>
    %cst_37 = arith.constant dense<0.000000e+00> : vector<8x128xf32>
    %81 = tpu.matmul %80, %66, %cst_37 {dimension_numbers = #tpu.dot_dimension_numbers<[1], [0], [0], [1], [0, 0, 1, 1], [], []>} : vector<8x8xbf16>, vector<8x128xbf16>, vector<8x128xf32> -> vector<8x128xf32>
    %c0_38 = arith.constant 0 : index
    %c128_39 = arith.constant 128 : index
    %82 = vector.load %arg18[%c0_38, %c128_39] : memref<8x256xf32, #tpu.memory_space<vmem>>, vector<8x128xf32>
    tpu.vector_store %arg18[%c0_38, %c128_39], %81 {strides = array<i32>} : memref<8x256xf32, #tpu.memory_space<vmem>>, vector<8x128xf32>,
    %c0_40 = arith.constant 0 : index
    %c0_41 = arith.constant 0 : index
    %83 = vector.load %arg18[%c0_40, %c0_41] : memref<8x256xf32, #tpu.memory_space<vmem>>, vector<8x256xf32>
    %84 = arith.truncf %83 : vector<8x256xf32> to vector<8x256xbf16>
    %c0_42 = arith.constant 0 : index
    %c0_43 = arith.constant 0 : index
    %85 = vector.load %arg6[%c0_42, %c0_43] : memref<256x256xbf16, #tpu.memory_space<vmem>>, vector<256x256xbf16>
    %cst_44 = arith.constant dense<0.000000e+00> : vector<8x256xf32>
    %86 = tpu.matmul %84, %85, %cst_44 {dimension_numbers = #tpu.dot_dimension_numbers<[1], [0], [0], [1], [0, 0, 1, 1], [], []>} : vector<8x256xbf16>, vector<256x256xbf16>, vector<8x256xf32> -> vector<8x256xf32>
    %c0_45 = arith.constant 0 : index
    %c0_46 = arith.constant 0 : index
    %87 = vector.load %arg7[%c0_45, %c0_46] : memref<1x256xf32, #tpu.memory_space<vmem>>, vector<1x256xf32>
    %88 = vector.broadcast %87 : vector<1x256xf32> to vector<8x256xf32>
    %89 = arith.addf %86, %88 : vector<8x256xf32>
    %c0_47 = arith.constant 0 : index
    %c0_48 = arith.constant 0 : index
    %90 = vector.load %arg8[%c0_47, %c0_48] : memref<1x256xf32, #tpu.memory_space<vmem>>, vector<1x256xf32>
    %91 = vector.broadcast %90 : vector<1x256xf32> to vector<8x256xf32>
    %92 = arith.mulf %89, %91 : vector<8x256xf32>
    %93 = arith.addf %1, %92 : vector<8x256xf32>
    %c0_49 = arith.constant 0 : index
    %c0_50 = arith.constant 0 : index
    %94 = vector.load %arg9[%c0_49, %c0_50] : memref<1x256xf32, #tpu.memory_space<vmem>>, vector<1x256xf32>
    %c0_51 = arith.constant 0 : index
    %c0_52 = arith.constant 0 : index
    %95 = vector.load %arg10[%c0_51, %c0_52] : memref<1x256xf32, #tpu.memory_space<vmem>>, vector<1x256xf32>
    %cst_53 = arith.constant dense<0.000000e+00> : vector<8xf32>
    %96 = vector.multi_reduction <add>, %93, %cst_53 [1] : vector<8x256xf32> to vector<8xf32>
    %97 = vector.shape_cast %96 : vector<8xf32> to vector<8x1xf32>
    %cst_54 = arith.constant 2.560000e+02 : f32
    %98 = vector.broadcast %cst_54 : f32 to vector<8x1xf32>
    %99 = arith.divf %97, %98 : vector<8x1xf32>
    %100 = arith.mulf %93, %93 : vector<8x256xf32>
    %cst_55 = arith.constant dense<0.000000e+00> : vector<8xf32>
    %101 = vector.multi_reduction <add>, %100, %cst_55 [1] : vector<8x256xf32> to vector<8xf32>
    %102 = vector.shape_cast %101 : vector<8xf32> to vector<8x1xf32>
    %cst_56 = arith.constant 2.560000e+02 : f32
    %103 = vector.broadcast %cst_56 : f32 to vector<8x1xf32>
    %104 = arith.divf %102, %103 : vector<8x1xf32>
    %105 = arith.mulf %99, %99 : vector<8x1xf32>
    %106 = arith.subf %104, %105 : vector<8x1xf32>
    %107 = vector.broadcast %99 : vector<8x1xf32> to vector<8x256xf32>
    %108 = arith.subf %93, %107 : vector<8x256xf32>
    %cst_57 = arith.constant 9.99999997E-7 : f32
    %109 = vector.broadcast %cst_57 : f32 to vector<8x1xf32>
    %110 = arith.addf %106, %109 : vector<8x1xf32>
    %111 = math.rsqrt %110 : vector<8x1xf32>
    %112 = vector.broadcast %111 : vector<8x1xf32> to vector<8x256xf32>
    %113 = arith.mulf %108, %112 : vector<8x256xf32>
    %114 = vector.broadcast %94 : vector<1x256xf32> to vector<8x256xf32>
    %115 = arith.mulf %113, %114 : vector<8x256xf32>
    %116 = vector.broadcast %95 : vector<1x256xf32> to vector<8x256xf32>
    %117 = arith.addf %115, %116 : vector<8x256xf32>
    %118 = arith.truncf %117 : vector<8x256xf32> to vector<8x256xbf16>
    %c0_58 = arith.constant 0 : index
    %c0_59 = arith.constant 0 : index
    %119 = vector.load %arg11[%c0_58, %c0_59] : memref<256x1024xbf16, #tpu.memory_space<vmem>>, vector<256x1024xbf16>
    %cst_60 = arith.constant dense<0.000000e+00> : vector<8x1024xf32>
    %120 = tpu.matmul %118, %119, %cst_60 {dimension_numbers = #tpu.dot_dimension_numbers<[1], [0], [0], [1], [0, 0, 1, 1], [], []>} : vector<8x256xbf16>, vector<256x1024xbf16>, vector<8x1024xf32> -> vector<8x1024xf32>
    %c0_61 = arith.constant 0 : index
    %c0_62 = arith.constant 0 : index
    %121 = vector.load %arg12[%c0_61, %c0_62] : memref<1x1024xf32, #tpu.memory_space<vmem>>, vector<1x1024xf32>
    %122 = vector.broadcast %121 : vector<1x1024xf32> to vector<8x1024xf32>
    %123 = arith.addf %120, %122 : vector<8x1024xf32>
    %124 = arith.mulf %123, %123 : vector<8x1024xf32>
    %125 = arith.mulf %123, %124 : vector<8x1024xf32>
    %cst_63 = arith.constant 4.471500e-02 : f32
    %126 = vector.broadcast %cst_63 : f32 to vector<8x1024xf32>
    %127 = arith.mulf %126, %125 : vector<8x1024xf32>
    %128 = arith.addf %123, %127 : vector<8x1024xf32>
    %cst_64 = arith.constant 0.797884583 : f32
    %129 = vector.broadcast %cst_64 : f32 to vector<8x1024xf32>
    %130 = arith.mulf %129, %128 : vector<8x1024xf32>
    %131 = math.tanh %130 : vector<8x1024xf32>
    %cst_65 = arith.constant 1.000000e+00 : f32
    %132 = vector.broadcast %cst_65 : f32 to vector<8x1024xf32>
    %133 = arith.addf %132, %131 : vector<8x1024xf32>
    %cst_66 = arith.constant 5.000000e-01 : f32
    %134 = vector.broadcast %cst_66 : f32 to vector<8x1024xf32>
    %135 = arith.mulf %134, %133 : vector<8x1024xf32>
    %136 = arith.mulf %123, %135 : vector<8x1024xf32>
    %137 = arith.truncf %136 : vector<8x1024xf32> to vector<8x1024xbf16>
    %c0_67 = arith.constant 0 : index
    %c0_68 = arith.constant 0 : index
    %138 = vector.load %arg13[%c0_67, %c0_68] : memref<1024x256xbf16, #tpu.memory_space<vmem>>, vector<1024x256xbf16>
    %cst_69 = arith.constant dense<0.000000e+00> : vector<8x256xf32>
    %139 = tpu.matmul %137, %138, %cst_69 {dimension_numbers = #tpu.dot_dimension_numbers<[1], [0], [0], [1], [0, 0, 1, 1], [], []>} : vector<8x1024xbf16>, vector<1024x256xbf16>, vector<8x256xf32> -> vector<8x256xf32>
    %c0_70 = arith.constant 0 : index
    %c0_71 = arith.constant 0 : index
    %140 = vector.load %arg14[%c0_70, %c0_71] : memref<1x256xf32, #tpu.memory_space<vmem>>, vector<1x256xf32>
    %141 = vector.broadcast %140 : vector<1x256xf32> to vector<8x256xf32>
    %142 = arith.addf %139, %141 : vector<8x256xf32>
    %c0_72 = arith.constant 0 : index
    %c0_73 = arith.constant 0 : index
    %143 = vector.load %arg15[%c0_72, %c0_73] : memref<1x256xf32, #tpu.memory_space<vmem>>, vector<1x256xf32>
    %144 = vector.broadcast %143 : vector<1x256xf32> to vector<8x256xf32>
    %145 = arith.mulf %142, %144 : vector<8x256xf32>
    %146 = arith.addf %93, %145 : vector<8x256xf32>
    %c0_74 = arith.constant 0 : index
    %c0_75 = arith.constant 0 : index
    %c0_76 = arith.constant 0 : index
    %147 = vector.load %arg16[%c0_74, %c0_75, %c0_76] : memref<1x8x256xf32, #tpu.memory_space<vmem>>, vector<1x8x256xf32>
    %148 = vector.shape_cast %147 : vector<1x8x256xf32> to vector<8x256xf32>
    %149 = vector.shape_cast %146 : vector<8x256xf32> to vector<1x8x256xf32>
    tpu.vector_store %arg16[%c0_74, %c0_75, %c0_76], %149 {strides = array<i32>} : memref<1x8x256xf32, #tpu.memory_space<vmem>>, vector<1x8x256xf32>,
    return
  }
  func.func @transform_0(%arg0: i32) -> (i32, i32, i32) {
    %c0_i32 = arith.constant 0 : i32
    %c0_i32_0 = arith.constant 0 : i32
    %c0_i32_1 = arith.constant 0 : i32
    return %arg0, %c0_i32, %c0_i32_0 : i32, i32, i32
  }
  func.func @transform_1(%arg0: i32) -> (i32, i32) {
    %c0_i32 = arith.constant 0 : i32
    %c0_i32_0 = arith.constant 0 : i32
    %c0_i32_1 = arith.constant 0 : i32
    return %c0_i32, %c0_i32_0 : i32, i32
  }
  func.func @transform_2(%arg0: i32) -> (i32, i32) {
    %c0_i32 = arith.constant 0 : i32
    %c0_i32_0 = arith.constant 0 : i32
    %c0_i32_1 = arith.constant 0 : i32
    return %c0_i32, %c0_i32_0 : i32, i32
  }
  func.func @transform_3(%arg0: i32) -> (i32, i32) {
    %c0_i32 = arith.constant 0 : i32
    %c0_i32_0 = arith.constant 0 : i32
    %c0_i32_1 = arith.constant 0 : i32
    return %c0_i32, %c0_i32_0 : i32, i32
  }
  func.func @transform_4(%arg0: i32) -> (i32, i32) {
    %c0_i32 = arith.constant 0 : i32
    %c0_i32_0 = arith.constant 0 : i32
    %c0_i32_1 = arith.constant 0 : i32
    return %c0_i32, %c0_i32_0 : i32, i32
  }
  func.func @transform_5(%arg0: i32) -> (i32, i32) {
    %c0_i32 = arith.constant 0 : i32
    %c0_i32_0 = arith.constant 0 : i32
    %c0_i32_1 = arith.constant 0 : i32
    return %c0_i32, %c0_i32_0 : i32, i32
  }
  func.func @transform_6(%arg0: i32) -> (i32, i32) {
    %c0_i32 = arith.constant 0 : i32
    %c0_i32_0 = arith.constant 0 : i32
    %c0_i32_1 = arith.constant 0 : i32
    return %c0_i32, %c0_i32_0 : i32, i32
  }
  func.func @transform_7(%arg0: i32) -> (i32, i32) {
    %c0_i32 = arith.constant 0 : i32
    %c0_i32_0 = arith.constant 0 : i32
    %c0_i32_1 = arith.constant 0 : i32
    return %c0_i32, %c0_i32_0 : i32, i32
  }
  func.func @transform_8(%arg0: i32) -> (i32, i32) {
    %c0_i32 = arith.constant 0 : i32
    %c0_i32_0 = arith.constant 0 : i32
    %c0_i32_1 = arith.constant 0 : i32
    return %c0_i32, %c0_i32_0 : i32, i32
  }
  func.func @transform_9(%arg0: i32) -> (i32, i32) {
    %c0_i32 = arith.constant 0 : i32
    %c0_i32_0 = arith.constant 0 : i32
    %c0_i32_1 = arith.constant 0 : i32
    return %c0_i32, %c0_i32_0 : i32, i32
  }
  func.func @transform_10(%arg0: i32) -> (i32, i32) {
    %c0_i32 = arith.constant 0 : i32
    %c0_i32_0 = arith.constant 0 : i32
    %c0_i32_1 = arith.constant 0 : i32
    return %c0_i32, %c0_i32_0 : i32, i32
  }
  func.func @transform_11(%arg0: i32) -> (i32, i32) {
    %c0_i32 = arith.constant 0 : i32
    %c0_i32_0 = arith.constant 0 : i32
    %c0_i32_1 = arith.constant 0 : i32
    return %c0_i32, %c0_i32_0 : i32, i32
  }
  func.func @transform_12(%arg0: i32) -> (i32, i32) {
    %c0_i32 = arith.constant 0 : i32
    %c0_i32_0 = arith.constant 0 : i32
    %c0_i32_1 = arith.constant 0 : i32
    return %c0_i32, %c0_i32_0 : i32, i32
  }
  func.func @transform_13(%arg0: i32) -> (i32, i32) {
    %c0_i32 = arith.constant 0 : i32
    %c0_i32_0 = arith.constant 0 : i32
    %c0_i32_1 = arith.constant 0 : i32
    return %c0_i32, %c0_i32_0 : i32, i32
  }
  func.func @transform_14(%arg0: i32) -> (i32, i32) {
    %c0_i32 = arith.constant 0 : i32
    %c0_i32_0 = arith.constant 0 : i32
    %c0_i32_1 = arith.constant 0 : i32
    return %c0_i32, %c0_i32_0 : i32, i32
  }
  func.func @transform_15(%arg0: i32) -> (i32, i32, i32) {
    %c0_i32 = arith.constant 0 : i32
    %c0_i32_0 = arith.constant 0 : i32
    %c0_i32_1 = arith.constant 0 : i32
    return %arg0, %c0_i32, %c0_i32_0 : i32, i32, i32
  }
}

module attributes {stable_mosaic.version = 11 : i64} {
  func.func @_block_kernel(%arg0: i32, %arg1: memref<1x8x256xf32, #tpu.memory_space<vmem>>, %arg2: memref<1x256xf32, #tpu.memory_space<vmem>>, %arg3: memref<1x256xf32, #tpu.memory_space<vmem>>, %arg4: memref<256x768xbf16, #tpu.memory_space<vmem>>, %arg5: memref<1x768xf32, #tpu.memory_space<vmem>>, %arg6: memref<256x256xbf16, #tpu.memory_space<vmem>>, %arg7: memref<1x256xf32, #tpu.memory_space<vmem>>, %arg8: memref<1x256xf32, #tpu.memory_space<vmem>>, %arg9: memref<1x256xf32, #tpu.memory_space<vmem>>, %arg10: memref<1x256xf32, #tpu.memory_space<vmem>>, %arg11: memref<256x1024xbf16, #tpu.memory_space<vmem>>, %arg12: memref<1x1024xf32, #tpu.memory_space<vmem>>, %arg13: memref<1024x256xbf16, #tpu.memory_space<vmem>>, %arg14: memref<1x256xf32, #tpu.memory_space<vmem>>, %arg15: memref<1x256xf32, #tpu.memory_space<vmem>>, %arg16: memref<1x8x256xf32, #tpu.memory_space<vmem>>, %arg17: memref<8x768xf32, #tpu.memory_space<vmem>>, %arg18: memref<8x256xf32, #tpu.memory_space<vmem>>) attributes {dimension_semantics = [#tpu.dimension_semantics<parallel>], iteration_bounds = array<i64: 2>, scalar_prefetch = 0 : i64, scratch_operands = 2 : i64, tpu.core_type = #tpu.core_type<tc>, window_params = [{transform_indices = @transform_0, window_bounds = array<i64: 1, 8, 256>}, {pipeline_mode = #tpu.pipeline_mode<synchronous>, transform_indices = @transform_1, window_bounds = array<i64: 1, 256>}, {pipeline_mode = #tpu.pipeline_mode<synchronous>, transform_indices = @transform_2, window_bounds = array<i64: 1, 256>}, {pipeline_mode = #tpu.pipeline_mode<synchronous>, transform_indices = @transform_3, window_bounds = array<i64: 256, 768>}, {pipeline_mode = #tpu.pipeline_mode<synchronous>, transform_indices = @transform_4, window_bounds = array<i64: 1, 768>}, {pipeline_mode = #tpu.pipeline_mode<synchronous>, transform_indices = @transform_5, window_bounds = array<i64: 256, 256>}, {pipeline_mode = #tpu.pipeline_mode<synchronous>, transform_indices = @transform_6, window_bounds = array<i64: 1, 256>}, {pipeline_mode = #tpu.pipeline_mode<synchronous>, transform_indices = @transform_7, window_bounds = array<i64: 1, 256>}, {pipeline_mode = #tpu.pipeline_mode<synchronous>, transform_indices = @transform_8, window_bounds = array<i64: 1, 256>}, {pipeline_mode = #tpu.pipeline_mode<synchronous>, transform_indices = @transform_9, window_bounds = array<i64: 1, 256>}, {pipeline_mode = #tpu.pipeline_mode<synchronous>, transform_indices = @transform_10, window_bounds = array<i64: 256, 1024>}, {pipeline_mode = #tpu.pipeline_mode<synchronous>, transform_indices = @transform_11, window_bounds = array<i64: 1, 1024>}, {pipeline_mode = #tpu.pipeline_mode<synchronous>, transform_indices = @transform_12, window_bounds = array<i64: 1024, 256>}, {pipeline_mode = #tpu.pipeline_mode<synchronous>, transform_indices = @transform_13, window_bounds = array<i64: 1, 256>}, {pipeline_mode = #tpu.pipeline_mode<synchronous>, transform_indices = @transform_14, window_bounds = array<i64: 1, 256>}, {transform_indices = @transform_15, window_bounds = array<i64: 1, 8, 256>}]} {
    %c0 = arith.constant 0 : index
    %c0_0 = arith.constant 0 : index
    %c0_1 = arith.constant 0 : index
    %0 = vector.load %arg1[%c0, %c0_0, %c0_1] : memref<1x8x256xf32, #tpu.memory_space<vmem>>, vector<1x8x256xf32>
    %1 = vector.shape_cast %0 : vector<1x8x256xf32> to vector<8x256xf32>
    %c0_2 = arith.constant 0 : index
    %c0_3 = arith.constant 0 : index
    %2 = vector.load %arg2[%c0_2, %c0_3] : memref<1x256xf32, #tpu.memory_space<vmem>>, vector<1x256xf32>
    %c0_4 = arith.constant 0 : index
    %c0_5 = arith.constant 0 : index
    %3 = vector.load %arg3[%c0_4, %c0_5] : memref<1x256xf32, #tpu.memory_space<vmem>>, vector<1x256xf32>
    %cst = arith.constant dense<0.000000e+00> : vector<8xf32>
    %4 = vector.multi_reduction <add>, %1, %cst [1] : vector<8x256xf32> to vector<8xf32>
    %5 = vector.shape_cast %4 : vector<8xf32> to vector<8x1xf32>
    %cst_6 = arith.constant 2.560000e+02 : f32
    %6 = vector.broadcast %cst_6 : f32 to vector<8x1xf32>
    %7 = arith.divf %5, %6 : vector<8x1xf32>
    %8 = arith.mulf %1, %1 : vector<8x256xf32>
    %cst_7 = arith.constant dense<0.000000e+00> : vector<8xf32>
    %9 = vector.multi_reduction <add>, %8, %cst_7 [1] : vector<8x256xf32> to vector<8xf32>
    %10 = vector.shape_cast %9 : vector<8xf32> to vector<8x1xf32>
    %cst_8 = arith.constant 2.560000e+02 : f32
    %11 = vector.broadcast %cst_8 : f32 to vector<8x1xf32>
    %12 = arith.divf %10, %11 : vector<8x1xf32>
    %13 = arith.mulf %7, %7 : vector<8x1xf32>
    %14 = arith.subf %12, %13 : vector<8x1xf32>
    %15 = vector.broadcast %7 : vector<8x1xf32> to vector<8x256xf32>
    %16 = arith.subf %1, %15 : vector<8x256xf32>
    %cst_9 = arith.constant 9.99999997E-7 : f32
    %17 = vector.broadcast %cst_9 : f32 to vector<8x1xf32>
    %18 = arith.addf %14, %17 : vector<8x1xf32>
    %19 = math.rsqrt %18 : vector<8x1xf32>
    %20 = vector.broadcast %19 : vector<8x1xf32> to vector<8x256xf32>
    %21 = arith.mulf %16, %20 : vector<8x256xf32>
    %22 = vector.broadcast %2 : vector<1x256xf32> to vector<8x256xf32>
    %23 = arith.mulf %21, %22 : vector<8x256xf32>
    %24 = vector.broadcast %3 : vector<1x256xf32> to vector<8x256xf32>
    %25 = arith.addf %23, %24 : vector<8x256xf32>
    %26 = arith.truncf %25 : vector<8x256xf32> to vector<8x256xbf16>
    %c0_10 = arith.constant 0 : index
    %c0_11 = arith.constant 0 : index
    %27 = vector.load %arg4[%c0_10, %c0_11] : memref<256x768xbf16, #tpu.memory_space<vmem>>, vector<256x768xbf16>
    %cst_12 = arith.constant dense<0.000000e+00> : vector<8x768xf32>
    %28 = tpu.matmul %26, %27, %cst_12 {dimension_numbers = #tpu.dot_dimension_numbers<[1], [0], [0], [1], [0, 0, 1, 1], [], []>} : vector<8x256xbf16>, vector<256x768xbf16>, vector<8x768xf32> -> vector<8x768xf32>
    %c0_13 = arith.constant 0 : index
    %c0_14 = arith.constant 0 : index
    %29 = vector.load %arg5[%c0_13, %c0_14] : memref<1x768xf32, #tpu.memory_space<vmem>>, vector<1x768xf32>
    %30 = vector.broadcast %29 : vector<1x768xf32> to vector<8x768xf32>
    %31 = arith.addf %28, %30 : vector<8x768xf32>
    %c0_15 = arith.constant 0 : index
    %c0_16 = arith.constant 0 : index
    %32 = vector.load %arg17[%c0_15, %c0_16] : memref<8x768xf32, #tpu.memory_space<vmem>>, vector<8x768xf32>
    tpu.vector_store %arg17[%c0_15, %c0_16], %31 {strides = array<i32>} : memref<8x768xf32, #tpu.memory_space<vmem>>, vector<8x768xf32>,
    %33 = tpu.iota {dimensions = array<i32: 1>} : vector<8x8xi32>
    %c5_i32 = arith.constant 5 : i32
    %34 = vector.broadcast %c5_i32 : i32 to vector<8x8xi32>
    %35 = arith.cmpi slt, %33, %34 : vector<8x8xi32>
    %cst_17 = arith.constant 0.000000e+00 : f32
    %cst_18 = arith.constant -1.000000e+30 : f32
    %36 = vector.broadcast %cst_17 : f32 to vector<8x8xf32>
    %37 = vector.broadcast %cst_18 : f32 to vector<8x8xf32>
    %38 = arith.select %35, %36, %37 : vector<8x8xi1>, vector<8x8xf32>
    %c0_19 = arith.constant 0 : index
    %c0_20 = arith.constant 0 : index
    %39 = vector.load %arg17[%c0_19, %c0_20] : memref<8x768xf32, #tpu.memory_space<vmem>>, vector<8x128xf32>
    %40 = arith.truncf %39 : vector<8x128xf32> to vector<8x128xbf16>
    %c0_21 = arith.constant 0 : index
    %c256 = arith.constant 256 : index
    %41 = vector.load %arg17[%c0_21, %c256] : memref<8x768xf32, #tpu.memory_space<vmem>>, vector<8x128xf32>
    %42 = arith.truncf %41 : vector<8x128xf32> to vector<8x128xbf16>
    %c0_22 = arith.constant 0 : index
    %c512 = arith.constant 512 : index
    %43 = vector.load %arg17[%c0_22, %c512] : memref<8x768xf32, #tpu.memory_space<vmem>>, vector<8x128xf32>
    %44 = arith.truncf %43 : vector<8x128xf32> to vector<8x128xbf16>
    %cst_23 = arith.constant dense<0.000000e+00> : vector<8x8xf32>
    %45 = tpu.matmul %40, %42, %cst_23 {dimension_numbers = #tpu.dot_dimension_numbers<[1], [1], [0], [0], [0, 0, 1, 0], [], []>} : vector<8x128xbf16>, vector<8x128xbf16>, vector<8x8xf32> -> vector<8x8xf32>
    %cst_24 = arith.constant 0.0883883461 : f32
    %46 = vector.broadcast %cst_24 : f32 to vector<8x8xf32>
    %47 = arith.mulf %45, %46 : vector<8x8xf32>
    %48 = arith.addf %47, %38 : vector<8x8xf32>
    %cst_25 = arith.constant dense<0xFF800000> : vector<8xf32>
    %49 = vector.multi_reduction <maximumf>, %48, %cst_25 [1] : vector<8x8xf32> to vector<8xf32>
    %50 = vector.shape_cast %49 : vector<8xf32> to vector<8x1xf32>
    %51 = vector.broadcast %50 : vector<8x1xf32> to vector<8x8xf32>
    %52 = arith.subf %48, %51 : vector<8x8xf32>
    %53 = math.exp %52 : vector<8x8xf32>
    %cst_26 = arith.constant dense<0.000000e+00> : vector<8xf32>
    %54 = vector.multi_reduction <add>, %53, %cst_26 [1] : vector<8x8xf32> to vector<8xf32>
    %55 = vector.shape_cast %54 : vector<8xf32> to vector<8x1xf32>
    %56 = vector.broadcast %55 : vector<8x1xf32> to vector<8x8xf32>
    %57 = arith.divf %53, %56 : vector<8x8xf32>
    %58 = arith.truncf %57 : vector<8x8xf32> to vector<8x8xbf16>
    %cst_27 = arith.constant dense<0.000000e+00> : vector<8x128xf32>
    %59 = tpu.matmul %58, %44, %cst_27 {dimension_numbers = #tpu.dot_dimension_numbers<[1], [0], [0], [1], [0, 0, 1, 1], [], []>} : vector<8x8xbf16>, vector<8x128xbf16>, vector<8x128xf32> -> vector<8x128xf32>
    %c0_28 = arith.constant 0 : index
    %c0_29 = arith.constant 0 : index
    %60 = vector.load %arg18[%c0_28, %c0_29] : memref<8x256xf32, #tpu.memory_space<vmem>>, vector<8x128xf32>
    tpu.vector_store %arg18[%c0_28, %c0_29], %59 {strides = array<i32>} : memref<8x256xf32, #tpu.memory_space<vmem>>, vector<8x128xf32>,
    %c0_30 = arith.constant 0 : index
    %c128 = arith.constant 128 : index
    %61 = vector.load %arg17[%c0_30, %c128] : memref<8x768xf32, #tpu.memory_space<vmem>>, vector<8x128xf32>
    %62 = arith.truncf %61 : vector<8x128xf32> to vector<8x128xbf16>
    %c0_31 = arith.constant 0 : index
    %c384 = arith.constant 384 : index
    %63 = vector.load %arg17[%c0_31, %c384] : memref<8x768xf32, #tpu.memory_space<vmem>>, vector<8x128xf32>
    %64 = arith.truncf %63 : vector<8x128xf32> to vector<8x128xbf16>
    %c0_32 = arith.constant 0 : index
    %c640 = arith.constant 640 : index
    %65 = vector.load %arg17[%c0_32, %c640] : memref<8x768xf32, #tpu.memory_space<vmem>>, vector<8x128xf32>
    %66 = arith.truncf %65 : vector<8x128xf32> to vector<8x128xbf16>
    %cst_33 = arith.constant dense<0.000000e+00> : vector<8x8xf32>
    %67 = tpu.matmul %62, %64, %cst_33 {dimension_numbers = #tpu.dot_dimension_numbers<[1], [1], [0], [0], [0, 0, 1, 0], [], []>} : vector<8x128xbf16>, vector<8x128xbf16>, vector<8x8xf32> -> vector<8x8xf32>
    %cst_34 = arith.constant 0.0883883461 : f32
    %68 = vector.broadcast %cst_34 : f32 to vector<8x8xf32>
    %69 = arith.mulf %67, %68 : vector<8x8xf32>
    %70 = arith.addf %69, %38 : vector<8x8xf32>
    %cst_35 = arith.constant dense<0xFF800000> : vector<8xf32>
    %71 = vector.multi_reduction <maximumf>, %70, %cst_35 [1] : vector<8x8xf32> to vector<8xf32>
    %72 = vector.shape_cast %71 : vector<8xf32> to vector<8x1xf32>
    %73 = vector.broadcast %72 : vector<8x1xf32> to vector<8x8xf32>
    %74 = arith.subf %70, %73 : vector<8x8xf32>
    %75 = math.exp %74 : vector<8x8xf32>
    %cst_36 = arith.constant dense<0.000000e+00> : vector<8xf32>
    %76 = vector.multi_reduction <add>, %75, %cst_36 [1] : vector<8x8xf32> to vector<8xf32>
    %77 = vector.shape_cast %76 : vector<8xf32> to vector<8x1xf32>
    %78 = vector.broadcast %77 : vector<8x1xf32> to vector<8x8xf32>
    %79 = arith.divf %75, %78 : vector<8x8xf32>
    %80 = arith.truncf %79 : vector<8x8xf32> to vector<8x8xbf16>
    %cst_37 = arith.constant dense<0.000000e+00> : vector<8x128xf32>
    %81 = tpu.matmul %80, %66, %cst_37 {dimension_numbers = #tpu.dot_dimension_numbers<[1], [0], [0], [1], [0, 0, 1, 1], [], []>} : vector<8x8xbf16>, vector<8x128xbf16>, vector<8x128xf32> -> vector<8x128xf32>
    %c0_38 = arith.constant 0 : index
    %c128_39 = arith.constant 128 : index
    %82 = vector.load %arg18[%c0_38, %c128_39] : memref<8x256xf32, #tpu.memory_space<vmem>>, vector<8x128xf32>
    tpu.vector_store %arg18[%c0_38, %c128_39], %81 {strides = array<i32>} : memref<8x256xf32, #tpu.memory_space<vmem>>, vector<8x128xf32>,
    %c0_40 = arith.constant 0 : index
    %c0_41 = arith.constant 0 : index
    %83 = vector.load %arg18[%c0_40, %c0_41] : memref<8x256xf32, #tpu.memory_space<vmem>>, vector<8x256xf32>
    %84 = arith.truncf %83 : vector<8x256xf32> to vector<8x256xbf16>
    %c0_42 = arith.constant 0 : index
    %c0_43 = arith.constant 0 : index
    %85 = vector.load %arg6[%c0_42, %c0_43] : memref<256x256xbf16, #tpu.memory_space<vmem>>, vector<256x256xbf16>
    %cst_44 = arith.constant dense<0.000000e+00> : vector<8x256xf32>
    %86 = tpu.matmul %84, %85, %cst_44 {dimension_numbers = #tpu.dot_dimension_numbers<[1], [0], [0], [1], [0, 0, 1, 1], [], []>} : vector<8x256xbf16>, vector<256x256xbf16>, vector<8x256xf32> -> vector<8x256xf32>
    %c0_45 = arith.constant 0 : index
    %c0_46 = arith.constant 0 : index
    %87 = vector.load %arg7[%c0_45, %c0_46] : memref<1x256xf32, #tpu.memory_space<vmem>>, vector<1x256xf32>
    %88 = vector.broadcast %87 : vector<1x256xf32> to vector<8x256xf32>
    %89 = arith.addf %86, %88 : vector<8x256xf32>
    %c0_47 = arith.constant 0 : index
    %c0_48 = arith.constant 0 : index
    %90 = vector.load %arg8[%c0_47, %c0_48] : memref<1x256xf32, #tpu.memory_space<vmem>>, vector<1x256xf32>
    %91 = vector.broadcast %90 : vector<1x256xf32> to vector<8x256xf32>
    %92 = arith.mulf %89, %91 : vector<8x256xf32>
    %93 = arith.addf %1, %92 : vector<8x256xf32>
    %c0_49 = arith.constant 0 : index
    %c0_50 = arith.constant 0 : index
    %94 = vector.load %arg9[%c0_49, %c0_50] : memref<1x256xf32, #tpu.memory_space<vmem>>, vector<1x256xf32>
    %c0_51 = arith.constant 0 : index
    %c0_52 = arith.constant 0 : index
    %95 = vector.load %arg10[%c0_51, %c0_52] : memref<1x256xf32, #tpu.memory_space<vmem>>, vector<1x256xf32>
    %cst_53 = arith.constant dense<0.000000e+00> : vector<8xf32>
    %96 = vector.multi_reduction <add>, %93, %cst_53 [1] : vector<8x256xf32> to vector<8xf32>
    %97 = vector.shape_cast %96 : vector<8xf32> to vector<8x1xf32>
    %cst_54 = arith.constant 2.560000e+02 : f32
    %98 = vector.broadcast %cst_54 : f32 to vector<8x1xf32>
    %99 = arith.divf %97, %98 : vector<8x1xf32>
    %100 = arith.mulf %93, %93 : vector<8x256xf32>
    %cst_55 = arith.constant dense<0.000000e+00> : vector<8xf32>
    %101 = vector.multi_reduction <add>, %100, %cst_55 [1] : vector<8x256xf32> to vector<8xf32>
    %102 = vector.shape_cast %101 : vector<8xf32> to vector<8x1xf32>
    %cst_56 = arith.constant 2.560000e+02 : f32
    %103 = vector.broadcast %cst_56 : f32 to vector<8x1xf32>
    %104 = arith.divf %102, %103 : vector<8x1xf32>
    %105 = arith.mulf %99, %99 : vector<8x1xf32>
    %106 = arith.subf %104, %105 : vector<8x1xf32>
    %107 = vector.broadcast %99 : vector<8x1xf32> to vector<8x256xf32>
    %108 = arith.subf %93, %107 : vector<8x256xf32>
    %cst_57 = arith.constant 9.99999997E-7 : f32
    %109 = vector.broadcast %cst_57 : f32 to vector<8x1xf32>
    %110 = arith.addf %106, %109 : vector<8x1xf32>
    %111 = math.rsqrt %110 : vector<8x1xf32>
    %112 = vector.broadcast %111 : vector<8x1xf32> to vector<8x256xf32>
    %113 = arith.mulf %108, %112 : vector<8x256xf32>
    %114 = vector.broadcast %94 : vector<1x256xf32> to vector<8x256xf32>
    %115 = arith.mulf %113, %114 : vector<8x256xf32>
    %116 = vector.broadcast %95 : vector<1x256xf32> to vector<8x256xf32>
    %117 = arith.addf %115, %116 : vector<8x256xf32>
    %118 = arith.truncf %117 : vector<8x256xf32> to vector<8x256xbf16>
    %c0_58 = arith.constant 0 : index
    %c0_59 = arith.constant 0 : index
    %119 = vector.load %arg11[%c0_58, %c0_59] : memref<256x1024xbf16, #tpu.memory_space<vmem>>, vector<256x1024xbf16>
    %cst_60 = arith.constant dense<0.000000e+00> : vector<8x1024xf32>
    %120 = tpu.matmul %118, %119, %cst_60 {dimension_numbers = #tpu.dot_dimension_numbers<[1], [0], [0], [1], [0, 0, 1, 1], [], []>} : vector<8x256xbf16>, vector<256x1024xbf16>, vector<8x1024xf32> -> vector<8x1024xf32>
    %c0_61 = arith.constant 0 : index
    %c0_62 = arith.constant 0 : index
    %121 = vector.load %arg12[%c0_61, %c0_62] : memref<1x1024xf32, #tpu.memory_space<vmem>>, vector<1x1024xf32>
    %122 = vector.broadcast %121 : vector<1x1024xf32> to vector<8x1024xf32>
    %123 = arith.addf %120, %122 : vector<8x1024xf32>
    %124 = arith.mulf %123, %123 : vector<8x1024xf32>
    %125 = arith.mulf %123, %124 : vector<8x1024xf32>
    %cst_63 = arith.constant 4.471500e-02 : f32
    %126 = vector.broadcast %cst_63 : f32 to vector<8x1024xf32>
    %127 = arith.mulf %126, %125 : vector<8x1024xf32>
    %128 = arith.addf %123, %127 : vector<8x1024xf32>
    %cst_64 = arith.constant 0.797884583 : f32
    %129 = vector.broadcast %cst_64 : f32 to vector<8x1024xf32>
    %130 = arith.mulf %129, %128 : vector<8x1024xf32>
    %131 = math.tanh %130 : vector<8x1024xf32>
    %cst_65 = arith.constant 1.000000e+00 : f32
    %132 = vector.broadcast %cst_65 : f32 to vector<8x1024xf32>
    %133 = arith.addf %132, %131 : vector<8x1024xf32>
    %cst_66 = arith.constant 5.000000e-01 : f32
    %134 = vector.broadcast %cst_66 : f32 to vector<8x1024xf32>
    %135 = arith.mulf %134, %133 : vector<8x1024xf32>
    %136 = arith.mulf %123, %135 : vector<8x1024xf32>
    %137 = arith.truncf %136 : vector<8x1024xf32> to vector<8x1024xbf16>
    %c0_67 = arith.constant 0 : index
    %c0_68 = arith.constant 0 : index
    %138 = vector.load %arg13[%c0_67, %c0_68] : memref<1024x256xbf16, #tpu.memory_space<vmem>>, vector<1024x256xbf16>
    %cst_69 = arith.constant dense<0.000000e+00> : vector<8x256xf32>
    %139 = tpu.matmul %137, %138, %cst_69 {dimension_numbers = #tpu.dot_dimension_numbers<[1], [0], [0], [1], [0, 0, 1, 1], [], []>} : vector<8x1024xbf16>, vector<1024x256xbf16>, vector<8x256xf32> -> vector<8x256xf32>
    %c0_70 = arith.constant 0 : index
    %c0_71 = arith.constant 0 : index
    %140 = vector.load %arg14[%c0_70, %c0_71] : memref<1x256xf32, #tpu.memory_space<vmem>>, vector<1x256xf32>
    %141 = vector.broadcast %140 : vector<1x256xf32> to vector<8x256xf32>
    %142 = arith.addf %139, %141 : vector<8x256xf32>
    %c0_72 = arith.constant 0 : index
    %c0_73 = arith.constant 0 : index
    %143 = vector.load %arg15[%c0_72, %c0_73] : memref<1x256xf32, #tpu.memory_space<vmem>>, vector<1x256xf32>
    %144 = vector.broadcast %143 : vector<1x256xf32> to vector<8x256xf32>
    %145 = arith.mulf %142, %144 : vector<8x256xf32>
    %146 = arith.addf %93, %145 : vector<8x256xf32>
    %c0_74 = arith.constant 0 : index
    %c0_75 = arith.constant 0 : index
    %c0_76 = arith.constant 0 : index
    %147 = vector.load %arg16[%c0_74, %c0_75, %c0_76] : memref<1x8x256xf32, #tpu.memory_space<vmem>>, vector<1x8x256xf32>
    %148 = vector.shape_cast %147 : vector<1x8x256xf32> to vector<8x256xf32>
    %149 = vector.shape_cast %146 : vector<8x256xf32> to vector<1x8x256xf32>
    tpu.vector_store %arg16[%c0_74, %c0_75, %c0_76], %149 {strides = array<i32>} : memref<1x8x256xf32, #tpu.memory_space<vmem>>, vector<1x8x256xf32>,
    return
  }
  func.func @transform_0(%arg0: i32) -> (i32, i32, i32) {
    %c0_i32 = arith.constant 0 : i32
    %c0_i32_0 = arith.constant 0 : i32
    %c0_i32_1 = arith.constant 0 : i32
    return %arg0, %c0_i32, %c0_i32_0 : i32, i32, i32
  }
  func.func @transform_1(%arg0: i32) -> (i32, i32) {
    %c0_i32 = arith.constant 0 : i32
    %c0_i32_0 = arith.constant 0 : i32
    %c0_i32_1 = arith.constant 0 : i32
    return %c0_i32, %c0_i32_0 : i32, i32
  }
  func.func @transform_2(%arg0: i32) -> (i32, i32) {
    %c0_i32 = arith.constant 0 : i32
    %c0_i32_0 = arith.constant 0 : i32
    %c0_i32_1 = arith.constant 0 : i32
    return %c0_i32, %c0_i32_0 : i32, i32
  }
  func.func @transform_3(%arg0: i32) -> (i32, i32) {
    %c0_i32 = arith.constant 0 : i32
    %c0_i32_0 = arith.constant 0 : i32
    %c0_i32_1 = arith.constant 0 : i32
    return %c0_i32, %c0_i32_0 : i32, i32
  }
  func.func @transform_4(%arg0: i32) -> (i32, i32) {
    %c0_i32 = arith.constant 0 : i32
    %c0_i32_0 = arith.constant 0 : i32
    %c0_i32_1 = arith.constant 0 : i32
    return %c0_i32, %c0_i32_0 : i32, i32
  }
  func.func @transform_5(%arg0: i32) -> (i32, i32) {
    %c0_i32 = arith.constant 0 : i32
    %c0_i32_0 = arith.constant 0 : i32
    %c0_i32_1 = arith.constant 0 : i32
    return %c0_i32, %c0_i32_0 : i32, i32
  }
  func.func @transform_6(%arg0: i32) -> (i32, i32) {
    %c0_i32 = arith.constant 0 : i32
    %c0_i32_0 = arith.constant 0 : i32
    %c0_i32_1 = arith.constant 0 : i32
    return %c0_i32, %c0_i32_0 : i32, i32
  }
  func.func @transform_7(%arg0: i32) -> (i32, i32) {
    %c0_i32 = arith.constant 0 : i32
    %c0_i32_0 = arith.constant 0 : i32
    %c0_i32_1 = arith.constant 0 : i32
    return %c0_i32, %c0_i32_0 : i32, i32
  }
  func.func @transform_8(%arg0: i32) -> (i32, i32) {
    %c0_i32 = arith.constant 0 : i32
    %c0_i32_0 = arith.constant 0 : i32
    %c0_i32_1 = arith.constant 0 : i32
    return %c0_i32, %c0_i32_0 : i32, i32
  }
  func.func @transform_9(%arg0: i32) -> (i32, i32) {
    %c0_i32 = arith.constant 0 : i32
    %c0_i32_0 = arith.constant 0 : i32
    %c0_i32_1 = arith.constant 0 : i32
    return %c0_i32, %c0_i32_0 : i32, i32
  }
  func.func @transform_10(%arg0: i32) -> (i32, i32) {
    %c0_i32 = arith.constant 0 : i32
    %c0_i32_0 = arith.constant 0 : i32
    %c0_i32_1 = arith.constant 0 : i32
    return %c0_i32, %c0_i32_0 : i32, i32
  }
  func.func @transform_11(%arg0: i32) -> (i32, i32) {
    %c0_i32 = arith.constant 0 : i32
    %c0_i32_0 = arith.constant 0 : i32
    %c0_i32_1 = arith.constant 0 : i32
    return %c0_i32, %c0_i32_0 : i32, i32
  }
  func.func @transform_12(%arg0: i32) -> (i32, i32) {
    %c0_i32 = arith.constant 0 : i32
    %c0_i32_0 = arith.constant 0 : i32
    %c0_i32_1 = arith.constant 0 : i32
    return %c0_i32, %c0_i32_0 : i32, i32
  }
  func.func @transform_13(%arg0: i32) -> (i32, i32) {
    %c0_i32 = arith.constant 0 : i32
    %c0_i32_0 = arith.constant 0 : i32
    %c0_i32_1 = arith.constant 0 : i32
    return %c0_i32, %c0_i32_0 : i32, i32
  }
  func.func @transform_14(%arg0: i32) -> (i32, i32) {
    %c0_i32 = arith.constant 0 : i32
    %c0_i32_0 = arith.constant 0 : i32
    %c0_i32_1 = arith.constant 0 : i32
    return %c0_i32, %c0_i32_0 : i32, i32
  }
  func.func @transform_15(%arg0: i32) -> (i32, i32, i32) {
    %c0_i32 = arith.constant 0 : i32
    %c0_i32_0 = arith.constant 0 : i32
    %c0_i32_1 = arith.constant 0 : i32
    return %arg0, %c0_i32, %c0_i32_0 : i32, i32, i32
  }
}

module attributes {stable_mosaic.version = 11 : i64} {
  func.func @_tail_kernel(%arg0: i32, %arg1: memref<1x8x256xf32, #tpu.memory_space<vmem>>, %arg2: memref<1x256xf32, #tpu.memory_space<vmem>>, %arg3: memref<1x256xf32, #tpu.memory_space<vmem>>, %arg4: memref<1x4x256xf32, #tpu.memory_space<vmem>>) attributes {dimension_semantics = [#tpu.dimension_semantics<parallel>], iteration_bounds = array<i64: 2>, scalar_prefetch = 0 : i64, scratch_operands = 0 : i64, tpu.core_type = #tpu.core_type<tc>, window_params = [{transform_indices = @transform_0, window_bounds = array<i64: 1, 8, 256>}, {pipeline_mode = #tpu.pipeline_mode<synchronous>, transform_indices = @transform_1, window_bounds = array<i64: 1, 256>}, {pipeline_mode = #tpu.pipeline_mode<synchronous>, transform_indices = @transform_2, window_bounds = array<i64: 1, 256>}, {transform_indices = @transform_3, window_bounds = array<i64: 1, 4, 256>}]} {
    %c0 = arith.constant 0 : index
    %c0_0 = arith.constant 0 : index
    %c0_1 = arith.constant 0 : index
    %0 = vector.load %arg1[%c0, %c0_0, %c0_1] : memref<1x8x256xf32, #tpu.memory_space<vmem>>, vector<1x4x256xf32>
    %1 = vector.shape_cast %0 : vector<1x4x256xf32> to vector<4x256xf32>
    %c0_2 = arith.constant 0 : index
    %c0_3 = arith.constant 0 : index
    %2 = vector.load %arg2[%c0_2, %c0_3] : memref<1x256xf32, #tpu.memory_space<vmem>>, vector<1x256xf32>
    %c0_4 = arith.constant 0 : index
    %c0_5 = arith.constant 0 : index
    %3 = vector.load %arg3[%c0_4, %c0_5] : memref<1x256xf32, #tpu.memory_space<vmem>>, vector<1x256xf32>
    %cst = arith.constant dense<0.000000e+00> : vector<4xf32>
    %4 = vector.multi_reduction <add>, %1, %cst [1] : vector<4x256xf32> to vector<4xf32>
    %5 = vector.shape_cast %4 : vector<4xf32> to vector<4x1xf32>
    %cst_6 = arith.constant 2.560000e+02 : f32
    %6 = vector.broadcast %cst_6 : f32 to vector<4x1xf32>
    %7 = arith.divf %5, %6 : vector<4x1xf32>
    %8 = arith.mulf %1, %1 : vector<4x256xf32>
    %cst_7 = arith.constant dense<0.000000e+00> : vector<4xf32>
    %9 = vector.multi_reduction <add>, %8, %cst_7 [1] : vector<4x256xf32> to vector<4xf32>
    %10 = vector.shape_cast %9 : vector<4xf32> to vector<4x1xf32>
    %cst_8 = arith.constant 2.560000e+02 : f32
    %11 = vector.broadcast %cst_8 : f32 to vector<4x1xf32>
    %12 = arith.divf %10, %11 : vector<4x1xf32>
    %13 = arith.mulf %7, %7 : vector<4x1xf32>
    %14 = arith.subf %12, %13 : vector<4x1xf32>
    %15 = vector.broadcast %7 : vector<4x1xf32> to vector<4x256xf32>
    %16 = arith.subf %1, %15 : vector<4x256xf32>
    %cst_9 = arith.constant 9.99999997E-7 : f32
    %17 = vector.broadcast %cst_9 : f32 to vector<4x1xf32>
    %18 = arith.addf %14, %17 : vector<4x1xf32>
    %19 = math.rsqrt %18 : vector<4x1xf32>
    %20 = vector.broadcast %19 : vector<4x1xf32> to vector<4x256xf32>
    %21 = arith.mulf %16, %20 : vector<4x256xf32>
    %22 = vector.broadcast %2 : vector<1x256xf32> to vector<4x256xf32>
    %23 = arith.mulf %21, %22 : vector<4x256xf32>
    %24 = vector.broadcast %3 : vector<1x256xf32> to vector<4x256xf32>
    %25 = arith.addf %23, %24 : vector<4x256xf32>
    %26 = arith.mulf %25, %25 : vector<4x256xf32>
    %cst_10 = arith.constant dense<0.000000e+00> : vector<4xf32>
    %27 = vector.multi_reduction <add>, %26, %cst_10 [1] : vector<4x256xf32> to vector<4xf32>
    %28 = vector.shape_cast %27 : vector<4xf32> to vector<4x1xf32>
    %29 = math.sqrt %28 : vector<4x1xf32>
    %cst_11 = arith.constant 9.99999996E-13 : f32
    %30 = vector.broadcast %cst_11 : f32 to vector<4x1xf32>
    %31 = arith.maximumf %29, %30 : vector<4x1xf32>
    %32 = vector.broadcast %31 : vector<4x1xf32> to vector<4x256xf32>
    %33 = arith.divf %25, %32 : vector<4x256xf32>
    %c0_12 = arith.constant 0 : index
    %c0_13 = arith.constant 0 : index
    %c0_14 = arith.constant 0 : index
    %34 = vector.load %arg4[%c0_12, %c0_13, %c0_14] : memref<1x4x256xf32, #tpu.memory_space<vmem>>, vector<1x4x256xf32>
    %35 = vector.shape_cast %34 : vector<1x4x256xf32> to vector<4x256xf32>
    %36 = vector.shape_cast %33 : vector<4x256xf32> to vector<1x4x256xf32>
    tpu.vector_store %arg4[%c0_12, %c0_13, %c0_14], %36 {strides = array<i32>} : memref<1x4x256xf32, #tpu.memory_space<vmem>>, vector<1x4x256xf32>,
    return
  }
  func.func @transform_0(%arg0: i32) -> (i32, i32, i32) {
    %c0_i32 = arith.constant 0 : i32
    %c0_i32_0 = arith.constant 0 : i32
    %c0_i32_1 = arith.constant 0 : i32
    return %arg0, %c0_i32, %c0_i32_0 : i32, i32, i32
  }
  func.func @transform_1(%arg0: i32) -> (i32, i32) {
    %c0_i32 = arith.constant 0 : i32
    %c0_i32_0 = arith.constant 0 : i32
    %c0_i32_1 = arith.constant 0 : i32
    return %c0_i32, %c0_i32_0 : i32, i32
  }
  func.func @transform_2(%arg0: i32) -> (i32, i32) {
    %c0_i32 = arith.constant 0 : i32
    %c0_i32_0 = arith.constant 0 : i32
    %c0_i32_1 = arith.constant 0 : i32
    return %c0_i32, %c0_i32_0 : i32, i32
  }
  func.func @transform_3(%arg0: i32) -> (i32, i32, i32) {
    %c0_i32 = arith.constant 0 : i32
    %c0_i32_0 = arith.constant 0 : i32
    %c0_i32_1 = arith.constant 0 : i32
    return %arg0, %c0_i32, %c0_i32_0 : i32, i32, i32
  }
}

</mosaic_0001>

<llo_original>
// kernel: dino_features_forward.4
$region0: #{dino_features_forward.4}
  #allocation0 [shape = 'u32[]', space=smem, size = 0x4, offset = 0x4, fixed_abs, tag = 'smem constant byte address 0x4 - core index']
  #allocation1 [shape = 'u32[72,128]{1,0:T(1,128)}', space=vmem, size = 0x9000, scoped, tag = 'internal scratch']
  %s0 = inlined_call_operand.vmem [shape: f32[2,4,640], index: 0, kind: input, shape index: {}]
  %s1 = inlined_call_operand.vmem [shape: bf16[640,256], index: 1, kind: input, shape index: {}]
  %s2 = inlined_call_operand.vmem [shape: f32[1,256], index: 2, kind: input, shape index: {}]
  %s3 = inlined_call_operand.vmem [shape: f32[4,256], index: 3, kind: input, shape index: {}]
  %s4 = inlined_call_operand.vmem [shape: f32[2,4,256], index: 4, kind: output, shape index: {}]
  %s5 = sld [smem:[#allocation0]]
  $region49: #{dino_features_forward.4} parent=0
    _
  %s7 = ssub.s32 1, %s5
  %s8 = scalar_select 0, %s7, %s5
  loop: start=0, step=1, limit=4
  $region2: #{dino_features_forward.4} parent=0 // loop_pre_header
    _
  $region3: #{dino_features_forward.4} parent=0 // loop_header
    %s10 = sphi 0, %s14
    %p11 = scmp.ge.s32.totalorder %s10, 4
    %s20 = sphi 0, %s22
    %s23 = sphi 0, %s20
    %s24 = sphi 0, %s23
    %s40 = sphi 0, %s24
    %s44 = sphi 0, %s44
    %s46 = sphi 0, %s44
    %s47 = sphi 0, %s46
    %s61 = sphi 0, %s47
    %s65 = sphi 0, %s65
    %s67 = sphi 0, %s65
    %s68 = sphi 0, %s67
    %s82 = sphi 0, %s68
    %s86 = sphi 0, %s86
    %s88 = sphi 0, %s86
    %s89 = sphi 0, %s88
    %s103 = sphi 0, %s89
    %s109 = sphi 0, %s111
    %s112 = sphi 0, %s109
    %s113 = sphi 0, %s112
    %s129 = sphi 0, %s113
  $region4: #{dino_features_forward.4} parent=0 // loop_header_branch
    %13 = sbr.rel (%p11) target = $region8
  $region5: #{dino_features_forward.4} parent=0 // loop_body
    %s15 = ssub.s32 %s10, 1
    %s16 = ssub.s32 %s10, 2
    %s17 = sadd.s32 %s10, 1
    %s18 = ssub.s32 %s10, %s17
    %p19 = scmp.eq.s32.totalorder %s18, 0
    %s21 = sadd.s32 %s20, 1
    %s22 = scalar_select %p19, %s20, %s21
    %p25 = pneg %p19
    %p26 = scmp.eq.s32.totalorder %s10, 1
    %p27 = por %p25, %p26
    %p28 = scmp.ne.s32.totalorder %s20, %s23
    %p29 = scmp.eq.s32.totalorder %s10, 0
    %p30 = por %p28, %p29
    %p31 = scmp.ne.s32.totalorder %s20, %s23
    %p32 = scmp.eq.s32.totalorder %s15, 1
    %p33 = por %p31, %p32
    %p34 = scmp.ne.s32.totalorder %s23, %s24
    %p35 = scmp.eq.s32.totalorder %s15, 0
    %p36 = por %p34, %p35
    %p37 = scmp.ne.s32.totalorder %s23, %s24
    %p38 = scmp.eq.s32.totalorder %s16, 1
    %p39 = por %p37, %p38
    %p41 = scmp.ne.s32.totalorder %s24, %s40
    %p42 = scmp.eq.s32.totalorder %s16, 0
    %p43 = por %p41, %p42
    %s45 = sadd.s32 %s44, 1
    %p48 = scmp.eq.s32.totalorder %s10, 1
    %p49 = scmp.ne.s32.totalorder %s44, %s46
    %p50 = scmp.eq.s32.totalorder %s10, 0
    %p51 = por %p49, %p50
    %p52 = scmp.ne.s32.totalorder %s44, %s46
    %p53 = scmp.eq.s32.totalorder %s15, 1
    %p54 = por %p52, %p53
    %p55 = scmp.ne.s32.totalorder %s46, %s47
    %p56 = scmp.eq.s32.totalorder %s15, 0
    %p57 = por %p55, %p56
    %p58 = scmp.ne.s32.totalorder %s46, %s47
    %p59 = scmp.eq.s32.totalorder %s16, 1
    %p60 = por %p58, %p59
    %p62 = scmp.ne.s32.totalorder %s47, %s61
    %p63 = scmp.eq.s32.totalorder %s16, 0
    %p64 = por %p62, %p63
    %s66 = sadd.s32 %s65, 1
    %p69 = scmp.eq.s32.totalorder %s10, 1
    %p70 = scmp.ne.s32.totalorder %s65, %s67
    %p71 = scmp.eq.s32.totalorder %s10, 0
    %p72 = por %p70, %p71
    %p73 = scmp.ne.s32.totalorder %s65, %s67
    %p74 = scmp.eq.s32.totalorder %s15, 1
    %p75 = por %p73, %p74
    %p76 = scmp.ne.s32.totalorder %s67, %s68
    %p77 = scmp.eq.s32.totalorder %s15, 0
    %p78 = por %p76, %p77
    %p79 = scmp.ne.s32.totalorder %s67, %s68
    %p80 = scmp.eq.s32.totalorder %s16, 1
    %p81 = por %p79, %p80
    %p83 = scmp.ne.s32.totalorder %s68, %s82
    %p84 = scmp.eq.s32.totalorder %s16, 0
    %p85 = por %p83, %p84
    %s87 = sadd.s32 %s86, 1
    %p90 = scmp.eq.s32.totalorder %s10, 1
    %p91 = scmp.ne.s32.totalorder %s86, %s88
    %p92 = scmp.eq.s32.totalorder %s10, 0
    %p93 = por %p91, %p92
    %p94 = scmp.ne.s32.totalorder %s86, %s88
    %p95 = scmp.eq.s32.totalorder %s15, 1
    %p96 = por %p94, %p95
    %p97 = scmp.ne.s32.totalorder %s88, %s89
    %p98 = scmp.eq.s32.totalorder %s15, 0
    %p99 = por %p97, %p98
    %p100 = scmp.ne.s32.totalorder %s88, %s89
    %p101 = scmp.eq.s32.totalorder %s16, 1
    %p102 = por %p100, %p101
    %p104 = scmp.ne.s32.totalorder %s89, %s103
    %p105 = scmp.eq.s32.totalorder %s16, 0
    %p106 = por %p104, %p105
    %s107 = ssub.s32 %s10, %s17
    %p108 = scmp.eq.s32.totalorder %s107, 0
    %s110 = sadd.s32 %s109, 1
    %s111 = scalar_select %p108, %s109, %s110
    %p114 = pneg %p108
    %p115 = scmp.eq.s32.totalorder %s10, 1
    %p116 = por %p114, %p115
    %p117 = scmp.ne.s32.totalorder %s109, %s112
    %p118 = scmp.eq.s32.totalorder %s10, 0
    %p119 = por %p117, %p118
    %p120 = scmp.ne.s32.totalorder %s109, %s112
    %p121 = scmp.eq.s32.totalorder %s15, 1
    %p122 = por %p120, %p121
    %p123 = scmp.ne.s32.totalorder %s112, %s113
    %p124 = scmp.eq.s32.totalorder %s15, 0
    %p125 = por %p123, %p124
    %p126 = scmp.ne.s32.totalorder %s112, %s113
    %p127 = scmp.eq.s32.totalorder %s16, 1
    %p128 = por %p126, %p127
    %p130 = scmp.ne.s32.totalorder %s113, %s129
    %p131 = scmp.eq.s32.totalorder %s16, 0
    %p132 = por %p130, %p131
    %p133 = scmp.le.s32.totalorder 1, %s10
    %p134 = scmp.lt.s32.totalorder %s10, 3
    %p135 = pnand %p133, %p134
    %p136 = pneg %p135
    // Predicated region
    $region9: #{dino_features_forward.4} parent=5 // pred_check
      _
    $region10: #{dino_features_forward.4} parent=5 // pred_check_branch
      %138 = sbr.rel (%p135) target = $region12
    $region11: #{dino_features_forward.4} parent=5 // pred_region
      %s139 = ssub.s32 %s10, 1
      // Predicated region
      $region13: #{dino_features_forward.4} parent=11 // pred_check
        %p140 = pneg %p57
      $region14: #{dino_features_forward.4} parent=11 // pred_check_branch
        %142 = sbr.rel (%p140) target = $region16
      $region15: #{dino_features_forward.4} parent=11 // pred_region
        _
      $region16: #{dino_features_forward.4} parent=11 // pred_fallthru
        _
      // Predicated region
      $region17: #{dino_features_forward.4} parent=11 // pred_check
        %p143 = pneg %p78
      $region18: #{dino_features_forward.4} parent=11 // pred_check_branch
        %145 = sbr.rel (%p143) target = $region20
      $region19: #{dino_features_forward.4} parent=11 // pred_region
        _
      $region20: #{dino_features_forward.4} parent=11 // pred_fallthru
        _
      // Predicated region
      $region21: #{dino_features_forward.4} parent=11 // pred_check
        %p146 = pneg %p99
      $region22: #{dino_features_forward.4} parent=11 // pred_check_branch
        %148 = sbr.rel (%p146) target = $region24
      $region23: #{dino_features_forward.4} parent=11 // pred_region
        _
      $region24: #{dino_features_forward.4} parent=11 // pred_fallthru
        _
    $region12: #{dino_features_forward.4} parent=5 // pred_fallthru
      _
    %p149 = scmp.lt.s32.totalorder %s10, 2
    // Predicated region
    $region25: #{dino_features_forward.4} parent=5 // pred_check
      %p150 = pneg %p149
    $region26: #{dino_features_forward.4} parent=5 // pred_check_branch
      %152 = sbr.rel (%p150) target = $region28
    $region27: #{dino_features_forward.4} parent=5 // pred_region
      // Predicated region
      $region29: #{dino_features_forward.4} parent=27 // pred_check
        %p153 = pneg %p30
      $region30: #{dino_features_forward.4} parent=27 // pred_check_branch
        %155 = sbr.rel (%p153) target = $region32
      $region31: #{dino_features_forward.4} parent=27 // pred_region
        %p156 = scmp.lt.s32.totalorder %s10, 1
        %s157 = scalar_select %p156, %s10, 1
        %s158 = smul.addr %s157, 5
        %s159 = smul.addr %s158, 4
        %s160 = scalar_lea.vmem %s0, %s159
      $region32: #{dino_features_forward.4} parent=27 // pred_fallthru
        _
    $region28: #{dino_features_forward.4} parent=5 // pred_fallthru
      _
    %p161 = scmp.le.s32.totalorder 1, %s10
    %p162 = scmp.lt.s32.totalorder %s10, 3
    %p163 = pnand %p161, %p162
    %p164 = pneg %p163
    // Predicated region
    $region33: #{dino_features_forward.4} parent=5 // pred_check
      _
    $region34: #{dino_features_forward.4} parent=5 // pred_check_branch
      %166 = sbr.rel (%p163) target = $region36
    $region35: #{dino_features_forward.4} parent=5 // pred_region
      %s167 = ssub.s32 %s10, 1
      %p168 = scmp.lt.s32.totalorder %s15, 1
      %s169 = scalar_select %p168, %s15, 1
      %s170 = smul.addr %s169, 5
      %s171 = smul.addr %s170, 4
      %s172 = scalar_lea.vmem %s0, %s171
      %p173 = pneg %p36
      %p174 = pneg %p33
      %p175 = pneg %p57
      %p176 = pneg %p54
      %p177 = pneg %p78
      %p178 = pneg %p75
      %p179 = pneg %p99
      %p180 = pneg %p96
      %p181 = pneg %p125
      %p182 = pneg %p122
      %p183 = scmp.lt.s32.totalorder %s15, 1
      %s184 = scalar_select %p183, %s15, 1
      %s185 = smul.addr %s184, 2
      %s186 = smul.addr %s185, 4
      %s187 = scalar_lea.vmem %s4, %s186
      %p188 = scmp.lt.s32.totalorder %s15, 1
      %s189 = scalar_select %p188, %s15, 1
      %s190 = smul.addr %s189, 5
      %s191 = smul.addr %s190, 4
      %s192 = scalar_lea.vmem %s0, %s191
      %p193 = scmp.lt.s32.totalorder %s15, 1
      %s194 = scalar_select %p193, %s15, 1
      %s195 = smul.addr %s194, 2
      %s196 = smul.addr %s195, 4
      %s197 = scalar_lea.vmem %s4, %s196
      %v198 = vld [vmem:[%s192] sm:$0xff]
      %v199 = vld [vmem:[%s192 + $0x8] sm:$0xff]
      %v200 = vld [vmem:[%s192 + $0x10] sm:$0xf]
      %204 = vst [vmem:[#allocation1] ss:$2 sm:$0xff] %v198
      %s205 = scalar_lea.vmem [#allocation1], 16
      %206 = vst [vmem:[%s205] ss:$2 sm:$0xff] %v199
      %s207 = scalar_lea.vmem [#allocation1], 32
      %208 = vst [vmem:[%s207] ss:$2 sm:$0xff] %v200
      %v209 = vld.sshfl [vmem:[#allocation1] sm:$0xff pattern:$0x75316420]
      %v210 = vld.sshfl [vmem:[#allocation1 + $0x8] sm:$0xff pattern:$0x75316420]
      %v211 = vld.sshfl [vmem:[#allocation1 + $0x10] sm:$0xff pattern:$0x75316420]
      %v212 = vld.sshfl [vmem:[#allocation1 + $0x18] sm:$0xff pattern:$0x75316420]
      %v213 = vld.sshfl [vmem:[#allocation1 + $0x20] sm:$0xff pattern:$0x75316420]
      %v219 = vpack.c.bf16 %v209, %v209
      %v220 = vpack.c.bf16 %v210, %v210
      %v221 = vpack.c.bf16 %v211, %v211
      %v222 = vpack.c.bf16 %v212, %v212
      %v223 = vpack.c.bf16 %v213, %v213
      %v224 = vld [vmem:[%s1] sm:$0xff]
      %v225 = vld [vmem:[%s1 + $0x8] sm:$0xff]
      %v226 = vld [vmem:[%s1 + $0x10] sm:$0xff]
      %v227 = vld [vmem:[%s1 + $0x18] sm:$0xff]
      %v228 = vld [vmem:[%s1 + $0x20] sm:$0xff]
      %v229 = vld [vmem:[%s1 + $0x28] sm:$0xff]
      %v230 = vld [vmem:[%s1 + $0x30] sm:$0xff]
      %v231 = vld [vmem:[%s1 + $0x38] sm:$0xff]
      %v232 = vld [vmem:[%s1 + $0x40] sm:$0xff]
      %v233 = vld [vmem:[%s1 + $0x48] sm:$0xff]
      %v234 = vld [vmem:[%s1 + $0x50] sm:$0xff]
      %v235 = vld [vmem:[%s1 + $0x58] sm:$0xff]
      %v236 = vld [vmem:[%s1 + $0x60] sm:$0xff]
      %v237 = vld [vmem:[%s1 + $0x68] sm:$0xff]
      %v238 = vld [vmem:[%s1 + $0x70] sm:$0xff]
      %v239 = vld [vmem:[%s1 + $0x78] sm:$0xff]
      %v240 = vld [vmem:[%s1 + $0x80] sm:$0xff]
      %v241 = vld [vmem:[%s1 + $0x88] sm:$0xff]
      %v242 = vld [vmem:[%s1 + $0x90] sm:$0xff]
      %v243 = vld [vmem:[%s1 + $0x98] sm:$0xff]
      %v244 = vld [vmem:[%s1 + $0xa0] sm:$0xff]
      %v245 = vld [vmem:[%s1 + $0xa8] sm:$0xff]
      %v246 = vld [vmem:[%s1 + $0xb0] sm:$0xff]
      %v247 = vld [vmem:[%s1 + $0xb8] sm:$0xff]
      %v248 = vld [vmem:[%s1 + $0xc0] sm:$0xff]
      %v249 = vld [vmem:[%s1 + $0xc8] sm:$0xff]
      %v250 = vld [vmem:[%s1 + $0xd0] sm:$0xff]
      %v251 = vld [vmem:[%s1 + $0xd8] sm:$0xff]
      %v252 = vld [vmem:[%s1 + $0xe0] sm:$0xff]
      %v253 = vld [vmem:[%s1 + $0xe8] sm:$0xff]
      %v254 = vld [vmem:[%s1 + $0xf0] sm:$0xff]
      %v255 = vld [vmem:[%s1 + $0xf8] sm:$0xff]
      %v256 = vld [vmem:[%s1 + $0x100] sm:$0xff]
      %v257 = vld [vmem:[%s1 + $0x108] sm:$0xff]
      %v258 = vld [vmem:[%s1 + $0x110] sm:$0xff]
      %v259 = vld [vmem:[%s1 + $0x118] sm:$0xff]
      %v260 = vld [vmem:[%s1 + $0x120] sm:$0xff]
      %v261 = vld [vmem:[%s1 + $0x128] sm:$0xff]
      %v262 = vld [vmem:[%s1 + $0x130] sm:$0xff]
      %v263 = vld [vmem:[%s1 + $0x138] sm:$0xff]
      %v264 = vld [vmem:[%s1 + $0x140] sm:$0xff]
      %v265 = vld [vmem:[%s1 + $0x148] sm:$0xff]
      %v266 = vld [vmem:[%s1 + $0x150] sm:$0xff]
      %v267 = vld [vmem:[%s1 + $0x158] sm:$0xff]
      %v268 = vld [vmem:[%s1 + $0x160] sm:$0xff]
      %v269 = vld [vmem:[%s1 + $0x168] sm:$0xff]
      %v270 = vld [vmem:[%s1 + $0x170] sm:$0xff]
      %v271 = vld [vmem:[%s1 + $0x178] sm:$0xff]
      %v272 = vld [vmem:[%s1 + $0x180] sm:$0xff]
      %v273 = vld [vmem:[%s1 + $0x188] sm:$0xff]
      %v274 = vld [vmem:[%s1 + $0x190] sm:$0xff]
      %v275 = vld [vmem:[%s1 + $0x198] sm:$0xff]
      %v276 = vld [vmem:[%s1 + $0x1a0] sm:$0xff]
      %v277 = vld [vmem:[%s1 + $0x1a8] sm:$0xff]
      %v278 = vld [vmem:[%s1 + $0x1b0] sm:$0xff]
      %v279 = vld [vmem:[%s1 + $0x1b8] sm:$0xff]
      %v280 = vld [vmem:[%s1 + $0x1c0] sm:$0xff]
      %v281 = vld [vmem:[%s1 + $0x1c8] sm:$0xff]
      %v282 = vld [vmem:[%s1 + $0x1d0] sm:$0xff]
      %v283 = vld [vmem:[%s1 + $0x1d8] sm:$0xff]
      %v284 = vld [vmem:[%s1 + $0x1e0] sm:$0xff]
      %v285 = vld [vmem:[%s1 + $0x1e8] sm:$0xff]
      %v286 = vld [vmem:[%s1 + $0x1f0] sm:$0xff]
      %v287 = vld [vmem:[%s1 + $0x1f8] sm:$0xff]
      %v288 = vld [vmem:[%s1 + $0x200] sm:$0xff]
      %v289 = vld [vmem:[%s1 + $0x208] sm:$0xff]
      %v290 = vld [vmem:[%s1 + $0x210] sm:$0xff]
      %v291 = vld [vmem:[%s1 + $0x218] sm:$0xff]
      %v292 = vld [vmem:[%s1 + $0x220] sm:$0xff]
      %v293 = vld [vmem:[%s1 + $0x228] sm:$0xff]
      %v294 = vld [vmem:[%s1 + $0x230] sm:$0xff]
      %v295 = vld [vmem:[%s1 + $0x238] sm:$0xff]
      %v296 = vld [vmem:[%s1 + $0x240] sm:$0xff]
      %v297 = vld [vmem:[%s1 + $0x248] sm:$0xff]
      %v298 = vld [vmem:[%s1 + $0x250] sm:$0xff]
      %v299 = vld [vmem:[%s1 + $0x258] sm:$0xff]
      %v300 = vld [vmem:[%s1 + $0x260] sm:$0xff]
      %v301 = vld [vmem:[%s1 + $0x268] sm:$0xff]
      %v302 = vld [vmem:[%s1 + $0x270] sm:$0xff]
      %v303 = vld [vmem:[%s1 + $0x278] sm:$0xff]
      %v304 = vld [vmem:[%s2] sm:$0x3]
      %v306 = vperm.slane %v304, 0
      %v307 = vperm.slane %v304, 1
      %v390 = vunpack.c.l.b16 %v224
      %v391 = vunpack.c.h.b16 %v224
      %v392 = vunpack.c.l.b16 %v225
      %v393 = vunpack.c.h.b16 %v225
      %v394 = vunpack.c.l.b16 %v226
      %v395 = vunpack.c.h.b16 %v226
      %v396 = vunpack.c.l.b16 %v227
      %v397 = vunpack.c.h.b16 %v227
      %v398 = vunpack.c.l.b16 %v228
      %v399 = vunpack.c.h.b16 %v228
      %v400 = vunpack.c.l.b16 %v229
      %v401 = vunpack.c.h.b16 %v229
      %v402 = vunpack.c.l.b16 %v230
      %v403 = vunpack.c.h.b16 %v230
      %v404 = vunpack.c.l.b16 %v231
      %v405 = vunpack.c.h.b16 %v231
      %v406 = vunpack.c.l.b16 %v232
      %v407 = vunpack.c.h.b16 %v232
      %v408 = vunpack.c.l.b16 %v233
      %v409 = vunpack.c.h.b16 %v233
      %v410 = vunpack.c.l.b16 %v234
      %v411 = vunpack.c.h.b16 %v234
      %v412 = vunpack.c.l.b16 %v235
      %v413 = vunpack.c.h.b16 %v235
      %v414 = vunpack.c.l.b16 %v236
      %v415 = vunpack.c.h.b16 %v236
      %v416 = vunpack.c.l.b16 %v237
      %v417 = vunpack.c.h.b16 %v237
      %v418 = vunpack.c.l.b16 %v238
      %v419 = vunpack.c.h.b16 %v238
      %v420 = vunpack.c.l.b16 %v239
      %v421 = vunpack.c.h.b16 %v239
      %v422 = vunpack.c.l.b16 %v240
      %v423 = vunpack.c.h.b16 %v240
      %v424 = vunpack.c.l.b16 %v241
      %v425 = vunpack.c.h.b16 %v241
      %v426 = vunpack.c.l.b16 %v242
      %v427 = vunpack.c.h.b16 %v242
      %v428 = vunpack.c.l.b16 %v243
      %v429 = vunpack.c.h.b16 %v243
      %v430 = vunpack.c.l.b16 %v244
      %v431 = vunpack.c.h.b16 %v244
      %v432 = vunpack.c.l.b16 %v245
      %v433 = vunpack.c.h.b16 %v245
      %v434 = vunpack.c.l.b16 %v246
      %v435 = vunpack.c.h.b16 %v246
      %v436 = vunpack.c.l.b16 %v247
      %v437 = vunpack.c.h.b16 %v247
      %v438 = vunpack.c.l.b16 %v248
      %v439 = vunpack.c.h.b16 %v248
      %v440 = vunpack.c.l.b16 %v249
      %v441 = vunpack.c.h.b16 %v249
      %v442 = vunpack.c.l.b16 %v250
      %v443 = vunpack.c.h.b16 %v250
      %v444 = vunpack.c.l.b16 %v251
      %v445 = vunpack.c.h.b16 %v251
      %v446 = vunpack.c.l.b16 %v252
      %v447 = vunpack.c.h.b16 %v252
      %v448 = vunpack.c.l.b16 %v253
      %v449 = vunpack.c.h.b16 %v253
      %v450 = vunpack.c.l.b16 %v254
      %v451 = vunpack.c.h.b16 %v254
      %v452 = vunpack.c.l.b16 %v255
      %v453 = vunpack.c.h.b16 %v255
      %v454 = vunpack.c.l.b16 %v256
      %v455 = vunpack.c.h.b16 %v256
      %v456 = vunpack.c.l.b16 %v257
      %v457 = vunpack.c.h.b16 %v257
      %v458 = vunpack.c.l.b16 %v258
      %v459 = vunpack.c.h.b16 %v258
      %v460 = vunpack.c.l.b16 %v259
      %v461 = vunpack.c.h.b16 %v259
      %v462 = vunpack.c.l.b16 %v260
      %v463 = vunpack.c.h.b16 %v260
      %v464 = vunpack.c.l.b16 %v261
      %v465 = vunpack.c.h.b16 %v261
      %v466 = vunpack.c.l.b16 %v262
      %v467 = vunpack.c.h.b16 %v262
      %v468 = vunpack.c.l.b16 %v263
      %v469 = vunpack.c.h.b16 %v263
      %v470 = vunpack.c.l.b16 %v264
      %v471 = vunpack.c.h.b16 %v264
      %v472 = vunpack.c.l.b16 %v265
      %v473 = vunpack.c.h.b16 %v265
      %v474 = vunpack.c.l.b16 %v266
      %v475 = vunpack.c.h.b16 %v266
      %v476 = vunpack.c.l.b16 %v267
      %v477 = vunpack.c.h.b16 %v267
      %v478 = vunpack.c.l.b16 %v268
      %v479 = vunpack.c.h.b16 %v268
      %v480 = vunpack.c.l.b16 %v269
      %v481 = vunpack.c.h.b16 %v269
      %v482 = vunpack.c.l.b16 %v270
      %v483 = vunpack.c.h.b16 %v270
      %v484 = vunpack.c.l.b16 %v271
      %v485 = vunpack.c.h.b16 %v271
      %v486 = vunpack.c.l.b16 %v272
      %v487 = vunpack.c.h.b16 %v272
      %v488 = vunpack.c.l.b16 %v273
      %v489 = vunpack.c.h.b16 %v273
      %v490 = vunpack.c.l.b16 %v274
      %v491 = vunpack.c.h.b16 %v274
      %v492 = vunpack.c.l.b16 %v275
      %v493 = vunpack.c.h.b16 %v275
      %v494 = vunpack.c.l.b16 %v276
      %v495 = vunpack.c.h.b16 %v276
      %v496 = vunpack.c.l.b16 %v277
      %v497 = vunpack.c.h.b16 %v277
      %v498 = vunpack.c.l.b16 %v278
      %v499 = vunpack.c.h.b16 %v278
      %v500 = vunpack.c.l.b16 %v279
      %v501 = vunpack.c.h.b16 %v279
      %v502 = vunpack.c.l.b16 %v280
      %v503 = vunpack.c.h.b16 %v280
      %v504 = vunpack.c.l.b16 %v281
      %v505 = vunpack.c.h.b16 %v281
      %v506 = vunpack.c.l.b16 %v282
      %v507 = vunpack.c.h.b16 %v282
      %v508 = vunpack.c.l.b16 %v283
      %v509 = vunpack.c.h.b16 %v283
      %v510 = vunpack.c.l.b16 %v284
      %v511 = vunpack.c.h.b16 %v284
      %v512 = vunpack.c.l.b16 %v285
      %v513 = vunpack.c.h.b16 %v285
      %v514 = vunpack.c.l.b16 %v286
      %v515 = vunpack.c.h.b16 %v286
      %v516 = vunpack.c.l.b16 %v287
      %v517 = vunpack.c.h.b16 %v287
      %v518 = vunpack.c.l.b16 %v288
      %v519 = vunpack.c.h.b16 %v288
      %v520 = vunpack.c.l.b16 %v289
      %v521 = vunpack.c.h.b16 %v289
      %v522 = vunpack.c.l.b16 %v290
      %v523 = vunpack.c.h.b16 %v290
      %v524 = vunpack.c.l.b16 %v291
      %v525 = vunpack.c.h.b16 %v291
      %v526 = vunpack.c.l.b16 %v292
      %v527 = vunpack.c.h.b16 %v292
      %v528 = vunpack.c.l.b16 %v293
      %v529 = vunpack.c.h.b16 %v293
      %v530 = vunpack.c.l.b16 %v294
      %v531 = vunpack.c.h.b16 %v294
      %v532 = vunpack.c.l.b16 %v295
      %v533 = vunpack.c.h.b16 %v295
      %v534 = vunpack.c.l.b16 %v296
      %v535 = vunpack.c.h.b16 %v296
      %v536 = vunpack.c.l.b16 %v297
      %v537 = vunpack.c.h.b16 %v297
      %v538 = vunpack.c.l.b16 %v298
      %v539 = vunpack.c.h.b16 %v298
      %v540 = vunpack.c.l.b16 %v299
      %v541 = vunpack.c.h.b16 %v299
      %v542 = vunpack.c.l.b16 %v300
      %v543 = vunpack.c.h.b16 %v300
      %v544 = vunpack.c.l.b16 %v301
      %v545 = vunpack.c.h.b16 %v301
      %v546 = vunpack.c.l.b16 %v302
      %v547 = vunpack.c.h.b16 %v302
      %v548 = vunpack.c.l.b16 %v303
      %v549 = vunpack.c.h.b16 %v303
      %v550 = vpack.c.b16 %v392, %v390
      %v551 = vpack.c.b16 %v393, %v391
      %v552 = vpack.c.b16 %v396, %v394
      %v553 = vpack.c.b16 %v397, %v395
      %v554 = vpack.c.b16 %v400, %v398
      %v555 = vpack.c.b16 %v401, %v399
      %v556 = vpack.c.b16 %v404, %v402
      %v557 = vpack.c.b16 %v405, %v403
      %v558 = vpack.c.b16 %v408, %v406
      %v559 = vpack.c.b16 %v409, %v407
      %v560 = vpack.c.b16 %v412, %v410
      %v561 = vpack.c.b16 %v413, %v411
      %v562 = vpack.c.b16 %v416, %v414
      %v563 = vpack.c.b16 %v417, %v415
      %v564 = vpack.c.b16 %v420, %v418
      %v565 = vpack.c.b16 %v421, %v419
      %v566 = vpack.c.b16 %v424, %v422
      %v567 = vpack.c.b16 %v425, %v423
      %v568 = vpack.c.b16 %v428, %v426
      %v569 = vpack.c.b16 %v429, %v427
      %v570 = vpack.c.b16 %v432, %v430
      %v571 = vpack.c.b16 %v433, %v431
      %v572 = vpack.c.b16 %v436, %v434
      %v573 = vpack.c.b16 %v437, %v435
      %v574 = vpack.c.b16 %v440, %v438
      %v575 = vpack.c.b16 %v441, %v439
      %v576 = vpack.c.b16 %v444, %v442
      %v577 = vpack.c.b16 %v445, %v443
      %v578 = vpack.c.b16 %v448, %v446
      %v579 = vpack.c.b16 %v449, %v447
      %v580 = vpack.c.b16 %v452, %v450
      %v581 = vpack.c.b16 %v453, %v451
      %v582 = vpack.c.b16 %v456, %v454
      %v583 = vpack.c.b16 %v457, %v455
      %v584 = vpack.c.b16 %v460, %v458
      %v585 = vpack.c.b16 %v461, %v459
      %v586 = vpack.c.b16 %v464, %v462
      %v587 = vpack.c.b16 %v465, %v463
      %v588 = vpack.c.b16 %v468, %v466
      %v589 = vpack.c.b16 %v469, %v467
      %v590 = vpack.c.b16 %v472, %v470
      %v591 = vpack.c.b16 %v473, %v471
      %v592 = vpack.c.b16 %v476, %v474
      %v593 = vpack.c.b16 %v477, %v475
      %v594 = vpack.c.b16 %v480, %v478
      %v595 = vpack.c.b16 %v481, %v479
      %v596 = vpack.c.b16 %v484, %v482
      %v597 = vpack.c.b16 %v485, %v483
      %v598 = vpack.c.b16 %v488, %v486
      %v599 = vpack.c.b16 %v489, %v487
      %v600 = vpack.c.b16 %v492, %v490
      %v601 = vpack.c.b16 %v493, %v491
      %v602 = vpack.c.b16 %v496, %v494
      %v603 = vpack.c.b16 %v497, %v495
      %v604 = vpack.c.b16 %v500, %v498
      %v605 = vpack.c.b16 %v501, %v499
      %v606 = vpack.c.b16 %v504, %v502
      %v607 = vpack.c.b16 %v505, %v503
      %v608 = vpack.c.b16 %v508, %v506
      %v609 = vpack.c.b16 %v509, %v507
      %v610 = vpack.c.b16 %v512, %v510
      %v611 = vpack.c.b16 %v513, %v511
      %v612 = vpack.c.b16 %v516, %v514
      %v613 = vpack.c.b16 %v517, %v515
      %v614 = vpack.c.b16 %v520, %v518
      %v615 = vpack.c.b16 %v521, %v519
      %v616 = vpack.c.b16 %v524, %v522
      %v617 = vpack.c.b16 %v525, %v523
      %v618 = vpack.c.b16 %v528, %v526
      %v619 = vpack.c.b16 %v529, %v527
      %v620 = vpack.c.b16 %v532, %v530
      %v621 = vpack.c.b16 %v533, %v531
      %v622 = vpack.c.b16 %v536, %v534
      %v623 = vpack.c.b16 %v537, %v535
      %v624 = vpack.c.b16 %v540, %v538
      %v625 = vpack.c.b16 %v541, %v539
      %v626 = vpack.c.b16 %v544, %v542
      %v627 = vpack.c.b16 %v545, %v543
      %v628 = vpack.c.b16 %v548, %v546
      %v629 = vpack.c.b16 %v549, %v547
      %710 = vmatpush.bf16.msra.mxu0 %v564
      %711 = vmatpush.bf16.msra.mxu0 %v562
      %712 = vmatpush.bf16.msra.mxu0 %v560
      %713 = vmatpush.bf16.msra.mxu0 %v558
      %714 = vmatpush.bf16.msra.mxu0 %v556
      %715 = vmatpush.bf16.msra.mxu0 %v554
      %716 = vmatpush.bf16.msra.mxu0 %v552
      %717 = vmatpush.bf16.msra.mxu0 %v550
      %718 = vmatmul.bf16.gmra.mxu0 %v219
      %v719 = vpop.f32.mrf.mxu0
      %v720 = vadd.f32 %v306, %v719
      %v721 = vpop.f32.mrf.mxu0
      %722 = vdwg.mxu0
      %723 = vmatpush.bf16.msra.mxu0 %v580
      %724 = vmatpush.bf16.msra.mxu0 %v578
      %725 = vmatpush.bf16.msra.mxu0 %v576
      %726 = vmatpush.bf16.msra.mxu0 %v574
      %727 = vmatpush.bf16.msra.mxu0 %v572
      %728 = vmatpush.bf16.msra.mxu0 %v570
      %729 = vmatpush.bf16.msra.mxu0 %v568
      %730 = vmatpush.bf16.msra.mxu0 %v566
      %731 = vmatmul.bf16.gmra.mxu0 %v220
      %v732 = vpop.f32.mrf.mxu0
      %v733 = vadd.f32 %v720, %v732
      %v734 = vpop.f32.mrf.mxu0
      %735 = vdwg.mxu0
      %736 = vmatpush.bf16.msra.mxu0 %v596
      %737 = vmatpush.bf16.msra.mxu0 %v594
      %738 = vmatpush.bf16.msra.mxu0 %v592
      %739 = vmatpush.bf16.msra.mxu0 %v590
      %740 = vmatpush.bf16.msra.mxu0 %v588
      %741 = vmatpush.bf16.msra.mxu0 %v586
      %742 = vmatpush.bf16.msra.mxu0 %v584
      %743 = vmatpush.bf16.msra.mxu0 %v582
      %744 = vmatmul.bf16.gmra.mxu0 %v221
      %v745 = vpop.f32.mrf.mxu0
      %v746 = vadd.f32 %v733, %v745
      %v747 = vpop.f32.mrf.mxu0
      %748 = vdwg.mxu0
      %749 = vmatpush.bf16.msra.mxu0 %v612
      %750 = vmatpush.bf16.msra.mxu0 %v610
      %751 = vmatpush.bf16.msra.mxu0 %v608
      %752 = vmatpush.bf16.msra.mxu0 %v606
      %753 = vmatpush.bf16.msra.mxu0 %v604
      %754 = vmatpush.bf16.msra.mxu0 %v602
      %755 = vmatpush.bf16.msra.mxu0 %v600
      %756 = vmatpush.bf16.msra.mxu0 %v598
      %757 = vmatmul.bf16.gmra.mxu0 %v222
      %v758 = vpop.f32.mrf.mxu0
      %v759 = vadd.f32 %v746, %v758
      %v760 = vpop.f32.mrf.mxu0
      %761 = vdwg.mxu0
      %762 = vmatpush.bf16.msra.mxu0 %v628
      %763 = vmatpush.bf16.msra.mxu0 %v626
      %764 = vmatpush.bf16.msra.mxu0 %v624
      %765 = vmatpush.bf16.msra.mxu0 %v622
      %766 = vmatpush.bf16.msra.mxu0 %v620
      %767 = vmatpush.bf16.msra.mxu0 %v618
      %768 = vmatpush.bf16.msra.mxu0 %v616
      %769 = vmatpush.bf16.msra.mxu0 %v614
      %770 = vmatmul.bf16.gmra.mxu0 %v223
      %v771 = vpop.f32.mrf.mxu0
      %v772 = vadd.f32 %v759, %v771
      %v773 = vpop.f32.mrf.mxu0
      %774 = vdwg.mxu0
      %775 = vmatpush.bf16.msra.mxu0 %v565
      %776 = vmatpush.bf16.msra.mxu0 %v563
      %777 = vmatpush.bf16.msra.mxu0 %v561
      %778 = vmatpush.bf16.msra.mxu0 %v559
      %779 = vmatpush.bf16.msra.mxu0 %v557
      %780 = vmatpush.bf16.msra.mxu0 %v555
      %781 = vmatpush.bf16.msra.mxu0 %v553
      %782 = vmatpush.bf16.msra.mxu0 %v551
      %783 = vmatmul.bf16.gmra.mxu0 %v219
      %v784 = vpop.f32.mrf.mxu0
      %v785 = vadd.f32 %v307, %v784
      %v786 = vpop.f32.mrf.mxu0
      %787 = vdwg.mxu0
      %788 = vmatpush.bf16.msra.mxu0 %v581
      %789 = vmatpush.bf16.msra.mxu0 %v579
      %790 = vmatpush.bf16.msra.mxu0 %v577
      %791 = vmatpush.bf16.msra.mxu0 %v575
      %792 = vmatpush.bf16.msra.mxu0 %v573
      %793 = vmatpush.bf16.msra.mxu0 %v571
      %794 = vmatpush.bf16.msra.mxu0 %v569
      %795 = vmatpush.bf16.msra.mxu0 %v567
      %796 = vmatmul.bf16.gmra.mxu0 %v220
      %v797 = vpop.f32.mrf.mxu0
      %v798 = vadd.f32 %v785, %v797
      %v799 = vpop.f32.mrf.mxu0
      %800 = vdwg.mxu0
      %801 = vmatpush.bf16.msra.mxu0 %v597
      %802 = vmatpush.bf16.msra.mxu0 %v595
      %803 = vmatpush.bf16.msra.mxu0 %v593
      %804 = vmatpush.bf16.msra.mxu0 %v591
      %805 = vmatpush.bf16.msra.mxu0 %v589
      %806 = vmatpush.bf16.msra.mxu0 %v587
      %807 = vmatpush.bf16.msra.mxu0 %v585
      %808 = vmatpush.bf16.msra.mxu0 %v583
      %809 = vmatmul.bf16.gmra.mxu0 %v221
      %v810 = vpop.f32.mrf.mxu0
      %v811 = vadd.f32 %v798, %v810
      %v812 = vpop.f32.mrf.mxu0
      %813 = vdwg.mxu0
      %814 = vmatpush.bf16.msra.mxu0 %v613
      %815 = vmatpush.bf16.msra.mxu0 %v611
      %816 = vmatpush.bf16.msra.mxu0 %v609
      %817 = vmatpush.bf16.msra.mxu0 %v607
      %818 = vmatpush.bf16.msra.mxu0 %v605
      %819 = vmatpush.bf16.msra.mxu0 %v603
      %820 = vmatpush.bf16.msra.mxu0 %v601
      %821 = vmatpush.bf16.msra.mxu0 %v599
      %822 = vmatmul.bf16.gmra.mxu0 %v222
      %v823 = vpop.f32.mrf.mxu0
      %v824 = vadd.f32 %v811, %v823
      %v825 = vpop.f32.mrf.mxu0
      %826 = vdwg.mxu0
      %827 = vmatpush.bf16.msra.mxu0 %v629
      %828 = vmatpush.bf16.msra.mxu0 %v627
      %829 = vmatpush.bf16.msra.mxu0 %v625
      %830 = vmatpush.bf16.msra.mxu0 %v623
      %831 = vmatpush.bf16.msra.mxu0 %v621
      %832 = vmatpush.bf16.msra.mxu0 %v619
      %833 = vmatpush.bf16.msra.mxu0 %v617
      %834 = vmatpush.bf16.msra.mxu0 %v615
      %835 = vmatmul.bf16.gmra.mxu0 %v223
      %v836 = vpop.f32.mrf.mxu0
      %v837 = vadd.f32 %v824, %v836
      %v838 = vpop.f32.mrf.mxu0
      %839 = vdwg.mxu0
      %v840 = vld [vmem:[%s3] sm:$0xff]
      %842 = vst [vmem:[#allocation1] ss:$2 sm:$0xff] %v840
      %v843 = vld.sshfl [vmem:[#allocation1] sm:$0xff pattern:$0x75316420]
      %v844 = vld.sshfl [vmem:[#allocation1 + $0x8] sm:$0xff pattern:$0x75316420]
      %v847 = vadd.f32 %v772, %v843
      %v848 = vadd.f32 %v837, %v844
      %v851 = vrot.slane %v848, 4
      %vm852 = vcmask 1043456
      %v853 = vsel %vm852, %v847, %v851
      %855 = vst [vmem:[%s197] sm:$0xff] %v853
      %p856 = scmp.lt.s32.totalorder %s15, 1
      %s857 = scalar_select %p856, %s15, 1
      %s858 = smul.addr %s857, 2
      %s859 = smul.addr %s858, 4
      %s860 = scalar_lea.vmem %s4, %s859
      // Predicated region
      $region37: #{dino_features_forward.4} parent=35 // pred_check
        %p861 = pneg %p122
      $region38: #{dino_features_forward.4} parent=35 // pred_check_branch
        %863 = sbr.rel (%p861) target = $region40
      $region39: #{dino_features_forward.4} parent=35 // pred_region
        _
      $region40: #{dino_features_forward.4} parent=35 // pred_fallthru
        _
    $region36: #{dino_features_forward.4} parent=5 // pred_fallthru
      _
    %p864 = scmp.le.s32.totalorder 2, %s10
    // Predicated region
    $region41: #{dino_features_forward.4} parent=5 // pred_check
      %p865 = pneg %p864
    $region42: #{dino_features_forward.4} parent=5 // pred_check_branch
      %867 = sbr.rel (%p865) target = $region44
    $region43: #{dino_features_forward.4} parent=5 // pred_region
      %s868 = ssub.s32 %s10, 2
      // Predicated region
      $region45: #{dino_features_forward.4} parent=43 // pred_check
        %p869 = pneg %p128
      $region46: #{dino_features_forward.4} parent=43 // pred_check_branch
        %871 = sbr.rel (%p869) target = $region48
      $region47: #{dino_features_forward.4} parent=43 // pred_region
        %p872 = scmp.lt.s32.totalorder %s16, 1
        %s873 = scalar_select %p872, %s16, 1
        %s874 = smul.addr %s873, 2
        %s875 = smul.addr %s874, 4
        %s876 = scalar_lea.vmem %s4, %s875
      $region48: #{dino_features_forward.4} parent=43 // pred_fallthru
        _
    $region44: #{dino_features_forward.4} parent=5 // pred_fallthru
      _
  $region6: #{dino_features_forward.4} parent=0 // loop_footer
    %s14 = sadd.s32 1, %s10
  $region7: #{dino_features_forward.4} parent=0 // loop_footer_branch
    %9 = sbr.rel target = $region3
  $region8: #{dino_features_forward.4} parent=0 // loop_exit
    _

// kernel: dino_features_forward.7
$region0: #{dino_features_forward.7}
  #allocation0 [shape = 'u32[]', space=smem, size = 0x4, offset = 0x4, fixed_abs, tag = 'smem constant byte address 0x4 - core index']
  #allocation1 [shape = 'u32[72,128]{1,0:T(1,128)}', space=vmem, size = 0x9000, scoped, tag = 'internal scratch']
  %s0 = inlined_call_operand.vmem [shape: f32[2,8,256], index: 0, kind: input, shape index: {}]
  %s1 = inlined_call_operand.vmem [shape: f32[1,256], index: 1, kind: input, shape index: {}]
  %s2 = inlined_call_operand.vmem [shape: f32[1,256], index: 2, kind: input, shape index: {}]
  %s3 = inlined_call_operand.vmem [shape: f32[2,4,256], index: 3, kind: output, shape index: {}]
  %s4 = sld [smem:[#allocation0]]
  $region45: #{dino_features_forward.7} parent=0
    _
  %s6 = ssub.s32 1, %s4
  %s7 = scalar_select 0, %s6, %s4
  loop: start=0, step=1, limit=4
  $region2: #{dino_features_forward.7} parent=0 // loop_pre_header
    _
  $region3: #{dino_features_forward.7} parent=0 // loop_header
    %s9 = sphi 0, %s13
    %p10 = scmp.ge.s32.totalorder %s9, 4
    %s19 = sphi 0, %s21
    %s22 = sphi 0, %s19
    %s23 = sphi 0, %s22
    %s39 = sphi 0, %s23
    %s43 = sphi 0, %s43
    %s45 = sphi 0, %s43
    %s46 = sphi 0, %s45
    %s60 = sphi 0, %s46
    %s64 = sphi 0, %s64
    %s66 = sphi 0, %s64
    %s67 = sphi 0, %s66
    %s81 = sphi 0, %s67
    %s87 = sphi 0, %s89
    %s90 = sphi 0, %s87
    %s91 = sphi 0, %s90
    %s107 = sphi 0, %s91
  $region4: #{dino_features_forward.7} parent=0 // loop_header_branch
    %12 = sbr.rel (%p10) target = $region8
  $region5: #{dino_features_forward.7} parent=0 // loop_body
    %s14 = ssub.s32 %s9, 1
    %s15 = ssub.s32 %s9, 2
    %s16 = sadd.s32 %s9, 1
    %s17 = ssub.s32 %s9, %s16
    %p18 = scmp.eq.s32.totalorder %s17, 0
    %s20 = sadd.s32 %s19, 1
    %s21 = scalar_select %p18, %s19, %s20
    %p24 = pneg %p18
    %p25 = scmp.eq.s32.totalorder %s9, 1
    %p26 = por %p24, %p25
    %p27 = scmp.ne.s32.totalorder %s19, %s22
    %p28 = scmp.eq.s32.totalorder %s9, 0
    %p29 = por %p27, %p28
    %p30 = scmp.ne.s32.totalorder %s19, %s22
    %p31 = scmp.eq.s32.totalorder %s14, 1
    %p32 = por %p30, %p31
    %p33 = scmp.ne.s32.totalorder %s22, %s23
    %p34 = scmp.eq.s32.totalorder %s14, 0
    %p35 = por %p33, %p34
    %p36 = scmp.ne.s32.totalorder %s22, %s23
    %p37 = scmp.eq.s32.totalorder %s15, 1
    %p38 = por %p36, %p37
    %p40 = scmp.ne.s32.totalorder %s23, %s39
    %p41 = scmp.eq.s32.totalorder %s15, 0
    %p42 = por %p40, %p41
    %s44 = sadd.s32 %s43, 1
    %p47 = scmp.eq.s32.totalorder %s9, 1
    %p48 = scmp.ne.s32.totalorder %s43, %s45
    %p49 = scmp.eq.s32.totalorder %s9, 0
    %p50 = por %p48, %p49
    %p51 = scmp.ne.s32.totalorder %s43, %s45
    %p52 = scmp.eq.s32.totalorder %s14, 1
    %p53 = por %p51, %p52
    %p54 = scmp.ne.s32.totalorder %s45, %s46
    %p55 = scmp.eq.s32.totalorder %s14, 0
    %p56 = por %p54, %p55
    %p57 = scmp.ne.s32.totalorder %s45, %s46
    %p58 = scmp.eq.s32.totalorder %s15, 1
    %p59 = por %p57, %p58
    %p61 = scmp.ne.s32.totalorder %s46, %s60
    %p62 = scmp.eq.s32.totalorder %s15, 0
    %p63 = por %p61, %p62
    %s65 = sadd.s32 %s64, 1
    %p68 = scmp.eq.s32.totalorder %s9, 1
    %p69 = scmp.ne.s32.totalorder %s64, %s66
    %p70 = scmp.eq.s32.totalorder %s9, 0
    %p71 = por %p69, %p70
    %p72 = scmp.ne.s32.totalorder %s64, %s66
    %p73 = scmp.eq.s32.totalorder %s14, 1
    %p74 = por %p72, %p73
    %p75 = scmp.ne.s32.totalorder %s66, %s67
    %p76 = scmp.eq.s32.totalorder %s14, 0
    %p77 = por %p75, %p76
    %p78 = scmp.ne.s32.totalorder %s66, %s67
    %p79 = scmp.eq.s32.totalorder %s15, 1
    %p80 = por %p78, %p79
    %p82 = scmp.ne.s32.totalorder %s67, %s81
    %p83 = scmp.eq.s32.totalorder %s15, 0
    %p84 = por %p82, %p83
    %s85 = ssub.s32 %s9, %s16
    %p86 = scmp.eq.s32.totalorder %s85, 0
    %s88 = sadd.s32 %s87, 1
    %s89 = scalar_select %p86, %s87, %s88
    %p92 = pneg %p86
    %p93 = scmp.eq.s32.totalorder %s9, 1
    %p94 = por %p92, %p93
    %p95 = scmp.ne.s32.totalorder %s87, %s90
    %p96 = scmp.eq.s32.totalorder %s9, 0
    %p97 = por %p95, %p96
    %p98 = scmp.ne.s32.totalorder %s87, %s90
    %p99 = scmp.eq.s32.totalorder %s14, 1
    %p100 = por %p98, %p99
    %p101 = scmp.ne.s32.totalorder %s90, %s91
    %p102 = scmp.eq.s32.totalorder %s14, 0
    %p103 = por %p101, %p102
    %p104 = scmp.ne.s32.totalorder %s90, %s91
    %p105 = scmp.eq.s32.totalorder %s15, 1
    %p106 = por %p104, %p105
    %p108 = scmp.ne.s32.totalorder %s91, %s107
    %p109 = scmp.eq.s32.totalorder %s15, 0
    %p110 = por %p108, %p109
    %p111 = scmp.le.s32.totalorder 1, %s9
    %p112 = scmp.lt.s32.totalorder %s9, 3
    %p113 = pnand %p111, %p112
    %p114 = pneg %p113
    // Predicated region
    $region9: #{dino_features_forward.7} parent=5 // pred_check
      _
    $region10: #{dino_features_forward.7} parent=5 // pred_check_branch
      %116 = sbr.rel (%p113) target = $region12
    $region11: #{dino_features_forward.7} parent=5 // pred_region
      %s117 = ssub.s32 %s9, 1
      // Predicated region
      $region13: #{dino_features_forward.7} parent=11 // pred_check
        %p118 = pneg %p56
      $region14: #{dino_features_forward.7} parent=11 // pred_check_branch
        %120 = sbr.rel (%p118) target = $region16
      $region15: #{dino_features_forward.7} parent=11 // pred_region
        _
      $region16: #{dino_features_forward.7} parent=11 // pred_fallthru
        _
      // Predicated region
      $region17: #{dino_features_forward.7} parent=11 // pred_check
        %p121 = pneg %p77
      $region18: #{dino_features_forward.7} parent=11 // pred_check_branch
        %123 = sbr.rel (%p121) target = $region20
      $region19: #{dino_features_forward.7} parent=11 // pred_region
        _
      $region20: #{dino_features_forward.7} parent=11 // pred_fallthru
        _
    $region12: #{dino_features_forward.7} parent=5 // pred_fallthru
      _
    %p124 = scmp.lt.s32.totalorder %s9, 2
    // Predicated region
    $region21: #{dino_features_forward.7} parent=5 // pred_check
      %p125 = pneg %p124
    $region22: #{dino_features_forward.7} parent=5 // pred_check_branch
      %127 = sbr.rel (%p125) target = $region24
    $region23: #{dino_features_forward.7} parent=5 // pred_region
      // Predicated region
      $region25: #{dino_features_forward.7} parent=23 // pred_check
        %p128 = pneg %p29
      $region26: #{dino_features_forward.7} parent=23 // pred_check_branch
        %130 = sbr.rel (%p128) target = $region28
      $region27: #{dino_features_forward.7} parent=23 // pred_region
        %p131 = scmp.lt.s32.totalorder %s9, 1
        %s132 = scalar_select %p131, %s9, 1
        %s133 = smul.addr %s132, 2
        %s134 = smul.addr %s133, 8
        %s135 = scalar_lea.vmem %s0, %s134
      $region28: #{dino_features_forward.7} parent=23 // pred_fallthru
        _
    $region24: #{dino_features_forward.7} parent=5 // pred_fallthru
      _
    %p136 = scmp.le.s32.totalorder 1, %s9
    %p137 = scmp.lt.s32.totalorder %s9, 3
    %p138 = pnand %p136, %p137
    %p139 = pneg %p138
    // Predicated region
    $region29: #{dino_features_forward.7} parent=5 // pred_check
      _
    $region30: #{dino_features_forward.7} parent=5 // pred_check_branch
      %141 = sbr.rel (%p138) target = $region32
    $region31: #{dino_features_forward.7} parent=5 // pred_region
      %s142 = ssub.s32 %s9, 1
      %p143 = scmp.lt.s32.totalorder %s14, 1
      %s144 = scalar_select %p143, %s14, 1
      %s145 = smul.addr %s144, 2
      %s146 = smul.addr %s145, 8
      %s147 = scalar_lea.vmem %s0, %s146
      %p148 = pneg %p35
      %p149 = pneg %p32
      %p150 = pneg %p56
      %p151 = pneg %p53
      %p152 = pneg %p77
      %p153 = pneg %p74
      %p154 = pneg %p103
      %p155 = pneg %p100
      %p156 = scmp.lt.s32.totalorder %s14, 1
      %s157 = scalar_select %p156, %s14, 1
      %s158 = smul.addr %s157, 2
      %s159 = smul.addr %s158, 4
      %s160 = scalar_lea.vmem %s3, %s159
      %p161 = scmp.lt.s32.totalorder %s14, 1
      %s162 = scalar_select %p161, %s14, 1
      %s163 = smul.addr %s162, 2
      %s164 = smul.addr %s163, 8
      %s165 = scalar_lea.vmem %s0, %s164
      %p166 = scmp.lt.s32.totalorder %s14, 1
      %s167 = scalar_select %p166, %s14, 1
      %s168 = smul.addr %s167, 2
      %s169 = smul.addr %s168, 4
      %s170 = scalar_lea.vmem %s3, %s169
      %v171 = vld [vmem:[%s165] sm:$0xf]
      %v172 = vld [vmem:[%s165 + $0x8] sm:$0xf]
      %v173 = vld [vmem:[%s1] sm:$0x3]
      %v174 = vld [vmem:[%s2] sm:$0x3]
      %vm175 = vcmask 1043456
      %v176 = vsel %vm175, %v171, 0.0
      %v177 = vsel %vm175, %v172, 0.0
      %v178 = vadd.f32 %v176, %v177
      %179 = vadd.xlane.f32.xlu0 %v178
      %v180 = vpop.xlane.xlu0 %179
      %v181 = vrcp.pop 256.0
      %v182 = vmul.f32 256.0, %v181
      %v183 = vsub.f32 1.0, %v182
      %v184 = vmul.f32 %v181, %v183
      %v185 = vadd.f32 %v181, %v184
      %vm186 = vweird.f32 %v181
      %v187 = vsel %vm186, %v181, %v185
      %v188 = vmul.f32 %v180, %v187
      %v189 = vmul.f32 %v171, %v171
      %v190 = vmul.f32 %v172, %v172
      %v191 = vsel %vm175, %v189, 0.0
      %v192 = vsel %vm175, %v190, 0.0
      %v193 = vadd.f32 %v191, %v192
      %194 = vadd.xlane.f32.xlu0 %v193
      %v195 = vpop.xlane.xlu0 %194
      %v196 = vmul.f32 %v195, %v187
      %v197 = vmul.f32 %v188, %v188
      %v198 = vsub.f32 %v196, %v197
      %v199 = vsub.f32 %v171, %v188
      %v200 = vsub.f32 %v172, %v188
      %v201 = vadd.f32 %v198, 1e-06
      %v202 = vrsqrt.pop %v201
      %v203 = vmul.f32 %v202, %v201
      %v204 = vmul.f32 %v203, %v202
      %v205 = vmul.f32 0.5, %v204
      %v206 = vsub.f32 1.5, %v205
      %v207 = vmul.f32 %v202, %v206
      %vm208 = vweird.f32 %v201
      %vm209 = vweird.f32 %v202
      %vm210 = vmor %vm208, %vm209
      %v211 = vsel %vm210, %v202, %v207
      %v212 = vmul.f32 %v199, %v211
      %v213 = vmul.f32 %v200, %v211
      %v215 = vperm.slane %v173, 0
      %v216 = vperm.slane %v173, 1
      %v219 = vmul.f32 %v212, %v215
      %v220 = vmul.f32 %v213, %v216
      %v222 = vperm.slane %v174, 0
      %v223 = vperm.slane %v174, 1
      %v226 = vadd.f32 %v219, %v222
      %v227 = vadd.f32 %v220, %v223
      %v228 = vmul.f32 %v226, %v226
      %v229 = vmul.f32 %v227, %v227
      %v230 = vsel %vm175, %v228, 0.0
      %v231 = vsel %vm175, %v229, 0.0
      %v232 = vadd.f32 %v230, %v231
      %233 = vadd.xlane.f32.xlu0 %v232
      %v234 = vpop.xlane.xlu0 %233
      %v235 = vrsqrt.pop %v234
      %v236 = vmul.f32 %v235, %v234
      %v237 = vmul.f32 %v236, %v235
      %v238 = vmul.f32 0.5, %v237
      %v239 = vsub.f32 1.5, %v238
      %v240 = vmul.f32 %v235, %v239
      %v241 = vmul.f32 %v234, %v240
      %vm242 = vcmp.eq.f32.partialorder %v234, inf
      %v243 = vsel %vm242, %v234, %v241
      %vm244 = vcmp.eq.f32.partialorder %v234, 0.0
      %v245 = vand.u32 %v234, 2147483648
      %v246 = vsel %vm244, %v245, %v243
      %v247 = vmax.f32 %v246, 1e-12
      %v248 = vrcp.pop %v247
      %v249 = vmul.f32 %v247, %v248
      %v250 = vsub.f32 1.0, %v249
      %v251 = vmul.f32 %v248, %v250
      %v252 = vadd.f32 %v248, %v251
      %vm253 = vweird.f32 %v247
      %vm254 = vweird.f32 %v248
      %vm255 = vmor %vm253, %vm254
      %v256 = vsel %vm255, %v248, %v252
      %v257 = vand.u32 2147483647, %v247
      %vm258 = vcmp.eq.f32.partialorder %v257, 8.507059e+37
      %v259 = vand.u32 %v247, 2147483648
      %v260 = vor.u32 1.1754944e-38, %v259
      %v261 = vsel %vm258, %v260, %v256
      %v262 = vmul.f32 %v226, %v261
      %v263 = vmul.f32 %v227, %v261
      %v266 = vrot.slane %v263, 4
      %v267 = vsel %vm175, %v262, %v266
      %269 = vst [vmem:[%s170] sm:$0xff] %v267
      %p270 = scmp.lt.s32.totalorder %s14, 1
      %s271 = scalar_select %p270, %s14, 1
      %s272 = smul.addr %s271, 2
      %s273 = smul.addr %s272, 4
      %s274 = scalar_lea.vmem %s3, %s273
      // Predicated region
      $region33: #{dino_features_forward.7} parent=31 // pred_check
        %p275 = pneg %p100
      $region34: #{dino_features_forward.7} parent=31 // pred_check_branch
        %277 = sbr.rel (%p275) target = $region36
      $region35: #{dino_features_forward.7} parent=31 // pred_region
        _
      $region36: #{dino_features_forward.7} parent=31 // pred_fallthru
        _
    $region32: #{dino_features_forward.7} parent=5 // pred_fallthru
      _
    %p278 = scmp.le.s32.totalorder 2, %s9
    // Predicated region
    $region37: #{dino_features_forward.7} parent=5 // pred_check
      %p279 = pneg %p278
    $region38: #{dino_features_forward.7} parent=5 // pred_check_branch
      %281 = sbr.rel (%p279) target = $region40
    $region39: #{dino_features_forward.7} parent=5 // pred_region
      %s282 = ssub.s32 %s9, 2
      // Predicated region
      $region41: #{dino_features_forward.7} parent=39 // pred_check
        %p283 = pneg %p106
      $region42: #{dino_features_forward.7} parent=39 // pred_check_branch
        %285 = sbr.rel (%p283) target = $region44
      $region43: #{dino_features_forward.7} parent=39 // pred_region
        %p286 = scmp.lt.s32.totalorder %s15, 1
        %s287 = scalar_select %p286, %s15, 1
        %s288 = smul.addr %s287, 2
        %s289 = smul.addr %s288, 4
        %s290 = scalar_lea.vmem %s3, %s289
      $region44: #{dino_features_forward.7} parent=39 // pred_fallthru
        _
    $region40: #{dino_features_forward.7} parent=5 // pred_fallthru
      _
  $region6: #{dino_features_forward.7} parent=0 // loop_footer
    %s13 = sadd.s32 1, %s9
  $region7: #{dino_features_forward.7} parent=0 // loop_footer_branch
    %8 = sbr.rel target = $region3
  $region8: #{dino_features_forward.7} parent=0 // loop_exit
    _

// kernel: dino_features_forward.6
$region0: #{dino_features_forward.6}
  #allocation0 [shape = 'u32[]', space=smem, size = 0x4, offset = 0x4, fixed_abs, tag = 'smem constant byte address 0x4 - core index']
  #allocation1 [shape = 'u32[72,128]{1,0:T(1,128)}', space=vmem, size = 0x9000, scoped, tag = 'internal scratch']
  #allocation2 [shape = 'f32[8,768]{1,0:T(8,128)}', space=vmem, size = 0x6000, scoped, tag = 'scratch operand']
  #allocation3 [shape = 'f32[8,256]{1,0:T(8,128)}', space=vmem, size = 0x2000, scoped, tag = 'scratch operand']
  %s0 = inlined_call_operand.vmem [shape: f32[2,8,256], index: 0, kind: input, shape index: {}]
  %s1 = inlined_call_operand.vmem [shape: f32[1,256], index: 1, kind: input, shape index: {}]
  %s2 = inlined_call_operand.vmem [shape: f32[1,256], index: 2, kind: input, shape index: {}]
  %s3 = inlined_call_operand.hbm [shape: bf16[256,768], index: 3, kind: input, shape index: {}]
  %s4 = inlined_call_operand.vmem [shape: f32[1,768], index: 4, kind: input, shape index: {}]
  %s5 = inlined_call_operand.hbm [shape: bf16[256,256], index: 5, kind: input, shape index: {}]
  %s6 = inlined_call_operand.vmem [shape: f32[1,256], index: 6, kind: input, shape index: {}]
  %s7 = inlined_call_operand.vmem [shape: f32[1,256], index: 7, kind: input, shape index: {}]
  %s8 = inlined_call_operand.vmem [shape: f32[1,256], index: 8, kind: input, shape index: {}]
  %s9 = inlined_call_operand.vmem [shape: f32[1,256], index: 9, kind: input, shape index: {}]
  %s10 = inlined_call_operand.hbm [shape: bf16[256,1024], index: 10, kind: input, shape index: {}]
  %s11 = inlined_call_operand.vmem [shape: f32[1,1024], index: 11, kind: input, shape index: {}]
  %s12 = inlined_call_operand.hbm [shape: bf16[1024,256], index: 12, kind: input, shape index: {}]
  %s13 = inlined_call_operand.vmem [shape: f32[1,256], index: 13, kind: input, shape index: {}]
  %s14 = inlined_call_operand.vmem [shape: f32[1,256], index: 14, kind: input, shape index: {}]
  %s15 = inlined_call_operand.vmem [shape: f32[2,8,256], index: 15, kind: output, shape index: {}]
  %s16 = sld [smem:[#allocation0]]
  $region109: #{dino_features_forward.6} parent=0
    _
  %s18 = ssub.s32 1, %s16
  %s19 = scalar_select 0, %s18, %s16
  $region1: #{dino_features_forward.6} parent=0
    #allocation4 [shape = 'u8[393216]{0}', space=vmem, size = 0x60000, scoped, tag = 'input window, operand 3, single buffered']
    #allocation5 [shape = 's32[2]{0}', space=sflag, size = 0x8, scoped, tag = 'scoped memory for dino_features_forward.6']
    #allocation6 [shape = 'u8[131072]{0}', space=vmem, size = 0x20000, scoped, tag = 'input window, operand 5, single buffered']
    #allocation7 [shape = 's32[1]{0}', space=sflag, size = 0x4, scoped, tag = 'scoped memory for dino_features_forward.6']
    #allocation8 [shape = 'u8[524288]{0}', space=vmem, size = 0x80000, scoped, tag = 'input window, operand 10, single buffered']
    #allocation9 [shape = 'u8[524288]{0}', space=vmem, size = 0x80000, scoped, tag = 'input window, operand 12, single buffered']
    #allocation10 [shape = 's32[1]{0}', space=sflag, size = 0x4, scoped, tag = 'scoped memory for dino_features_forward.6']
    %20 = vsyncpa [#allocation5], 0
    %21 = vsyncpa [#allocation7], 0
    %22 = vsyncpa [#allocation10], 0
    loop: start=0, step=1, limit=4
    $region2: #{dino_features_forward.6} parent=1 // loop_pre_header
      _
    $region3: #{dino_features_forward.6} parent=1 // loop_header
      %s24 = sphi 0, %s28
      %p25 = scmp.ge.s32.totalorder %s24, 4
      %s34 = sphi 0, %s36
      %s37 = sphi 0, %s34
      %s38 = sphi 0, %s37
      %s54 = sphi 0, %s38
      %s58 = sphi 0, %s58
      %s60 = sphi 0, %s58
      %s61 = sphi 0, %s60
      %s75 = sphi 0, %s61
      %s79 = sphi 0, %s79
      %s81 = sphi 0, %s79
      %s82 = sphi 0, %s81
      %s96 = sphi 0, %s82
      %s100 = sphi 0, %s100
      %s102 = sphi 0, %s100
      %s103 = sphi 0, %s102
      %s117 = sphi 0, %s103
      %s121 = sphi 0, %s121
      %s123 = sphi 0, %s121
      %s124 = sphi 0, %s123
      %s138 = sphi 0, %s124
      %s142 = sphi 0, %s142
      %s144 = sphi 0, %s142
      %s145 = sphi 0, %s144
      %s159 = sphi 0, %s145
      %s163 = sphi 0, %s163
      %s165 = sphi 0, %s163
      %s166 = sphi 0, %s165
      %s180 = sphi 0, %s166
      %s184 = sphi 0, %s184
      %s186 = sphi 0, %s184
      %s187 = sphi 0, %s186
      %s201 = sphi 0, %s187
      %s205 = sphi 0, %s205
      %s207 = sphi 0, %s205
      %s208 = sphi 0, %s207
      %s222 = sphi 0, %s208
      %s226 = sphi 0, %s226
      %s228 = sphi 0, %s226
      %s229 = sphi 0, %s228
      %s243 = sphi 0, %s229
      %s247 = sphi 0, %s247
      %s249 = sphi 0, %s247
      %s250 = sphi 0, %s249
      %s264 = sphi 0, %s250
      %s268 = sphi 0, %s268
      %s270 = sphi 0, %s268
      %s271 = sphi 0, %s270
      %s285 = sphi 0, %s271
      %s289 = sphi 0, %s289
      %s291 = sphi 0, %s289
      %s292 = sphi 0, %s291
      %s306 = sphi 0, %s292
      %s310 = sphi 0, %s310
      %s312 = sphi 0, %s310
      %s313 = sphi 0, %s312
      %s327 = sphi 0, %s313
      %s331 = sphi 0, %s331
      %s333 = sphi 0, %s331
      %s334 = sphi 0, %s333
      %s348 = sphi 0, %s334
      %s354 = sphi 0, %s356
      %s357 = sphi 0, %s354
      %s358 = sphi 0, %s357
      %s374 = sphi 0, %s358
    $region4: #{dino_features_forward.6} parent=1 // loop_header_branch
      %27 = sbr.rel (%p25) target = $region8
    $region5: #{dino_features_forward.6} parent=1 // loop_body
      %s29 = ssub.s32 %s24, 1
      %s30 = ssub.s32 %s24, 2
      %s31 = sadd.s32 %s24, 1
      %s32 = ssub.s32 %s24, %s31
      %p33 = scmp.eq.s32.totalorder %s32, 0
      %s35 = sadd.s32 %s34, 1
      %s36 = scalar_select %p33, %s34, %s35
      %p39 = pneg %p33
      %p40 = scmp.eq.s32.totalorder %s24, 1
      %p41 = por %p39, %p40
      %p42 = scmp.ne.s32.totalorder %s34, %s37
      %p43 = scmp.eq.s32.totalorder %s24, 0
      %p44 = por %p42, %p43
      %p45 = scmp.ne.s32.totalorder %s34, %s37
      %p46 = scmp.eq.s32.totalorder %s29, 1
      %p47 = por %p45, %p46
      %p48 = scmp.ne.s32.totalorder %s37, %s38
      %p49 = scmp.eq.s32.totalorder %s29, 0
      %p50 = por %p48, %p49
      %p51 = scmp.ne.s32.totalorder %s37, %s38
      %p52 = scmp.eq.s32.totalorder %s30, 1
      %p53 = por %p51, %p52
      %p55 = scmp.ne.s32.totalorder %s38, %s54
      %p56 = scmp.eq.s32.totalorder %s30, 0
      %p57 = por %p55, %p56
      %s59 = sadd.s32 %s58, 1
      %p62 = scmp.eq.s32.totalorder %s24, 1
      %p63 = scmp.ne.s32.totalorder %s58, %s60
      %p64 = scmp.eq.s32.totalorder %s24, 0
      %p65 = por %p63, %p64
      %p66 = scmp.ne.s32.totalorder %s58, %s60
      %p67 = scmp.eq.s32.totalorder %s29, 1
      %p68 = por %p66, %p67
      %p69 = scmp.ne.s32.totalorder %s60, %s61
      %p70 = scmp.eq.s32.totalorder %s29, 0
      %p71 = por %p69, %p70
      %p72 = scmp.ne.s32.totalorder %s60, %s61
      %p73 = scmp.eq.s32.totalorder %s30, 1
      %p74 = por %p72, %p73
      %p76 = scmp.ne.s32.totalorder %s61, %s75
      %p77 = scmp.eq.s32.totalorder %s30, 0
      %p78 = por %p76, %p77
      %s80 = sadd.s32 %s79, 1
      %p83 = scmp.eq.s32.totalorder %s24, 1
      %p84 = scmp.ne.s32.totalorder %s79, %s81
      %p85 = scmp.eq.s32.totalorder %s24, 0
      %p86 = por %p84, %p85
      %p87 = scmp.ne.s32.totalorder %s79, %s81
      %p88 = scmp.eq.s32.totalorder %s29, 1
      %p89 = por %p87, %p88
      %p90 = scmp.ne.s32.totalorder %s81, %s82
      %p91 = scmp.eq.s32.totalorder %s29, 0
      %p92 = por %p90, %p91
      %p93 = scmp.ne.s32.totalorder %s81, %s82
      %p94 = scmp.eq.s32.totalorder %s30, 1
      %p95 = por %p93, %p94
      %p97 = scmp.ne.s32.totalorder %s82, %s96
      %p98 = scmp.eq.s32.totalorder %s30, 0
      %p99 = por %p97, %p98
      %s101 = sadd.s32 %s100, 1
      %p104 = scmp.eq.s32.totalorder %s24, 1
      %p105 = scmp.ne.s32.totalorder %s100, %s102
      %p106 = scmp.eq.s32.totalorder %s24, 0
      %p107 = por %p105, %p106
      %p108 = scmp.ne.s32.totalorder %s100, %s102
      %p109 = scmp.eq.s32.totalorder %s29, 1
      %p110 = por %p108, %p109
      %p111 = scmp.ne.s32.totalorder %s102, %s103
      %p112 = scmp.eq.s32.totalorder %s29, 0
      %p113 = por %p111, %p112
      %p114 = scmp.ne.s32.totalorder %s102, %s103
      %p115 = scmp.eq.s32.totalorder %s30, 1
      %p116 = por %p114, %p115
      %p118 = scmp.ne.s32.totalorder %s103, %s117
      %p119 = scmp.eq.s32.totalorder %s30, 0
      %p120 = por %p118, %p119
      %s122 = sadd.s32 %s121, 1
      %p125 = scmp.eq.s32.totalorder %s24, 1
      %p126 = scmp.ne.s32.totalorder %s121, %s123
      %p127 = scmp.eq.s32.totalorder %s24, 0
      %p128 = por %p126, %p127
      %p129 = scmp.ne.s32.totalorder %s121, %s123
      %p130 = scmp.eq.s32.totalorder %s29, 1
      %p131 = por %p129, %p130
      %p132 = scmp.ne.s32.totalorder %s123, %s124
      %p133 = scmp.eq.s32.totalorder %s29, 0
      %p134 = por %p132, %p133
      %p135 = scmp.ne.s32.totalorder %s123, %s124
      %p136 = scmp.eq.s32.totalorder %s30, 1
      %p137 = por %p135, %p136
      %p139 = scmp.ne.s32.totalorder %s124, %s138
      %p140 = scmp.eq.s32.totalorder %s30, 0
      %p141 = por %p139, %p140
      %s143 = sadd.s32 %s142, 1
      %p146 = scmp.eq.s32.totalorder %s24, 1
      %p147 = scmp.ne.s32.totalorder %s142, %s144
      %p148 = scmp.eq.s32.totalorder %s24, 0
      %p149 = por %p147, %p148
      %p150 = scmp.ne.s32.totalorder %s142, %s144
      %p151 = scmp.eq.s32.totalorder %s29, 1
      %p152 = por %p150, %p151
      %p153 = scmp.ne.s32.totalorder %s144, %s145
      %p154 = scmp.eq.s32.totalorder %s29, 0
      %p155 = por %p153, %p154
      %p156 = scmp.ne.s32.totalorder %s144, %s145
      %p157 = scmp.eq.s32.totalorder %s30, 1
      %p158 = por %p156, %p157
      %p160 = scmp.ne.s32.totalorder %s145, %s159
      %p161 = scmp.eq.s32.totalorder %s30, 0
      %p162 = por %p160, %p161
      %s164 = sadd.s32 %s163, 1
      %p167 = scmp.eq.s32.totalorder %s24, 1
      %p168 = scmp.ne.s32.totalorder %s163, %s165
      %p169 = scmp.eq.s32.totalorder %s24, 0
      %p170 = por %p168, %p169
      %p171 = scmp.ne.s32.totalorder %s163, %s165
      %p172 = scmp.eq.s32.totalorder %s29, 1
      %p173 = por %p171, %p172
      %p174 = scmp.ne.s32.totalorder %s165, %s166
      %p175 = scmp.eq.s32.totalorder %s29, 0
      %p176 = por %p174, %p175
      %p177 = scmp.ne.s32.totalorder %s165, %s166
      %p178 = scmp.eq.s32.totalorder %s30, 1
      %p179 = por %p177, %p178
      %p181 = scmp.ne.s32.totalorder %s166, %s180
      %p182 = scmp.eq.s32.totalorder %s30, 0
      %p183 = por %p181, %p182
      %s185 = sadd.s32 %s184, 1
      %p188 = scmp.eq.s32.totalorder %s24, 1
      %p189 = scmp.ne.s32.totalorder %s184, %s186
      %p190 = scmp.eq.s32.totalorder %s24, 0
      %p191 = por %p189, %p190
      %p192 = scmp.ne.s32.totalorder %s184, %s186
      %p193 = scmp.eq.s32.totalorder %s29, 1
      %p194 = por %p192, %p193
      %p195 = scmp.ne.s32.totalorder %s186, %s187
      %p196 = scmp.eq.s32.totalorder %s29, 0
      %p197 = por %p195, %p196
      %p198 = scmp.ne.s32.totalorder %s186, %s187
      %p199 = scmp.eq.s32.totalorder %s30, 1
      %p200 = por %p198, %p199
      %p202 = scmp.ne.s32.totalorder %s187, %s201
      %p203 = scmp.eq.s32.totalorder %s30, 0
      %p204 = por %p202, %p203
      %s206 = sadd.s32 %s205, 1
      %p209 = scmp.eq.s32.totalorder %s24, 1
      %p210 = scmp.ne.s32.totalorder %s205, %s207
      %p211 = scmp.eq.s32.totalorder %s24, 0
      %p212 = por %p210, %p211
      %p213 = scmp.ne.s32.totalorder %s205, %s207
      %p214 = scmp.eq.s32.totalorder %s29, 1
      %p215 = por %p213, %p214
      %p216 = scmp.ne.s32.totalorder %s207, %s208
      %p217 = scmp.eq.s32.totalorder %s29, 0
      %p218 = por %p216, %p217
      %p219 = scmp.ne.s32.totalorder %s207, %s208
      %p220 = scmp.eq.s32.totalorder %s30, 1
      %p221 = por %p219, %p220
      %p223 = scmp.ne.s32.totalorder %s208, %s222
      %p224 = scmp.eq.s32.totalorder %s30, 0
      %p225 = por %p223, %p224
      %s227 = sadd.s32 %s226, 1
      %p230 = scmp.eq.s32.totalorder %s24, 1
      %p231 = scmp.ne.s32.totalorder %s226, %s228
      %p232 = scmp.eq.s32.totalorder %s24, 0
      %p233 = por %p231, %p232
      %p234 = scmp.ne.s32.totalorder %s226, %s228
      %p235 = scmp.eq.s32.totalorder %s29, 1
      %p236 = por %p234, %p235
      %p237 = scmp.ne.s32.totalorder %s228, %s229
      %p238 = scmp.eq.s32.totalorder %s29, 0
      %p239 = por %p237, %p238
      %p240 = scmp.ne.s32.totalorder %s228, %s229
      %p241 = scmp.eq.s32.totalorder %s30, 1
      %p242 = por %p240, %p241
      %p244 = scmp.ne.s32.totalorder %s229, %s243
      %p245 = scmp.eq.s32.totalorder %s30, 0
      %p246 = por %p244, %p245
      %s248 = sadd.s32 %s247, 1
      %p251 = scmp.eq.s32.totalorder %s24, 1
      %p252 = scmp.ne.s32.totalorder %s247, %s249
      %p253 = scmp.eq.s32.totalorder %s24, 0
      %p254 = por %p252, %p253
      %p255 = scmp.ne.s32.totalorder %s247, %s249
      %p256 = scmp.eq.s32.totalorder %s29, 1
      %p257 = por %p255, %p256
      %p258 = scmp.ne.s32.totalorder %s249, %s250
      %p259 = scmp.eq.s32.totalorder %s29, 0
      %p260 = por %p258, %p259
      %p261 = scmp.ne.s32.totalorder %s249, %s250
      %p262 = scmp.eq.s32.totalorder %s30, 1
      %p263 = por %p261, %p262
      %p265 = scmp.ne.s32.totalorder %s250, %s264
      %p266 = scmp.eq.s32.totalorder %s30, 0
      %p267 = por %p265, %p266
      %s269 = sadd.s32 %s268, 1
      %p272 = scmp.eq.s32.totalorder %s24, 1
      %p273 = scmp.ne.s32.totalorder %s268, %s270
      %p274 = scmp.eq.s32.totalorder %s24, 0
      %p275 = por %p273, %p274
      %p276 = scmp.ne.s32.totalorder %s268, %s270
      %p277 = scmp.eq.s32.totalorder %s29, 1
      %p278 = por %p276, %p277
      %p279 = scmp.ne.s32.totalorder %s270, %s271
      %p280 = scmp.eq.s32.totalorder %s29, 0
      %p281 = por %p279, %p280
      %p282 = scmp.ne.s32.totalorder %s270, %s271
      %p283 = scmp.eq.s32.totalorder %s30, 1
      %p284 = por %p282, %p283
      %p286 = scmp.ne.s32.totalorder %s271, %s285
      %p287 = scmp.eq.s32.totalorder %s30, 0
      %p288 = por %p286, %p287
      %s290 = sadd.s32 %s289, 1
      %p293 = scmp.eq.s32.totalorder %s24, 1
      %p294 = scmp.ne.s32.totalorder %s289, %s291
      %p295 = scmp.eq.s32.totalorder %s24, 0
      %p296 = por %p294, %p295
      %p297 = scmp.ne.s32.totalorder %s289, %s291
      %p298 = scmp.eq.s32.totalorder %s29, 1
      %p299 = por %p297, %p298
      %p300 = scmp.ne.s32.totalorder %s291, %s292
      %p301 = scmp.eq.s32.totalorder %s29, 0
      %p302 = por %p300, %p301
      %p303 = scmp.ne.s32.totalorder %s291, %s292
      %p304 = scmp.eq.s32.totalorder %s30, 1
      %p305 = por %p303, %p304
      %p307 = scmp.ne.s32.totalorder %s292, %s306
      %p308 = scmp.eq.s32.totalorder %s30, 0
      %p309 = por %p307, %p308
      %s311 = sadd.s32 %s310, 1
      %p314 = scmp.eq.s32.totalorder %s24, 1
      %p315 = scmp.ne.s32.totalorder %s310, %s312
      %p316 = scmp.eq.s32.totalorder %s24, 0
      %p317 = por %p315, %p316
      %p318 = scmp.ne.s32.totalorder %s310, %s312
      %p319 = scmp.eq.s32.totalorder %s29, 1
      %p320 = por %p318, %p319
      %p321 = scmp.ne.s32.totalorder %s312, %s313
      %p322 = scmp.eq.s32.totalorder %s29, 0
      %p323 = por %p321, %p322
      %p324 = scmp.ne.s32.totalorder %s312, %s313
      %p325 = scmp.eq.s32.totalorder %s30, 1
      %p326 = por %p324, %p325
      %p328 = scmp.ne.s32.totalorder %s313, %s327
      %p329 = scmp.eq.s32.totalorder %s30, 0
      %p330 = por %p328, %p329
      %s332 = sadd.s32 %s331, 1
      %p335 = scmp.eq.s32.totalorder %s24, 1
      %p336 = scmp.ne.s32.totalorder %s331, %s333
      %p337 = scmp.eq.s32.totalorder %s24, 0
      %p338 = por %p336, %p337
      %p339 = scmp.ne.s32.totalorder %s331, %s333
      %p340 = scmp.eq.s32.totalorder %s29, 1
      %p341 = por %p339, %p340
      %p342 = scmp.ne.s32.totalorder %s333, %s334
      %p343 = scmp.eq.s32.totalorder %s29, 0
      %p344 = por %p342, %p343
      %p345 = scmp.ne.s32.totalorder %s333, %s334
      %p346 = scmp.eq.s32.totalorder %s30, 1
      %p347 = por %p345, %p346
      %p349 = scmp.ne.s32.totalorder %s334, %s348
      %p350 = scmp.eq.s32.totalorder %s30, 0
      %p351 = por %p349, %p350
      %s352 = ssub.s32 %s24, %s31
      %p353 = scmp.eq.s32.totalorder %s352, 0
      %s355 = sadd.s32 %s354, 1
      %s356 = scalar_select %p353, %s354, %s355
      %p359 = pneg %p353
      %p360 = scmp.eq.s32.totalorder %s24, 1
      %p361 = por %p359, %p360
      %p362 = scmp.ne.s32.totalorder %s354, %s357
      %p363 = scmp.eq.s32.totalorder %s24, 0
      %p364 = por %p362, %p363
      %p365 = scmp.ne.s32.totalorder %s354, %s357
      %p366 = scmp.eq.s32.totalorder %s29, 1
      %p367 = por %p365, %p366
      %p368 = scmp.ne.s32.totalorder %s357, %s358
      %p369 = scmp.eq.s32.totalorder %s29, 0
      %p370 = por %p368, %p369
      %p371 = scmp.ne.s32.totalorder %s357, %s358
      %p372 = scmp.eq.s32.totalorder %s30, 1
      %p373 = por %p371, %p372
      %p375 = scmp.ne.s32.totalorder %s358, %s374
      %p376 = scmp.eq.s32.totalorder %s30, 0
      %p377 = por %p375, %p376
      %p378 = scmp.le.s32.totalorder 1, %s24
      %p379 = scmp.lt.s32.totalorder %s24, 3
      %p380 = pnand %p378, %p379
      %p381 = pneg %p380
      // Predicated region
      $region9: #{dino_features_forward.6} parent=5 // pred_check
        _
      $region10: #{dino_features_forward.6} parent=5 // pred_check_branch
        %383 = sbr.rel (%p380) target = $region12
      $region11: #{dino_features_forward.6} parent=5 // pred_region
        %s384 = ssub.s32 %s24, 1
        // Predicated region
        $region13: #{dino_features_forward.6} parent=11 // pred_check
          %p385 = pneg %p71
        $region14: #{dino_features_forward.6} parent=11 // pred_check_branch
          %387 = sbr.rel (%p385) target = $region16
        $region15: #{dino_features_forward.6} parent=11 // pred_region
          _
        $region16: #{dino_features_forward.6} parent=11 // pred_fallthru
          _
        // Predicated region
        $region17: #{dino_features_forward.6} parent=11 // pred_check
          %p388 = pneg %p92
        $region18: #{dino_features_forward.6} parent=11 // pred_check_branch
          %390 = sbr.rel (%p388) target = $region20
        $region19: #{dino_features_forward.6} parent=11 // pred_region
          _
        $region20: #{dino_features_forward.6} parent=11 // pred_fallthru
          _
        // Predicated region
        $region21: #{dino_features_forward.6} parent=11 // pred_check
          %p391 = pneg %p113
        $region22: #{dino_features_forward.6} parent=11 // pred_check_branch
          %393 = sbr.rel (%p391) target = $region24
        $region23: #{dino_features_forward.6} parent=11 // pred_region
          %395 = vsyncadd [#allocation5], 0
          %s396 = sshll.u32 %s3, 4
          %s397 = int_to_ptr.hbm [resolvable:$true] %s396
          %s398 = sshll.u32 [#allocation4], 4
          %s399 = int_to_ptr.vmem [resolvable:$true] %s398
          %404 = dma.hbm_to_vmem [thread:$0]  %s397, 12288, %s399, [#allocation5], 384, 384, 24
        $region24: #{dino_features_forward.6} parent=11 // pred_fallthru
          _
        // Predicated region
        $region25: #{dino_features_forward.6} parent=11 // pred_check
          %p405 = pneg %p134
        $region26: #{dino_features_forward.6} parent=11 // pred_check_branch
          %407 = sbr.rel (%p405) target = $region28
        $region27: #{dino_features_forward.6} parent=11 // pred_region
          _
        $region28: #{dino_features_forward.6} parent=11 // pred_fallthru
          _
        // Predicated region
        $region29: #{dino_features_forward.6} parent=11 // pred_check
          %p408 = pneg %p155
        $region30: #{dino_features_forward.6} parent=11 // pred_check_branch
          %410 = sbr.rel (%p408) target = $region32
        $region31: #{dino_features_forward.6} parent=11 // pred_region
          %412 = vsyncadd [#allocation7], 0
          %s413 = sshll.u32 %s5, 4
          %s414 = int_to_ptr.hbm [resolvable:$true] %s413
          %s415 = sshll.u32 [#allocation6], 4
          %s416 = int_to_ptr.vmem [resolvable:$true] %s415
          %421 = dma.hbm_to_vmem [thread:$0]  %s414, 4096, %s416, [#allocation7], 128, 128, 8
        $region32: #{dino_features_forward.6} parent=11 // pred_fallthru
          _
        // Predicated region
        $region33: #{dino_features_forward.6} parent=11 // pred_check
          %p422 = pneg %p176
        $region34: #{dino_features_forward.6} parent=11 // pred_check_branch
          %424 = sbr.rel (%p422) target = $region36
        $region35: #{dino_features_forward.6} parent=11 // pred_region
          _
        $region36: #{dino_features_forward.6} parent=11 // pred_fallthru
          _
        // Predicated region
        $region37: #{dino_features_forward.6} parent=11 // pred_check
          %p425 = pneg %p197
        $region38: #{dino_features_forward.6} parent=11 // pred_check_branch
          %427 = sbr.rel (%p425) target = $region40
        $region39: #{dino_features_forward.6} parent=11 // pred_region
          _
        $region40: #{dino_features_forward.6} parent=11 // pred_fallthru
          _
        // Predicated region
        $region41: #{dino_features_forward.6} parent=11 // pred_check
          %p428 = pneg %p218
        $region42: #{dino_features_forward.6} parent=11 // pred_check_branch
          %430 = sbr.rel (%p428) target = $region44
        $region43: #{dino_features_forward.6} parent=11 // pred_region
          _
        $region44: #{dino_features_forward.6} parent=11 // pred_fallthru
          _
        // Predicated region
        $region45: #{dino_features_forward.6} parent=11 // pred_check
          %p431 = pneg %p239
        $region46: #{dino_features_forward.6} parent=11 // pred_check_branch
          %433 = sbr.rel (%p431) target = $region48
        $region47: #{dino_features_forward.6} parent=11 // pred_region
          _
        $region48: #{dino_features_forward.6} parent=11 // pred_fallthru
          _
        // Predicated region
        $region49: #{dino_features_forward.6} parent=11 // pred_check
          %p434 = pneg %p260
        $region50: #{dino_features_forward.6} parent=11 // pred_check_branch
          %436 = sbr.rel (%p434) target = $region52
        $region51: #{dino_features_forward.6} parent=11 // pred_region
          %438 = vsyncadd [#allocation7], 0
          %s439 = sshll.u32 %s10, 4
          %s440 = int_to_ptr.hbm [resolvable:$true] %s439
          %s441 = sshll.u32 [#allocation8], 4
          %s442 = int_to_ptr.vmem [resolvable:$true] %s441
          %447 = dma.hbm_to_vmem [thread:$0]  %s440, 16384, %s442, [#allocation7], 512, 512, 32
        $region52: #{dino_features_forward.6} parent=11 // pred_fallthru
          _
        // Predicated region
        $region53: #{dino_features_forward.6} parent=11 // pred_check
          %p448 = pneg %p281
        $region54: #{dino_features_forward.6} parent=11 // pred_check_branch
          %450 = sbr.rel (%p448) target = $region56
        $region55: #{dino_features_forward.6} parent=11 // pred_region
          _
        $region56: #{dino_features_forward.6} parent=11 // pred_fallthru
          _
        // Predicated region
        $region57: #{dino_features_forward.6} parent=11 // pred_check
          %p451 = pneg %p302
        $region58: #{dino_features_forward.6} parent=11 // pred_check_branch
          %453 = sbr.rel (%p451) target = $region60
        $region59: #{dino_features_forward.6} parent=11 // pred_region
          %455 = vsyncadd [#allocation10], 0
          %s456 = sshll.u32 %s12, 4
          %s457 = int_to_ptr.hbm [resolvable:$true] %s456
          %s458 = sshll.u32 [#allocation9], 4
          %s459 = int_to_ptr.vmem [resolvable:$true] %s458
          %464 = dma.hbm_to_vmem [thread:$0]  %s457, 16384, %s459, [#allocation10], 128, 128, 8
        $region60: #{dino_features_forward.6} parent=11 // pred_fallthru
          _
        // Predicated region
        $region61: #{dino_features_forward.6} parent=11 // pred_check
          %p465 = pneg %p323
        $region62: #{dino_features_forward.6} parent=11 // pred_check_branch
          %467 = sbr.rel (%p465) target = $region64
        $region63: #{dino_features_forward.6} parent=11 // pred_region
          _
        $region64: #{dino_features_forward.6} parent=11 // pred_fallthru
          _
        // Predicated region
        $region65: #{dino_features_forward.6} parent=11 // pred_check
          %p468 = pneg %p344
        $region66: #{dino_features_forward.6} parent=11 // pred_check_branch
          %470 = sbr.rel (%p468) target = $region68
        $region67: #{dino_features_forward.6} parent=11 // pred_region
          _
        $region68: #{dino_features_forward.6} parent=11 // pred_fallthru
          _
      $region12: #{dino_features_forward.6} parent=5 // pred_fallthru
        _
      %p471 = scmp.lt.s32.totalorder %s24, 2
      // Predicated region
      $region69: #{dino_features_forward.6} parent=5 // pred_check
        %p472 = pneg %p471
      $region70: #{dino_features_forward.6} parent=5 // pred_check_branch
        %474 = sbr.rel (%p472) target = $region72
      $region71: #{dino_features_forward.6} parent=5 // pred_region
        // Predicated region
        $region73: #{dino_features_forward.6} parent=71 // pred_check
          %p475 = pneg %p44
        $region74: #{dino_features_forward.6} parent=71 // pred_check_branch
          %477 = sbr.rel (%p475) target = $region76
        $region75: #{dino_features_forward.6} parent=71 // pred_region
          %p478 = scmp.lt.s32.totalorder %s24, 1
          %s479 = scalar_select %p478, %s24, 1
          %s480 = smul.addr %s479, 2
          %s481 = smul.addr %s480, 8
          %s482 = scalar_lea.vmem %s0, %s481
        $region76: #{dino_features_forward.6} parent=71 // pred_fallthru
          _
      $region72: #{dino_features_forward.6} parent=5 // pred_fallthru
        _
      %p483 = scmp.le.s32.totalorder 1, %s24
      %p484 = scmp.lt.s32.totalorder %s24, 3
      %p485 = pnand %p483, %p484
      %p486 = pneg %p485
      // Predicated region
      $region77: #{dino_features_forward.6} parent=5 // pred_check
        _
      $region78: #{dino_features_forward.6} parent=5 // pred_check_branch
        %488 = sbr.rel (%p485) target = $region80
      $region79: #{dino_features_forward.6} parent=5 // pred_region
        %s489 = ssub.s32 %s24, 1
        // Predicated region
        $region81: #{dino_features_forward.6} parent=79 // pred_check
          %p490 = pneg %p113
        $region82: #{dino_features_forward.6} parent=79 // pred_check_branch
          %492 = sbr.rel (%p490) target = $region84
        $region83: #{dino_features_forward.6} parent=79 // pred_region
          %494 = dma.done [#allocation5], 12288
        $region84: #{dino_features_forward.6} parent=79 // pred_fallthru
          _
        // Predicated region
        $region85: #{dino_features_forward.6} parent=79 // pred_check
          %p495 = pneg %p155
        $region86: #{dino_features_forward.6} parent=79 // pred_check_branch
          %497 = sbr.rel (%p495) target = $region88
        $region87: #{dino_features_forward.6} parent=79 // pred_region
          %499 = dma.done [#allocation7], 4096
        $region88: #{dino_features_forward.6} parent=79 // pred_fallthru
          _
        // Predicated region
        $region89: #{dino_features_forward.6} parent=79 // pred_check
          %p500 = pneg %p260
        $region90: #{dino_features_forward.6} parent=79 // pred_check_branch
          %502 = sbr.rel (%p500) target = $region92
        $region91: #{dino_features_forward.6} parent=79 // pred_region
          %504 = dma.done [#allocation7], 16384
        $region92: #{dino_features_forward.6} parent=79 // pred_fallthru
          _
        // Predicated region
        $region93: #{dino_features_forward.6} parent=79 // pred_check
          %p505 = pneg %p302
        $region94: #{dino_features_forward.6} parent=79 // pred_check_branch
          %507 = sbr.rel (%p505) target = $region96
        $region95: #{dino_features_forward.6} parent=79 // pred_region
          %509 = dma.done [#allocation10], 16384
        $region96: #{dino_features_forward.6} parent=79 // pred_fallthru
          _
        %p510 = scmp.lt.s32.totalorder %s29, 1
        %s511 = scalar_select %p510, %s29, 1
        %s512 = smul.addr %s511, 2
        %s513 = smul.addr %s512, 8
        %s514 = scalar_lea.vmem %s0, %s513
        %p515 = pneg %p50
        %p516 = pneg %p47
        %p517 = pneg %p71
        %p518 = pneg %p68
        %p519 = pneg %p92
        %p520 = pneg %p89
        %p521 = pneg %p113
        %p522 = pneg %p110
        %p523 = pneg %p134
        %p524 = pneg %p131
        %p525 = pneg %p155
        %p526 = pneg %p152
        %p527 = pneg %p176
        %p528 = pneg %p173
        %p529 = pneg %p197
        %p530 = pneg %p194
        %p531 = pneg %p218
        %p532 = pneg %p215
        %p533 = pneg %p239
        %p534 = pneg %p236
        %p535 = pneg %p260
        %p536 = pneg %p257
        %p537 = pneg %p281
        %p538 = pneg %p278
        %p539 = pneg %p302
        %p540 = pneg %p299
        %p541 = pneg %p323
        %p542 = pneg %p320
        %p543 = pneg %p344
        %p544 = pneg %p341
        %p545 = pneg %p370
        %p546 = pneg %p367
        %p547 = scmp.lt.s32.totalorder %s29, 1
        %s548 = scalar_select %p547, %s29, 1
        %s549 = smul.addr %s548, 2
        %s550 = smul.addr %s549, 8
        %s551 = scalar_lea.vmem %s15, %s550
        %p552 = scmp.lt.s32.totalorder %s29, 1
        %s553 = scalar_select %p552, %s29, 1
        %s554 = smul.addr %s553, 2
        %s555 = smul.addr %s554, 8
        %s556 = scalar_lea.vmem %s0, %s555
        %p557 = scmp.lt.s32.totalorder %s29, 1
        %s558 = scalar_select %p557, %s29, 1
        %s559 = smul.addr %s558, 2
        %s560 = smul.addr %s559, 8
        %s561 = scalar_lea.vmem %s15, %s560
        %v563 = vld [vmem:[%s556] sm:$0xff]
        %v564 = vld [vmem:[%s556 + $0x8] sm:$0xff]
        %v565 = vld [vmem:[%s1] sm:$0x3]
        %v566 = vld [vmem:[%s2] sm:$0x3]
        %v567 = vadd.f32 %v563, %v564
        %568 = vadd.xlane.f32.xlu0 %v567
        %v569 = vpop.xlane.xlu0 %568
        %v570 = vrcp.pop 256.0
        %v571 = vmul.f32 256.0, %v570
        %v572 = vsub.f32 1.0, %v571
        %v573 = vmul.f32 %v570, %v572
        %v574 = vadd.f32 %v570, %v573
        %vm575 = vweird.f32 %v570
        %v576 = vsel %vm575, %v570, %v574
        %v577 = vmul.f32 %v569, %v576
        %v578 = vmul.f32 %v563, %v563
        %v579 = vmul.f32 %v564, %v564
        %v580 = vadd.f32 %v578, %v579
        %581 = vadd.xlane.f32.xlu0 %v580
        %v582 = vpop.xlane.xlu0 %581
        %v583 = vmul.f32 %v582, %v576
        %v584 = vmul.f32 %v577, %v577
        %v585 = vsub.f32 %v583, %v584
        %v586 = vsub.f32 %v563, %v577
        %v587 = vsub.f32 %v564, %v577
        %v588 = vadd.f32 %v585, 1e-06
        %v589 = vrsqrt.pop %v588
        %v590 = vmul.f32 %v589, %v588
        %v591 = vmul.f32 %v590, %v589
        %v592 = vmul.f32 0.5, %v591
        %v593 = vsub.f32 1.5, %v592
        %v594 = vmul.f32 %v589, %v593
        %vm595 = vweird.f32 %v588
        %vm596 = vweird.f32 %v589
        %vm597 = vmor %vm595, %vm596
        %v598 = vsel %vm597, %v589, %v594
        %v599 = vmul.f32 %v586, %v598
        %v600 = vmul.f32 %v587, %v598
        %v602 = vperm.slane %v565, 0
        %v603 = vperm.slane %v565, 1
        %v606 = vmul.f32 %v599, %v602
        %v607 = vmul.f32 %v600, %v603
        %v609 = vperm.slane %v566, 0
        %v610 = vperm.slane %v566, 1
        %v613 = vadd.f32 %v606, %v609
        %v614 = vadd.f32 %v607, %v610
        %v615 = vpack.c.bf16 %v613, %v613
        %v616 = vpack.c.bf16 %v614, %v614
        %v617 = vld [vmem:[#allocation4] sm:$0xff]
        %v618 = vld [vmem:[#allocation4 + $0x8] sm:$0xff]
        %v619 = vld [vmem:[#allocation4 + $0x10] sm:$0xff]
        %v620 = vld [vmem:[#allocation4 + $0x18] sm:$0xff]
        %v621 = vld [vmem:[#allocation4 + $0x20] sm:$0xff]
        %v622 = vld [vmem:[#allocation4 + $0x28] sm:$0xff]
        %v623 = vld [vmem:[#allocation4 + $0x30] sm:$0xff]
        %v624 = vld [vmem:[#allocation4 + $0x38] sm:$0xff]
        %v625 = vld [vmem:[#allocation4 + $0x40] sm:$0xff]
        %v626 = vld [vmem:[#allocation4 + $0x48] sm:$0xff]
        %v627 = vld [vmem:[#allocation4 + $0x50] sm:$0xff]
        %v628 = vld [vmem:[#allocation4 + $0x58] sm:$0xff]
        %v629 = vld [vmem:[#allocation4 + $0x60] sm:$0xff]
        %v630 = vld [vmem:[#allocation4 + $0x68] sm:$0xff]
        %v631 = vld [vmem:[#allocation4 + $0x70] sm:$0xff]
        %v632 = vld [vmem:[#allocation4 + $0x78] sm:$0xff]
        %v633 = vld [vmem:[#allocation4 + $0x80] sm:$0xff]
        %v634 = vld [vmem:[#allocation4 + $0x88] sm:$0xff]
        %v635 = vld [vmem:[#allocation4 + $0x90] sm:$0xff]
        %v636 = vld [vmem:[#allocation4 + $0x98] sm:$0xff]
        %v637 = vld [vmem:[#allocation4 + $0xa0] sm:$0xff]
        %v638 = vld [vmem:[#allocation4 + $0xa8] sm:$0xff]
        %v639 = vld [vmem:[#allocation4 + $0xb0] sm:$0xff]
        %v640 = vld [vmem:[#allocation4 + $0xb8] sm:$0xff]
        %v641 = vld [vmem:[#allocation4 + $0xc0] sm:$0xff]
        %v642 = vld [vmem:[#allocation4 + $0xc8] sm:$0xff]
        %v643 = vld [vmem:[#allocation4 + $0xd0] sm:$0xff]
        %v644 = vld [vmem:[#allocation4 + $0xd8] sm:$0xff]
        %v645 = vld [vmem:[#allocation4 + $0xe0] sm:$0xff]
        %v646 = vld [vmem:[#allocation4 + $0xe8] sm:$0xff]
        %v647 = vld [vmem:[#allocation4 + $0xf0] sm:$0xff]
        %v648 = vld [vmem:[#allocation4 + $0xf8] sm:$0xff]
        %v649 = vld [vmem:[#allocation4 + $0x100] sm:$0xff]
        %v650 = vld [vmem:[#allocation4 + $0x108] sm:$0xff]
        %v651 = vld [vmem:[#allocation4 + $0x110] sm:$0xff]
        %v652 = vld [vmem:[#allocation4 + $0x118] sm:$0xff]
        %v653 = vld [vmem:[#allocation4 + $0x120] sm:$0xff]
        %v654 = vld [vmem:[#allocation4 + $0x128] sm:$0xff]
        %v655 = vld [vmem:[#allocation4 + $0x130] sm:$0xff]
        %v656 = vld [vmem:[#allocation4 + $0x138] sm:$0xff]
        %v657 = vld [vmem:[#allocation4 + $0x140] sm:$0xff]
        %v658 = vld [vmem:[#allocation4 + $0x148] sm:$0xff]
        %v659 = vld [vmem:[#allocation4 + $0x150] sm:$0xff]
        %v660 = vld [vmem:[#allocation4 + $0x158] sm:$0xff]
        %v661 = vld [vmem:[#allocation4 + $0x160] sm:$0xff]
        %v662 = vld [vmem:[#allocation4 + $0x168] sm:$0xff]
        %v663 = vld [vmem:[#allocation4 + $0x170] sm:$0xff]
        %v664 = vld [vmem:[#allocation4 + $0x178] sm:$0xff]
        %v665 = vld [vmem:[#allocation4 + $0x180] sm:$0xff]
        %v666 = vld [vmem:[#allocation4 + $0x188] sm:$0xff]
        %v667 = vld [vmem:[#allocation4 + $0x190] sm:$0xff]
        %v668 = vld [vmem:[#allocation4 + $0x198] sm:$0xff]
        %v669 = vld [vmem:[#allocation4 + $0x1a0] sm:$0xff]
        %v670 = vld [vmem:[#allocation4 + $0x1a8] sm:$0xff]
        %v671 = vld [vmem:[#allocation4 + $0x1b0] sm:$0xff]
        %v672 = vld [vmem:[#allocation4 + $0x1b8] sm:$0xff]
        %v673 = vld [vmem:[#allocation4 + $0x1c0] sm:$0xff]
        %v674 = vld [vmem:[#allocation4 + $0x1c8] sm:$0xff]
        %v675 = vld [vmem:[#allocation4 + $0x1d0] sm:$0xff]
        %v676 = vld [vmem:[#allocation4 + $0x1d8] sm:$0xff]
        %v677 = vld [vmem:[#allocation4 + $0x1e0] sm:$0xff]
        %v678 = vld [vmem:[#allocation4 + $0x1e8] sm:$0xff]
        %v679 = vld [vmem:[#allocation4 + $0x1f0] sm:$0xff]
        %v680 = vld [vmem:[#allocation4 + $0x1f8] sm:$0xff]
        %v681 = vld [vmem:[#allocation4 + $0x200] sm:$0xff]
        %v682 = vld [vmem:[#allocation4 + $0x208] sm:$0xff]
        %v683 = vld [vmem:[#allocation4 + $0x210] sm:$0xff]
        %v684 = vld [vmem:[#allocation4 + $0x218] sm:$0xff]
        %v685 = vld [vmem:[#allocation4 + $0x220] sm:$0xff]
        %v686 = vld [vmem:[#allocation4 + $0x228] sm:$0xff]
        %v687 = vld [vmem:[#allocation4 + $0x230] sm:$0xff]
        %v688 = vld [vmem:[#allocation4 + $0x238] sm:$0xff]
        %v689 = vld [vmem:[#allocation4 + $0x240] sm:$0xff]
        %v690 = vld [vmem:[#allocation4 + $0x248] sm:$0xff]
        %v691 = vld [vmem:[#allocation4 + $0x250] sm:$0xff]
        %v692 = vld [vmem:[#allocation4 + $0x258] sm:$0xff]
        %v693 = vld [vmem:[#allocation4 + $0x260] sm:$0xff]
        %v694 = vld [vmem:[#allocation4 + $0x268] sm:$0xff]
        %v695 = vld [vmem:[#allocation4 + $0x270] sm:$0xff]
        %v696 = vld [vmem:[#allocation4 + $0x278] sm:$0xff]
        %v697 = vld [vmem:[#allocation4 + $0x280] sm:$0xff]
        %v698 = vld [vmem:[#allocation4 + $0x288] sm:$0xff]
        %v699 = vld [vmem:[#allocation4 + $0x290] sm:$0xff]
        %v700 = vld [vmem:[#allocation4 + $0x298] sm:$0xff]
        %v701 = vld [vmem:[#allocation4 + $0x2a0] sm:$0xff]
        %v702 = vld [vmem:[#allocation4 + $0x2a8] sm:$0xff]
        %v703 = vld [vmem:[#allocation4 + $0x2b0] sm:$0xff]
        %v704 = vld [vmem:[#allocation4 + $0x2b8] sm:$0xff]
        %v705 = vld [vmem:[#allocation4 + $0x2c0] sm:$0xff]
        %v706 = vld [vmem:[#allocation4 + $0x2c8] sm:$0xff]
        %v707 = vld [vmem:[#allocation4 + $0x2d0] sm:$0xff]
        %v708 = vld [vmem:[#allocation4 + $0x2d8] sm:$0xff]
        %v709 = vld [vmem:[#allocation4 + $0x2e0] sm:$0xff]
        %v710 = vld [vmem:[#allocation4 + $0x2e8] sm:$0xff]
        %v711 = vld [vmem:[#allocation4 + $0x2f0] sm:$0xff]
        %v712 = vld [vmem:[#allocation4 + $0x2f8] sm:$0xff]
        %v713 = vld [vmem:[%s4] sm:$0x3f]
        %v715 = vperm.slane %v713, 0
        %v716 = vperm.slane %v713, 1
        %v717 = vperm.slane %v713, 2
        %v718 = vperm.slane %v713, 3
        %v719 = vperm.slane %v713, 4
        %v720 = vperm.slane %v713, 5
        %v823 = vunpack.c.l.b16 %v617
        %v824 = vunpack.c.h.b16 %v617
        %v825 = vunpack.c.l.b16 %v618
        %v826 = vunpack.c.h.b16 %v618
        %v827 = vunpack.c.l.b16 %v619
        %v828 = vunpack.c.h.b16 %v619
        %v829 = vunpack.c.l.b16 %v620
        %v830 = vunpack.c.h.b16 %v620
        %v831 = vunpack.c.l.b16 %v621
        %v832 = vunpack.c.h.b16 %v621
        %v833 = vunpack.c.l.b16 %v622
        %v834 = vunpack.c.h.b16 %v622
        %v835 = vunpack.c.l.b16 %v623
        %v836 = vunpack.c.h.b16 %v623
        %v837 = vunpack.c.l.b16 %v624
        %v838 = vunpack.c.h.b16 %v624
        %v839 = vunpack.c.l.b16 %v625
        %v840 = vunpack.c.h.b16 %v625
        %v841 = vunpack.c.l.b16 %v626
        %v842 = vunpack.c.h.b16 %v626
        %v843 = vunpack.c.l.b16 %v627
        %v844 = vunpack.c.h.b16 %v627
        %v845 = vunpack.c.l.b16 %v628
        %v846 = vunpack.c.h.b16 %v628
        %v847 = vunpack.c.l.b16 %v629
        %v848 = vunpack.c.h.b16 %v629
        %v849 = vunpack.c.l.b16 %v630
        %v850 = vunpack.c.h.b16 %v630
        %v851 = vunpack.c.l.b16 %v631
        %v852 = vunpack.c.h.b16 %v631
        %v853 = vunpack.c.l.b16 %v632
        %v854 = vunpack.c.h.b16 %v632
        %v855 = vunpack.c.l.b16 %v633
        %v856 = vunpack.c.h.b16 %v633
        %v857 = vunpack.c.l.b16 %v634
        %v858 = vunpack.c.h.b16 %v634
        %v859 = vunpack.c.l.b16 %v635
        %v860 = vunpack.c.h.b16 %v635
        %v861 = vunpack.c.l.b16 %v636
        %v862 = vunpack.c.h.b16 %v636
        %v863 = vunpack.c.l.b16 %v637
        %v864 = vunpack.c.h.b16 %v637
        %v865 = vunpack.c.l.b16 %v638
        %v866 = vunpack.c.h.b16 %v638
        %v867 = vunpack.c.l.b16 %v639
        %v868 = vunpack.c.h.b16 %v639
        %v869 = vunpack.c.l.b16 %v640
        %v870 = vunpack.c.h.b16 %v640
        %v871 = vunpack.c.l.b16 %v641
        %v872 = vunpack.c.h.b16 %v641
        %v873 = vunpack.c.l.b16 %v642
        %v874 = vunpack.c.h.b16 %v642
        %v875 = vunpack.c.l.b16 %v643
        %v876 = vunpack.c.h.b16 %v643
        %v877 = vunpack.c.l.b16 %v644
        %v878 = vunpack.c.h.b16 %v644
        %v879 = vunpack.c.l.b16 %v645
        %v880 = vunpack.c.h.b16 %v645
        %v881 = vunpack.c.l.b16 %v646
        %v882 = vunpack.c.h.b16 %v646
        %v883 = vunpack.c.l.b16 %v647
        %v884 = vunpack.c.h.b16 %v647
        %v885 = vunpack.c.l.b16 %v648
        %v886 = vunpack.c.h.b16 %v648
        %v887 = vunpack.c.l.b16 %v649
        %v888 = vunpack.c.h.b16 %v649
        %v889 = vunpack.c.l.b16 %v650
        %v890 = vunpack.c.h.b16 %v650
        %v891 = vunpack.c.l.b16 %v651
        %v892 = vunpack.c.h.b16 %v651
        %v893 = vunpack.c.l.b16 %v652
        %v894 = vunpack.c.h.b16 %v652
        %v895 = vunpack.c.l.b16 %v653
        %v896 = vunpack.c.h.b16 %v653
        %v897 = vunpack.c.l.b16 %v654
        %v898 = vunpack.c.h.b16 %v654
        %v899 = vunpack.c.l.b16 %v655
        %v900 = vunpack.c.h.b16 %v655
        %v901 = vunpack.c.l.b16 %v656
        %v902 = vunpack.c.h.b16 %v656
        %v903 = vunpack.c.l.b16 %v657
        %v904 = vunpack.c.h.b16 %v657
        %v905 = vunpack.c.l.b16 %v658
        %v906 = vunpack.c.h.b16 %v658
        %v907 = vunpack.c.l.b16 %v659
        %v908 = vunpack.c.h.b16 %v659
        %v909 = vunpack.c.l.b16 %v660
        %v910 = vunpack.c.h.b16 %v660
        %v911 = vunpack.c.l.b16 %v661
        %v912 = vunpack.c.h.b16 %v661
        %v913 = vunpack.c.l.b16 %v662
        %v914 = vunpack.c.h.b16 %v662
        %v915 = vunpack.c.l.b16 %v663
        %v916 = vunpack.c.h.b16 %v663
        %v917 = vunpack.c.l.b16 %v664
        %v918 = vunpack.c.h.b16 %v664
        %v919 = vunpack.c.l.b16 %v665
        %v920 = vunpack.c.h.b16 %v665
        %v921 = vunpack.c.l.b16 %v666
        %v922 = vunpack.c.h.b16 %v666
        %v923 = vunpack.c.l.b16 %v667
        %v924 = vunpack.c.h.b16 %v667
        %v925 = vunpack.c.l.b16 %v668
        %v926 = vunpack.c.h.b16 %v668
        %v927 = vunpack.c.l.b16 %v669
        %v928 = vunpack.c.h.b16 %v669
        %v929 = vunpack.c.l.b16 %v670
        %v930 = vunpack.c.h.b16 %v670
        %v931 = vunpack.c.l.b16 %v671
        %v932 = vunpack.c.h.b16 %v671
        %v933 = vunpack.c.l.b16 %v672
        %v934 = vunpack.c.h.b16 %v672
        %v935 = vunpack.c.l.b16 %v673
        %v936 = vunpack.c.h.b16 %v673
        %v937 = vunpack.c.l.b16 %v674
        %v938 = vunpack.c.h.b16 %v674
        %v939 = vunpack.c.l.b16 %v675
        %v940 = vunpack.c.h.b16 %v675
        %v941 = vunpack.c.l.b16 %v676
        %v942 = vunpack.c.h.b16 %v676
        %v943 = vunpack.c.l.b16 %v677
        %v944 = vunpack.c.h.b16 %v677
        %v945 = vunpack.c.l.b16 %v678
        %v946 = vunpack.c.h.b16 %v678
        %v947 = vunpack.c.l.b16 %v679
        %v948 = vunpack.c.h.b16 %v679
        %v949 = vunpack.c.l.b16 %v680
        %v950 = vunpack.c.h.b16 %v680
        %v951 = vunpack.c.l.b16 %v681
        %v952 = vunpack.c.h.b16 %v681
        %v953 = vunpack.c.l.b16 %v682
        %v954 = vunpack.c.h.b16 %v682
        %v955 = vunpack.c.l.b16 %v683
        %v956 = vunpack.c.h.b16 %v683
        %v957 = vunpack.c.l.b16 %v684
        %v958 = vunpack.c.h.b16 %v684
        %v959 = vunpack.c.l.b16 %v685
        %v960 = vunpack.c.h.b16 %v685
        %v961 = vunpack.c.l.b16 %v686
        %v962 = vunpack.c.h.b16 %v686
        %v963 = vunpack.c.l.b16 %v687
        %v964 = vunpack.c.h.b16 %v687
        %v965 = vunpack.c.l.b16 %v688
        %v966 = vunpack.c.h.b16 %v688
        %v967 = vunpack.c.l.b16 %v689
        %v968 = vunpack.c.h.b16 %v689
        %v969 = vunpack.c.l.b16 %v690
        %v970 = vunpack.c.h.b16 %v690
        %v971 = vunpack.c.l.b16 %v691
        %v972 = vunpack.c.h.b16 %v691
        %v973 = vunpack.c.l.b16 %v692
        %v974 = vunpack.c.h.b16 %v692
        %v975 = vunpack.c.l.b16 %v693
        %v976 = vunpack.c.h.b16 %v693
        %v977 = vunpack.c.l.b16 %v694
        %v978 = vunpack.c.h.b16 %v694
        %v979 = vunpack.c.l.b16 %v695
        %v980 = vunpack.c.h.b16 %v695
        %v981 = vunpack.c.l.b16 %v696
        %v982 = vunpack.c.h.b16 %v696
        %v983 = vunpack.c.l.b16 %v697
        %v984 = vunpack.c.h.b16 %v697
        %v985 = vunpack.c.l.b16 %v698
        %v986 = vunpack.c.h.b16 %v698
        %v987 = vunpack.c.l.b16 %v699
        %v988 = vunpack.c.h.b16 %v699
        %v989 = vunpack.c.l.b16 %v700
        %v990 = vunpack.c.h.b16 %v700
        %v991 = vunpack.c.l.b16 %v701
        %v992 = vunpack.c.h.b16 %v701
        %v993 = vunpack.c.l.b16 %v702
        %v994 = vunpack.c.h.b16 %v702
        %v995 = vunpack.c.l.b16 %v703
        %v996 = vunpack.c.h.b16 %v703
        %v997 = vunpack.c.l.b16 %v704
        %v998 = vunpack.c.h.b16 %v704
        %v999 = vunpack.c.l.b16 %v705
        %v1000 = vunpack.c.h.b16 %v705
        %v1001 = vunpack.c.l.b16 %v706
        %v1002 = vunpack.c.h.b16 %v706
        %v1003 = vunpack.c.l.b16 %v707
        %v1004 = vunpack.c.h.b16 %v707
        %v1005 = vunpack.c.l.b16 %v708
        %v1006 = vunpack.c.h.b16 %v708
        %v1007 = vunpack.c.l.b16 %v709
        %v1008 = vunpack.c.h.b16 %v709
        %v1009 = vunpack.c.l.b16 %v710
        %v1010 = vunpack.c.h.b16 %v710
        %v1011 = vunpack.c.l.b16 %v711
        %v1012 = vunpack.c.h.b16 %v711
        %v1013 = vunpack.c.l.b16 %v712
        %v1014 = vunpack.c.h.b16 %v712
        %v1015 = vpack.c.b16 %v829, %v823
        %v1016 = vpack.c.b16 %v830, %v824
        %v1017 = vpack.c.b16 %v831, %v825
        %v1018 = vpack.c.b16 %v832, %v826
        %v1019 = vpack.c.b16 %v833, %v827
        %v1020 = vpack.c.b16 %v834, %v828
        %v1021 = vpack.c.b16 %v841, %v835
        %v1022 = vpack.c.b16 %v842, %v836
        %v1023 = vpack.c.b16 %v843, %v837
        %v1024 = vpack.c.b16 %v844, %v838
        %v1025 = vpack.c.b16 %v845, %v839
        %v1026 = vpack.c.b16 %v846, %v840
        %v1027 = vpack.c.b16 %v853, %v847
        %v1028 = vpack.c.b16 %v854, %v848
        %v1029 = vpack.c.b16 %v855, %v849
        %v1030 = vpack.c.b16 %v856, %v850
        %v1031 = vpack.c.b16 %v857, %v851
        %v1032 = vpack.c.b16 %v858, %v852
        %v1033 = vpack.c.b16 %v865, %v859
        %v1034 = vpack.c.b16 %v866, %v860
        %v1035 = vpack.c.b16 %v867, %v861
        %v1036 = vpack.c.b16 %v868, %v862
        %v1037 = vpack.c.b16 %v869, %v863
        %v1038 = vpack.c.b16 %v870, %v864
        %v1039 = vpack.c.b16 %v877, %v871
        %v1040 = vpack.c.b16 %v878, %v872
        %v1041 = vpack.c.b16 %v879, %v873
        %v1042 = vpack.c.b16 %v880, %v874
        %v1043 = vpack.c.b16 %v881, %v875
        %v1044 = vpack.c.b16 %v882, %v876
        %v1045 = vpack.c.b16 %v889, %v883
        %v1046 = vpack.c.b16 %v890, %v884
        %v1047 = vpack.c.b16 %v891, %v885
        %v1048 = vpack.c.b16 %v892, %v886
        %v1049 = vpack.c.b16 %v893, %v887
        %v1050 = vpack.c.b16 %v894, %v888
        %v1051 = vpack.c.b16 %v901, %v895
        %v1052 = vpack.c.b16 %v902, %v896
        %v1053 = vpack.c.b16 %v903, %v897
        %v1054 = vpack.c.b16 %v904, %v898
        %v1055 = vpack.c.b16 %v905, %v899
        %v1056 = vpack.c.b16 %v906, %v900
        %v1057 = vpack.c.b16 %v913, %v907
        %v1058 = vpack.c.b16 %v914, %v908
        %v1059 = vpack.c.b16 %v915, %v909
        %v1060 = vpack.c.b16 %v916, %v910
        %v1061 = vpack.c.b16 %v917, %v911
        %v1062 = vpack.c.b16 %v918, %v912
        %v1063 = vpack.c.b16 %v925, %v919
        %v1064 = vpack.c.b16 %v926, %v920
        %v1065 = vpack.c.b16 %v927, %v921
        %v1066 = vpack.c.b16 %v928, %v922
        %v1067 = vpack.c.b16 %v929, %v923
        %v1068 = vpack.c.b16 %v930, %v924
        %v1069 = vpack.c.b16 %v937, %v931
        %v1070 = vpack.c.b16 %v938, %v932
        %v1071 = vpack.c.b16 %v939, %v933
        %v1072 = vpack.c.b16 %v940, %v934
        %v1073 = vpack.c.b16 %v941, %v935
        %v1074 = vpack.c.b16 %v942, %v936
        %v1075 = vpack.c.b16 %v949, %v943
        %v1076 = vpack.c.b16 %v950, %v944
        %v1077 = vpack.c.b16 %v951, %v945
        %v1078 = vpack.c.b16 %v952, %v946
        %v1079 = vpack.c.b16 %v953, %v947
        %v1080 = vpack.c.b16 %v954, %v948
        %v1081 = vpack.c.b16 %v961, %v955
        %v1082 = vpack.c.b16 %v962, %v956
        %v1083 = vpack.c.b16 %v963, %v957
        %v1084 = vpack.c.b16 %v964, %v958
        %v1085 = vpack.c.b16 %v965, %v959
        %v1086 = vpack.c.b16 %v966, %v960
        %v1087 = vpack.c.b16 %v973, %v967
        %v1088 = vpack.c.b16 %v974, %v968
        %v1089 = vpack.c.b16 %v975, %v969
        %v1090 = vpack.c.b16 %v976, %v970
        %v1091 = vpack.c.b16 %v977, %v971
        %v1092 = vpack.c.b16 %v978, %v972
        %v1093 = vpack.c.b16 %v985, %v979
        %v1094 = vpack.c.b16 %v986, %v980
        %v1095 = vpack.c.b16 %v987, %v981
        %v1096 = vpack.c.b16 %v988, %v982
        %v1097 = vpack.c.b16 %v989, %v983
        %v1098 = vpack.c.b16 %v990, %v984
        %v1099 = vpack.c.b16 %v997, %v991
        %v1100 = vpack.c.b16 %v998, %v992
        %v1101 = vpack.c.b16 %v999, %v993
        %v1102 = vpack.c.b16 %v1000, %v994
        %v1103 = vpack.c.b16 %v1001, %v995
        %v1104 = vpack.c.b16 %v1002, %v996
        %v1105 = vpack.c.b16 %v1009, %v1003
        %v1106 = vpack.c.b16 %v1010, %v1004
        %v1107 = vpack.c.b16 %v1011, %v1005
        %v1108 = vpack.c.b16 %v1012, %v1006
        %v1109 = vpack.c.b16 %v1013, %v1007
        %v1110 = vpack.c.b16 %v1014, %v1008
        %1207 = vmatpush.bf16.msra.mxu0 %v1057
        %1208 = vmatpush.bf16.msra.mxu0 %v1051
        %1209 = vmatpush.bf16.msra.mxu0 %v1045
        %1210 = vmatpush.bf16.msra.mxu0 %v1039
        %1211 = vmatpush.bf16.msra.mxu0 %v1033
        %1212 = vmatpush.bf16.msra.mxu0 %v1027
        %1213 = vmatpush.bf16.msra.mxu0 %v1021
        %1214 = vmatpush.bf16.msra.mxu0 %v1015
        %1215 = vmatmul.bf16.gmra.mxu0 %v615
        %v1216 = vpop.f32.mrf.mxu0
        %v1217 = vadd.f32 %v715, %v1216
        %v1218 = vpop.f32.mrf.mxu0
        %1219 = vdwg.mxu0
        %1220 = vmatpush.bf16.msra.mxu0 %v1105
        %1221 = vmatpush.bf16.msra.mxu0 %v1099
        %1222 = vmatpush.bf16.msra.mxu0 %v1093
        %1223 = vmatpush.bf16.msra.mxu0 %v1087
        %1224 = vmatpush.bf16.msra.mxu0 %v1081
        %1225 = vmatpush.bf16.msra.mxu0 %v1075
        %1226 = vmatpush.bf16.msra.mxu0 %v1069
        %1227 = vmatpush.bf16.msra.mxu0 %v1063
        %1228 = vmatmul.bf16.gmra.mxu0 %v616
        %v1229 = vpop.f32.mrf.mxu0
        %v1230 = vadd.f32 %v1217, %v1229
        %v1231 = vpop.f32.mrf.mxu0
        %1232 = vdwg.mxu0
        %1233 = vmatpush.bf16.msra.mxu0 %v1058
        %1234 = vmatpush.bf16.msra.mxu0 %v1052
        %1235 = vmatpush.bf16.msra.mxu0 %v1046
        %1236 = vmatpush.bf16.msra.mxu0 %v1040
        %1237 = vmatpush.bf16.msra.mxu0 %v1034
        %1238 = vmatpush.bf16.msra.mxu0 %v1028
        %1239 = vmatpush.bf16.msra.mxu0 %v1022
        %1240 = vmatpush.bf16.msra.mxu0 %v1016
        %1241 = vmatmul.bf16.gmra.mxu0 %v615
        %v1242 = vpop.f32.mrf.mxu0
        %v1243 = vadd.f32 %v716, %v1242
        %v1244 = vpop.f32.mrf.mxu0
        %1245 = vdwg.mxu0
        %1246 = vmatpush.bf16.msra.mxu0 %v1106
        %1247 = vmatpush.bf16.msra.mxu0 %v1100
        %1248 = vmatpush.bf16.msra.mxu0 %v1094
        %1249 = vmatpush.bf16.msra.mxu0 %v1088
        %1250 = vmatpush.bf16.msra.mxu0 %v1082
        %1251 = vmatpush.bf16.msra.mxu0 %v1076
        %1252 = vmatpush.bf16.msra.mxu0 %v1070
        %1253 = vmatpush.bf16.msra.mxu0 %v1064
        %1254 = vmatmul.bf16.gmra.mxu0 %v616
        %v1255 = vpop.f32.mrf.mxu0
        %v1256 = vadd.f32 %v1243, %v1255
        %v1257 = vpop.f32.mrf.mxu0
        %1258 = vdwg.mxu0
        %1259 = vmatpush.bf16.msra.mxu0 %v1059
        %1260 = vmatpush.bf16.msra.mxu0 %v1053
        %1261 = vmatpush.bf16.msra.mxu0 %v1047
        %1262 = vmatpush.bf16.msra.mxu0 %v1041
        %1263 = vmatpush.bf16.msra.mxu0 %v1035
        %1264 = vmatpush.bf16.msra.mxu0 %v1029
        %1265 = vmatpush.bf16.msra.mxu0 %v1023
        %1266 = vmatpush.bf16.msra.mxu0 %v1017
        %1267 = vmatmul.bf16.gmra.mxu0 %v615
        %v1268 = vpop.f32.mrf.mxu0
        %v1269 = vadd.f32 %v717, %v1268
        %v1270 = vpop.f32.mrf.mxu0
        %1271 = vdwg.mxu0
        %1272 = vmatpush.bf16.msra.mxu0 %v1107
        %1273 = vmatpush.bf16.msra.mxu0 %v1101
        %1274 = vmatpush.bf16.msra.mxu0 %v1095
        %1275 = vmatpush.bf16.msra.mxu0 %v1089
        %1276 = vmatpush.bf16.msra.mxu0 %v1083
        %1277 = vmatpush.bf16.msra.mxu0 %v1077
        %1278 = vmatpush.bf16.msra.mxu0 %v1071
        %1279 = vmatpush.bf16.msra.mxu0 %v1065
        %1280 = vmatmul.bf16.gmra.mxu0 %v616
        %v1281 = vpop.f32.mrf.mxu0
        %v1282 = vadd.f32 %v1269, %v1281
        %v1283 = vpop.f32.mrf.mxu0
        %1284 = vdwg.mxu0
        %1285 = vmatpush.bf16.msra.mxu0 %v1060
        %1286 = vmatpush.bf16.msra.mxu0 %v1054
        %1287 = vmatpush.bf16.msra.mxu0 %v1048
        %1288 = vmatpush.bf16.msra.mxu0 %v1042
        %1289 = vmatpush.bf16.msra.mxu0 %v1036
        %1290 = vmatpush.bf16.msra.mxu0 %v1030
        %1291 = vmatpush.bf16.msra.mxu0 %v1024
        %1292 = vmatpush.bf16.msra.mxu0 %v1018
        %1293 = vmatmul.bf16.gmra.mxu0 %v615
        %v1294 = vpop.f32.mrf.mxu0
        %v1295 = vadd.f32 %v718, %v1294
        %v1296 = vpop.f32.mrf.mxu0
        %1297 = vdwg.mxu0
        %1298 = vmatpush.bf16.msra.mxu0 %v1108
        %1299 = vmatpush.bf16.msra.mxu0 %v1102
        %1300 = vmatpush.bf16.msra.mxu0 %v1096
        %1301 = vmatpush.bf16.msra.mxu0 %v1090
        %1302 = vmatpush.bf16.msra.mxu0 %v1084
        %1303 = vmatpush.bf16.msra.mxu0 %v1078
        %1304 = vmatpush.bf16.msra.mxu0 %v1072
        %1305 = vmatpush.bf16.msra.mxu0 %v1066
        %1306 = vmatmul.bf16.gmra.mxu0 %v616
        %v1307 = vpop.f32.mrf.mxu0
        %v1308 = vadd.f32 %v1295, %v1307
        %v1309 = vpop.f32.mrf.mxu0
        %1310 = vdwg.mxu0
        %1311 = vmatpush.bf16.msra.mxu0 %v1061
        %1312 = vmatpush.bf16.msra.mxu0 %v1055
        %1313 = vmatpush.bf16.msra.mxu0 %v1049
        %1314 = vmatpush.bf16.msra.mxu0 %v1043
        %1315 = vmatpush.bf16.msra.mxu0 %v1037
        %1316 = vmatpush.bf16.msra.mxu0 %v1031
        %1317 = vmatpush.bf16.msra.mxu0 %v1025
        %1318 = vmatpush.bf16.msra.mxu0 %v1019
        %1319 = vmatmul.bf16.gmra.mxu0 %v615
        %v1320 = vpop.f32.mrf.mxu0
        %v1321 = vadd.f32 %v719, %v1320
        %v1322 = vpop.f32.mrf.mxu0
        %1323 = vdwg.mxu0
        %1324 = vmatpush.bf16.msra.mxu0 %v1109
        %1325 = vmatpush.bf16.msra.mxu0 %v1103
        %1326 = vmatpush.bf16.msra.mxu0 %v1097
        %1327 = vmatpush.bf16.msra.mxu0 %v1091
        %1328 = vmatpush.bf16.msra.mxu0 %v1085
        %1329 = vmatpush.bf16.msra.mxu0 %v1079
        %1330 = vmatpush.bf16.msra.mxu0 %v1073
        %1331 = vmatpush.bf16.msra.mxu0 %v1067
        %1332 = vmatmul.bf16.gmra.mxu0 %v616
        %v1333 = vpop.f32.mrf.mxu0
        %v1334 = vadd.f32 %v1321, %v1333
        %v1335 = vpop.f32.mrf.mxu0
        %1336 = vdwg.mxu0
        %1337 = vmatpush.bf16.msra.mxu0 %v1062
        %1338 = vmatpush.bf16.msra.mxu0 %v1056
        %1339 = vmatpush.bf16.msra.mxu0 %v1050
        %1340 = vmatpush.bf16.msra.mxu0 %v1044
        %1341 = vmatpush.bf16.msra.mxu0 %v1038
        %1342 = vmatpush.bf16.msra.mxu0 %v1032
        %1343 = vmatpush.bf16.msra.mxu0 %v1026
        %1344 = vmatpush.bf16.msra.mxu0 %v1020
        %1345 = vmatmul.bf16.gmra.mxu0 %v615
        %v1346 = vpop.f32.mrf.mxu0
        %v1347 = vadd.f32 %v720, %v1346
        %v1348 = vpop.f32.mrf.mxu0
        %1349 = vdwg.mxu0
        %1350 = vmatpush.bf16.msra.mxu0 %v1110
        %1351 = vmatpush.bf16.msra.mxu0 %v1104
        %1352 = vmatpush.bf16.msra.mxu0 %v1098
        %1353 = vmatpush.bf16.msra.mxu0 %v1092
        %1354 = vmatpush.bf16.msra.mxu0 %v1086
        %1355 = vmatpush.bf16.msra.mxu0 %v1080
        %1356 = vmatpush.bf16.msra.mxu0 %v1074
        %1357 = vmatpush.bf16.msra.mxu0 %v1068
        %1358 = vmatmul.bf16.gmra.mxu0 %v616
        %v1359 = vpop.f32.mrf.mxu0
        %v1360 = vadd.f32 %v1347, %v1359
        %v1361 = vpop.f32.mrf.mxu0
        %1362 = vdwg.mxu0
        %1363 = vst [vmem:[#allocation2] sm:$0xff] %v1230
        %1364 = vst [vmem:[#allocation2 + $0x8] sm:$0xff] %v1256
        %1365 = vst [vmem:[#allocation2 + $0x10] sm:$0xff] %v1282
        %1366 = vst [vmem:[#allocation2 + $0x18] sm:$0xff] %v1308
        %1367 = vst [vmem:[#allocation2 + $0x20] sm:$0xff] %v1334
        %1368 = vst [vmem:[#allocation2 + $0x28] sm:$0xff] %v1360
        %v1369 = vlaneseq
        %v1370 = vand.u32 %v1369, 127
        %vm1371 = vcmp.lt.s32.totalorder %v1370, 5
        %v1372 = vsel %vm1371, 0.0, -1e+30
        %v1373 = vld [vmem:[#allocation2] sm:$0xff]
        %v1374 = vpack.c.bf16 %v1373, %v1373
        %v1375 = vld [vmem:[#allocation2 + $0x10] sm:$0xff]
        %v1376 = vpack.c.bf16 %v1375, %v1375
        %v1377 = vld [vmem:[#allocation2 + $0x20] sm:$0xff]
        %v1378 = vpack.c.bf16 %v1377, %v1377
        %1379 = vmatpush.bf16.xpose.msra.mxu0 0
        %1380 = vmatpush.bf16.xpose.msra.mxu0 0
        %1381 = vmatpush.bf16.xpose.msra.mxu0 0
        %1382 = vmatpush.bf16.xpose.msra.mxu0 0
        %1383 = vmatpush.bf16.xpose.msra.mxu0 0
        %1384 = vmatpush.bf16.xpose.msra.mxu0 0
        %1385 = vmatpush.bf16.xpose.msra.mxu0 0
        %1386 = vmatpush.bf16.xpose.msra.mxu0 %v1376
        %1387 = vmatmul.bf16.gmra.mxu0 %v1374
        %v1388 = vpop.f32.mrf.mxu0
        %v1389 = vadd.f32 0.0, %v1388
        %v1390 = vpop.f32.mrf.mxu0
        %1391 = vdwg.mxu0
        %v1392 = vmul.f32 %v1389, 0.088388346
        %v1393 = vadd.f32 %v1392, %v1372
        %vm1394 = vcmask 64512
        %v1395 = vsel %vm1394, %v1393, -inf
        %1396 = vmax.xlane.f32.xlu0 %v1395
        %v1397 = vpop.xlane.xlu0 %1396
        %v1398 = vsub.f32 %v1393, %v1397
        %v1399 = vmul.f32 %v1398, 1.442695
        %v1400 = vpow.pop %v1399
        %v1401 = vsel %vm1394, %v1400, 0.0
        %1402 = vadd.xlane.f32.xlu0 %v1401
        %v1403 = vpop.xlane.xlu0 %1402
        %v1404 = vrcp.pop %v1403
        %v1405 = vmul.f32 %v1403, %v1404
        %v1406 = vsub.f32 1.0, %v1405
        %v1407 = vmul.f32 %v1404, %v1406
        %v1408 = vadd.f32 %v1404, %v1407
        %vm1409 = vweird.f32 %v1403
        %vm1410 = vweird.f32 %v1404
        %vm1411 = vmor %vm1409, %vm1410
        %v1412 = vsel %vm1411, %v1404, %v1408
        %v1413 = vand.u32 2147483647, %v1403
        %vm1414 = vcmp.eq.f32.partialorder %v1413, 8.507059e+37
        %v1415 = vand.u32 %v1403, 2147483648
        %v1416 = vor.u32 1.1754944e-38, %v1415
        %v1417 = vsel %vm1414, %v1416, %v1412
        %v1418 = vmul.f32 %v1400, %v1417
        %v1419 = vpack.c.bf16 %v1418, %v1418
        %v1421 = vsel %vm1394, %v1419, 0
        %vm1423 = vcmask 1043456
        %v1425 = vsel %vm1423, %v1378, 0
        %1427 = vmatpush.bf16.msra.mxu0 0
        %1428 = vmatpush.bf16.msra.mxu0 0
        %1429 = vmatpush.bf16.msra.mxu0 0
        %1430 = vmatpush.bf16.msra.mxu0 0
        %1431 = vmatpush.bf16.msra.mxu0 0
        %1432 = vmatpush.bf16.msra.mxu0 0
        %1433 = vmatpush.bf16.msra.mxu0 0
        %1434 = vmatpush.bf16.msra.mxu0 %v1425
        %1435 = vmatmul.bf16.gmra.mxu0 %v1421
        %v1436 = vpop.f32.mrf.mxu0
        %v1437 = vadd.f32 0.0, %v1436
        %v1438 = vpop.f32.mrf.mxu0
        %1439 = vdwg.mxu0
        %1440 = vst [vmem:[#allocation3] sm:$0xff] %v1437
        %v1441 = vld [vmem:[#allocation2 + $0x8] sm:$0xff]
        %v1442 = vpack.c.bf16 %v1441, %v1441
        %v1443 = vld [vmem:[#allocation2 + $0x18] sm:$0xff]
        %v1444 = vpack.c.bf16 %v1443, %v1443
        %v1445 = vld [vmem:[#allocation2 + $0x28] sm:$0xff]
        %v1446 = vpack.c.bf16 %v1445, %v1445
        %1447 = vmatpush.bf16.xpose.msra.mxu0 0
        %1448 = vmatpush.bf16.xpose.msra.mxu0 0
        %1449 = vmatpush.bf16.xpose.msra.mxu0 0
        %1450 = vmatpush.bf16.xpose.msra.mxu0 0
        %1451 = vmatpush.bf16.xpose.msra.mxu0 0
        %1452 = vmatpush.bf16.xpose.msra.mxu0 0
        %1453 = vmatpush.bf16.xpose.msra.mxu0 0
        %1454 = vmatpush.bf16.xpose.msra.mxu0 %v1444
        %1455 = vmatmul.bf16.gmra.mxu0 %v1442
        %v1456 = vpop.f32.mrf.mxu0
        %v1457 = vadd.f32 0.0, %v1456
        %v1458 = vpop.f32.mrf.mxu0
        %1459 = vdwg.mxu0
        %v1460 = vmul.f32 %v1457, 0.088388346
        %v1461 = vadd.f32 %v1460, %v1372
        %v1462 = vsel %vm1394, %v1461, -inf
        %1463 = vmax.xlane.f32.xlu0 %v1462
        %v1464 = vpop.xlane.xlu0 %1463
        %v1465 = vsub.f32 %v1461, %v1464
        %v1466 = vmul.f32 %v1465, 1.442695
        %v1467 = vpow.pop %v1466
        %v1468 = vsel %vm1394, %v1467, 0.0
        %1469 = vadd.xlane.f32.xlu0 %v1468
        %v1470 = vpop.xlane.xlu0 %1469
        %v1471 = vrcp.pop %v1470
        %v1472 = vmul.f32 %v1470, %v1471
        %v1473 = vsub.f32 1.0, %v1472
        %v1474 = vmul.f32 %v1471, %v1473
        %v1475 = vadd.f32 %v1471, %v1474
        %vm1476 = vweird.f32 %v1470
        %vm1477 = vweird.f32 %v1471
        %vm1478 = vmor %vm1476, %vm1477
        %v1479 = vsel %vm1478, %v1471, %v1475
        %v1480 = vand.u32 2147483647, %v1470
        %vm1481 = vcmp.eq.f32.partialorder %v1480, 8.507059e+37
        %v1482 = vand.u32 %v1470, 2147483648
        %v1483 = vor.u32 1.1754944e-38, %v1482
        %v1484 = vsel %vm1481, %v1483, %v1479
        %v1485 = vmul.f32 %v1467, %v1484
        %v1486 = vpack.c.bf16 %v1485, %v1485
        %v1488 = vsel %vm1394, %v1486, 0
        %v1491 = vsel %vm1423, %v1446, 0
        %1493 = vmatpush.bf16.msra.mxu0 0
        %1494 = vmatpush.bf16.msra.mxu0 0
        %1495 = vmatpush.bf16.msra.mxu0 0
        %1496 = vmatpush.bf16.msra.mxu0 0
        %1497 = vmatpush.bf16.msra.mxu0 0
        %1498 = vmatpush.bf16.msra.mxu0 0
        %1499 = vmatpush.bf16.msra.mxu0 0
        %1500 = vmatpush.bf16.msra.mxu0 %v1491
        %1501 = vmatmul.bf16.gmra.mxu0 %v1488
        %v1502 = vpop.f32.mrf.mxu0
        %v1503 = vadd.f32 0.0, %v1502
        %v1504 = vpop.f32.mrf.mxu0
        %1505 = vdwg.mxu0
        %1506 = vst [vmem:[#allocation3 + $0x8] sm:$0xff] %v1503
        %v1507 = vld [vmem:[#allocation3] sm:$0xff]
        %v1508 = vld [vmem:[#allocation3 + $0x8] sm:$0xff]
        %v1509 = vpack.c.bf16 %v1507, %v1507
        %v1510 = vpack.c.bf16 %v1508, %v1508
        %v1511 = vld [vmem:[#allocation6] sm:$0xff]
        %v1512 = vld [vmem:[#allocation6 + $0x8] sm:$0xff]
        %v1513 = vld [vmem:[#allocation6 + $0x10] sm:$0xff]
        %v1514 = vld [vmem:[#allocation6 + $0x18] sm:$0xff]
        %v1515 = vld [vmem:[#allocation6 + $0x20] sm:$0xff]
        %v1516 = vld [vmem:[#allocation6 + $0x28] sm:$0xff]
        %v1517 = vld [vmem:[#allocation6 + $0x30] sm:$0xff]
        %v1518 = vld [vmem:[#allocation6 + $0x38] sm:$0xff]
        %v1519 = vld [vmem:[#allocation6 + $0x40] sm:$0xff]
        %v1520 = vld [vmem:[#allocation6 + $0x48] sm:$0xff]
        %v1521 = vld [vmem:[#allocation6 + $0x50] sm:$0xff]
        %v1522 = vld [vmem:[#allocation6 + $0x58] sm:$0xff]
        %v1523 = vld [vmem:[#allocation6 + $0x60] sm:$0xff]
        %v1524 = vld [vmem:[#allocation6 + $0x68] sm:$0xff]
        %v1525 = vld [vmem:[#allocation6 + $0x70] sm:$0xff]
        %v1526 = vld [vmem:[#allocation6 + $0x78] sm:$0xff]
        %v1527 = vld [vmem:[#allocation6 + $0x80] sm:$0xff]
        %v1528 = vld [vmem:[#allocation6 + $0x88] sm:$0xff]
        %v1529 = vld [vmem:[#allocation6 + $0x90] sm:$0xff]
        %v1530 = vld [vmem:[#allocation6 + $0x98] sm:$0xff]
        %v1531 = vld [vmem:[#allocation6 + $0xa0] sm:$0xff]
        %v1532 = vld [vmem:[#allocation6 + $0xa8] sm:$0xff]
        %v1533 = vld [vmem:[#allocation6 + $0xb0] sm:$0xff]
        %v1534 = vld [vmem:[#allocation6 + $0xb8] sm:$0xff]
        %v1535 = vld [vmem:[#allocation6 + $0xc0] sm:$0xff]
        %v1536 = vld [vmem:[#allocation6 + $0xc8] sm:$0xff]
        %v1537 = vld [vmem:[#allocation6 + $0xd0] sm:$0xff]
        %v1538 = vld [vmem:[#allocation6 + $0xd8] sm:$0xff]
        %v1539 = vld [vmem:[#allocation6 + $0xe0] sm:$0xff]
        %v1540 = vld [vmem:[#allocation6 + $0xe8] sm:$0xff]
        %v1541 = vld [vmem:[#allocation6 + $0xf0] sm:$0xff]
        %v1542 = vld [vmem:[#allocation6 + $0xf8] sm:$0xff]
        %v1543 = vld [vmem:[%s6] sm:$0x3]
        %v1545 = vperm.slane %v1543, 0
        %v1546 = vperm.slane %v1543, 1
        %v1581 = vunpack.c.l.b16 %v1511
        %v1582 = vunpack.c.h.b16 %v1511
        %v1583 = vunpack.c.l.b16 %v1512
        %v1584 = vunpack.c.h.b16 %v1512
        %v1585 = vunpack.c.l.b16 %v1513
        %v1586 = vunpack.c.h.b16 %v1513
        %v1587 = vunpack.c.l.b16 %v1514
        %v1588 = vunpack.c.h.b16 %v1514
        %v1589 = vunpack.c.l.b16 %v1515
        %v1590 = vunpack.c.h.b16 %v1515
        %v1591 = vunpack.c.l.b16 %v1516
        %v1592 = vunpack.c.h.b16 %v1516
        %v1593 = vunpack.c.l.b16 %v1517
        %v1594 = vunpack.c.h.b16 %v1517
        %v1595 = vunpack.c.l.b16 %v1518
        %v1596 = vunpack.c.h.b16 %v1518
        %v1597 = vunpack.c.l.b16 %v1519
        %v1598 = vunpack.c.h.b16 %v1519
        %v1599 = vunpack.c.l.b16 %v1520
        %v1600 = vunpack.c.h.b16 %v1520
        %v1601 = vunpack.c.l.b16 %v1521
        %v1602 = vunpack.c.h.b16 %v1521
        %v1603 = vunpack.c.l.b16 %v1522
        %v1604 = vunpack.c.h.b16 %v1522
        %v1605 = vunpack.c.l.b16 %v1523
        %v1606 = vunpack.c.h.b16 %v1523
        %v1607 = vunpack.c.l.b16 %v1524
        %v1608 = vunpack.c.h.b16 %v1524
        %v1609 = vunpack.c.l.b16 %v1525
        %v1610 = vunpack.c.h.b16 %v1525
        %v1611 = vunpack.c.l.b16 %v1526
        %v1612 = vunpack.c.h.b16 %v1526
        %v1613 = vunpack.c.l.b16 %v1527
        %v1614 = vunpack.c.h.b16 %v1527
        %v1615 = vunpack.c.l.b16 %v1528
        %v1616 = vunpack.c.h.b16 %v1528
        %v1617 = vunpack.c.l.b16 %v1529
        %v1618 = vunpack.c.h.b16 %v1529
        %v1619 = vunpack.c.l.b16 %v1530
        %v1620 = vunpack.c.h.b16 %v1530
        %v1621 = vunpack.c.l.b16 %v1531
        %v1622 = vunpack.c.h.b16 %v1531
        %v1623 = vunpack.c.l.b16 %v1532
        %v1624 = vunpack.c.h.b16 %v1532
        %v1625 = vunpack.c.l.b16 %v1533
        %v1626 = vunpack.c.h.b16 %v1533
        %v1627 = vunpack.c.l.b16 %v1534
        %v1628 = vunpack.c.h.b16 %v1534
        %v1629 = vunpack.c.l.b16 %v1535
        %v1630 = vunpack.c.h.b16 %v1535
        %v1631 = vunpack.c.l.b16 %v1536
        %v1632 = vunpack.c.h.b16 %v1536
        %v1633 = vunpack.c.l.b16 %v1537
        %v1634 = vunpack.c.h.b16 %v1537
        %v1635 = vunpack.c.l.b16 %v1538
        %v1636 = vunpack.c.h.b16 %v1538
        %v1637 = vunpack.c.l.b16 %v1539
        %v1638 = vunpack.c.h.b16 %v1539
        %v1639 = vunpack.c.l.b16 %v1540
        %v1640 = vunpack.c.h.b16 %v1540
        %v1641 = vunpack.c.l.b16 %v1541
        %v1642 = vunpack.c.h.b16 %v1541
        %v1643 = vunpack.c.l.b16 %v1542
        %v1644 = vunpack.c.h.b16 %v1542
        %v1645 = vpack.c.b16 %v1583, %v1581
        %v1646 = vpack.c.b16 %v1584, %v1582
        %v1647 = vpack.c.b16 %v1587, %v1585
        %v1648 = vpack.c.b16 %v1588, %v1586
        %v1649 = vpack.c.b16 %v1591, %v1589
        %v1650 = vpack.c.b16 %v1592, %v1590
        %v1651 = vpack.c.b16 %v1595, %v1593
        %v1652 = vpack.c.b16 %v1596, %v1594
        %v1653 = vpack.c.b16 %v1599, %v1597
        %v1654 = vpack.c.b16 %v1600, %v1598
        %v1655 = vpack.c.b16 %v1603, %v1601
        %v1656 = vpack.c.b16 %v1604, %v1602
        %v1657 = vpack.c.b16 %v1607, %v1605
        %v1658 = vpack.c.b16 %v1608, %v1606
        %v1659 = vpack.c.b16 %v1611, %v1609
        %v1660 = vpack.c.b16 %v1612, %v1610
        %v1661 = vpack.c.b16 %v1615, %v1613
        %v1662 = vpack.c.b16 %v1616, %v1614
        %v1663 = vpack.c.b16 %v1619, %v1617
        %v1664 = vpack.c.b16 %v1620, %v1618
        %v1665 = vpack.c.b16 %v1623, %v1621
        %v1666 = vpack.c.b16 %v1624, %v1622
        %v1667 = vpack.c.b16 %v1627, %v1625
        %v1668 = vpack.c.b16 %v1628, %v1626
        %v1669 = vpack.c.b16 %v1631, %v1629
        %v1670 = vpack.c.b16 %v1632, %v1630
        %v1671 = vpack.c.b16 %v1635, %v1633
        %v1672 = vpack.c.b16 %v1636, %v1634
        %v1673 = vpack.c.b16 %v1639, %v1637
        %v1674 = vpack.c.b16 %v1640, %v1638
        %v1675 = vpack.c.b16 %v1643, %v1641
        %v1676 = vpack.c.b16 %v1644, %v1642
        %1709 = vmatpush.bf16.msra.mxu0 %v1659
        %1710 = vmatpush.bf16.msra.mxu0 %v1657
        %1711 = vmatpush.bf16.msra.mxu0 %v1655
        %1712 = vmatpush.bf16.msra.mxu0 %v1653
        %1713 = vmatpush.bf16.msra.mxu0 %v1651
        %1714 = vmatpush.bf16.msra.mxu0 %v1649
        %1715 = vmatpush.bf16.msra.mxu0 %v1647
        %1716 = vmatpush.bf16.msra.mxu0 %v1645
        %1717 = vmatmul.bf16.gmra.mxu0 %v1509
        %v1718 = vpop.f32.mrf.mxu0
        %v1719 = vadd.f32 %v1545, %v1718
        %v1720 = vpop.f32.mrf.mxu0
        %1721 = vdwg.mxu0
        %1722 = vmatpush.bf16.msra.mxu0 %v1675
        %1723 = vmatpush.bf16.msra.mxu0 %v1673
        %1724 = vmatpush.bf16.msra.mxu0 %v1671
        %1725 = vmatpush.bf16.msra.mxu0 %v1669
        %1726 = vmatpush.bf16.msra.mxu0 %v1667
        %1727 = vmatpush.bf16.msra.mxu0 %v1665
        %1728 = vmatpush.bf16.msra.mxu0 %v1663
        %1729 = vmatpush.bf16.msra.mxu0 %v1661
        %1730 = vmatmul.bf16.gmra.mxu0 %v1510
        %v1731 = vpop.f32.mrf.mxu0
        %v1732 = vadd.f32 %v1719, %v1731
        %v1733 = vpop.f32.mrf.mxu0
        %1734 = vdwg.mxu0
        %1735 = vmatpush.bf16.msra.mxu0 %v1660
        %1736 = vmatpush.bf16.msra.mxu0 %v1658
        %1737 = vmatpush.bf16.msra.mxu0 %v1656
        %1738 = vmatpush.bf16.msra.mxu0 %v1654
        %1739 = vmatpush.bf16.msra.mxu0 %v1652
        %1740 = vmatpush.bf16.msra.mxu0 %v1650
        %1741 = vmatpush.bf16.msra.mxu0 %v1648
        %1742 = vmatpush.bf16.msra.mxu0 %v1646
        %1743 = vmatmul.bf16.gmra.mxu0 %v1509
        %v1744 = vpop.f32.mrf.mxu0
        %v1745 = vadd.f32 %v1546, %v1744
        %v1746 = vpop.f32.mrf.mxu0
        %1747 = vdwg.mxu0
        %1748 = vmatpush.bf16.msra.mxu0 %v1676
        %1749 = vmatpush.bf16.msra.mxu0 %v1674
        %1750 = vmatpush.bf16.msra.mxu0 %v1672
        %1751 = vmatpush.bf16.msra.mxu0 %v1670
        %1752 = vmatpush.bf16.msra.mxu0 %v1668
        %1753 = vmatpush.bf16.msra.mxu0 %v1666
        %1754 = vmatpush.bf16.msra.mxu0 %v1664
        %1755 = vmatpush.bf16.msra.mxu0 %v1662
        %1756 = vmatmul.bf16.gmra.mxu0 %v1510
        %v1757 = vpop.f32.mrf.mxu0
        %v1758 = vadd.f32 %v1745, %v1757
        %v1759 = vpop.f32.mrf.mxu0
        %1760 = vdwg.mxu0
        %v1761 = vld [vmem:[%s7] sm:$0x3]
        %v1763 = vperm.slane %v1761, 0
        %v1764 = vperm.slane %v1761, 1
        %v1767 = vmul.f32 %v1732, %v1763
        %v1768 = vmul.f32 %v1758, %v1764
        %v1769 = vadd.f32 %v563, %v1767
        %v1770 = vadd.f32 %v564, %v1768
        %v1771 = vld [vmem:[%s8] sm:$0x3]
        %v1772 = vld [vmem:[%s9] sm:$0x3]
        %v1773 = vadd.f32 %v1769, %v1770
        %1774 = vadd.xlane.f32.xlu0 %v1773
        %v1775 = vpop.xlane.xlu0 %1774
        %v1776 = vmul.f32 %v1775, %v576
        %v1777 = vmul.f32 %v1769, %v1769
        %v1778 = vmul.f32 %v1770, %v1770
        %v1779 = vadd.f32 %v1777, %v1778
        %1780 = vadd.xlane.f32.xlu0 %v1779
        %v1781 = vpop.xlane.xlu0 %1780
        %v1782 = vmul.f32 %v1781, %v576
        %v1783 = vmul.f32 %v1776, %v1776
        %v1784 = vsub.f32 %v1782, %v1783
        %v1785 = vsub.f32 %v1769, %v1776
        %v1786 = vsub.f32 %v1770, %v1776
        %v1787 = vadd.f32 %v1784, 1e-06
        %v1788 = vrsqrt.pop %v1787
        %v1789 = vmul.f32 %v1788, %v1787
        %v1790 = vmul.f32 %v1789, %v1788
        %v1791 = vmul.f32 0.5, %v1790
        %v1792 = vsub.f32 1.5, %v1791
        %v1793 = vmul.f32 %v1788, %v1792
        %vm1794 = vweird.f32 %v1787
        %vm1795 = vweird.f32 %v1788
        %vm1796 = vmor %vm1794, %vm1795
        %v1797 = vsel %vm1796, %v1788, %v1793
        %v1798 = vmul.f32 %v1785, %v1797
        %v1799 = vmul.f32 %v1786, %v1797
        %v1801 = vperm.slane %v1771, 0
        %v1802 = vperm.slane %v1771, 1
        %v1805 = vmul.f32 %v1798, %v1801
        %v1806 = vmul.f32 %v1799, %v1802
        %v1808 = vperm.slane %v1772, 0
        %v1809 = vperm.slane %v1772, 1
        %v1812 = vadd.f32 %v1805, %v1808
        %v1813 = vadd.f32 %v1806, %v1809
        %v1814 = vpack.c.bf16 %v1812, %v1812
        %v1815 = vpack.c.bf16 %v1813, %v1813
        %v1816 = vld [vmem:[#allocation8] sm:$0xff]
        %v1817 = vld [vmem:[#allocation8 + $0x8] sm:$0xff]
        %v1818 = vld [vmem:[#allocation8 + $0x10] sm:$0xff]
        %v1819 = vld [vmem:[#allocation8 + $0x18] sm:$0xff]
        %v1820 = vld [vmem:[#allocation8 + $0x20] sm:$0xff]
        %v1821 = vld [vmem:[#allocation8 + $0x28] sm:$0xff]
        %v1822 = vld [vmem:[#allocation8 + $0x30] sm:$0xff]
        %v1823 = vld [vmem:[#allocation8 + $0x38] sm:$0xff]
        %v1824 = vld [vmem:[#allocation8 + $0x40] sm:$0xff]
        %v1825 = vld [vmem:[#allocation8 + $0x48] sm:$0xff]
        %v1826 = vld [vmem:[#allocation8 + $0x50] sm:$0xff]
        %v1827 = vld [vmem:[#allocation8 + $0x58] sm:$0xff]
        %v1828 = vld [vmem:[#allocation8 + $0x60] sm:$0xff]
        %v1829 = vld [vmem:[#allocation8 + $0x68] sm:$0xff]
        %v1830 = vld [vmem:[#allocation8 + $0x70] sm:$0xff]
        %v1831 = vld [vmem:[#allocation8 + $0x78] sm:$0xff]
        %v1832 = vld [vmem:[#allocation8 + $0x80] sm:$0xff]
        %v1833 = vld [vmem:[#allocation8 + $0x88] sm:$0xff]
        %v1834 = vld [vmem:[#allocation8 + $0x90] sm:$0xff]
        %v1835 = vld [vmem:[#allocation8 + $0x98] sm:$0xff]
        %v1836 = vld [vmem:[#allocation8 + $0xa0] sm:$0xff]
        %v1837 = vld [vmem:[#allocation8 + $0xa8] sm:$0xff]
        %v1838 = vld [vmem:[#allocation8 + $0xb0] sm:$0xff]
        %v1839 = vld [vmem:[#allocation8 + $0xb8] sm:$0xff]
        %v1840 = vld [vmem:[#allocation8 + $0xc0] sm:$0xff]
        %v1841 = vld [vmem:[#allocation8 + $0xc8] sm:$0xff]
        %v1842 = vld [vmem:[#allocation8 + $0xd0] sm:$0xff]
        %v1843 = vld [vmem:[#allocation8 + $0xd8] sm:$0xff]
        %v1844 = vld [vmem:[#allocation8 + $0xe0] sm:$0xff]
        %v1845 = vld [vmem:[#allocation8 + $0xe8] sm:$0xff]
        %v1846 = vld [vmem:[#allocation8 + $0xf0] sm:$0xff]
        %v1847 = vld [vmem:[#allocation8 + $0xf8] sm:$0xff]
        %v1848 = vld [vmem:[#allocation8 + $0x100] sm:$0xff]
        %v1849 = vld [vmem:[#allocation8 + $0x108] sm:$0xff]
        %v1850 = vld [vmem:[#allocation8 + $0x110] sm:$0xff]
        %v1851 = vld [vmem:[#allocation8 + $0x118] sm:$0xff]
        %v1852 = vld [vmem:[#allocation8 + $0x120] sm:$0xff]
        %v1853 = vld [vmem:[#allocation8 + $0x128] sm:$0xff]
        %v1854 = vld [vmem:[#allocation8 + $0x130] sm:$0xff]
        %v1855 = vld [vmem:[#allocation8 + $0x138] sm:$0xff]
        %v1856 = vld [vmem:[#allocation8 + $0x140] sm:$0xff]
        %v1857 = vld [vmem:[#allocation8 + $0x148] sm:$0xff]
        %v1858 = vld [vmem:[#allocation8 + $0x150] sm:$0xff]
        %v1859 = vld [vmem:[#allocation8 + $0x158] sm:$0xff]
        %v1860 = vld [vmem:[#allocation8 + $0x160] sm:$0xff]
        %v1861 = vld [vmem:[#allocation8 + $0x168] sm:$0xff]
        %v1862 = vld [vmem:[#allocation8 + $0x170] sm:$0xff]
        %v1863 = vld [vmem:[#allocation8 + $0x178] sm:$0xff]
        %v1864 = vld [vmem:[#allocation8 + $0x180] sm:$0xff]
        %v1865 = vld [vmem:[#allocation8 + $0x188] sm:$0xff]
        %v1866 = vld [vmem:[#allocation8 + $0x190] sm:$0xff]
        %v1867 = vld [vmem:[#allocation8 + $0x198] sm:$0xff]
        %v1868 = vld [vmem:[#allocation8 + $0x1a0] sm:$0xff]
        %v1869 = vld [vmem:[#allocation8 + $0x1a8] sm:$0xff]
        %v1870 = vld [vmem:[#allocation8 + $0x1b0] sm:$0xff]
        %v1871 = vld [vmem:[#allocation8 + $0x1b8] sm:$0xff]
        %v1872 = vld [vmem:[#allocation8 + $0x1c0] sm:$0xff]
        %v1873 = vld [vmem:[#allocation8 + $0x1c8] sm:$0xff]
        %v1874 = vld [vmem:[#allocation8 + $0x1d0] sm:$0xff]
        %v1875 = vld [vmem:[#allocation8 + $0x1d8] sm:$0xff]
        %v1876 = vld [vmem:[#allocation8 + $0x1e0] sm:$0xff]
        %v1877 = vld [vmem:[#allocation8 + $0x1e8] sm:$0xff]
        %v1878 = vld [vmem:[#allocation8 + $0x1f0] sm:$0xff]
        %v1879 = vld [vmem:[#allocation8 + $0x1f8] sm:$0xff]
        %v1880 = vld [vmem:[#allocation8 + $0x200] sm:$0xff]
        %v1881 = vld [vmem:[#allocation8 + $0x208] sm:$0xff]
        %v1882 = vld [vmem:[#allocation8 + $0x210] sm:$0xff]
        %v1883 = vld [vmem:[#allocation8 + $0x218] sm:$0xff]
        %v1884 = vld [vmem:[#allocation8 + $0x220] sm:$0xff]
        %v1885 = vld [vmem:[#allocation8 + $0x228] sm:$0xff]
        %v1886 = vld [vmem:[#allocation8 + $0x230] sm:$0xff]
        %v1887 = vld [vmem:[#allocation8 + $0x238] sm:$0xff]
        %v1888 = vld [vmem:[#allocation8 + $0x240] sm:$0xff]
        %v1889 = vld [vmem:[#allocation8 + $0x248] sm:$0xff]
        %v1890 = vld [vmem:[#allocation8 + $0x250] sm:$0xff]
        %v1891 = vld [vmem:[#allocation8 + $0x258] sm:$0xff]
        %v1892 = vld [vmem:[#allocation8 + $0x260] sm:$0xff]
        %v1893 = vld [vmem:[#allocation8 + $0x268] sm:$0xff]
        %v1894 = vld [vmem:[#allocation8 + $0x270] sm:$0xff]
        %v1895 = vld [vmem:[#allocation8 + $0x278] sm:$0xff]
        %v1896 = vld [vmem:[#allocation8 + $0x280] sm:$0xff]
        %v1897 = vld [vmem:[#allocation8 + $0x288] sm:$0xff]
        %v1898 = vld [vmem:[#allocation8 + $0x290] sm:$0xff]
        %v1899 = vld [vmem:[#allocation8 + $0x298] sm:$0xff]
        %v1900 = vld [vmem:[#allocation8 + $0x2a0] sm:$0xff]
        %v1901 = vld [vmem:[#allocation8 + $0x2a8] sm:$0xff]
        %v1902 = vld [vmem:[#allocation8 + $0x2b0] sm:$0xff]
        %v1903 = vld [vmem:[#allocation8 + $0x2b8] sm:$0xff]
        %v1904 = vld [vmem:[#allocation8 + $0x2c0] sm:$0xff]
        %v1905 = vld [vmem:[#allocation8 + $0x2c8] sm:$0xff]
        %v1906 = vld [vmem:[#allocation8 + $0x2d0] sm:$0xff]
        %v1907 = vld [vmem:[#allocation8 + $0x2d8] sm:$0xff]
        %v1908 = vld [vmem:[#allocation8 + $0x2e0] sm:$0xff]
        %v1909 = vld [vmem:[#allocation8 + $0x2e8] sm:$0xff]
        %v1910 = vld [vmem:[#allocation8 + $0x2f0] sm:$0xff]
        %v1911 = vld [vmem:[#allocation8 + $0x2f8] sm:$0xff]
        %v1912 = vld [vmem:[#allocation8 + $0x300] sm:$0xff]
        %v1913 = vld [vmem:[#allocation8 + $0x308] sm:$0xff]
        %v1914 = vld [vmem:[#allocation8 + $0x310] sm:$0xff]
        %v1915 = vld [vmem:[#allocation8 + $0x318] sm:$0xff]
        %v1916 = vld [vmem:[#allocation8 + $0x320] sm:$0xff]
        %v1917 = vld [vmem:[#allocation8 + $0x328] sm:$0xff]
        %v1918 = vld [vmem:[#allocation8 + $0x330] sm:$0xff]
        %v1919 = vld [vmem:[#allocation8 + $0x338] sm:$0xff]
        %v1920 = vld [vmem:[#allocation8 + $0x340] sm:$0xff]
        %v1921 = vld [vmem:[#allocation8 + $0x348] sm:$0xff]
        %v1922 = vld [vmem:[#allocation8 + $0x350] sm:$0xff]
        %v1923 = vld [vmem:[#allocation8 + $0x358] sm:$0xff]
        %v1924 = vld [vmem:[#allocation8 + $0x360] sm:$0xff]
        %v1925 = vld [vmem:[#allocation8 + $0x368] sm:$0xff]
        %v1926 = vld [vmem:[#allocation8 + $0x370] sm:$0xff]
        %v1927 = vld [vmem:[#allocation8 + $0x378] sm:$0xff]
        %v1928 = vld [vmem:[#allocation8 + $0x380] sm:$0xff]
        %v1929 = vld [vmem:[#allocation8 + $0x388] sm:$0xff]
        %v1930 = vld [vmem:[#allocation8 + $0x390] sm:$0xff]
        %v1931 = vld [vmem:[#allocation8 + $0x398] sm:$0xff]
        %v1932 = vld [vmem:[#allocation8 + $0x3a0] sm:$0xff]
        %v1933 = vld [vmem:[#allocation8 + $0x3a8] sm:$0xff]
        %v1934 = vld [vmem:[#allocation8 + $0x3b0] sm:$0xff]
        %v1935 = vld [vmem:[#allocation8 + $0x3b8] sm:$0xff]
        %v1936 = vld [vmem:[#allocation8 + $0x3c0] sm:$0xff]
        %v1937 = vld [vmem:[#allocation8 + $0x3c8] sm:$0xff]
        %v1938 = vld [vmem:[#allocation8 + $0x3d0] sm:$0xff]
        %v1939 = vld [vmem:[#allocation8 + $0x3d8] sm:$0xff]
        %v1940 = vld [vmem:[#allocation8 + $0x3e0] sm:$0xff]
        %v1941 = vld [vmem:[#allocation8 + $0x3e8] sm:$0xff]
        %v1942 = vld [vmem:[#allocation8 + $0x3f0] sm:$0xff]
        %v1943 = vld [vmem:[#allocation8 + $0x3f8] sm:$0xff]
        %v1944 = vld [vmem:[%s11] sm:$0xff]
        %v1946 = vperm.slane %v1944, 0
        %v1947 = vperm.slane %v1944, 1
        %v1948 = vperm.slane %v1944, 2
        %v1949 = vperm.slane %v1944, 3
        %v1950 = vperm.slane %v1944, 4
        %v1951 = vperm.slane %v1944, 5
        %v1952 = vperm.slane %v1944, 6
        %v1953 = vperm.slane %v1944, 7
        %v2090 = vunpack.c.l.b16 %v1816
        %v2091 = vunpack.c.h.b16 %v1816
        %v2092 = vunpack.c.l.b16 %v1817
        %v2093 = vunpack.c.h.b16 %v1817
        %v2094 = vunpack.c.l.b16 %v1818
        %v2095 = vunpack.c.h.b16 %v1818
        %v2096 = vunpack.c.l.b16 %v1819
        %v2097 = vunpack.c.h.b16 %v1819
        %v2098 = vunpack.c.l.b16 %v1820
        %v2099 = vunpack.c.h.b16 %v1820
        %v2100 = vunpack.c.l.b16 %v1821
        %v2101 = vunpack.c.h.b16 %v1821
        %v2102 = vunpack.c.l.b16 %v1822
        %v2103 = vunpack.c.h.b16 %v1822
        %v2104 = vunpack.c.l.b16 %v1823
        %v2105 = vunpack.c.h.b16 %v1823
        %v2106 = vunpack.c.l.b16 %v1824
        %v2107 = vunpack.c.h.b16 %v1824
        %v2108 = vunpack.c.l.b16 %v1825
        %v2109 = vunpack.c.h.b16 %v1825
        %v2110 = vunpack.c.l.b16 %v1826
        %v2111 = vunpack.c.h.b16 %v1826
        %v2112 = vunpack.c.l.b16 %v1827
        %v2113 = vunpack.c.h.b16 %v1827
        %v2114 = vunpack.c.l.b16 %v1828
        %v2115 = vunpack.c.h.b16 %v1828
        %v2116 = vunpack.c.l.b16 %v1829
        %v2117 = vunpack.c.h.b16 %v1829
        %v2118 = vunpack.c.l.b16 %v1830
        %v2119 = vunpack.c.h.b16 %v1830
        %v2120 = vunpack.c.l.b16 %v1831
        %v2121 = vunpack.c.h.b16 %v1831
        %v2122 = vunpack.c.l.b16 %v1832
        %v2123 = vunpack.c.h.b16 %v1832
        %v2124 = vunpack.c.l.b16 %v1833
        %v2125 = vunpack.c.h.b16 %v1833
        %v2126 = vunpack.c.l.b16 %v1834
        %v2127 = vunpack.c.h.b16 %v1834
        %v2128 = vunpack.c.l.b16 %v1835
        %v2129 = vunpack.c.h.b16 %v1835
        %v2130 = vunpack.c.l.b16 %v1836
        %v2131 = vunpack.c.h.b16 %v1836
        %v2132 = vunpack.c.l.b16 %v1837
        %v2133 = vunpack.c.h.b16 %v1837
        %v2134 = vunpack.c.l.b16 %v1838
        %v2135 = vunpack.c.h.b16 %v1838
        %v2136 = vunpack.c.l.b16 %v1839
        %v2137 = vunpack.c.h.b16 %v1839
        %v2138 = vunpack.c.l.b16 %v1840
        %v2139 = vunpack.c.h.b16 %v1840
        %v2140 = vunpack.c.l.b16 %v1841
        %v2141 = vunpack.c.h.b16 %v1841
        %v2142 = vunpack.c.l.b16 %v1842
        %v2143 = vunpack.c.h.b16 %v1842
        %v2144 = vunpack.c.l.b16 %v1843
        %v2145 = vunpack.c.h.b16 %v1843
        %v2146 = vunpack.c.l.b16 %v1844
        %v2147 = vunpack.c.h.b16 %v1844
        %v2148 = vunpack.c.l.b16 %v1845
        %v2149 = vunpack.c.h.b16 %v1845
        %v2150 = vunpack.c.l.b16 %v1846
        %v2151 = vunpack.c.h.b16 %v1846
        %v2152 = vunpack.c.l.b16 %v1847
        %v2153 = vunpack.c.h.b16 %v1847
        %v2154 = vunpack.c.l.b16 %v1848
        %v2155 = vunpack.c.h.b16 %v1848
        %v2156 = vunpack.c.l.b16 %v1849
        %v2157 = vunpack.c.h.b16 %v1849
        %v2158 = vunpack.c.l.b16 %v1850
        %v2159 = vunpack.c.h.b16 %v1850
        %v2160 = vunpack.c.l.b16 %v1851
        %v2161 = vunpack.c.h.b16 %v1851
        %v2162 = vunpack.c.l.b16 %v1852
        %v2163 = vunpack.c.h.b16 %v1852
        %v2164 = vunpack.c.l.b16 %v1853
        %v2165 = vunpack.c.h.b16 %v1853
        %v2166 = vunpack.c.l.b16 %v1854
        %v2167 = vunpack.c.h.b16 %v1854
        %v2168 = vunpack.c.l.b16 %v1855
        %v2169 = vunpack.c.h.b16 %v1855
        %v2170 = vunpack.c.l.b16 %v1856
        %v2171 = vunpack.c.h.b16 %v1856
        %v2172 = vunpack.c.l.b16 %v1857
        %v2173 = vunpack.c.h.b16 %v1857
        %v2174 = vunpack.c.l.b16 %v1858
        %v2175 = vunpack.c.h.b16 %v1858
        %v2176 = vunpack.c.l.b16 %v1859
        %v2177 = vunpack.c.h.b16 %v1859
        %v2178 = vunpack.c.l.b16 %v1860
        %v2179 = vunpack.c.h.b16 %v1860
        %v2180 = vunpack.c.l.b16 %v1861
        %v2181 = vunpack.c.h.b16 %v1861
        %v2182 = vunpack.c.l.b16 %v1862
        %v2183 = vunpack.c.h.b16 %v1862
        %v2184 = vunpack.c.l.b16 %v1863
        %v2185 = vunpack.c.h.b16 %v1863
        %v2186 = vunpack.c.l.b16 %v1864
        %v2187 = vunpack.c.h.b16 %v1864
        %v2188 = vunpack.c.l.b16 %v1865
        %v2189 = vunpack.c.h.b16 %v1865
        %v2190 = vunpack.c.l.b16 %v1866
        %v2191 = vunpack.c.h.b16 %v1866
        %v2192 = vunpack.c.l.b16 %v1867
        %v2193 = vunpack.c.h.b16 %v1867
        %v2194 = vunpack.c.l.b16 %v1868
        %v2195 = vunpack.c.h.b16 %v1868
        %v2196 = vunpack.c.l.b16 %v1869
        %v2197 = vunpack.c.h.b16 %v1869
        %v2198 = vunpack.c.l.b16 %v1870
        %v2199 = vunpack.c.h.b16 %v1870
        %v2200 = vunpack.c.l.b16 %v1871
        %v2201 = vunpack.c.h.b16 %v1871
        %v2202 = vunpack.c.l.b16 %v1872
        %v2203 = vunpack.c.h.b16 %v1872
        %v2204 = vunpack.c.l.b16 %v1873
        %v2205 = vunpack.c.h.b16 %v1873
        %v2206 = vunpack.c.l.b16 %v1874
        %v2207 = vunpack.c.h.b16 %v1874
        %v2208 = vunpack.c.l.b16 %v1875
        %v2209 = vunpack.c.h.b16 %v1875
        %v2210 = vunpack.c.l.b16 %v1876
        %v2211 = vunpack.c.h.b16 %v1876
        %v2212 = vunpack.c.l.b16 %v1877
        %v2213 = vunpack.c.h.b16 %v1877
        %v2214 = vunpack.c.l.b16 %v1878
        %v2215 = vunpack.c.h.b16 %v1878
        %v2216 = vunpack.c.l.b16 %v1879
        %v2217 = vunpack.c.h.b16 %v1879
        %v2218 = vunpack.c.l.b16 %v1880
        %v2219 = vunpack.c.h.b16 %v1880
        %v2220 = vunpack.c.l.b16 %v1881
        %v2221 = vunpack.c.h.b16 %v1881
        %v2222 = vunpack.c.l.b16 %v1882
        %v2223 = vunpack.c.h.b16 %v1882
        %v2224 = vunpack.c.l.b16 %v1883
        %v2225 = vunpack.c.h.b16 %v1883
        %v2226 = vunpack.c.l.b16 %v1884
        %v2227 = vunpack.c.h.b16 %v1884
        %v2228 = vunpack.c.l.b16 %v1885
        %v2229 = vunpack.c.h.b16 %v1885
        %v2230 = vunpack.c.l.b16 %v1886
        %v2231 = vunpack.c.h.b16 %v1886
        %v2232 = vunpack.c.l.b16 %v1887
        %v2233 = vunpack.c.h.b16 %v1887
        %v2234 = vunpack.c.l.b16 %v1888
        %v2235 = vunpack.c.h.b16 %v1888
        %v2236 = vunpack.c.l.b16 %v1889
        %v2237 = vunpack.c.h.b16 %v1889
        %v2238 = vunpack.c.l.b16 %v1890
        %v2239 = vunpack.c.h.b16 %v1890
        %v2240 = vunpack.c.l.b16 %v1891
        %v2241 = vunpack.c.h.b16 %v1891
        %v2242 = vunpack.c.l.b16 %v1892
        %v2243 = vunpack.c.h.b16 %v1892
        %v2244 = vunpack.c.l.b16 %v1893
        %v2245 = vunpack.c.h.b16 %v1893
        %v2246 = vunpack.c.l.b16 %v1894
        %v2247 = vunpack.c.h.b16 %v1894
        %v2248 = vunpack.c.l.b16 %v1895
        %v2249 = vunpack.c.h.b16 %v1895
        %v2250 = vunpack.c.l.b16 %v1896
        %v2251 = vunpack.c.h.b16 %v1896
        %v2252 = vunpack.c.l.b16 %v1897
        %v2253 = vunpack.c.h.b16 %v1897
        %v2254 = vunpack.c.l.b16 %v1898
        %v2255 = vunpack.c.h.b16 %v1898
        %v2256 = vunpack.c.l.b16 %v1899
        %v2257 = vunpack.c.h.b16 %v1899
        %v2258 = vunpack.c.l.b16 %v1900
        %v2259 = vunpack.c.h.b16 %v1900
        %v2260 = vunpack.c.l.b16 %v1901
        %v2261 = vunpack.c.h.b16 %v1901
        %v2262 = vunpack.c.l.b16 %v1902
        %v2263 = vunpack.c.h.b16 %v1902
        %v2264 = vunpack.c.l.b16 %v1903
        %v2265 = vunpack.c.h.b16 %v1903
        %v2266 = vunpack.c.l.b16 %v1904
        %v2267 = vunpack.c.h.b16 %v1904
        %v2268 = vunpack.c.l.b16 %v1905
        %v2269 = vunpack.c.h.b16 %v1905
        %v2270 = vunpack.c.l.b16 %v1906
        %v2271 = vunpack.c.h.b16 %v1906
        %v2272 = vunpack.c.l.b16 %v1907
        %v2273 = vunpack.c.h.b16 %v1907
        %v2274 = vunpack.c.l.b16 %v1908
        %v2275 = vunpack.c.h.b16 %v1908
        %v2276 = vunpack.c.l.b16 %v1909
        %v2277 = vunpack.c.h.b16 %v1909
        %v2278 = vunpack.c.l.b16 %v1910
        %v2279 = vunpack.c.h.b16 %v1910
        %v2280 = vunpack.c.l.b16 %v1911
        %v2281 = vunpack.c.h.b16 %v1911
        %v2282 = vunpack.c.l.b16 %v1912
        %v2283 = vunpack.c.h.b16 %v1912
        %v2284 = vunpack.c.l.b16 %v1913
        %v2285 = vunpack.c.h.b16 %v1913
        %v2286 = vunpack.c.l.b16 %v1914
        %v2287 = vunpack.c.h.b16 %v1914
        %v2288 = vunpack.c.l.b16 %v1915
        %v2289 = vunpack.c.h.b16 %v1915
        %v2290 = vunpack.c.l.b16 %v1916
        %v2291 = vunpack.c.h.b16 %v1916
        %v2292 = vunpack.c.l.b16 %v1917
        %v2293 = vunpack.c.h.b16 %v1917
        %v2294 = vunpack.c.l.b16 %v1918
        %v2295 = vunpack.c.h.b16 %v1918
        %v2296 = vunpack.c.l.b16 %v1919
        %v2297 = vunpack.c.h.b16 %v1919
        %v2298 = vunpack.c.l.b16 %v1920
        %v2299 = vunpack.c.h.b16 %v1920
        %v2300 = vunpack.c.l.b16 %v1921
        %v2301 = vunpack.c.h.b16 %v1921
        %v2302 = vunpack.c.l.b16 %v1922
        %v2303 = vunpack.c.h.b16 %v1922
        %v2304 = vunpack.c.l.b16 %v1923
        %v2305 = vunpack.c.h.b16 %v1923
        %v2306 = vunpack.c.l.b16 %v1924
        %v2307 = vunpack.c.h.b16 %v1924
        %v2308 = vunpack.c.l.b16 %v1925
        %v2309 = vunpack.c.h.b16 %v1925
        %v2310 = vunpack.c.l.b16 %v1926
        %v2311 = vunpack.c.h.b16 %v1926
        %v2312 = vunpack.c.l.b16 %v1927
        %v2313 = vunpack.c.h.b16 %v1927
        %v2314 = vunpack.c.l.b16 %v1928
        %v2315 = vunpack.c.h.b16 %v1928
        %v2316 = vunpack.c.l.b16 %v1929
        %v2317 = vunpack.c.h.b16 %v1929
        %v2318 = vunpack.c.l.b16 %v1930
        %v2319 = vunpack.c.h.b16 %v1930
        %v2320 = vunpack.c.l.b16 %v1931
        %v2321 = vunpack.c.h.b16 %v1931
        %v2322 = vunpack.c.l.b16 %v1932
        %v2323 = vunpack.c.h.b16 %v1932
        %v2324 = vunpack.c.l.b16 %v1933
        %v2325 = vunpack.c.h.b16 %v1933
        %v2326 = vunpack.c.l.b16 %v1934
        %v2327 = vunpack.c.h.b16 %v1934
        %v2328 = vunpack.c.l.b16 %v1935
        %v2329 = vunpack.c.h.b16 %v1935
        %v2330 = vunpack.c.l.b16 %v1936
        %v2331 = vunpack.c.h.b16 %v1936
        %v2332 = vunpack.c.l.b16 %v1937
        %v2333 = vunpack.c.h.b16 %v1937
        %v2334 = vunpack.c.l.b16 %v1938
        %v2335 = vunpack.c.h.b16 %v1938
        %v2336 = vunpack.c.l.b16 %v1939
        %v2337 = vunpack.c.h.b16 %v1939
        %v2338 = vunpack.c.l.b16 %v1940
        %v2339 = vunpack.c.h.b16 %v1940
        %v2340 = vunpack.c.l.b16 %v1941
        %v2341 = vunpack.c.h.b16 %v1941
        %v2342 = vunpack.c.l.b16 %v1942
        %v2343 = vunpack.c.h.b16 %v1942
        %v2344 = vunpack.c.l.b16 %v1943
        %v2345 = vunpack.c.h.b16 %v1943
        %v2346 = vpack.c.b16 %v2098, %v2090
        %v2347 = vpack.c.b16 %v2099, %v2091
        %v2348 = vpack.c.b16 %v2100, %v2092
        %v2349 = vpack.c.b16 %v2101, %v2093
        %v2350 = vpack.c.b16 %v2102, %v2094
        %v2351 = vpack.c.b16 %v2103, %v2095
        %v2352 = vpack.c.b16 %v2104, %v2096
        %v2353 = vpack.c.b16 %v2105, %v2097
        %v2354 = vpack.c.b16 %v2114, %v2106
        %v2355 = vpack.c.b16 %v2115, %v2107
        %v2356 = vpack.c.b16 %v2116, %v2108
        %v2357 = vpack.c.b16 %v2117, %v2109
        %v2358 = vpack.c.b16 %v2118, %v2110
        %v2359 = vpack.c.b16 %v2119, %v2111
        %v2360 = vpack.c.b16 %v2120, %v2112
        %v2361 = vpack.c.b16 %v2121, %v2113
        %v2362 = vpack.c.b16 %v2130, %v2122
        %v2363 = vpack.c.b16 %v2131, %v2123
        %v2364 = vpack.c.b16 %v2132, %v2124
        %v2365 = vpack.c.b16 %v2133, %v2125
        %v2366 = vpack.c.b16 %v2134, %v2126
        %v2367 = vpack.c.b16 %v2135, %v2127
        %v2368 = vpack.c.b16 %v2136, %v2128
        %v2369 = vpack.c.b16 %v2137, %v2129
        %v2370 = vpack.c.b16 %v2146, %v2138
        %v2371 = vpack.c.b16 %v2147, %v2139
        %v2372 = vpack.c.b16 %v2148, %v2140
        %v2373 = vpack.c.b16 %v2149, %v2141
        %v2374 = vpack.c.b16 %v2150, %v2142
        %v2375 = vpack.c.b16 %v2151, %v2143
        %v2376 = vpack.c.b16 %v2152, %v2144
        %v2377 = vpack.c.b16 %v2153, %v2145
        %v2378 = vpack.c.b16 %v2162, %v2154
        %v2379 = vpack.c.b16 %v2163, %v2155
        %v2380 = vpack.c.b16 %v2164, %v2156
        %v2381 = vpack.c.b16 %v2165, %v2157
        %v2382 = vpack.c.b16 %v2166, %v2158
        %v2383 = vpack.c.b16 %v2167, %v2159
        %v2384 = vpack.c.b16 %v2168, %v2160
        %v2385 = vpack.c.b16 %v2169, %v2161
        %v2386 = vpack.c.b16 %v2178, %v2170
        %v2387 = vpack.c.b16 %v2179, %v2171
        %v2388 = vpack.c.b16 %v2180, %v2172
        %v2389 = vpack.c.b16 %v2181, %v2173
        %v2390 = vpack.c.b16 %v2182, %v2174
        %v2391 = vpack.c.b16 %v2183, %v2175
        %v2392 = vpack.c.b16 %v2184, %v2176
        %v2393 = vpack.c.b16 %v2185, %v2177
        %v2394 = vpack.c.b16 %v2194, %v2186
        %v2395 = vpack.c.b16 %v2195, %v2187
        %v2396 = vpack.c.b16 %v2196, %v2188
        %v2397 = vpack.c.b16 %v2197, %v2189
        %v2398 = vpack.c.b16 %v2198, %v2190
        %v2399 = vpack.c.b16 %v2199, %v2191
        %v2400 = vpack.c.b16 %v2200, %v2192
        %v2401 = vpack.c.b16 %v2201, %v2193
        %v2402 = vpack.c.b16 %v2210, %v2202
        %v2403 = vpack.c.b16 %v2211, %v2203
        %v2404 = vpack.c.b16 %v2212, %v2204
        %v2405 = vpack.c.b16 %v2213, %v2205
        %v2406 = vpack.c.b16 %v2214, %v2206
        %v2407 = vpack.c.b16 %v2215, %v2207
        %v2408 = vpack.c.b16 %v2216, %v2208
        %v2409 = vpack.c.b16 %v2217, %v2209
        %v2410 = vpack.c.b16 %v2226, %v2218
        %v2411 = vpack.c.b16 %v2227, %v2219
        %v2412 = vpack.c.b16 %v2228, %v2220
        %v2413 = vpack.c.b16 %v2229, %v2221
        %v2414 = vpack.c.b16 %v2230, %v2222
        %v2415 = vpack.c.b16 %v2231, %v2223
        %v2416 = vpack.c.b16 %v2232, %v2224
        %v2417 = vpack.c.b16 %v2233, %v2225
        %v2418 = vpack.c.b16 %v2242, %v2234
        %v2419 = vpack.c.b16 %v2243, %v2235
        %v2420 = vpack.c.b16 %v2244, %v2236
        %v2421 = vpack.c.b16 %v2245, %v2237
        %v2422 = vpack.c.b16 %v2246, %v2238
        %v2423 = vpack.c.b16 %v2247, %v2239
        %v2424 = vpack.c.b16 %v2248, %v2240
        %v2425 = vpack.c.b16 %v2249, %v2241
        %v2426 = vpack.c.b16 %v2258, %v2250
        %v2427 = vpack.c.b16 %v2259, %v2251
        %v2428 = vpack.c.b16 %v2260, %v2252
        %v2429 = vpack.c.b16 %v2261, %v2253
        %v2430 = vpack.c.b16 %v2262, %v2254
        %v2431 = vpack.c.b16 %v2263, %v2255
        %v2432 = vpack.c.b16 %v2264, %v2256
        %v2433 = vpack.c.b16 %v2265, %v2257
        %v2434 = vpack.c.b16 %v2274, %v2266
        %v2435 = vpack.c.b16 %v2275, %v2267
        %v2436 = vpack.c.b16 %v2276, %v2268
        %v2437 = vpack.c.b16 %v2277, %v2269
        %v2438 = vpack.c.b16 %v2278, %v2270
        %v2439 = vpack.c.b16 %v2279, %v2271
        %v2440 = vpack.c.b16 %v2280, %v2272
        %v2441 = vpack.c.b16 %v2281, %v2273
        %v2442 = vpack.c.b16 %v2290, %v2282
        %v2443 = vpack.c.b16 %v2291, %v2283
        %v2444 = vpack.c.b16 %v2292, %v2284
        %v2445 = vpack.c.b16 %v2293, %v2285
        %v2446 = vpack.c.b16 %v2294, %v2286
        %v2447 = vpack.c.b16 %v2295, %v2287
        %v2448 = vpack.c.b16 %v2296, %v2288
        %v2449 = vpack.c.b16 %v2297, %v2289
        %v2450 = vpack.c.b16 %v2306, %v2298
        %v2451 = vpack.c.b16 %v2307, %v2299
        %v2452 = vpack.c.b16 %v2308, %v2300
        %v2453 = vpack.c.b16 %v2309, %v2301
        %v2454 = vpack.c.b16 %v2310, %v2302
        %v2455 = vpack.c.b16 %v2311, %v2303
        %v2456 = vpack.c.b16 %v2312, %v2304
        %v2457 = vpack.c.b16 %v2313, %v2305
        %v2458 = vpack.c.b16 %v2322, %v2314
        %v2459 = vpack.c.b16 %v2323, %v2315
        %v2460 = vpack.c.b16 %v2324, %v2316
        %v2461 = vpack.c.b16 %v2325, %v2317
        %v2462 = vpack.c.b16 %v2326, %v2318
        %v2463 = vpack.c.b16 %v2327, %v2319
        %v2464 = vpack.c.b16 %v2328, %v2320
        %v2465 = vpack.c.b16 %v2329, %v2321
        %v2466 = vpack.c.b16 %v2338, %v2330
        %v2467 = vpack.c.b16 %v2339, %v2331
        %v2468 = vpack.c.b16 %v2340, %v2332
        %v2469 = vpack.c.b16 %v2341, %v2333
        %v2470 = vpack.c.b16 %v2342, %v2334
        %v2471 = vpack.c.b16 %v2343, %v2335
        %v2472 = vpack.c.b16 %v2344, %v2336
        %v2473 = vpack.c.b16 %v2345, %v2337
        %2602 = vmatpush.bf16.msra.mxu0 %v2402
        %2603 = vmatpush.bf16.msra.mxu0 %v2394
        %2604 = vmatpush.bf16.msra.mxu0 %v2386
        %2605 = vmatpush.bf16.msra.mxu0 %v2378
        %2606 = vmatpush.bf16.msra.mxu0 %v2370
        %2607 = vmatpush.bf16.msra.mxu0 %v2362
        %2608 = vmatpush.bf16.msra.mxu0 %v2354
        %2609 = vmatpush.bf16.msra.mxu0 %v2346
        %2610 = vmatmul.bf16.gmra.mxu0 %v1814
        %v2611 = vpop.f32.mrf.mxu0
        %v2612 = vadd.f32 %v1946, %v2611
        %v2613 = vpop.f32.mrf.mxu0
        %2614 = vdwg.mxu0
        %2615 = vmatpush.bf16.msra.mxu0 %v2466
        %2616 = vmatpush.bf16.msra.mxu0 %v2458
        %2617 = vmatpush.bf16.msra.mxu0 %v2450
        %2618 = vmatpush.bf16.msra.mxu0 %v2442
        %2619 = vmatpush.bf16.msra.mxu0 %v2434
        %2620 = vmatpush.bf16.msra.mxu0 %v2426
        %2621 = vmatpush.bf16.msra.mxu0 %v2418
        %2622 = vmatpush.bf16.msra.mxu0 %v2410
        %2623 = vmatmul.bf16.gmra.mxu0 %v1815
        %v2624 = vpop.f32.mrf.mxu0
        %v2625 = vadd.f32 %v2612, %v2624
        %v2626 = vpop.f32.mrf.mxu0
        %2627 = vdwg.mxu0
        %2628 = vmatpush.bf16.msra.mxu0 %v2403
        %2629 = vmatpush.bf16.msra.mxu0 %v2395
        %2630 = vmatpush.bf16.msra.mxu0 %v2387
        %2631 = vmatpush.bf16.msra.mxu0 %v2379
        %2632 = vmatpush.bf16.msra.mxu0 %v2371
        %2633 = vmatpush.bf16.msra.mxu0 %v2363
        %2634 = vmatpush.bf16.msra.mxu0 %v2355
        %2635 = vmatpush.bf16.msra.mxu0 %v2347
        %2636 = vmatmul.bf16.gmra.mxu0 %v1814
        %v2637 = vpop.f32.mrf.mxu0
        %v2638 = vadd.f32 %v1947, %v2637
        %v2639 = vpop.f32.mrf.mxu0
        %2640 = vdwg.mxu0
        %2641 = vmatpush.bf16.msra.mxu0 %v2467
        %2642 = vmatpush.bf16.msra.mxu0 %v2459
        %2643 = vmatpush.bf16.msra.mxu0 %v2451
        %2644 = vmatpush.bf16.msra.mxu0 %v2443
        %2645 = vmatpush.bf16.msra.mxu0 %v2435
        %2646 = vmatpush.bf16.msra.mxu0 %v2427
        %2647 = vmatpush.bf16.msra.mxu0 %v2419
        %2648 = vmatpush.bf16.msra.mxu0 %v2411
        %2649 = vmatmul.bf16.gmra.mxu0 %v1815
        %v2650 = vpop.f32.mrf.mxu0
        %v2651 = vadd.f32 %v2638, %v2650
        %v2652 = vpop.f32.mrf.mxu0
        %2653 = vdwg.mxu0
        %2654 = vmatpush.bf16.msra.mxu0 %v2404
        %2655 = vmatpush.bf16.msra.mxu0 %v2396
        %2656 = vmatpush.bf16.msra.mxu0 %v2388
        %2657 = vmatpush.bf16.msra.mxu0 %v2380
        %2658 = vmatpush.bf16.msra.mxu0 %v2372
        %2659 = vmatpush.bf16.msra.mxu0 %v2364
        %2660 = vmatpush.bf16.msra.mxu0 %v2356
        %2661 = vmatpush.bf16.msra.mxu0 %v2348
        %2662 = vmatmul.bf16.gmra.mxu0 %v1814
        %v2663 = vpop.f32.mrf.mxu0
        %v2664 = vadd.f32 %v1948, %v2663
        %v2665 = vpop.f32.mrf.mxu0
        %2666 = vdwg.mxu0
        %2667 = vmatpush.bf16.msra.mxu0 %v2468
        %2668 = vmatpush.bf16.msra.mxu0 %v2460
        %2669 = vmatpush.bf16.msra.mxu0 %v2452
        %2670 = vmatpush.bf16.msra.mxu0 %v2444
        %2671 = vmatpush.bf16.msra.mxu0 %v2436
        %2672 = vmatpush.bf16.msra.mxu0 %v2428
        %2673 = vmatpush.bf16.msra.mxu0 %v2420
        %2674 = vmatpush.bf16.msra.mxu0 %v2412
        %2675 = vmatmul.bf16.gmra.mxu0 %v1815
        %v2676 = vpop.f32.mrf.mxu0
        %v2677 = vadd.f32 %v2664, %v2676
        %v2678 = vpop.f32.mrf.mxu0
        %2679 = vdwg.mxu0
        %2680 = vmatpush.bf16.msra.mxu0 %v2405
        %2681 = vmatpush.bf16.msra.mxu0 %v2397
        %2682 = vmatpush.bf16.msra.mxu0 %v2389
        %2683 = vmatpush.bf16.msra.mxu0 %v2381
        %2684 = vmatpush.bf16.msra.mxu0 %v2373
        %2685 = vmatpush.bf16.msra.mxu0 %v2365
        %2686 = vmatpush.bf16.msra.mxu0 %v2357
        %2687 = vmatpush.bf16.msra.mxu0 %v2349
        %2688 = vmatmul.bf16.gmra.mxu0 %v1814
        %v2689 = vpop.f32.mrf.mxu0
        %v2690 = vadd.f32 %v1949, %v2689
        %v2691 = vpop.f32.mrf.mxu0
        %2692 = vdwg.mxu0
        %2693 = vmatpush.bf16.msra.mxu0 %v2469
        %2694 = vmatpush.bf16.msra.mxu0 %v2461
        %2695 = vmatpush.bf16.msra.mxu0 %v2453
        %2696 = vmatpush.bf16.msra.mxu0 %v2445
        %2697 = vmatpush.bf16.msra.mxu0 %v2437
        %2698 = vmatpush.bf16.msra.mxu0 %v2429
        %2699 = vmatpush.bf16.msra.mxu0 %v2421
        %2700 = vmatpush.bf16.msra.mxu0 %v2413
        %2701 = vmatmul.bf16.gmra.mxu0 %v1815
        %v2702 = vpop.f32.mrf.mxu0
        %v2703 = vadd.f32 %v2690, %v2702
        %v2704 = vpop.f32.mrf.mxu0
        %2705 = vdwg.mxu0
        %2706 = vmatpush.bf16.msra.mxu0 %v2406
        %2707 = vmatpush.bf16.msra.mxu0 %v2398
        %2708 = vmatpush.bf16.msra.mxu0 %v2390
        %2709 = vmatpush.bf16.msra.mxu0 %v2382
        %2710 = vmatpush.bf16.msra.mxu0 %v2374
        %2711 = vmatpush.bf16.msra.mxu0 %v2366
        %2712 = vmatpush.bf16.msra.mxu0 %v2358
        %2713 = vmatpush.bf16.msra.mxu0 %v2350
        %2714 = vmatmul.bf16.gmra.mxu0 %v1814
        %v2715 = vpop.f32.mrf.mxu0
        %v2716 = vadd.f32 %v1950, %v2715
        %v2717 = vpop.f32.mrf.mxu0
        %2718 = vdwg.mxu0
        %2719 = vmatpush.bf16.msra.mxu0 %v2470
        %2720 = vmatpush.bf16.msra.mxu0 %v2462
        %2721 = vmatpush.bf16.msra.mxu0 %v2454
        %2722 = vmatpush.bf16.msra.mxu0 %v2446
        %2723 = vmatpush.bf16.msra.mxu0 %v2438
        %2724 = vmatpush.bf16.msra.mxu0 %v2430
        %2725 = vmatpush.bf16.msra.mxu0 %v2422
        %2726 = vmatpush.bf16.msra.mxu0 %v2414
        %2727 = vmatmul.bf16.gmra.mxu0 %v1815
        %v2728 = vpop.f32.mrf.mxu0
        %v2729 = vadd.f32 %v2716, %v2728
        %v2730 = vpop.f32.mrf.mxu0
        %2731 = vdwg.mxu0
        %2732 = vmatpush.bf16.msra.mxu0 %v2407
        %2733 = vmatpush.bf16.msra.mxu0 %v2399
        %2734 = vmatpush.bf16.msra.mxu0 %v2391
        %2735 = vmatpush.bf16.msra.mxu0 %v2383
        %2736 = vmatpush.bf16.msra.mxu0 %v2375
        %2737 = vmatpush.bf16.msra.mxu0 %v2367
        %2738 = vmatpush.bf16.msra.mxu0 %v2359
        %2739 = vmatpush.bf16.msra.mxu0 %v2351
        %2740 = vmatmul.bf16.gmra.mxu0 %v1814
        %v2741 = vpop.f32.mrf.mxu0
        %v2742 = vadd.f32 %v1951, %v2741
        %v2743 = vpop.f32.mrf.mxu0
        %2744 = vdwg.mxu0
        %2745 = vmatpush.bf16.msra.mxu0 %v2471
        %2746 = vmatpush.bf16.msra.mxu0 %v2463
        %2747 = vmatpush.bf16.msra.mxu0 %v2455
        %2748 = vmatpush.bf16.msra.mxu0 %v2447
        %2749 = vmatpush.bf16.msra.mxu0 %v2439
        %2750 = vmatpush.bf16.msra.mxu0 %v2431
        %2751 = vmatpush.bf16.msra.mxu0 %v2423
        %2752 = vmatpush.bf16.msra.mxu0 %v2415
        %2753 = vmatmul.bf16.gmra.mxu0 %v1815
        %v2754 = vpop.f32.mrf.mxu0
        %v2755 = vadd.f32 %v2742, %v2754
        %v2756 = vpop.f32.mrf.mxu0
        %2757 = vdwg.mxu0
        %2758 = vmatpush.bf16.msra.mxu0 %v2408
        %2759 = vmatpush.bf16.msra.mxu0 %v2400
        %2760 = vmatpush.bf16.msra.mxu0 %v2392
        %2761 = vmatpush.bf16.msra.mxu0 %v2384
        %2762 = vmatpush.bf16.msra.mxu0 %v2376
        %2763 = vmatpush.bf16.msra.mxu0 %v2368
        %2764 = vmatpush.bf16.msra.mxu0 %v2360
        %2765 = vmatpush.bf16.msra.mxu0 %v2352
        %2766 = vmatmul.bf16.gmra.mxu0 %v1814
        %v2767 = vpop.f32.mrf.mxu0
        %v2768 = vadd.f32 %v1952, %v2767
        %v2769 = vpop.f32.mrf.mxu0
        %2770 = vdwg.mxu0
        %2771 = vmatpush.bf16.msra.mxu0 %v2472
        %2772 = vmatpush.bf16.msra.mxu0 %v2464
        %2773 = vmatpush.bf16.msra.mxu0 %v2456
        %2774 = vmatpush.bf16.msra.mxu0 %v2448
        %2775 = vmatpush.bf16.msra.mxu0 %v2440
        %2776 = vmatpush.bf16.msra.mxu0 %v2432
        %2777 = vmatpush.bf16.msra.mxu0 %v2424
        %2778 = vmatpush.bf16.msra.mxu0 %v2416
        %2779 = vmatmul.bf16.gmra.mxu0 %v1815
        %v2780 = vpop.f32.mrf.mxu0
        %v2781 = vadd.f32 %v2768, %v2780
        %v2782 = vpop.f32.mrf.mxu0
        %2783 = vdwg.mxu0
        %2784 = vmatpush.bf16.msra.mxu0 %v2409
        %2785 = vmatpush.bf16.msra.mxu0 %v2401
        %2786 = vmatpush.bf16.msra.mxu0 %v2393
        %2787 = vmatpush.bf16.msra.mxu0 %v2385
        %2788 = vmatpush.bf16.msra.mxu0 %v2377
        %2789 = vmatpush.bf16.msra.mxu0 %v2369
        %2790 = vmatpush.bf16.msra.mxu0 %v2361
        %2791 = vmatpush.bf16.msra.mxu0 %v2353
        %2792 = vmatmul.bf16.gmra.mxu0 %v1814
        %v2793 = vpop.f32.mrf.mxu0
        %v2794 = vadd.f32 %v1953, %v2793
        %v2795 = vpop.f32.mrf.mxu0
        %2796 = vdwg.mxu0
        %2797 = vmatpush.bf16.msra.mxu0 %v2473
        %2798 = vmatpush.bf16.msra.mxu0 %v2465
        %2799 = vmatpush.bf16.msra.mxu0 %v2457
        %2800 = vmatpush.bf16.msra.mxu0 %v2449
        %2801 = vmatpush.bf16.msra.mxu0 %v2441
        %2802 = vmatpush.bf16.msra.mxu0 %v2433
        %2803 = vmatpush.bf16.msra.mxu0 %v2425
        %2804 = vmatpush.bf16.msra.mxu0 %v2417
        %2805 = vmatmul.bf16.gmra.mxu0 %v1815
        %v2806 = vpop.f32.mrf.mxu0
        %v2807 = vadd.f32 %v2794, %v2806
        %v2808 = vpop.f32.mrf.mxu0
        %2809 = vdwg.mxu0
        %v2810 = vmul.f32 %v2625, %v2625
        %v2811 = vmul.f32 %v2651, %v2651
        %v2812 = vmul.f32 %v2677, %v2677
        %v2813 = vmul.f32 %v2703, %v2703
        %v2814 = vmul.f32 %v2729, %v2729
        %v2815 = vmul.f32 %v2755, %v2755
        %v2816 = vmul.f32 %v2781, %v2781
        %v2817 = vmul.f32 %v2807, %v2807
        %v2818 = vmul.f32 %v2625, %v2810
        %v2819 = vmul.f32 %v2651, %v2811
        %v2820 = vmul.f32 %v2677, %v2812
        %v2821 = vmul.f32 %v2703, %v2813
        %v2822 = vmul.f32 %v2729, %v2814
        %v2823 = vmul.f32 %v2755, %v2815
        %v2824 = vmul.f32 %v2781, %v2816
        %v2825 = vmul.f32 %v2807, %v2817
        %v2826 = vmul.f32 %v2818, 0.044715
        %v2827 = vmul.f32 %v2819, 0.044715
        %v2828 = vmul.f32 %v2820, 0.044715
        %v2829 = vmul.f32 %v2821, 0.044715
        %v2830 = vmul.f32 %v2822, 0.044715
        %v2831 = vmul.f32 %v2823, 0.044715
        %v2832 = vmul.f32 %v2824, 0.044715
        %v2833 = vmul.f32 %v2825, 0.044715
        %v2834 = vadd.f32 %v2625, %v2826
        %v2835 = vadd.f32 %v2651, %v2827
        %v2836 = vadd.f32 %v2677, %v2828
        %v2837 = vadd.f32 %v2703, %v2829
        %v2838 = vadd.f32 %v2729, %v2830
        %v2839 = vadd.f32 %v2755, %v2831
        %v2840 = vadd.f32 %v2781, %v2832
        %v2841 = vadd.f32 %v2807, %v2833
        %v2842 = vmul.f32 %v2834, 0.7978846
        %v2843 = vmul.f32 %v2835, 0.7978846
        %v2844 = vmul.f32 %v2836, 0.7978846
        %v2845 = vmul.f32 %v2837, 0.7978846
        %v2846 = vmul.f32 %v2838, 0.7978846
        %v2847 = vmul.f32 %v2839, 0.7978846
        %v2848 = vmul.f32 %v2840, 0.7978846
        %v2849 = vmul.f32 %v2841, 0.7978846
        %v2850 = vtanh.pop %v2842
        %v2851 = vtanh.pop %v2843
        %v2852 = vtanh.pop %v2844
        %v2853 = vtanh.pop %v2845
        %v2854 = vtanh.pop %v2846
        %v2855 = vtanh.pop %v2847
        %v2856 = vtanh.pop %v2848
        %v2857 = vtanh.pop %v2849
        %v2858 = vadd.f32 %v2850, 1.0
        %v2859 = vadd.f32 %v2851, 1.0
        %v2860 = vadd.f32 %v2852, 1.0
        %v2861 = vadd.f32 %v2853, 1.0
        %v2862 = vadd.f32 %v2854, 1.0
        %v2863 = vadd.f32 %v2855, 1.0
        %v2864 = vadd.f32 %v2856, 1.0
        %v2865 = vadd.f32 %v2857, 1.0
        %v2866 = vmul.f32 %v2858, 0.5
        %v2867 = vmul.f32 %v2859, 0.5
        %v2868 = vmul.f32 %v2860, 0.5
        %v2869 = vmul.f32 %v2861, 0.5
        %v2870 = vmul.f32 %v2862, 0.5
        %v2871 = vmul.f32 %v2863, 0.5
        %v2872 = vmul.f32 %v2864, 0.5
        %v2873 = vmul.f32 %v2865, 0.5
        %v2874 = vmul.f32 %v2625, %v2866
        %v2875 = vmul.f32 %v2651, %v2867
        %v2876 = vmul.f32 %v2677, %v2868
        %v2877 = vmul.f32 %v2703, %v2869
        %v2878 = vmul.f32 %v2729, %v2870
        %v2879 = vmul.f32 %v2755, %v2871
        %v2880 = vmul.f32 %v2781, %v2872
        %v2881 = vmul.f32 %v2807, %v2873
        %v2882 = vpack.c.bf16 %v2874, %v2874
        %v2883 = vpack.c.bf16 %v2875, %v2875
        %v2884 = vpack.c.bf16 %v2876, %v2876
        %v2885 = vpack.c.bf16 %v2877, %v2877
        %v2886 = vpack.c.bf16 %v2878, %v2878
        %v2887 = vpack.c.bf16 %v2879, %v2879
        %v2888 = vpack.c.bf16 %v2880, %v2880
        %v2889 = vpack.c.bf16 %v2881, %v2881
        %v2890 = vld [vmem:[#allocation9] sm:$0xff]
        %v2891 = vld [vmem:[#allocation9 + $0x8] sm:$0xff]
        %v2892 = vld [vmem:[#allocation9 + $0x10] sm:$0xff]
        %v2893 = vld [vmem:[#allocation9 + $0x18] sm:$0xff]
        %v2894 = vld [vmem:[#allocation9 + $0x20] sm:$0xff]
        %v2895 = vld [vmem:[#allocation9 + $0x28] sm:$0xff]
        %v2896 = vld [vmem:[#allocation9 + $0x30] sm:$0xff]
        %v2897 = vld [vmem:[#allocation9 + $0x38] sm:$0xff]
        %v2898 = vld [vmem:[#allocation9 + $0x40] sm:$0xff]
        %v2899 = vld [vmem:[#allocation9 + $0x48] sm:$0xff]
        %v2900 = vld [vmem:[#allocation9 + $0x50] sm:$0xff]
        %v2901 = vld [vmem:[#allocation9 + $0x58] sm:$0xff]
        %v2902 = vld [vmem:[#allocation9 + $0x60] sm:$0xff]
        %v2903 = vld [vmem:[#allocation9 + $0x68] sm:$0xff]
        %v2904 = vld [vmem:[#allocation9 + $0x70] sm:$0xff]
        %v2905 = vld [vmem:[#allocation9 + $0x78] sm:$0xff]
        %v2906 = vld [vmem:[#allocation9 + $0x80] sm:$0xff]
        %v2907 = vld [vmem:[#allocation9 + $0x88] sm:$0xff]
        %v2908 = vld [vmem:[#allocation9 + $0x90] sm:$0xff]
        %v2909 = vld [vmem:[#allocation9 + $0x98] sm:$0xff]
        %v2910 = vld [vmem:[#allocation9 + $0xa0] sm:$0xff]
        %v2911 = vld [vmem:[#allocation9 + $0xa8] sm:$0xff]
        %v2912 = vld [vmem:[#allocation9 + $0xb0] sm:$0xff]
        %v2913 = vld [vmem:[#allocation9 + $0xb8] sm:$0xff]
        %v2914 = vld [vmem:[#allocation9 + $0xc0] sm:$0xff]
        %v2915 = vld [vmem:[#allocation9 + $0xc8] sm:$0xff]
        %v2916 = vld [vmem:[#allocation9 + $0xd0] sm:$0xff]
        %v2917 = vld [vmem:[#allocation9 + $0xd8] sm:$0xff]
        %v2918 = vld [vmem:[#allocation9 + $0xe0] sm:$0xff]
        %v2919 = vld [vmem:[#allocation9 + $0xe8] sm:$0xff]
        %v2920 = vld [vmem:[#allocation9 + $0xf0] sm:$0xff]
        %v2921 = vld [vmem:[#allocation9 + $0xf8] sm:$0xff]
        %v2922 = vld [vmem:[#allocation9 + $0x100] sm:$0xff]
        %v2923 = vld [vmem:[#allocation9 + $0x108] sm:$0xff]
        %v2924 = vld [vmem:[#allocation9 + $0x110] sm:$0xff]
        %v2925 = vld [vmem:[#allocation9 + $0x118] sm:$0xff]
        %v2926 = vld [vmem:[#allocation9 + $0x120] sm:$0xff]
        %v2927 = vld [vmem:[#allocation9 + $0x128] sm:$0xff]
        %v2928 = vld [vmem:[#allocation9 + $0x130] sm:$0xff]
        %v2929 = vld [vmem:[#allocation9 + $0x138] sm:$0xff]
        %v2930 = vld [vmem:[#allocation9 + $0x140] sm:$0xff]
        %v2931 = vld [vmem:[#allocation9 + $0x148] sm:$0xff]
        %v2932 = vld [vmem:[#allocation9 + $0x150] sm:$0xff]
        %v2933 = vld [vmem:[#allocation9 + $0x158] sm:$0xff]
        %v2934 = vld [vmem:[#allocation9 + $0x160] sm:$0xff]
        %v2935 = vld [vmem:[#allocation9 + $0x168] sm:$0xff]
        %v2936 = vld [vmem:[#allocation9 + $0x170] sm:$0xff]
        %v2937 = vld [vmem:[#allocation9 + $0x178] sm:$0xff]
        %v2938 = vld [vmem:[#allocation9 + $0x180] sm:$0xff]
        %v2939 = vld [vmem:[#allocation9 + $0x188] sm:$0xff]
        %v2940 = vld [vmem:[#allocation9 + $0x190] sm:$0xff]
        %v2941 = vld [vmem:[#allocation9 + $0x198] sm:$0xff]
        %v2942 = vld [vmem:[#allocation9 + $0x1a0] sm:$0xff]
        %v2943 = vld [vmem:[#allocation9 + $0x1a8] sm:$0xff]
        %v2944 = vld [vmem:[#allocation9 + $0x1b0] sm:$0xff]
        %v2945 = vld [vmem:[#allocation9 + $0x1b8] sm:$0xff]
        %v2946 = vld [vmem:[#allocation9 + $0x1c0] sm:$0xff]
        %v2947 = vld [vmem:[#allocation9 + $0x1c8] sm:$0xff]
        %v2948 = vld [vmem:[#allocation9 + $0x1d0] sm:$0xff]
        %v2949 = vld [vmem:[#allocation9 + $0x1d8] sm:$0xff]
        %v2950 = vld [vmem:[#allocation9 + $0x1e0] sm:$0xff]
        %v2951 = vld [vmem:[#allocation9 + $0x1e8] sm:$0xff]
        %v2952 = vld [vmem:[#allocation9 + $0x1f0] sm:$0xff]
        %v2953 = vld [vmem:[#allocation9 + $0x1f8] sm:$0xff]
        %v2954 = vld [vmem:[#allocation9 + $0x200] sm:$0xff]
        %v2955 = vld [vmem:[#allocation9 + $0x208] sm:$0xff]
        %v2956 = vld [vmem:[#allocation9 + $0x210] sm:$0xff]
        %v2957 = vld [vmem:[#allocation9 + $0x218] sm:$0xff]
        %v2958 = vld [vmem:[#allocation9 + $0x220] sm:$0xff]
        %v2959 = vld [vmem:[#allocation9 + $0x228] sm:$0xff]
        %v2960 = vld [vmem:[#allocation9 + $0x230] sm:$0xff]
        %v2961 = vld [vmem:[#allocation9 + $0x238] sm:$0xff]
        %v2962 = vld [vmem:[#allocation9 + $0x240] sm:$0xff]
        %v2963 = vld [vmem:[#allocation9 + $0x248] sm:$0xff]
        %v2964 = vld [vmem:[#allocation9 + $0x250] sm:$0xff]
        %v2965 = vld [vmem:[#allocation9 + $0x258] sm:$0xff]
        %v2966 = vld [vmem:[#allocation9 + $0x260] sm:$0xff]
        %v2967 = vld [vmem:[#allocation9 + $0x268] sm:$0xff]
        %v2968 = vld [vmem:[#allocation9 + $0x270] sm:$0xff]
        %v2969 = vld [vmem:[#allocation9 + $0x278] sm:$0xff]
        %v2970 = vld [vmem:[#allocation9 + $0x280] sm:$0xff]
        %v2971 = vld [vmem:[#allocation9 + $0x288] sm:$0xff]
        %v2972 = vld [vmem:[#allocation9 + $0x290] sm:$0xff]
        %v2973 = vld [vmem:[#allocation9 + $0x298] sm:$0xff]
        %v2974 = vld [vmem:[#allocation9 + $0x2a0] sm:$0xff]
        %v2975 = vld [vmem:[#allocation9 + $0x2a8] sm:$0xff]
        %v2976 = vld [vmem:[#allocation9 + $0x2b0] sm:$0xff]
        %v2977 = vld [vmem:[#allocation9 + $0x2b8] sm:$0xff]
        %v2978 = vld [vmem:[#allocation9 + $0x2c0] sm:$0xff]
        %v2979 = vld [vmem:[#allocation9 + $0x2c8] sm:$0xff]
        %v2980 = vld [vmem:[#allocation9 + $0x2d0] sm:$0xff]
        %v2981 = vld [vmem:[#allocation9 + $0x2d8] sm:$0xff]
        %v2982 = vld [vmem:[#allocation9 + $0x2e0] sm:$0xff]
        %v2983 = vld [vmem:[#allocation9 + $0x2e8] sm:$0xff]
        %v2984 = vld [vmem:[#allocation9 + $0x2f0] sm:$0xff]
        %v2985 = vld [vmem:[#allocation9 + $0x2f8] sm:$0xff]
        %v2986 = vld [vmem:[#allocation9 + $0x300] sm:$0xff]
        %v2987 = vld [vmem:[#allocation9 + $0x308] sm:$0xff]
        %v2988 = vld [vmem:[#allocation9 + $0x310] sm:$0xff]
        %v2989 = vld [vmem:[#allocation9 + $0x318] sm:$0xff]
        %v2990 = vld [vmem:[#allocation9 + $0x320] sm:$0xff]
        %v2991 = vld [vmem:[#allocation9 + $0x328] sm:$0xff]
        %v2992 = vld [vmem:[#allocation9 + $0x330] sm:$0xff]
        %v2993 = vld [vmem:[#allocation9 + $0x338] sm:$0xff]
        %v2994 = vld [vmem:[#allocation9 + $0x340] sm:$0xff]
        %v2995 = vld [vmem:[#allocation9 + $0x348] sm:$0xff]
        %v2996 = vld [vmem:[#allocation9 + $0x350] sm:$0xff]
        %v2997 = vld [vmem:[#allocation9 + $0x358] sm:$0xff]
        %v2998 = vld [vmem:[#allocation9 + $0x360] sm:$0xff]
        %v2999 = vld [vmem:[#allocation9 + $0x368] sm:$0xff]
        %v3000 = vld [vmem:[#allocation9 + $0x370] sm:$0xff]
        %v3001 = vld [vmem:[#allocation9 + $0x378] sm:$0xff]
        %v3002 = vld [vmem:[#allocation9 + $0x380] sm:$0xff]
        %v3003 = vld [vmem:[#allocation9 + $0x388] sm:$0xff]
        %v3004 = vld [vmem:[#allocation9 + $0x390] sm:$0xff]
        %v3005 = vld [vmem:[#allocation9 + $0x398] sm:$0xff]
        %v3006 = vld [vmem:[#allocation9 + $0x3a0] sm:$0xff]
        %v3007 = vld [vmem:[#allocation9 + $0x3a8] sm:$0xff]
        %v3008 = vld [vmem:[#allocation9 + $0x3b0] sm:$0xff]
        %v3009 = vld [vmem:[#allocation9 + $0x3b8] sm:$0xff]
        %v3010 = vld [vmem:[#allocation9 + $0x3c0] sm:$0xff]
        %v3011 = vld [vmem:[#allocation9 + $0x3c8] sm:$0xff]
        %v3012 = vld [vmem:[#allocation9 + $0x3d0] sm:$0xff]
        %v3013 = vld [vmem:[#allocation9 + $0x3d8] sm:$0xff]
        %v3014 = vld [vmem:[#allocation9 + $0x3e0] sm:$0xff]
        %v3015 = vld [vmem:[#allocation9 + $0x3e8] sm:$0xff]
        %v3016 = vld [vmem:[#allocation9 + $0x3f0] sm:$0xff]
        %v3017 = vld [vmem:[#allocation9 + $0x3f8] sm:$0xff]
        %v3018 = vld [vmem:[%s13] sm:$0x3]
        %v3020 = vperm.slane %v3018, 0
        %v3021 = vperm.slane %v3018, 1
        %v3152 = vunpack.c.l.b16 %v2890
        %v3153 = vunpack.c.h.b16 %v2890
        %v3154 = vunpack.c.l.b16 %v2891
        %v3155 = vunpack.c.h.b16 %v2891
        %v3156 = vunpack.c.l.b16 %v2892
        %v3157 = vunpack.c.h.b16 %v2892
        %v3158 = vunpack.c.l.b16 %v2893
        %v3159 = vunpack.c.h.b16 %v2893
        %v3160 = vunpack.c.l.b16 %v2894
        %v3161 = vunpack.c.h.b16 %v2894
        %v3162 = vunpack.c.l.b16 %v2895
        %v3163 = vunpack.c.h.b16 %v2895
        %v3164 = vunpack.c.l.b16 %v2896
        %v3165 = vunpack.c.h.b16 %v2896
        %v3166 = vunpack.c.l.b16 %v2897
        %v3167 = vunpack.c.h.b16 %v2897
        %v3168 = vunpack.c.l.b16 %v2898
        %v3169 = vunpack.c.h.b16 %v2898
        %v3170 = vunpack.c.l.b16 %v2899
        %v3171 = vunpack.c.h.b16 %v2899
        %v3172 = vunpack.c.l.b16 %v2900
        %v3173 = vunpack.c.h.b16 %v2900
        %v3174 = vunpack.c.l.b16 %v2901
        %v3175 = vunpack.c.h.b16 %v2901
        %v3176 = vunpack.c.l.b16 %v2902
        %v3177 = vunpack.c.h.b16 %v2902
        %v3178 = vunpack.c.l.b16 %v2903
        %v3179 = vunpack.c.h.b16 %v2903
        %v3180 = vunpack.c.l.b16 %v2904
        %v3181 = vunpack.c.h.b16 %v2904
        %v3182 = vunpack.c.l.b16 %v2905
        %v3183 = vunpack.c.h.b16 %v2905
        %v3184 = vunpack.c.l.b16 %v2906
        %v3185 = vunpack.c.h.b16 %v2906
        %v3186 = vunpack.c.l.b16 %v2907
        %v3187 = vunpack.c.h.b16 %v2907
        %v3188 = vunpack.c.l.b16 %v2908
        %v3189 = vunpack.c.h.b16 %v2908
        %v3190 = vunpack.c.l.b16 %v2909
        %v3191 = vunpack.c.h.b16 %v2909
        %v3192 = vunpack.c.l.b16 %v2910
        %v3193 = vunpack.c.h.b16 %v2910
        %v3194 = vunpack.c.l.b16 %v2911
        %v3195 = vunpack.c.h.b16 %v2911
        %v3196 = vunpack.c.l.b16 %v2912
        %v3197 = vunpack.c.h.b16 %v2912
        %v3198 = vunpack.c.l.b16 %v2913
        %v3199 = vunpack.c.h.b16 %v2913
        %v3200 = vunpack.c.l.b16 %v2914
        %v3201 = vunpack.c.h.b16 %v2914
        %v3202 = vunpack.c.l.b16 %v2915
        %v3203 = vunpack.c.h.b16 %v2915
        %v3204 = vunpack.c.l.b16 %v2916
        %v3205 = vunpack.c.h.b16 %v2916
        %v3206 = vunpack.c.l.b16 %v2917
        %v3207 = vunpack.c.h.b16 %v2917
        %v3208 = vunpack.c.l.b16 %v2918
        %v3209 = vunpack.c.h.b16 %v2918
        %v3210 = vunpack.c.l.b16 %v2919
        %v3211 = vunpack.c.h.b16 %v2919
        %v3212 = vunpack.c.l.b16 %v2920
        %v3213 = vunpack.c.h.b16 %v2920
        %v3214 = vunpack.c.l.b16 %v2921
        %v3215 = vunpack.c.h.b16 %v2921
        %v3216 = vunpack.c.l.b16 %v2922
        %v3217 = vunpack.c.h.b16 %v2922
        %v3218 = vunpack.c.l.b16 %v2923
        %v3219 = vunpack.c.h.b16 %v2923
        %v3220 = vunpack.c.l.b16 %v2924
        %v3221 = vunpack.c.h.b16 %v2924
        %v3222 = vunpack.c.l.b16 %v2925
        %v3223 = vunpack.c.h.b16 %v2925
        %v3224 = vunpack.c.l.b16 %v2926
        %v3225 = vunpack.c.h.b16 %v2926
        %v3226 = vunpack.c.l.b16 %v2927
        %v3227 = vunpack.c.h.b16 %v2927
        %v3228 = vunpack.c.l.b16 %v2928
        %v3229 = vunpack.c.h.b16 %v2928
        %v3230 = vunpack.c.l.b16 %v2929
        %v3231 = vunpack.c.h.b16 %v2929
        %v3232 = vunpack.c.l.b16 %v2930
        %v3233 = vunpack.c.h.b16 %v2930
        %v3234 = vunpack.c.l.b16 %v2931
        %v3235 = vunpack.c.h.b16 %v2931
        %v3236 = vunpack.c.l.b16 %v2932
        %v3237 = vunpack.c.h.b16 %v2932
        %v3238 = vunpack.c.l.b16 %v2933
        %v3239 = vunpack.c.h.b16 %v2933
        %v3240 = vunpack.c.l.b16 %v2934
        %v3241 = vunpack.c.h.b16 %v2934
        %v3242 = vunpack.c.l.b16 %v2935
        %v3243 = vunpack.c.h.b16 %v2935
        %v3244 = vunpack.c.l.b16 %v2936
        %v3245 = vunpack.c.h.b16 %v2936
        %v3246 = vunpack.c.l.b16 %v2937
        %v3247 = vunpack.c.h.b16 %v2937
        %v3248 = vunpack.c.l.b16 %v2938
        %v3249 = vunpack.c.h.b16 %v2938
        %v3250 = vunpack.c.l.b16 %v2939
        %v3251 = vunpack.c.h.b16 %v2939
        %v3252 = vunpack.c.l.b16 %v2940
        %v3253 = vunpack.c.h.b16 %v2940
        %v3254 = vunpack.c.l.b16 %v2941
        %v3255 = vunpack.c.h.b16 %v2941
        %v3256 = vunpack.c.l.b16 %v2942
        %v3257 = vunpack.c.h.b16 %v2942
        %v3258 = vunpack.c.l.b16 %v2943
        %v3259 = vunpack.c.h.b16 %v2943
        %v3260 = vunpack.c.l.b16 %v2944
        %v3261 = vunpack.c.h.b16 %v2944
        %v3262 = vunpack.c.l.b16 %v2945
        %v3263 = vunpack.c.h.b16 %v2945
        %v3264 = vunpack.c.l.b16 %v2946
        %v3265 = vunpack.c.h.b16 %v2946
        %v3266 = vunpack.c.l.b16 %v2947
        %v3267 = vunpack.c.h.b16 %v2947
        %v3268 = vunpack.c.l.b16 %v2948
        %v3269 = vunpack.c.h.b16 %v2948
        %v3270 = vunpack.c.l.b16 %v2949
        %v3271 = vunpack.c.h.b16 %v2949
        %v3272 = vunpack.c.l.b16 %v2950
        %v3273 = vunpack.c.h.b16 %v2950
        %v3274 = vunpack.c.l.b16 %v2951
        %v3275 = vunpack.c.h.b16 %v2951
        %v3276 = vunpack.c.l.b16 %v2952
        %v3277 = vunpack.c.h.b16 %v2952
        %v3278 = vunpack.c.l.b16 %v2953
        %v3279 = vunpack.c.h.b16 %v2953
        %v3280 = vunpack.c.l.b16 %v2954
        %v3281 = vunpack.c.h.b16 %v2954
        %v3282 = vunpack.c.l.b16 %v2955
        %v3283 = vunpack.c.h.b16 %v2955
        %v3284 = vunpack.c.l.b16 %v2956
        %v3285 = vunpack.c.h.b16 %v2956
        %v3286 = vunpack.c.l.b16 %v2957
        %v3287 = vunpack.c.h.b16 %v2957
        %v3288 = vunpack.c.l.b16 %v2958
        %v3289 = vunpack.c.h.b16 %v2958
        %v3290 = vunpack.c.l.b16 %v2959
        %v3291 = vunpack.c.h.b16 %v2959
        %v3292 = vunpack.c.l.b16 %v2960
        %v3293 = vunpack.c.h.b16 %v2960
        %v3294 = vunpack.c.l.b16 %v2961
        %v3295 = vunpack.c.h.b16 %v2961
        %v3296 = vunpack.c.l.b16 %v2962
        %v3297 = vunpack.c.h.b16 %v2962
        %v3298 = vunpack.c.l.b16 %v2963
        %v3299 = vunpack.c.h.b16 %v2963
        %v3300 = vunpack.c.l.b16 %v2964
        %v3301 = vunpack.c.h.b16 %v2964
        %v3302 = vunpack.c.l.b16 %v2965
        %v3303 = vunpack.c.h.b16 %v2965
        %v3304 = vunpack.c.l.b16 %v2966
        %v3305 = vunpack.c.h.b16 %v2966
        %v3306 = vunpack.c.l.b16 %v2967
        %v3307 = vunpack.c.h.b16 %v2967
        %v3308 = vunpack.c.l.b16 %v2968
        %v3309 = vunpack.c.h.b16 %v2968
        %v3310 = vunpack.c.l.b16 %v2969
        %v3311 = vunpack.c.h.b16 %v2969
        %v3312 = vunpack.c.l.b16 %v2970
        %v3313 = vunpack.c.h.b16 %v2970
        %v3314 = vunpack.c.l.b16 %v2971
        %v3315 = vunpack.c.h.b16 %v2971
        %v3316 = vunpack.c.l.b16 %v2972
        %v3317 = vunpack.c.h.b16 %v2972
        %v3318 = vunpack.c.l.b16 %v2973
        %v3319 = vunpack.c.h.b16 %v2973
        %v3320 = vunpack.c.l.b16 %v2974
        %v3321 = vunpack.c.h.b16 %v2974
        %v3322 = vunpack.c.l.b16 %v2975
        %v3323 = vunpack.c.h.b16 %v2975
        %v3324 = vunpack.c.l.b16 %v2976
        %v3325 = vunpack.c.h.b16 %v2976
        %v3326 = vunpack.c.l.b16 %v2977
        %v3327 = vunpack.c.h.b16 %v2977
        %v3328 = vunpack.c.l.b16 %v2978
        %v3329 = vunpack.c.h.b16 %v2978
        %v3330 = vunpack.c.l.b16 %v2979
        %v3331 = vunpack.c.h.b16 %v2979
        %v3332 = vunpack.c.l.b16 %v2980
        %v3333 = vunpack.c.h.b16 %v2980
        %v3334 = vunpack.c.l.b16 %v2981
        %v3335 = vunpack.c.h.b16 %v2981
        %v3336 = vunpack.c.l.b16 %v2982
        %v3337 = vunpack.c.h.b16 %v2982
        %v3338 = vunpack.c.l.b16 %v2983
        %v3339 = vunpack.c.h.b16 %v2983
        %v3340 = vunpack.c.l.b16 %v2984
        %v3341 = vunpack.c.h.b16 %v2984
        %v3342 = vunpack.c.l.b16 %v2985
        %v3343 = vunpack.c.h.b16 %v2985
        %v3344 = vunpack.c.l.b16 %v2986
        %v3345 = vunpack.c.h.b16 %v2986
        %v3346 = vunpack.c.l.b16 %v2987
        %v3347 = vunpack.c.h.b16 %v2987
        %v3348 = vunpack.c.l.b16 %v2988
        %v3349 = vunpack.c.h.b16 %v2988
        %v3350 = vunpack.c.l.b16 %v2989
        %v3351 = vunpack.c.h.b16 %v2989
        %v3352 = vunpack.c.l.b16 %v2990
        %v3353 = vunpack.c.h.b16 %v2990
        %v3354 = vunpack.c.l.b16 %v2991
        %v3355 = vunpack.c.h.b16 %v2991
        %v3356 = vunpack.c.l.b16 %v2992
        %v3357 = vunpack.c.h.b16 %v2992
        %v3358 = vunpack.c.l.b16 %v2993
        %v3359 = vunpack.c.h.b16 %v2993
        %v3360 = vunpack.c.l.b16 %v2994
        %v3361 = vunpack.c.h.b16 %v2994
        %v3362 = vunpack.c.l.b16 %v2995
        %v3363 = vunpack.c.h.b16 %v2995
        %v3364 = vunpack.c.l.b16 %v2996
        %v3365 = vunpack.c.h.b16 %v2996
        %v3366 = vunpack.c.l.b16 %v2997
        %v3367 = vunpack.c.h.b16 %v2997
        %v3368 = vunpack.c.l.b16 %v2998
        %v3369 = vunpack.c.h.b16 %v2998
        %v3370 = vunpack.c.l.b16 %v2999
        %v3371 = vunpack.c.h.b16 %v2999
        %v3372 = vunpack.c.l.b16 %v3000
        %v3373 = vunpack.c.h.b16 %v3000
        %v3374 = vunpack.c.l.b16 %v3001
        %v3375 = vunpack.c.h.b16 %v3001
        %v3376 = vunpack.c.l.b16 %v3002
        %v3377 = vunpack.c.h.b16 %v3002
        %v3378 = vunpack.c.l.b16 %v3003
        %v3379 = vunpack.c.h.b16 %v3003
        %v3380 = vunpack.c.l.b16 %v3004
        %v3381 = vunpack.c.h.b16 %v3004
        %v3382 = vunpack.c.l.b16 %v3005
        %v3383 = vunpack.c.h.b16 %v3005
        %v3384 = vunpack.c.l.b16 %v3006
        %v3385 = vunpack.c.h.b16 %v3006
        %v3386 = vunpack.c.l.b16 %v3007
        %v3387 = vunpack.c.h.b16 %v3007
        %v3388 = vunpack.c.l.b16 %v3008
        %v3389 = vunpack.c.h.b16 %v3008
        %v3390 = vunpack.c.l.b16 %v3009
        %v3391 = vunpack.c.h.b16 %v3009
        %v3392 = vunpack.c.l.b16 %v3010
        %v3393 = vunpack.c.h.b16 %v3010
        %v3394 = vunpack.c.l.b16 %v3011
        %v3395 = vunpack.c.h.b16 %v3011
        %v3396 = vunpack.c.l.b16 %v3012
        %v3397 = vunpack.c.h.b16 %v3012
        %v3398 = vunpack.c.l.b16 %v3013
        %v3399 = vunpack.c.h.b16 %v3013
        %v3400 = vunpack.c.l.b16 %v3014
        %v3401 = vunpack.c.h.b16 %v3014
        %v3402 = vunpack.c.l.b16 %v3015
        %v3403 = vunpack.c.h.b16 %v3015
        %v3404 = vunpack.c.l.b16 %v3016
        %v3405 = vunpack.c.h.b16 %v3016
        %v3406 = vunpack.c.l.b16 %v3017
        %v3407 = vunpack.c.h.b16 %v3017
        %v3408 = vpack.c.b16 %v3154, %v3152
        %v3409 = vpack.c.b16 %v3155, %v3153
        %v3410 = vpack.c.b16 %v3158, %v3156
        %v3411 = vpack.c.b16 %v3159, %v3157
        %v3412 = vpack.c.b16 %v3162, %v3160
        %v3413 = vpack.c.b16 %v3163, %v3161
        %v3414 = vpack.c.b16 %v3166, %v3164
        %v3415 = vpack.c.b16 %v3167, %v3165
        %v3416 = vpack.c.b16 %v3170, %v3168
        %v3417 = vpack.c.b16 %v3171, %v3169
        %v3418 = vpack.c.b16 %v3174, %v3172
        %v3419 = vpack.c.b16 %v3175, %v3173
        %v3420 = vpack.c.b16 %v3178, %v3176
        %v3421 = vpack.c.b16 %v3179, %v3177
        %v3422 = vpack.c.b16 %v3182, %v3180
        %v3423 = vpack.c.b16 %v3183, %v3181
        %v3424 = vpack.c.b16 %v3186, %v3184
        %v3425 = vpack.c.b16 %v3187, %v3185
        %v3426 = vpack.c.b16 %v3190, %v3188
        %v3427 = vpack.c.b16 %v3191, %v3189
        %v3428 = vpack.c.b16 %v3194, %v3192
        %v3429 = vpack.c.b16 %v3195, %v3193
        %v3430 = vpack.c.b16 %v3198, %v3196
        %v3431 = vpack.c.b16 %v3199, %v3197
        %v3432 = vpack.c.b16 %v3202, %v3200
        %v3433 = vpack.c.b16 %v3203, %v3201
        %v3434 = vpack.c.b16 %v3206, %v3204
        %v3435 = vpack.c.b16 %v3207, %v3205
        %v3436 = vpack.c.b16 %v3210, %v3208
        %v3437 = vpack.c.b16 %v3211, %v3209
        %v3438 = vpack.c.b16 %v3214, %v3212
        %v3439 = vpack.c.b16 %v3215, %v3213
        %v3440 = vpack.c.b16 %v3218, %v3216
        %v3441 = vpack.c.b16 %v3219, %v3217
        %v3442 = vpack.c.b16 %v3222, %v3220
        %v3443 = vpack.c.b16 %v3223, %v3221
        %v3444 = vpack.c.b16 %v3226, %v3224
        %v3445 = vpack.c.b16 %v3227, %v3225
        %v3446 = vpack.c.b16 %v3230, %v3228
        %v3447 = vpack.c.b16 %v3231, %v3229
        %v3448 = vpack.c.b16 %v3234, %v3232
        %v3449 = vpack.c.b16 %v3235, %v3233
        %v3450 = vpack.c.b16 %v3238, %v3236
        %v3451 = vpack.c.b16 %v3239, %v3237
        %v3452 = vpack.c.b16 %v3242, %v3240
        %v3453 = vpack.c.b16 %v3243, %v3241
        %v3454 = vpack.c.b16 %v3246, %v3244
        %v3455 = vpack.c.b16 %v3247, %v3245
        %v3456 = vpack.c.b16 %v3250, %v3248
        %v3457 = vpack.c.b16 %v3251, %v3249
        %v3458 = vpack.c.b16 %v3254, %v3252
        %v3459 = vpack.c.b16 %v3255, %v3253
        %v3460 = vpack.c.b16 %v3258, %v3256
        %v3461 = vpack.c.b16 %v3259, %v3257
        %v3462 = vpack.c.b16 %v3262, %v3260
        %v3463 = vpack.c.b16 %v3263, %v3261
        %v3464 = vpack.c.b16 %v3266, %v3264
        %v3465 = vpack.c.b16 %v3267, %v3265
        %v3466 = vpack.c.b16 %v3270, %v3268
        %v3467 = vpack.c.b16 %v3271, %v3269
        %v3468 = vpack.c.b16 %v3274, %v3272
        %v3469 = vpack.c.b16 %v3275, %v3273
        %v3470 = vpack.c.b16 %v3278, %v3276
        %v3471 = vpack.c.b16 %v3279, %v3277
        %v3472 = vpack.c.b16 %v3282, %v3280
        %v3473 = vpack.c.b16 %v3283, %v3281
        %v3474 = vpack.c.b16 %v3286, %v3284
        %v3475 = vpack.c.b16 %v3287, %v3285
        %v3476 = vpack.c.b16 %v3290, %v3288
        %v3477 = vpack.c.b16 %v3291, %v3289
        %v3478 = vpack.c.b16 %v3294, %v3292
        %v3479 = vpack.c.b16 %v3295, %v3293
        %v3480 = vpack.c.b16 %v3298, %v3296
        %v3481 = vpack.c.b16 %v3299, %v3297
        %v3482 = vpack.c.b16 %v3302, %v3300
        %v3483 = vpack.c.b16 %v3303, %v3301
        %v3484 = vpack.c.b16 %v3306, %v3304
        %v3485 = vpack.c.b16 %v3307, %v3305
        %v3486 = vpack.c.b16 %v3310, %v3308
        %v3487 = vpack.c.b16 %v3311, %v3309
        %v3488 = vpack.c.b16 %v3314, %v3312
        %v3489 = vpack.c.b16 %v3315, %v3313
        %v3490 = vpack.c.b16 %v3318, %v3316
        %v3491 = vpack.c.b16 %v3319, %v3317
        %v3492 = vpack.c.b16 %v3322, %v3320
        %v3493 = vpack.c.b16 %v3323, %v3321
        %v3494 = vpack.c.b16 %v3326, %v3324
        %v3495 = vpack.c.b16 %v3327, %v3325
        %v3496 = vpack.c.b16 %v3330, %v3328
        %v3497 = vpack.c.b16 %v3331, %v3329
        %v3498 = vpack.c.b16 %v3334, %v3332
        %v3499 = vpack.c.b16 %v3335, %v3333
        %v3500 = vpack.c.b16 %v3338, %v3336
        %v3501 = vpack.c.b16 %v3339, %v3337
        %v3502 = vpack.c.b16 %v3342, %v3340
        %v3503 = vpack.c.b16 %v3343, %v3341
        %v3504 = vpack.c.b16 %v3346, %v3344
        %v3505 = vpack.c.b16 %v3347, %v3345
        %v3506 = vpack.c.b16 %v3350, %v3348
        %v3507 = vpack.c.b16 %v3351, %v3349
        %v3508 = vpack.c.b16 %v3354, %v3352
        %v3509 = vpack.c.b16 %v3355, %v3353
        %v3510 = vpack.c.b16 %v3358, %v3356
        %v3511 = vpack.c.b16 %v3359, %v3357
        %v3512 = vpack.c.b16 %v3362, %v3360
        %v3513 = vpack.c.b16 %v3363, %v3361
        %v3514 = vpack.c.b16 %v3366, %v3364
        %v3515 = vpack.c.b16 %v3367, %v3365
        %v3516 = vpack.c.b16 %v3370, %v3368
        %v3517 = vpack.c.b16 %v3371, %v3369
        %v3518 = vpack.c.b16 %v3374, %v3372
        %v3519 = vpack.c.b16 %v3375, %v3373
        %v3520 = vpack.c.b16 %v3378, %v3376
        %v3521 = vpack.c.b16 %v3379, %v3377
        %v3522 = vpack.c.b16 %v3382, %v3380
        %v3523 = vpack.c.b16 %v3383, %v3381
        %v3524 = vpack.c.b16 %v3386, %v3384
        %v3525 = vpack.c.b16 %v3387, %v3385
        %v3526 = vpack.c.b16 %v3390, %v3388
        %v3527 = vpack.c.b16 %v3391, %v3389
        %v3528 = vpack.c.b16 %v3394, %v3392
        %v3529 = vpack.c.b16 %v3395, %v3393
        %v3530 = vpack.c.b16 %v3398, %v3396
        %v3531 = vpack.c.b16 %v3399, %v3397
        %v3532 = vpack.c.b16 %v3402, %v3400
        %v3533 = vpack.c.b16 %v3403, %v3401
        %v3534 = vpack.c.b16 %v3406, %v3404
        %v3535 = vpack.c.b16 %v3407, %v3405
        %3664 = vmatpush.bf16.msra.mxu0 %v3422
        %3665 = vmatpush.bf16.msra.mxu0 %v3420
        %3666 = vmatpush.bf16.msra.mxu0 %v3418
        %3667 = vmatpush.bf16.msra.mxu0 %v3416
        %3668 = vmatpush.bf16.msra.mxu0 %v3414
        %3669 = vmatpush.bf16.msra.mxu0 %v3412
        %3670 = vmatpush.bf16.msra.mxu0 %v3410
        %3671 = vmatpush.bf16.msra.mxu0 %v3408
        %3672 = vmatmul.bf16.gmra.mxu0 %v2882
        %v3673 = vpop.f32.mrf.mxu0
        %v3674 = vadd.f32 %v3020, %v3673
        %v3675 = vpop.f32.mrf.mxu0
        %3676 = vdwg.mxu0
        %3677 = vmatpush.bf16.msra.mxu0 %v3438
        %3678 = vmatpush.bf16.msra.mxu0 %v3436
        %3679 = vmatpush.bf16.msra.mxu0 %v3434
        %3680 = vmatpush.bf16.msra.mxu0 %v3432
        %3681 = vmatpush.bf16.msra.mxu0 %v3430
        %3682 = vmatpush.bf16.msra.mxu0 %v3428
        %3683 = vmatpush.bf16.msra.mxu0 %v3426
        %3684 = vmatpush.bf16.msra.mxu0 %v3424
        %3685 = vmatmul.bf16.gmra.mxu0 %v2883
        %v3686 = vpop.f32.mrf.mxu0
        %v3687 = vadd.f32 %v3674, %v3686
        %v3688 = vpop.f32.mrf.mxu0
        %3689 = vdwg.mxu0
        %3690 = vmatpush.bf16.msra.mxu0 %v3454
        %3691 = vmatpush.bf16.msra.mxu0 %v3452
        %3692 = vmatpush.bf16.msra.mxu0 %v3450
        %3693 = vmatpush.bf16.msra.mxu0 %v3448
        %3694 = vmatpush.bf16.msra.mxu0 %v3446
        %3695 = vmatpush.bf16.msra.mxu0 %v3444
        %3696 = vmatpush.bf16.msra.mxu0 %v3442
        %3697 = vmatpush.bf16.msra.mxu0 %v3440
        %3698 = vmatmul.bf16.gmra.mxu0 %v2884
        %v3699 = vpop.f32.mrf.mxu0
        %v3700 = vadd.f32 %v3687, %v3699
        %v3701 = vpop.f32.mrf.mxu0
        %3702 = vdwg.mxu0
        %3703 = vmatpush.bf16.msra.mxu0 %v3470
        %3704 = vmatpush.bf16.msra.mxu0 %v3468
        %3705 = vmatpush.bf16.msra.mxu0 %v3466
        %3706 = vmatpush.bf16.msra.mxu0 %v3464
        %3707 = vmatpush.bf16.msra.mxu0 %v3462
        %3708 = vmatpush.bf16.msra.mxu0 %v3460
        %3709 = vmatpush.bf16.msra.mxu0 %v3458
        %3710 = vmatpush.bf16.msra.mxu0 %v3456
        %3711 = vmatmul.bf16.gmra.mxu0 %v2885
        %v3712 = vpop.f32.mrf.mxu0
        %v3713 = vadd.f32 %v3700, %v3712
        %v3714 = vpop.f32.mrf.mxu0
        %3715 = vdwg.mxu0
        %3716 = vmatpush.bf16.msra.mxu0 %v3486
        %3717 = vmatpush.bf16.msra.mxu0 %v3484
        %3718 = vmatpush.bf16.msra.mxu0 %v3482
        %3719 = vmatpush.bf16.msra.mxu0 %v3480
        %3720 = vmatpush.bf16.msra.mxu0 %v3478
        %3721 = vmatpush.bf16.msra.mxu0 %v3476
        %3722 = vmatpush.bf16.msra.mxu0 %v3474
        %3723 = vmatpush.bf16.msra.mxu0 %v3472
        %3724 = vmatmul.bf16.gmra.mxu0 %v2886
        %v3725 = vpop.f32.mrf.mxu0
        %v3726 = vadd.f32 %v3713, %v3725
        %v3727 = vpop.f32.mrf.mxu0
        %3728 = vdwg.mxu0
        %3729 = vmatpush.bf16.msra.mxu0 %v3502
        %3730 = vmatpush.bf16.msra.mxu0 %v3500
        %3731 = vmatpush.bf16.msra.mxu0 %v3498
        %3732 = vmatpush.bf16.msra.mxu0 %v3496
        %3733 = vmatpush.bf16.msra.mxu0 %v3494
        %3734 = vmatpush.bf16.msra.mxu0 %v3492
        %3735 = vmatpush.bf16.msra.mxu0 %v3490
        %3736 = vmatpush.bf16.msra.mxu0 %v3488
        %3737 = vmatmul.bf16.gmra.mxu0 %v2887
        %v3738 = vpop.f32.mrf.mxu0
        %v3739 = vadd.f32 %v3726, %v3738
        %v3740 = vpop.f32.mrf.mxu0
        %3741 = vdwg.mxu0
        %3742 = vmatpush.bf16.msra.mxu0 %v3518
        %3743 = vmatpush.bf16.msra.mxu0 %v3516
        %3744 = vmatpush.bf16.msra.mxu0 %v3514
        %3745 = vmatpush.bf16.msra.mxu0 %v3512
        %3746 = vmatpush.bf16.msra.mxu0 %v3510
        %3747 = vmatpush.bf16.msra.mxu0 %v3508
        %3748 = vmatpush.bf16.msra.mxu0 %v3506
        %3749 = vmatpush.bf16.msra.mxu0 %v3504
        %3750 = vmatmul.bf16.gmra.mxu0 %v2888
        %v3751 = vpop.f32.mrf.mxu0
        %v3752 = vadd.f32 %v3739, %v3751
        %v3753 = vpop.f32.mrf.mxu0
        %3754 = vdwg.mxu0
        %3755 = vmatpush.bf16.msra.mxu0 %v3534
        %3756 = vmatpush.bf16.msra.mxu0 %v3532
        %3757 = vmatpush.bf16.msra.mxu0 %v3530
        %3758 = vmatpush.bf16.msra.mxu0 %v3528
        %3759 = vmatpush.bf16.msra.mxu0 %v3526
        %3760 = vmatpush.bf16.msra.mxu0 %v3524
        %3761 = vmatpush.bf16.msra.mxu0 %v3522
        %3762 = vmatpush.bf16.msra.mxu0 %v3520
        %3763 = vmatmul.bf16.gmra.mxu0 %v2889
        %v3764 = vpop.f32.mrf.mxu0
        %v3765 = vadd.f32 %v3752, %v3764
        %v3766 = vpop.f32.mrf.mxu0
        %3767 = vdwg.mxu0
        %3768 = vmatpush.bf16.msra.mxu0 %v3423
        %3769 = vmatpush.bf16.msra.mxu0 %v3421
        %3770 = vmatpush.bf16.msra.mxu0 %v3419
        %3771 = vmatpush.bf16.msra.mxu0 %v3417
        %3772 = vmatpush.bf16.msra.mxu0 %v3415
        %3773 = vmatpush.bf16.msra.mxu0 %v3413
        %3774 = vmatpush.bf16.msra.mxu0 %v3411
        %3775 = vmatpush.bf16.msra.mxu0 %v3409
        %3776 = vmatmul.bf16.gmra.mxu0 %v2882
        %v3777 = vpop.f32.mrf.mxu0
        %v3778 = vadd.f32 %v3021, %v3777
        %v3779 = vpop.f32.mrf.mxu0
        %3780 = vdwg.mxu0
        %3781 = vmatpush.bf16.msra.mxu0 %v3439
        %3782 = vmatpush.bf16.msra.mxu0 %v3437
        %3783 = vmatpush.bf16.msra.mxu0 %v3435
        %3784 = vmatpush.bf16.msra.mxu0 %v3433
        %3785 = vmatpush.bf16.msra.mxu0 %v3431
        %3786 = vmatpush.bf16.msra.mxu0 %v3429
        %3787 = vmatpush.bf16.msra.mxu0 %v3427
        %3788 = vmatpush.bf16.msra.mxu0 %v3425
        %3789 = vmatmul.bf16.gmra.mxu0 %v2883
        %v3790 = vpop.f32.mrf.mxu0
        %v3791 = vadd.f32 %v3778, %v3790
        %v3792 = vpop.f32.mrf.mxu0
        %3793 = vdwg.mxu0
        %3794 = vmatpush.bf16.msra.mxu0 %v3455
        %3795 = vmatpush.bf16.msra.mxu0 %v3453
        %3796 = vmatpush.bf16.msra.mxu0 %v3451
        %3797 = vmatpush.bf16.msra.mxu0 %v3449
        %3798 = vmatpush.bf16.msra.mxu0 %v3447
        %3799 = vmatpush.bf16.msra.mxu0 %v3445
        %3800 = vmatpush.bf16.msra.mxu0 %v3443
        %3801 = vmatpush.bf16.msra.mxu0 %v3441
        %3802 = vmatmul.bf16.gmra.mxu0 %v2884
        %v3803 = vpop.f32.mrf.mxu0
        %v3804 = vadd.f32 %v3791, %v3803
        %v3805 = vpop.f32.mrf.mxu0
        %3806 = vdwg.mxu0
        %3807 = vmatpush.bf16.msra.mxu0 %v3471
        %3808 = vmatpush.bf16.msra.mxu0 %v3469
        %3809 = vmatpush.bf16.msra.mxu0 %v3467
        %3810 = vmatpush.bf16.msra.mxu0 %v3465
        %3811 = vmatpush.bf16.msra.mxu0 %v3463
        %3812 = vmatpush.bf16.msra.mxu0 %v3461
        %3813 = vmatpush.bf16.msra.mxu0 %v3459
        %3814 = vmatpush.bf16.msra.mxu0 %v3457
        %3815 = vmatmul.bf16.gmra.mxu0 %v2885
        %v3816 = vpop.f32.mrf.mxu0
        %v3817 = vadd.f32 %v3804, %v3816
        %v3818 = vpop.f32.mrf.mxu0
        %3819 = vdwg.mxu0
        %3820 = vmatpush.bf16.msra.mxu0 %v3487
        %3821 = vmatpush.bf16.msra.mxu0 %v3485
        %3822 = vmatpush.bf16.msra.mxu0 %v3483
        %3823 = vmatpush.bf16.msra.mxu0 %v3481
        %3824 = vmatpush.bf16.msra.mxu0 %v3479
        %3825 = vmatpush.bf16.msra.mxu0 %v3477
        %3826 = vmatpush.bf16.msra.mxu0 %v3475
        %3827 = vmatpush.bf16.msra.mxu0 %v3473
        %3828 = vmatmul.bf16.gmra.mxu0 %v2886
        %v3829 = vpop.f32.mrf.mxu0
        %v3830 = vadd.f32 %v3817, %v3829
        %v3831 = vpop.f32.mrf.mxu0
        %3832 = vdwg.mxu0
        %3833 = vmatpush.bf16.msra.mxu0 %v3503
        %3834 = vmatpush.bf16.msra.mxu0 %v3501
        %3835 = vmatpush.bf16.msra.mxu0 %v3499
        %3836 = vmatpush.bf16.msra.mxu0 %v3497
        %3837 = vmatpush.bf16.msra.mxu0 %v3495
        %3838 = vmatpush.bf16.msra.mxu0 %v3493
        %3839 = vmatpush.bf16.msra.mxu0 %v3491
        %3840 = vmatpush.bf16.msra.mxu0 %v3489
        %3841 = vmatmul.bf16.gmra.mxu0 %v2887
        %v3842 = vpop.f32.mrf.mxu0
        %v3843 = vadd.f32 %v3830, %v3842
        %v3844 = vpop.f32.mrf.mxu0
        %3845 = vdwg.mxu0
        %3846 = vmatpush.bf16.msra.mxu0 %v3519
        %3847 = vmatpush.bf16.msra.mxu0 %v3517
        %3848 = vmatpush.bf16.msra.mxu0 %v3515
        %3849 = vmatpush.bf16.msra.mxu0 %v3513
        %3850 = vmatpush.bf16.msra.mxu0 %v3511
        %3851 = vmatpush.bf16.msra.mxu0 %v3509
        %3852 = vmatpush.bf16.msra.mxu0 %v3507
        %3853 = vmatpush.bf16.msra.mxu0 %v3505
        %3854 = vmatmul.bf16.gmra.mxu0 %v2888
        %v3855 = vpop.f32.mrf.mxu0
        %v3856 = vadd.f32 %v3843, %v3855
        %v3857 = vpop.f32.mrf.mxu0
        %3858 = vdwg.mxu0
        %3859 = vmatpush.bf16.msra.mxu0 %v3535
        %3860 = vmatpush.bf16.msra.mxu0 %v3533
        %3861 = vmatpush.bf16.msra.mxu0 %v3531
        %3862 = vmatpush.bf16.msra.mxu0 %v3529
        %3863 = vmatpush.bf16.msra.mxu0 %v3527
        %3864 = vmatpush.bf16.msra.mxu0 %v3525
        %3865 = vmatpush.bf16.msra.mxu0 %v3523
        %3866 = vmatpush.bf16.msra.mxu0 %v3521
        %3867 = vmatmul.bf16.gmra.mxu0 %v2889
        %v3868 = vpop.f32.mrf.mxu0
        %v3869 = vadd.f32 %v3856, %v3868
        %v3870 = vpop.f32.mrf.mxu0
        %3871 = vdwg.mxu0
        %v3872 = vld [vmem:[%s14] sm:$0x3]
        %v3874 = vperm.slane %v3872, 0
        %v3875 = vperm.slane %v3872, 1
        %v3878 = vmul.f32 %v3765, %v3874
        %v3879 = vmul.f32 %v3869, %v3875
        %v3880 = vadd.f32 %v1769, %v3878
        %v3881 = vadd.f32 %v1770, %v3879
        %3882 = vst [vmem:[%s561] sm:$0xff] %v3880
        %3883 = vst [vmem:[%s561 + $0x8] sm:$0xff] %v3881
        %p3884 = scmp.lt.s32.totalorder %s29, 1
        %s3885 = scalar_select %p3884, %s29, 1
        %s3886 = smul.addr %s3885, 2
        %s3887 = smul.addr %s3886, 8
        %s3888 = scalar_lea.vmem %s15, %s3887
        // Predicated region
        $region97: #{dino_features_forward.6} parent=79 // pred_check
          %p3889 = pneg %p367
        $region98: #{dino_features_forward.6} parent=79 // pred_check_branch
          %3891 = sbr.rel (%p3889) target = $region100
        $region99: #{dino_features_forward.6} parent=79 // pred_region
          _
        $region100: #{dino_features_forward.6} parent=79 // pred_fallthru
          _
      $region80: #{dino_features_forward.6} parent=5 // pred_fallthru
        _
      %p3892 = scmp.le.s32.totalorder 2, %s24
      // Predicated region
      $region101: #{dino_features_forward.6} parent=5 // pred_check
        %p3893 = pneg %p3892
      $region102: #{dino_features_forward.6} parent=5 // pred_check_branch
        %3895 = sbr.rel (%p3893) target = $region104
      $region103: #{dino_features_forward.6} parent=5 // pred_region
        %s3896 = ssub.s32 %s24, 2
        // Predicated region
        $region105: #{dino_features_forward.6} parent=103 // pred_check
          %p3897 = pneg %p373
        $region106: #{dino_features_forward.6} parent=103 // pred_check_branch
          %3899 = sbr.rel (%p3897) target = $region108
        $region107: #{dino_features_forward.6} parent=103 // pred_region
          %p3900 = scmp.lt.s32.totalorder %s30, 1
          %s3901 = scalar_select %p3900, %s30, 1
          %s3902 = smul.addr %s3901, 2
          %s3903 = smul.addr %s3902, 8
          %s3904 = scalar_lea.vmem %s15, %s3903
        $region108: #{dino_features_forward.6} parent=103 // pred_fallthru
          _
      $region104: #{dino_features_forward.6} parent=5 // pred_fallthru
        _
    $region6: #{dino_features_forward.6} parent=1 // loop_footer
      %s28 = sadd.s32 1, %s24
    $region7: #{dino_features_forward.6} parent=1 // loop_footer_branch
      %23 = sbr.rel target = $region3
    $region8: #{dino_features_forward.6} parent=1 // loop_exit
      _
    %3905 = vsyncpa [#allocation5], 1
    %s3906 = scalar_lea.sflag [#allocation5], 1
    %3907 = vsyncpa %s3906, 1
    %3908 = vsyncpa [#allocation7], 1
    %3909 = vsyncpa [#allocation10], 1

// kernel: dino_features_forward.5
$region0: #{dino_features_forward.5}
  #allocation0 [shape = 'u32[]', space=smem, size = 0x4, offset = 0x4, fixed_abs, tag = 'smem constant byte address 0x4 - core index']
  #allocation1 [shape = 'u32[72,128]{1,0:T(1,128)}', space=vmem, size = 0x9000, scoped, tag = 'internal scratch']
  #allocation2 [shape = 'f32[8,768]{1,0:T(8,128)}', space=vmem, size = 0x6000, scoped, tag = 'scratch operand']
  #allocation3 [shape = 'f32[8,256]{1,0:T(8,128)}', space=vmem, size = 0x2000, scoped, tag = 'scratch operand']
  %s0 = inlined_call_operand.vmem [shape: f32[2,8,256], index: 0, kind: input, shape index: {}]
  %s1 = inlined_call_operand.vmem [shape: f32[1,256], index: 1, kind: input, shape index: {}]
  %s2 = inlined_call_operand.vmem [shape: f32[1,256], index: 2, kind: input, shape index: {}]
  %s3 = inlined_call_operand.hbm [shape: bf16[256,768], index: 3, kind: input, shape index: {}]
  %s4 = inlined_call_operand.vmem [shape: f32[1,768], index: 4, kind: input, shape index: {}]
  %s5 = inlined_call_operand.hbm [shape: bf16[256,256], index: 5, kind: input, shape index: {}]
  %s6 = inlined_call_operand.vmem [shape: f32[1,256], index: 6, kind: input, shape index: {}]
  %s7 = inlined_call_operand.vmem [shape: f32[1,256], index: 7, kind: input, shape index: {}]
  %s8 = inlined_call_operand.vmem [shape: f32[1,256], index: 8, kind: input, shape index: {}]
  %s9 = inlined_call_operand.vmem [shape: f32[1,256], index: 9, kind: input, shape index: {}]
  %s10 = inlined_call_operand.vmem [shape: bf16[256,1024], index: 10, kind: input, shape index: {}]
  %s11 = inlined_call_operand.vmem [shape: f32[1,1024], index: 11, kind: input, shape index: {}]
  %s12 = inlined_call_operand.hbm [shape: bf16[1024,256], index: 12, kind: input, shape index: {}]
  %s13 = inlined_call_operand.vmem [shape: f32[1,256], index: 13, kind: input, shape index: {}]
  %s14 = inlined_call_operand.vmem [shape: f32[1,256], index: 14, kind: input, shape index: {}]
  %s15 = inlined_call_operand.vmem [shape: f32[2,8,256], index: 15, kind: output, shape index: {}]
  %s16 = sld [smem:[#allocation0]]
  $region105: #{dino_features_forward.5} parent=0
    _
  %s18 = ssub.s32 1, %s16
  %s19 = scalar_select 0, %s18, %s16
  $region1: #{dino_features_forward.5} parent=0
    #allocation4 [shape = 'u8[393216]{0}', space=vmem, size = 0x60000, scoped, tag = 'input window, operand 3, single buffered']
    #allocation5 [shape = 's32[2]{0}', space=sflag, size = 0x8, scoped, tag = 'scoped memory for dino_features_forward.5']
    #allocation6 [shape = 'u8[131072]{0}', space=vmem, size = 0x20000, scoped, tag = 'input window, operand 5, single buffered']
    #allocation7 [shape = 's32[1]{0}', space=sflag, size = 0x4, scoped, tag = 'scoped memory for dino_features_forward.5']
    #allocation8 [shape = 'u8[524288]{0}', space=vmem, size = 0x80000, scoped, tag = 'input window, operand 12, single buffered']
    %20 = vsyncpa [#allocation5], 0
    %21 = vsyncpa [#allocation7], 0
    loop: start=0, step=1, limit=4
    $region2: #{dino_features_forward.5} parent=1 // loop_pre_header
      _
    $region3: #{dino_features_forward.5} parent=1 // loop_header
      %s23 = sphi 0, %s27
      %p24 = scmp.ge.s32.totalorder %s23, 4
      %s33 = sphi 0, %s35
      %s36 = sphi 0, %s33
      %s37 = sphi 0, %s36
      %s53 = sphi 0, %s37
      %s57 = sphi 0, %s57
      %s59 = sphi 0, %s57
      %s60 = sphi 0, %s59
      %s74 = sphi 0, %s60
      %s78 = sphi 0, %s78
      %s80 = sphi 0, %s78
      %s81 = sphi 0, %s80
      %s95 = sphi 0, %s81
      %s99 = sphi 0, %s99
      %s101 = sphi 0, %s99
      %s102 = sphi 0, %s101
      %s116 = sphi 0, %s102
      %s120 = sphi 0, %s120
      %s122 = sphi 0, %s120
      %s123 = sphi 0, %s122
      %s137 = sphi 0, %s123
      %s141 = sphi 0, %s141
      %s143 = sphi 0, %s141
      %s144 = sphi 0, %s143
      %s158 = sphi 0, %s144
      %s162 = sphi 0, %s162
      %s164 = sphi 0, %s162
      %s165 = sphi 0, %s164
      %s179 = sphi 0, %s165
      %s183 = sphi 0, %s183
      %s185 = sphi 0, %s183
      %s186 = sphi 0, %s185
      %s200 = sphi 0, %s186
      %s204 = sphi 0, %s204
      %s206 = sphi 0, %s204
      %s207 = sphi 0, %s206
      %s221 = sphi 0, %s207
      %s225 = sphi 0, %s225
      %s227 = sphi 0, %s225
      %s228 = sphi 0, %s227
      %s242 = sphi 0, %s228
      %s246 = sphi 0, %s246
      %s248 = sphi 0, %s246
      %s249 = sphi 0, %s248
      %s263 = sphi 0, %s249
      %s267 = sphi 0, %s267
      %s269 = sphi 0, %s267
      %s270 = sphi 0, %s269
      %s284 = sphi 0, %s270
      %s288 = sphi 0, %s288
      %s290 = sphi 0, %s288
      %s291 = sphi 0, %s290
      %s305 = sphi 0, %s291
      %s309 = sphi 0, %s309
      %s311 = sphi 0, %s309
      %s312 = sphi 0, %s311
      %s326 = sphi 0, %s312
      %s330 = sphi 0, %s330
      %s332 = sphi 0, %s330
      %s333 = sphi 0, %s332
      %s347 = sphi 0, %s333
      %s353 = sphi 0, %s355
      %s356 = sphi 0, %s353
      %s357 = sphi 0, %s356
      %s373 = sphi 0, %s357
    $region4: #{dino_features_forward.5} parent=1 // loop_header_branch
      %26 = sbr.rel (%p24) target = $region8
    $region5: #{dino_features_forward.5} parent=1 // loop_body
      %s28 = ssub.s32 %s23, 1
      %s29 = ssub.s32 %s23, 2
      %s30 = sadd.s32 %s23, 1
      %s31 = ssub.s32 %s23, %s30
      %p32 = scmp.eq.s32.totalorder %s31, 0
      %s34 = sadd.s32 %s33, 1
      %s35 = scalar_select %p32, %s33, %s34
      %p38 = pneg %p32
      %p39 = scmp.eq.s32.totalorder %s23, 1
      %p40 = por %p38, %p39
      %p41 = scmp.ne.s32.totalorder %s33, %s36
      %p42 = scmp.eq.s32.totalorder %s23, 0
      %p43 = por %p41, %p42
      %p44 = scmp.ne.s32.totalorder %s33, %s36
      %p45 = scmp.eq.s32.totalorder %s28, 1
      %p46 = por %p44, %p45
      %p47 = scmp.ne.s32.totalorder %s36, %s37
      %p48 = scmp.eq.s32.totalorder %s28, 0
      %p49 = por %p47, %p48
      %p50 = scmp.ne.s32.totalorder %s36, %s37
      %p51 = scmp.eq.s32.totalorder %s29, 1
      %p52 = por %p50, %p51
      %p54 = scmp.ne.s32.totalorder %s37, %s53
      %p55 = scmp.eq.s32.totalorder %s29, 0
      %p56 = por %p54, %p55
      %s58 = sadd.s32 %s57, 1
      %p61 = scmp.eq.s32.totalorder %s23, 1
      %p62 = scmp.ne.s32.totalorder %s57, %s59
      %p63 = scmp.eq.s32.totalorder %s23, 0
      %p64 = por %p62, %p63
      %p65 = scmp.ne.s32.totalorder %s57, %s59
      %p66 = scmp.eq.s32.totalorder %s28, 1
      %p67 = por %p65, %p66
      %p68 = scmp.ne.s32.totalorder %s59, %s60
      %p69 = scmp.eq.s32.totalorder %s28, 0
      %p70 = por %p68, %p69
      %p71 = scmp.ne.s32.totalorder %s59, %s60
      %p72 = scmp.eq.s32.totalorder %s29, 1
      %p73 = por %p71, %p72
      %p75 = scmp.ne.s32.totalorder %s60, %s74
      %p76 = scmp.eq.s32.totalorder %s29, 0
      %p77 = por %p75, %p76
      %s79 = sadd.s32 %s78, 1
      %p82 = scmp.eq.s32.totalorder %s23, 1
      %p83 = scmp.ne.s32.totalorder %s78, %s80
      %p84 = scmp.eq.s32.totalorder %s23, 0
      %p85 = por %p83, %p84
      %p86 = scmp.ne.s32.totalorder %s78, %s80
      %p87 = scmp.eq.s32.totalorder %s28, 1
      %p88 = por %p86, %p87
      %p89 = scmp.ne.s32.totalorder %s80, %s81
      %p90 = scmp.eq.s32.totalorder %s28, 0
      %p91 = por %p89, %p90
      %p92 = scmp.ne.s32.totalorder %s80, %s81
      %p93 = scmp.eq.s32.totalorder %s29, 1
      %p94 = por %p92, %p93
      %p96 = scmp.ne.s32.totalorder %s81, %s95
      %p97 = scmp.eq.s32.totalorder %s29, 0
      %p98 = por %p96, %p97
      %s100 = sadd.s32 %s99, 1
      %p103 = scmp.eq.s32.totalorder %s23, 1
      %p104 = scmp.ne.s32.totalorder %s99, %s101
      %p105 = scmp.eq.s32.totalorder %s23, 0
      %p106 = por %p104, %p105
      %p107 = scmp.ne.s32.totalorder %s99, %s101
      %p108 = scmp.eq.s32.totalorder %s28, 1
      %p109 = por %p107, %p108
      %p110 = scmp.ne.s32.totalorder %s101, %s102
      %p111 = scmp.eq.s32.totalorder %s28, 0
      %p112 = por %p110, %p111
      %p113 = scmp.ne.s32.totalorder %s101, %s102
      %p114 = scmp.eq.s32.totalorder %s29, 1
      %p115 = por %p113, %p114
      %p117 = scmp.ne.s32.totalorder %s102, %s116
      %p118 = scmp.eq.s32.totalorder %s29, 0
      %p119 = por %p117, %p118
      %s121 = sadd.s32 %s120, 1
      %p124 = scmp.eq.s32.totalorder %s23, 1
      %p125 = scmp.ne.s32.totalorder %s120, %s122
      %p126 = scmp.eq.s32.totalorder %s23, 0
      %p127 = por %p125, %p126
      %p128 = scmp.ne.s32.totalorder %s120, %s122
      %p129 = scmp.eq.s32.totalorder %s28, 1
      %p130 = por %p128, %p129
      %p131 = scmp.ne.s32.totalorder %s122, %s123
      %p132 = scmp.eq.s32.totalorder %s28, 0
      %p133 = por %p131, %p132
      %p134 = scmp.ne.s32.totalorder %s122, %s123
      %p135 = scmp.eq.s32.totalorder %s29, 1
      %p136 = por %p134, %p135
      %p138 = scmp.ne.s32.totalorder %s123, %s137
      %p139 = scmp.eq.s32.totalorder %s29, 0
      %p140 = por %p138, %p139
      %s142 = sadd.s32 %s141, 1
      %p145 = scmp.eq.s32.totalorder %s23, 1
      %p146 = scmp.ne.s32.totalorder %s141, %s143
      %p147 = scmp.eq.s32.totalorder %s23, 0
      %p148 = por %p146, %p147
      %p149 = scmp.ne.s32.totalorder %s141, %s143
      %p150 = scmp.eq.s32.totalorder %s28, 1
      %p151 = por %p149, %p150
      %p152 = scmp.ne.s32.totalorder %s143, %s144
      %p153 = scmp.eq.s32.totalorder %s28, 0
      %p154 = por %p152, %p153
      %p155 = scmp.ne.s32.totalorder %s143, %s144
      %p156 = scmp.eq.s32.totalorder %s29, 1
      %p157 = por %p155, %p156
      %p159 = scmp.ne.s32.totalorder %s144, %s158
      %p160 = scmp.eq.s32.totalorder %s29, 0
      %p161 = por %p159, %p160
      %s163 = sadd.s32 %s162, 1
      %p166 = scmp.eq.s32.totalorder %s23, 1
      %p167 = scmp.ne.s32.totalorder %s162, %s164
      %p168 = scmp.eq.s32.totalorder %s23, 0
      %p169 = por %p167, %p168
      %p170 = scmp.ne.s32.totalorder %s162, %s164
      %p171 = scmp.eq.s32.totalorder %s28, 1
      %p172 = por %p170, %p171
      %p173 = scmp.ne.s32.totalorder %s164, %s165
      %p174 = scmp.eq.s32.totalorder %s28, 0
      %p175 = por %p173, %p174
      %p176 = scmp.ne.s32.totalorder %s164, %s165
      %p177 = scmp.eq.s32.totalorder %s29, 1
      %p178 = por %p176, %p177
      %p180 = scmp.ne.s32.totalorder %s165, %s179
      %p181 = scmp.eq.s32.totalorder %s29, 0
      %p182 = por %p180, %p181
      %s184 = sadd.s32 %s183, 1
      %p187 = scmp.eq.s32.totalorder %s23, 1
      %p188 = scmp.ne.s32.totalorder %s183, %s185
      %p189 = scmp.eq.s32.totalorder %s23, 0
      %p190 = por %p188, %p189
      %p191 = scmp.ne.s32.totalorder %s183, %s185
      %p192 = scmp.eq.s32.totalorder %s28, 1
      %p193 = por %p191, %p192
      %p194 = scmp.ne.s32.totalorder %s185, %s186
      %p195 = scmp.eq.s32.totalorder %s28, 0
      %p196 = por %p194, %p195
      %p197 = scmp.ne.s32.totalorder %s185, %s186
      %p198 = scmp.eq.s32.totalorder %s29, 1
      %p199 = por %p197, %p198
      %p201 = scmp.ne.s32.totalorder %s186, %s200
      %p202 = scmp.eq.s32.totalorder %s29, 0
      %p203 = por %p201, %p202
      %s205 = sadd.s32 %s204, 1
      %p208 = scmp.eq.s32.totalorder %s23, 1
      %p209 = scmp.ne.s32.totalorder %s204, %s206
      %p210 = scmp.eq.s32.totalorder %s23, 0
      %p211 = por %p209, %p210
      %p212 = scmp.ne.s32.totalorder %s204, %s206
      %p213 = scmp.eq.s32.totalorder %s28, 1
      %p214 = por %p212, %p213
      %p215 = scmp.ne.s32.totalorder %s206, %s207
      %p216 = scmp.eq.s32.totalorder %s28, 0
      %p217 = por %p215, %p216
      %p218 = scmp.ne.s32.totalorder %s206, %s207
      %p219 = scmp.eq.s32.totalorder %s29, 1
      %p220 = por %p218, %p219
      %p222 = scmp.ne.s32.totalorder %s207, %s221
      %p223 = scmp.eq.s32.totalorder %s29, 0
      %p224 = por %p222, %p223
      %s226 = sadd.s32 %s225, 1
      %p229 = scmp.eq.s32.totalorder %s23, 1
      %p230 = scmp.ne.s32.totalorder %s225, %s227
      %p231 = scmp.eq.s32.totalorder %s23, 0
      %p232 = por %p230, %p231
      %p233 = scmp.ne.s32.totalorder %s225, %s227
      %p234 = scmp.eq.s32.totalorder %s28, 1
      %p235 = por %p233, %p234
      %p236 = scmp.ne.s32.totalorder %s227, %s228
      %p237 = scmp.eq.s32.totalorder %s28, 0
      %p238 = por %p236, %p237
      %p239 = scmp.ne.s32.totalorder %s227, %s228
      %p240 = scmp.eq.s32.totalorder %s29, 1
      %p241 = por %p239, %p240
      %p243 = scmp.ne.s32.totalorder %s228, %s242
      %p244 = scmp.eq.s32.totalorder %s29, 0
      %p245 = por %p243, %p244
      %s247 = sadd.s32 %s246, 1
      %p250 = scmp.eq.s32.totalorder %s23, 1
      %p251 = scmp.ne.s32.totalorder %s246, %s248
      %p252 = scmp.eq.s32.totalorder %s23, 0
      %p253 = por %p251, %p252
      %p254 = scmp.ne.s32.totalorder %s246, %s248
      %p255 = scmp.eq.s32.totalorder %s28, 1
      %p256 = por %p254, %p255
      %p257 = scmp.ne.s32.totalorder %s248, %s249
      %p258 = scmp.eq.s32.totalorder %s28, 0
      %p259 = por %p257, %p258
      %p260 = scmp.ne.s32.totalorder %s248, %s249
      %p261 = scmp.eq.s32.totalorder %s29, 1
      %p262 = por %p260, %p261
      %p264 = scmp.ne.s32.totalorder %s249, %s263
      %p265 = scmp.eq.s32.totalorder %s29, 0
      %p266 = por %p264, %p265
      %s268 = sadd.s32 %s267, 1
      %p271 = scmp.eq.s32.totalorder %s23, 1
      %p272 = scmp.ne.s32.totalorder %s267, %s269
      %p273 = scmp.eq.s32.totalorder %s23, 0
      %p274 = por %p272, %p273
      %p275 = scmp.ne.s32.totalorder %s267, %s269
      %p276 = scmp.eq.s32.totalorder %s28, 1
      %p277 = por %p275, %p276
      %p278 = scmp.ne.s32.totalorder %s269, %s270
      %p279 = scmp.eq.s32.totalorder %s28, 0
      %p280 = por %p278, %p279
      %p281 = scmp.ne.s32.totalorder %s269, %s270
      %p282 = scmp.eq.s32.totalorder %s29, 1
      %p283 = por %p281, %p282
      %p285 = scmp.ne.s32.totalorder %s270, %s284
      %p286 = scmp.eq.s32.totalorder %s29, 0
      %p287 = por %p285, %p286
      %s289 = sadd.s32 %s288, 1
      %p292 = scmp.eq.s32.totalorder %s23, 1
      %p293 = scmp.ne.s32.totalorder %s288, %s290
      %p294 = scmp.eq.s32.totalorder %s23, 0
      %p295 = por %p293, %p294
      %p296 = scmp.ne.s32.totalorder %s288, %s290
      %p297 = scmp.eq.s32.totalorder %s28, 1
      %p298 = por %p296, %p297
      %p299 = scmp.ne.s32.totalorder %s290, %s291
      %p300 = scmp.eq.s32.totalorder %s28, 0
      %p301 = por %p299, %p300
      %p302 = scmp.ne.s32.totalorder %s290, %s291
      %p303 = scmp.eq.s32.totalorder %s29, 1
      %p304 = por %p302, %p303
      %p306 = scmp.ne.s32.totalorder %s291, %s305
      %p307 = scmp.eq.s32.totalorder %s29, 0
      %p308 = por %p306, %p307
      %s310 = sadd.s32 %s309, 1
      %p313 = scmp.eq.s32.totalorder %s23, 1
      %p314 = scmp.ne.s32.totalorder %s309, %s311
      %p315 = scmp.eq.s32.totalorder %s23, 0
      %p316 = por %p314, %p315
      %p317 = scmp.ne.s32.totalorder %s309, %s311
      %p318 = scmp.eq.s32.totalorder %s28, 1
      %p319 = por %p317, %p318
      %p320 = scmp.ne.s32.totalorder %s311, %s312
      %p321 = scmp.eq.s32.totalorder %s28, 0
      %p322 = por %p320, %p321
      %p323 = scmp.ne.s32.totalorder %s311, %s312
      %p324 = scmp.eq.s32.totalorder %s29, 1
      %p325 = por %p323, %p324
      %p327 = scmp.ne.s32.totalorder %s312, %s326
      %p328 = scmp.eq.s32.totalorder %s29, 0
      %p329 = por %p327, %p328
      %s331 = sadd.s32 %s330, 1
      %p334 = scmp.eq.s32.totalorder %s23, 1
      %p335 = scmp.ne.s32.totalorder %s330, %s332
      %p336 = scmp.eq.s32.totalorder %s23, 0
      %p337 = por %p335, %p336
      %p338 = scmp.ne.s32.totalorder %s330, %s332
      %p339 = scmp.eq.s32.totalorder %s28, 1
      %p340 = por %p338, %p339
      %p341 = scmp.ne.s32.totalorder %s332, %s333
      %p342 = scmp.eq.s32.totalorder %s28, 0
      %p343 = por %p341, %p342
      %p344 = scmp.ne.s32.totalorder %s332, %s333
      %p345 = scmp.eq.s32.totalorder %s29, 1
      %p346 = por %p344, %p345
      %p348 = scmp.ne.s32.totalorder %s333, %s347
      %p349 = scmp.eq.s32.totalorder %s29, 0
      %p350 = por %p348, %p349
      %s351 = ssub.s32 %s23, %s30
      %p352 = scmp.eq.s32.totalorder %s351, 0
      %s354 = sadd.s32 %s353, 1
      %s355 = scalar_select %p352, %s353, %s354
      %p358 = pneg %p352
      %p359 = scmp.eq.s32.totalorder %s23, 1
      %p360 = por %p358, %p359
      %p361 = scmp.ne.s32.totalorder %s353, %s356
      %p362 = scmp.eq.s32.totalorder %s23, 0
      %p363 = por %p361, %p362
      %p364 = scmp.ne.s32.totalorder %s353, %s356
      %p365 = scmp.eq.s32.totalorder %s28, 1
      %p366 = por %p364, %p365
      %p367 = scmp.ne.s32.totalorder %s356, %s357
      %p368 = scmp.eq.s32.totalorder %s28, 0
      %p369 = por %p367, %p368
      %p370 = scmp.ne.s32.totalorder %s356, %s357
      %p371 = scmp.eq.s32.totalorder %s29, 1
      %p372 = por %p370, %p371
      %p374 = scmp.ne.s32.totalorder %s357, %s373
      %p375 = scmp.eq.s32.totalorder %s29, 0
      %p376 = por %p374, %p375
      %p377 = scmp.le.s32.totalorder 1, %s23
      %p378 = scmp.lt.s32.totalorder %s23, 3
      %p379 = pnand %p377, %p378
      %p380 = pneg %p379
      // Predicated region
      $region9: #{dino_features_forward.5} parent=5 // pred_check
        _
      $region10: #{dino_features_forward.5} parent=5 // pred_check_branch
        %382 = sbr.rel (%p379) target = $region12
      $region11: #{dino_features_forward.5} parent=5 // pred_region
        %s383 = ssub.s32 %s23, 1
        // Predicated region
        $region13: #{dino_features_forward.5} parent=11 // pred_check
          %p384 = pneg %p70
        $region14: #{dino_features_forward.5} parent=11 // pred_check_branch
          %386 = sbr.rel (%p384) target = $region16
        $region15: #{dino_features_forward.5} parent=11 // pred_region
          _
        $region16: #{dino_features_forward.5} parent=11 // pred_fallthru
          _
        // Predicated region
        $region17: #{dino_features_forward.5} parent=11 // pred_check
          %p387 = pneg %p91
        $region18: #{dino_features_forward.5} parent=11 // pred_check_branch
          %389 = sbr.rel (%p387) target = $region20
        $region19: #{dino_features_forward.5} parent=11 // pred_region
          _
        $region20: #{dino_features_forward.5} parent=11 // pred_fallthru
          _
        // Predicated region
        $region21: #{dino_features_forward.5} parent=11 // pred_check
          %p390 = pneg %p112
        $region22: #{dino_features_forward.5} parent=11 // pred_check_branch
          %392 = sbr.rel (%p390) target = $region24
        $region23: #{dino_features_forward.5} parent=11 // pred_region
          %394 = vsyncadd [#allocation5], 0
          %s395 = sshll.u32 %s3, 4
          %s396 = int_to_ptr.hbm [resolvable:$true] %s395
          %s397 = sshll.u32 [#allocation4], 4
          %s398 = int_to_ptr.vmem [resolvable:$true] %s397
          %403 = dma.hbm_to_vmem [thread:$0]  %s396, 12288, %s398, [#allocation5], 384, 384, 24
        $region24: #{dino_features_forward.5} parent=11 // pred_fallthru
          _
        // Predicated region
        $region25: #{dino_features_forward.5} parent=11 // pred_check
          %p404 = pneg %p133
        $region26: #{dino_features_forward.5} parent=11 // pred_check_branch
          %406 = sbr.rel (%p404) target = $region28
        $region27: #{dino_features_forward.5} parent=11 // pred_region
          _
        $region28: #{dino_features_forward.5} parent=11 // pred_fallthru
          _
        // Predicated region
        $region29: #{dino_features_forward.5} parent=11 // pred_check
          %p407 = pneg %p154
        $region30: #{dino_features_forward.5} parent=11 // pred_check_branch
          %409 = sbr.rel (%p407) target = $region32
        $region31: #{dino_features_forward.5} parent=11 // pred_region
          %411 = vsyncadd [#allocation7], 0
          %s412 = sshll.u32 %s5, 4
          %s413 = int_to_ptr.hbm [resolvable:$true] %s412
          %s414 = sshll.u32 [#allocation6], 4
          %s415 = int_to_ptr.vmem [resolvable:$true] %s414
          %420 = dma.hbm_to_vmem [thread:$0]  %s413, 4096, %s415, [#allocation7], 128, 128, 8
        $region32: #{dino_features_forward.5} parent=11 // pred_fallthru
          _
        // Predicated region
        $region33: #{dino_features_forward.5} parent=11 // pred_check
          %p421 = pneg %p175
        $region34: #{dino_features_forward.5} parent=11 // pred_check_branch
          %423 = sbr.rel (%p421) target = $region36
        $region35: #{dino_features_forward.5} parent=11 // pred_region
          _
        $region36: #{dino_features_forward.5} parent=11 // pred_fallthru
          _
        // Predicated region
        $region37: #{dino_features_forward.5} parent=11 // pred_check
          %p424 = pneg %p196
        $region38: #{dino_features_forward.5} parent=11 // pred_check_branch
          %426 = sbr.rel (%p424) target = $region40
        $region39: #{dino_features_forward.5} parent=11 // pred_region
          _
        $region40: #{dino_features_forward.5} parent=11 // pred_fallthru
          _
        // Predicated region
        $region41: #{dino_features_forward.5} parent=11 // pred_check
          %p427 = pneg %p217
        $region42: #{dino_features_forward.5} parent=11 // pred_check_branch
          %429 = sbr.rel (%p427) target = $region44
        $region43: #{dino_features_forward.5} parent=11 // pred_region
          _
        $region44: #{dino_features_forward.5} parent=11 // pred_fallthru
          _
        // Predicated region
        $region45: #{dino_features_forward.5} parent=11 // pred_check
          %p430 = pneg %p238
        $region46: #{dino_features_forward.5} parent=11 // pred_check_branch
          %432 = sbr.rel (%p430) target = $region48
        $region47: #{dino_features_forward.5} parent=11 // pred_region
          _
        $region48: #{dino_features_forward.5} parent=11 // pred_fallthru
          _
        // Predicated region
        $region49: #{dino_features_forward.5} parent=11 // pred_check
          %p433 = pneg %p259
        $region50: #{dino_features_forward.5} parent=11 // pred_check_branch
          %435 = sbr.rel (%p433) target = $region52
        $region51: #{dino_features_forward.5} parent=11 // pred_region
          _
        $region52: #{dino_features_forward.5} parent=11 // pred_fallthru
          _
        // Predicated region
        $region53: #{dino_features_forward.5} parent=11 // pred_check
          %p436 = pneg %p280
        $region54: #{dino_features_forward.5} parent=11 // pred_check_branch
          %438 = sbr.rel (%p436) target = $region56
        $region55: #{dino_features_forward.5} parent=11 // pred_region
          _
        $region56: #{dino_features_forward.5} parent=11 // pred_fallthru
          _
        // Predicated region
        $region57: #{dino_features_forward.5} parent=11 // pred_check
          %p439 = pneg %p301
        $region58: #{dino_features_forward.5} parent=11 // pred_check_branch
          %441 = sbr.rel (%p439) target = $region60
        $region59: #{dino_features_forward.5} parent=11 // pred_region
          %443 = vsyncadd [#allocation7], 0
          %s444 = sshll.u32 %s12, 4
          %s445 = int_to_ptr.hbm [resolvable:$true] %s444
          %s446 = sshll.u32 [#allocation8], 4
          %s447 = int_to_ptr.vmem [resolvable:$true] %s446
          %452 = dma.hbm_to_vmem [thread:$0]  %s445, 16384, %s447, [#allocation7], 128, 128, 8
        $region60: #{dino_features_forward.5} parent=11 // pred_fallthru
          _
        // Predicated region
        $region61: #{dino_features_forward.5} parent=11 // pred_check
          %p453 = pneg %p322
        $region62: #{dino_features_forward.5} parent=11 // pred_check_branch
          %455 = sbr.rel (%p453) target = $region64
        $region63: #{dino_features_forward.5} parent=11 // pred_region
          _
        $region64: #{dino_features_forward.5} parent=11 // pred_fallthru
          _
        // Predicated region
        $region65: #{dino_features_forward.5} parent=11 // pred_check
          %p456 = pneg %p343
        $region66: #{dino_features_forward.5} parent=11 // pred_check_branch
          %458 = sbr.rel (%p456) target = $region68
        $region67: #{dino_features_forward.5} parent=11 // pred_region
          _
        $region68: #{dino_features_forward.5} parent=11 // pred_fallthru
          _
      $region12: #{dino_features_forward.5} parent=5 // pred_fallthru
        _
      %p459 = scmp.lt.s32.totalorder %s23, 2
      // Predicated region
      $region69: #{dino_features_forward.5} parent=5 // pred_check
        %p460 = pneg %p459
      $region70: #{dino_features_forward.5} parent=5 // pred_check_branch
        %462 = sbr.rel (%p460) target = $region72
      $region71: #{dino_features_forward.5} parent=5 // pred_region
        // Predicated region
        $region73: #{dino_features_forward.5} parent=71 // pred_check
          %p463 = pneg %p43
        $region74: #{dino_features_forward.5} parent=71 // pred_check_branch
          %465 = sbr.rel (%p463) target = $region76
        $region75: #{dino_features_forward.5} parent=71 // pred_region
          %p466 = scmp.lt.s32.totalorder %s23, 1
          %s467 = scalar_select %p466, %s23, 1
          %s468 = smul.addr %s467, 2
          %s469 = smul.addr %s468, 8
          %s470 = scalar_lea.vmem %s0, %s469
        $region76: #{dino_features_forward.5} parent=71 // pred_fallthru
          _
      $region72: #{dino_features_forward.5} parent=5 // pred_fallthru
        _
      %p471 = scmp.le.s32.totalorder 1, %s23
      %p472 = scmp.lt.s32.totalorder %s23, 3
      %p473 = pnand %p471, %p472
      %p474 = pneg %p473
      // Predicated region
      $region77: #{dino_features_forward.5} parent=5 // pred_check
        _
      $region78: #{dino_features_forward.5} parent=5 // pred_check_branch
        %476 = sbr.rel (%p473) target = $region80
      $region79: #{dino_features_forward.5} parent=5 // pred_region
        %s477 = ssub.s32 %s23, 1
        // Predicated region
        $region81: #{dino_features_forward.5} parent=79 // pred_check
          %p478 = pneg %p112
        $region82: #{dino_features_forward.5} parent=79 // pred_check_branch
          %480 = sbr.rel (%p478) target = $region84
        $region83: #{dino_features_forward.5} parent=79 // pred_region
          %482 = dma.done [#allocation5], 12288
        $region84: #{dino_features_forward.5} parent=79 // pred_fallthru
          _
        // Predicated region
        $region85: #{dino_features_forward.5} parent=79 // pred_check
          %p483 = pneg %p154
        $region86: #{dino_features_forward.5} parent=79 // pred_check_branch
          %485 = sbr.rel (%p483) target = $region88
        $region87: #{dino_features_forward.5} parent=79 // pred_region
          %487 = dma.done [#allocation7], 4096
        $region88: #{dino_features_forward.5} parent=79 // pred_fallthru
          _
        // Predicated region
        $region89: #{dino_features_forward.5} parent=79 // pred_check
          %p488 = pneg %p301
        $region90: #{dino_features_forward.5} parent=79 // pred_check_branch
          %490 = sbr.rel (%p488) target = $region92
        $region91: #{dino_features_forward.5} parent=79 // pred_region
          %492 = dma.done [#allocation7], 16384
        $region92: #{dino_features_forward.5} parent=79 // pred_fallthru
          _
        %p493 = scmp.lt.s32.totalorder %s28, 1
        %s494 = scalar_select %p493, %s28, 1
        %s495 = smul.addr %s494, 2
        %s496 = smul.addr %s495, 8
        %s497 = scalar_lea.vmem %s0, %s496
        %p498 = pneg %p49
        %p499 = pneg %p46
        %p500 = pneg %p70
        %p501 = pneg %p67
        %p502 = pneg %p91
        %p503 = pneg %p88
        %p504 = pneg %p112
        %p505 = pneg %p109
        %p506 = pneg %p133
        %p507 = pneg %p130
        %p508 = pneg %p154
        %p509 = pneg %p151
        %p510 = pneg %p175
        %p511 = pneg %p172
        %p512 = pneg %p196
        %p513 = pneg %p193
        %p514 = pneg %p217
        %p515 = pneg %p214
        %p516 = pneg %p238
        %p517 = pneg %p235
        %p518 = pneg %p259
        %p519 = pneg %p256
        %p520 = pneg %p280
        %p521 = pneg %p277
        %p522 = pneg %p301
        %p523 = pneg %p298
        %p524 = pneg %p322
        %p525 = pneg %p319
        %p526 = pneg %p343
        %p527 = pneg %p340
        %p528 = pneg %p369
        %p529 = pneg %p366
        %p530 = scmp.lt.s32.totalorder %s28, 1
        %s531 = scalar_select %p530, %s28, 1
        %s532 = smul.addr %s531, 2
        %s533 = smul.addr %s532, 8
        %s534 = scalar_lea.vmem %s15, %s533
        %p535 = scmp.lt.s32.totalorder %s28, 1
        %s536 = scalar_select %p535, %s28, 1
        %s537 = smul.addr %s536, 2
        %s538 = smul.addr %s537, 8
        %s539 = scalar_lea.vmem %s0, %s538
        %p540 = scmp.lt.s32.totalorder %s28, 1
        %s541 = scalar_select %p540, %s28, 1
        %s542 = smul.addr %s541, 2
        %s543 = smul.addr %s542, 8
        %s544 = scalar_lea.vmem %s15, %s543
        %v546 = vld [vmem:[%s539] sm:$0xff]
        %v547 = vld [vmem:[%s539 + $0x8] sm:$0xff]
        %v548 = vld [vmem:[%s1] sm:$0x3]
        %v549 = vld [vmem:[%s2] sm:$0x3]
        %v550 = vadd.f32 %v546, %v547
        %551 = vadd.xlane.f32.xlu0 %v550
        %v552 = vpop.xlane.xlu0 %551
        %v553 = vrcp.pop 256.0
        %v554 = vmul.f32 256.0, %v553
        %v555 = vsub.f32 1.0, %v554
        %v556 = vmul.f32 %v553, %v555
        %v557 = vadd.f32 %v553, %v556
        %vm558 = vweird.f32 %v553
        %v559 = vsel %vm558, %v553, %v557
        %v560 = vmul.f32 %v552, %v559
        %v561 = vmul.f32 %v546, %v546
        %v562 = vmul.f32 %v547, %v547
        %v563 = vadd.f32 %v561, %v562
        %564 = vadd.xlane.f32.xlu0 %v563
        %v565 = vpop.xlane.xlu0 %564
        %v566 = vmul.f32 %v565, %v559
        %v567 = vmul.f32 %v560, %v560
        %v568 = vsub.f32 %v566, %v567
        %v569 = vsub.f32 %v546, %v560
        %v570 = vsub.f32 %v547, %v560
        %v571 = vadd.f32 %v568, 1e-06
        %v572 = vrsqrt.pop %v571
        %v573 = vmul.f32 %v572, %v571
        %v574 = vmul.f32 %v573, %v572
        %v575 = vmul.f32 0.5, %v574
        %v576 = vsub.f32 1.5, %v575
        %v577 = vmul.f32 %v572, %v576
        %vm578 = vweird.f32 %v571
        %vm579 = vweird.f32 %v572
        %vm580 = vmor %vm578, %vm579
        %v581 = vsel %vm580, %v572, %v577
        %v582 = vmul.f32 %v569, %v581
        %v583 = vmul.f32 %v570, %v581
        %v585 = vperm.slane %v548, 0
        %v586 = vperm.slane %v548, 1
        %v589 = vmul.f32 %v582, %v585
        %v590 = vmul.f32 %v583, %v586
        %v592 = vperm.slane %v549, 0
        %v593 = vperm.slane %v549, 1
        %v596 = vadd.f32 %v589, %v592
        %v597 = vadd.f32 %v590, %v593
        %v598 = vpack.c.bf16 %v596, %v596
        %v599 = vpack.c.bf16 %v597, %v597
        %v600 = vld [vmem:[#allocation4] sm:$0xff]
        %v601 = vld [vmem:[#allocation4 + $0x8] sm:$0xff]
        %v602 = vld [vmem:[#allocation4 + $0x10] sm:$0xff]
        %v603 = vld [vmem:[#allocation4 + $0x18] sm:$0xff]
        %v604 = vld [vmem:[#allocation4 + $0x20] sm:$0xff]
        %v605 = vld [vmem:[#allocation4 + $0x28] sm:$0xff]
        %v606 = vld [vmem:[#allocation4 + $0x30] sm:$0xff]
        %v607 = vld [vmem:[#allocation4 + $0x38] sm:$0xff]
        %v608 = vld [vmem:[#allocation4 + $0x40] sm:$0xff]
        %v609 = vld [vmem:[#allocation4 + $0x48] sm:$0xff]
        %v610 = vld [vmem:[#allocation4 + $0x50] sm:$0xff]
        %v611 = vld [vmem:[#allocation4 + $0x58] sm:$0xff]
        %v612 = vld [vmem:[#allocation4 + $0x60] sm:$0xff]
        %v613 = vld [vmem:[#allocation4 + $0x68] sm:$0xff]
        %v614 = vld [vmem:[#allocation4 + $0x70] sm:$0xff]
        %v615 = vld [vmem:[#allocation4 + $0x78] sm:$0xff]
        %v616 = vld [vmem:[#allocation4 + $0x80] sm:$0xff]
        %v617 = vld [vmem:[#allocation4 + $0x88] sm:$0xff]
        %v618 = vld [vmem:[#allocation4 + $0x90] sm:$0xff]
        %v619 = vld [vmem:[#allocation4 + $0x98] sm:$0xff]
        %v620 = vld [vmem:[#allocation4 + $0xa0] sm:$0xff]
        %v621 = vld [vmem:[#allocation4 + $0xa8] sm:$0xff]
        %v622 = vld [vmem:[#allocation4 + $0xb0] sm:$0xff]
        %v623 = vld [vmem:[#allocation4 + $0xb8] sm:$0xff]
        %v624 = vld [vmem:[#allocation4 + $0xc0] sm:$0xff]
        %v625 = vld [vmem:[#allocation4 + $0xc8] sm:$0xff]
        %v626 = vld [vmem:[#allocation4 + $0xd0] sm:$0xff]
        %v627 = vld [vmem:[#allocation4 + $0xd8] sm:$0xff]
        %v628 = vld [vmem:[#allocation4 + $0xe0] sm:$0xff]
        %v629 = vld [vmem:[#allocation4 + $0xe8] sm:$0xff]
        %v630 = vld [vmem:[#allocation4 + $0xf0] sm:$0xff]
        %v631 = vld [vmem:[#allocation4 + $0xf8] sm:$0xff]
        %v632 = vld [vmem:[#allocation4 + $0x100] sm:$0xff]
        %v633 = vld [vmem:[#allocation4 + $0x108] sm:$0xff]
        %v634 = vld [vmem:[#allocation4 + $0x110] sm:$0xff]
        %v635 = vld [vmem:[#allocation4 + $0x118] sm:$0xff]
        %v636 = vld [vmem:[#allocation4 + $0x120] sm:$0xff]
        %v637 = vld [vmem:[#allocation4 + $0x128] sm:$0xff]
        %v638 = vld [vmem:[#allocation4 + $0x130] sm:$0xff]
        %v639 = vld [vmem:[#allocation4 + $0x138] sm:$0xff]
        %v640 = vld [vmem:[#allocation4 + $0x140] sm:$0xff]
        %v641 = vld [vmem:[#allocation4 + $0x148] sm:$0xff]
        %v642 = vld [vmem:[#allocation4 + $0x150] sm:$0xff]
        %v643 = vld [vmem:[#allocation4 + $0x158] sm:$0xff]
        %v644 = vld [vmem:[#allocation4 + $0x160] sm:$0xff]
        %v645 = vld [vmem:[#allocation4 + $0x168] sm:$0xff]
        %v646 = vld [vmem:[#allocation4 + $0x170] sm:$0xff]
        %v647 = vld [vmem:[#allocation4 + $0x178] sm:$0xff]
        %v648 = vld [vmem:[#allocation4 + $0x180] sm:$0xff]
        %v649 = vld [vmem:[#allocation4 + $0x188] sm:$0xff]
        %v650 = vld [vmem:[#allocation4 + $0x190] sm:$0xff]
        %v651 = vld [vmem:[#allocation4 + $0x198] sm:$0xff]
        %v652 = vld [vmem:[#allocation4 + $0x1a0] sm:$0xff]
        %v653 = vld [vmem:[#allocation4 + $0x1a8] sm:$0xff]
        %v654 = vld [vmem:[#allocation4 + $0x1b0] sm:$0xff]
        %v655 = vld [vmem:[#allocation4 + $0x1b8] sm:$0xff]
        %v656 = vld [vmem:[#allocation4 + $0x1c0] sm:$0xff]
        %v657 = vld [vmem:[#allocation4 + $0x1c8] sm:$0xff]
        %v658 = vld [vmem:[#allocation4 + $0x1d0] sm:$0xff]
        %v659 = vld [vmem:[#allocation4 + $0x1d8] sm:$0xff]
        %v660 = vld [vmem:[#allocation4 + $0x1e0] sm:$0xff]
        %v661 = vld [vmem:[#allocation4 + $0x1e8] sm:$0xff]
        %v662 = vld [vmem:[#allocation4 + $0x1f0] sm:$0xff]
        %v663 = vld [vmem:[#allocation4 + $0x1f8] sm:$0xff]
        %v664 = vld [vmem:[#allocation4 + $0x200] sm:$0xff]
        %v665 = vld [vmem:[#allocation4 + $0x208] sm:$0xff]
        %v666 = vld [vmem:[#allocation4 + $0x210] sm:$0xff]
        %v667 = vld [vmem:[#allocation4 + $0x218] sm:$0xff]
        %v668 = vld [vmem:[#allocation4 + $0x220] sm:$0xff]
        %v669 = vld [vmem:[#allocation4 + $0x228] sm:$0xff]
        %v670 = vld [vmem:[#allocation4 + $0x230] sm:$0xff]
        %v671 = vld [vmem:[#allocation4 + $0x238] sm:$0xff]
        %v672 = vld [vmem:[#allocation4 + $0x240] sm:$0xff]
        %v673 = vld [vmem:[#allocation4 + $0x248] sm:$0xff]
        %v674 = vld [vmem:[#allocation4 + $0x250] sm:$0xff]
        %v675 = vld [vmem:[#allocation4 + $0x258] sm:$0xff]
        %v676 = vld [vmem:[#allocation4 + $0x260] sm:$0xff]
        %v677 = vld [vmem:[#allocation4 + $0x268] sm:$0xff]
        %v678 = vld [vmem:[#allocation4 + $0x270] sm:$0xff]
        %v679 = vld [vmem:[#allocation4 + $0x278] sm:$0xff]
        %v680 = vld [vmem:[#allocation4 + $0x280] sm:$0xff]
        %v681 = vld [vmem:[#allocation4 + $0x288] sm:$0xff]
        %v682 = vld [vmem:[#allocation4 + $0x290] sm:$0xff]
        %v683 = vld [vmem:[#allocation4 + $0x298] sm:$0xff]
        %v684 = vld [vmem:[#allocation4 + $0x2a0] sm:$0xff]
        %v685 = vld [vmem:[#allocation4 + $0x2a8] sm:$0xff]
        %v686 = vld [vmem:[#allocation4 + $0x2b0] sm:$0xff]
        %v687 = vld [vmem:[#allocation4 + $0x2b8] sm:$0xff]
        %v688 = vld [vmem:[#allocation4 + $0x2c0] sm:$0xff]
        %v689 = vld [vmem:[#allocation4 + $0x2c8] sm:$0xff]
        %v690 = vld [vmem:[#allocation4 + $0x2d0] sm:$0xff]
        %v691 = vld [vmem:[#allocation4 + $0x2d8] sm:$0xff]
        %v692 = vld [vmem:[#allocation4 + $0x2e0] sm:$0xff]
        %v693 = vld [vmem:[#allocation4 + $0x2e8] sm:$0xff]
        %v694 = vld [vmem:[#allocation4 + $0x2f0] sm:$0xff]
        %v695 = vld [vmem:[#allocation4 + $0x2f8] sm:$0xff]
        %v696 = vld [vmem:[%s4] sm:$0x3f]
        %v698 = vperm.slane %v696, 0
        %v699 = vperm.slane %v696, 1
        %v700 = vperm.slane %v696, 2
        %v701 = vperm.slane %v696, 3
        %v702 = vperm.slane %v696, 4
        %v703 = vperm.slane %v696, 5
        %v806 = vunpack.c.l.b16 %v600
        %v807 = vunpack.c.h.b16 %v600
        %v808 = vunpack.c.l.b16 %v601
        %v809 = vunpack.c.h.b16 %v601
        %v810 = vunpack.c.l.b16 %v602
        %v811 = vunpack.c.h.b16 %v602
        %v812 = vunpack.c.l.b16 %v603
        %v813 = vunpack.c.h.b16 %v603
        %v814 = vunpack.c.l.b16 %v604
        %v815 = vunpack.c.h.b16 %v604
        %v816 = vunpack.c.l.b16 %v605
        %v817 = vunpack.c.h.b16 %v605
        %v818 = vunpack.c.l.b16 %v606
        %v819 = vunpack.c.h.b16 %v606
        %v820 = vunpack.c.l.b16 %v607
        %v821 = vunpack.c.h.b16 %v607
        %v822 = vunpack.c.l.b16 %v608
        %v823 = vunpack.c.h.b16 %v608
        %v824 = vunpack.c.l.b16 %v609
        %v825 = vunpack.c.h.b16 %v609
        %v826 = vunpack.c.l.b16 %v610
        %v827 = vunpack.c.h.b16 %v610
        %v828 = vunpack.c.l.b16 %v611
        %v829 = vunpack.c.h.b16 %v611
        %v830 = vunpack.c.l.b16 %v612
        %v831 = vunpack.c.h.b16 %v612
        %v832 = vunpack.c.l.b16 %v613
        %v833 = vunpack.c.h.b16 %v613
        %v834 = vunpack.c.l.b16 %v614
        %v835 = vunpack.c.h.b16 %v614
        %v836 = vunpack.c.l.b16 %v615
        %v837 = vunpack.c.h.b16 %v615
        %v838 = vunpack.c.l.b16 %v616
        %v839 = vunpack.c.h.b16 %v616
        %v840 = vunpack.c.l.b16 %v617
        %v841 = vunpack.c.h.b16 %v617
        %v842 = vunpack.c.l.b16 %v618
        %v843 = vunpack.c.h.b16 %v618
        %v844 = vunpack.c.l.b16 %v619
        %v845 = vunpack.c.h.b16 %v619
        %v846 = vunpack.c.l.b16 %v620
        %v847 = vunpack.c.h.b16 %v620
        %v848 = vunpack.c.l.b16 %v621
        %v849 = vunpack.c.h.b16 %v621
        %v850 = vunpack.c.l.b16 %v622
        %v851 = vunpack.c.h.b16 %v622
        %v852 = vunpack.c.l.b16 %v623
        %v853 = vunpack.c.h.b16 %v623
        %v854 = vunpack.c.l.b16 %v624
        %v855 = vunpack.c.h.b16 %v624
        %v856 = vunpack.c.l.b16 %v625
        %v857 = vunpack.c.h.b16 %v625
        %v858 = vunpack.c.l.b16 %v626
        %v859 = vunpack.c.h.b16 %v626
        %v860 = vunpack.c.l.b16 %v627
        %v861 = vunpack.c.h.b16 %v627
        %v862 = vunpack.c.l.b16 %v628
        %v863 = vunpack.c.h.b16 %v628
        %v864 = vunpack.c.l.b16 %v629
        %v865 = vunpack.c.h.b16 %v629
        %v866 = vunpack.c.l.b16 %v630
        %v867 = vunpack.c.h.b16 %v630
        %v868 = vunpack.c.l.b16 %v631
        %v869 = vunpack.c.h.b16 %v631
        %v870 = vunpack.c.l.b16 %v632
        %v871 = vunpack.c.h.b16 %v632
        %v872 = vunpack.c.l.b16 %v633
        %v873 = vunpack.c.h.b16 %v633
        %v874 = vunpack.c.l.b16 %v634
        %v875 = vunpack.c.h.b16 %v634
        %v876 = vunpack.c.l.b16 %v635
        %v877 = vunpack.c.h.b16 %v635
        %v878 = vunpack.c.l.b16 %v636
        %v879 = vunpack.c.h.b16 %v636
        %v880 = vunpack.c.l.b16 %v637
        %v881 = vunpack.c.h.b16 %v637
        %v882 = vunpack.c.l.b16 %v638
        %v883 = vunpack.c.h.b16 %v638
        %v884 = vunpack.c.l.b16 %v639
        %v885 = vunpack.c.h.b16 %v639
        %v886 = vunpack.c.l.b16 %v640
        %v887 = vunpack.c.h.b16 %v640
        %v888 = vunpack.c.l.b16 %v641
        %v889 = vunpack.c.h.b16 %v641
        %v890 = vunpack.c.l.b16 %v642
        %v891 = vunpack.c.h.b16 %v642
        %v892 = vunpack.c.l.b16 %v643
        %v893 = vunpack.c.h.b16 %v643
        %v894 = vunpack.c.l.b16 %v644
        %v895 = vunpack.c.h.b16 %v644
        %v896 = vunpack.c.l.b16 %v645
        %v897 = vunpack.c.h.b16 %v645
        %v898 = vunpack.c.l.b16 %v646
        %v899 = vunpack.c.h.b16 %v646
        %v900 = vunpack.c.l.b16 %v647
        %v901 = vunpack.c.h.b16 %v647
        %v902 = vunpack.c.l.b16 %v648
        %v903 = vunpack.c.h.b16 %v648
        %v904 = vunpack.c.l.b16 %v649
        %v905 = vunpack.c.h.b16 %v649
        %v906 = vunpack.c.l.b16 %v650
        %v907 = vunpack.c.h.b16 %v650
        %v908 = vunpack.c.l.b16 %v651
        %v909 = vunpack.c.h.b16 %v651
        %v910 = vunpack.c.l.b16 %v652
        %v911 = vunpack.c.h.b16 %v652
        %v912 = vunpack.c.l.b16 %v653
        %v913 = vunpack.c.h.b16 %v653
        %v914 = vunpack.c.l.b16 %v654
        %v915 = vunpack.c.h.b16 %v654
        %v916 = vunpack.c.l.b16 %v655
        %v917 = vunpack.c.h.b16 %v655
        %v918 = vunpack.c.l.b16 %v656
        %v919 = vunpack.c.h.b16 %v656
        %v920 = vunpack.c.l.b16 %v657
        %v921 = vunpack.c.h.b16 %v657
        %v922 = vunpack.c.l.b16 %v658
        %v923 = vunpack.c.h.b16 %v658
        %v924 = vunpack.c.l.b16 %v659
        %v925 = vunpack.c.h.b16 %v659
        %v926 = vunpack.c.l.b16 %v660
        %v927 = vunpack.c.h.b16 %v660
        %v928 = vunpack.c.l.b16 %v661
        %v929 = vunpack.c.h.b16 %v661
        %v930 = vunpack.c.l.b16 %v662
        %v931 = vunpack.c.h.b16 %v662
        %v932 = vunpack.c.l.b16 %v663
        %v933 = vunpack.c.h.b16 %v663
        %v934 = vunpack.c.l.b16 %v664
        %v935 = vunpack.c.h.b16 %v664
        %v936 = vunpack.c.l.b16 %v665
        %v937 = vunpack.c.h.b16 %v665
        %v938 = vunpack.c.l.b16 %v666
        %v939 = vunpack.c.h.b16 %v666
        %v940 = vunpack.c.l.b16 %v667
        %v941 = vunpack.c.h.b16 %v667
        %v942 = vunpack.c.l.b16 %v668
        %v943 = vunpack.c.h.b16 %v668
        %v944 = vunpack.c.l.b16 %v669
        %v945 = vunpack.c.h.b16 %v669
        %v946 = vunpack.c.l.b16 %v670
        %v947 = vunpack.c.h.b16 %v670
        %v948 = vunpack.c.l.b16 %v671
        %v949 = vunpack.c.h.b16 %v671
        %v950 = vunpack.c.l.b16 %v672
        %v951 = vunpack.c.h.b16 %v672
        %v952 = vunpack.c.l.b16 %v673
        %v953 = vunpack.c.h.b16 %v673
        %v954 = vunpack.c.l.b16 %v674
        %v955 = vunpack.c.h.b16 %v674
        %v956 = vunpack.c.l.b16 %v675
        %v957 = vunpack.c.h.b16 %v675
        %v958 = vunpack.c.l.b16 %v676
        %v959 = vunpack.c.h.b16 %v676
        %v960 = vunpack.c.l.b16 %v677
        %v961 = vunpack.c.h.b16 %v677
        %v962 = vunpack.c.l.b16 %v678
        %v963 = vunpack.c.h.b16 %v678
        %v964 = vunpack.c.l.b16 %v679
        %v965 = vunpack.c.h.b16 %v679
        %v966 = vunpack.c.l.b16 %v680
        %v967 = vunpack.c.h.b16 %v680
        %v968 = vunpack.c.l.b16 %v681
        %v969 = vunpack.c.h.b16 %v681
        %v970 = vunpack.c.l.b16 %v682
        %v971 = vunpack.c.h.b16 %v682
        %v972 = vunpack.c.l.b16 %v683
        %v973 = vunpack.c.h.b16 %v683
        %v974 = vunpack.c.l.b16 %v684
        %v975 = vunpack.c.h.b16 %v684
        %v976 = vunpack.c.l.b16 %v685
        %v977 = vunpack.c.h.b16 %v685
        %v978 = vunpack.c.l.b16 %v686
        %v979 = vunpack.c.h.b16 %v686
        %v980 = vunpack.c.l.b16 %v687
        %v981 = vunpack.c.h.b16 %v687
        %v982 = vunpack.c.l.b16 %v688
        %v983 = vunpack.c.h.b16 %v688
        %v984 = vunpack.c.l.b16 %v689
        %v985 = vunpack.c.h.b16 %v689
        %v986 = vunpack.c.l.b16 %v690
        %v987 = vunpack.c.h.b16 %v690
        %v988 = vunpack.c.l.b16 %v691
        %v989 = vunpack.c.h.b16 %v691
        %v990 = vunpack.c.l.b16 %v692
        %v991 = vunpack.c.h.b16 %v692
        %v992 = vunpack.c.l.b16 %v693
        %v993 = vunpack.c.h.b16 %v693
        %v994 = vunpack.c.l.b16 %v694
        %v995 = vunpack.c.h.b16 %v694
        %v996 = vunpack.c.l.b16 %v695
        %v997 = vunpack.c.h.b16 %v695
        %v998 = vpack.c.b16 %v812, %v806
        %v999 = vpack.c.b16 %v813, %v807
        %v1000 = vpack.c.b16 %v814, %v808
        %v1001 = vpack.c.b16 %v815, %v809
        %v1002 = vpack.c.b16 %v816, %v810
        %v1003 = vpack.c.b16 %v817, %v811
        %v1004 = vpack.c.b16 %v824, %v818
        %v1005 = vpack.c.b16 %v825, %v819
        %v1006 = vpack.c.b16 %v826, %v820
        %v1007 = vpack.c.b16 %v827, %v821
        %v1008 = vpack.c.b16 %v828, %v822
        %v1009 = vpack.c.b16 %v829, %v823
        %v1010 = vpack.c.b16 %v836, %v830
        %v1011 = vpack.c.b16 %v837, %v831
        %v1012 = vpack.c.b16 %v838, %v832
        %v1013 = vpack.c.b16 %v839, %v833
        %v1014 = vpack.c.b16 %v840, %v834
        %v1015 = vpack.c.b16 %v841, %v835
        %v1016 = vpack.c.b16 %v848, %v842
        %v1017 = vpack.c.b16 %v849, %v843
        %v1018 = vpack.c.b16 %v850, %v844
        %v1019 = vpack.c.b16 %v851, %v845
        %v1020 = vpack.c.b16 %v852, %v846
        %v1021 = vpack.c.b16 %v853, %v847
        %v1022 = vpack.c.b16 %v860, %v854
        %v1023 = vpack.c.b16 %v861, %v855
        %v1024 = vpack.c.b16 %v862, %v856
        %v1025 = vpack.c.b16 %v863, %v857
        %v1026 = vpack.c.b16 %v864, %v858
        %v1027 = vpack.c.b16 %v865, %v859
        %v1028 = vpack.c.b16 %v872, %v866
        %v1029 = vpack.c.b16 %v873, %v867
        %v1030 = vpack.c.b16 %v874, %v868
        %v1031 = vpack.c.b16 %v875, %v869
        %v1032 = vpack.c.b16 %v876, %v870
        %v1033 = vpack.c.b16 %v877, %v871
        %v1034 = vpack.c.b16 %v884, %v878
        %v1035 = vpack.c.b16 %v885, %v879
        %v1036 = vpack.c.b16 %v886, %v880
        %v1037 = vpack.c.b16 %v887, %v881
        %v1038 = vpack.c.b16 %v888, %v882
        %v1039 = vpack.c.b16 %v889, %v883
        %v1040 = vpack.c.b16 %v896, %v890
        %v1041 = vpack.c.b16 %v897, %v891
        %v1042 = vpack.c.b16 %v898, %v892
        %v1043 = vpack.c.b16 %v899, %v893
        %v1044 = vpack.c.b16 %v900, %v894
        %v1045 = vpack.c.b16 %v901, %v895
        %v1046 = vpack.c.b16 %v908, %v902
        %v1047 = vpack.c.b16 %v909, %v903
        %v1048 = vpack.c.b16 %v910, %v904
        %v1049 = vpack.c.b16 %v911, %v905
        %v1050 = vpack.c.b16 %v912, %v906
        %v1051 = vpack.c.b16 %v913, %v907
        %v1052 = vpack.c.b16 %v920, %v914
        %v1053 = vpack.c.b16 %v921, %v915
        %v1054 = vpack.c.b16 %v922, %v916
        %v1055 = vpack.c.b16 %v923, %v917
        %v1056 = vpack.c.b16 %v924, %v918
        %v1057 = vpack.c.b16 %v925, %v919
        %v1058 = vpack.c.b16 %v932, %v926
        %v1059 = vpack.c.b16 %v933, %v927
        %v1060 = vpack.c.b16 %v934, %v928
        %v1061 = vpack.c.b16 %v935, %v929
        %v1062 = vpack.c.b16 %v936, %v930
        %v1063 = vpack.c.b16 %v937, %v931
        %v1064 = vpack.c.b16 %v944, %v938
        %v1065 = vpack.c.b16 %v945, %v939
        %v1066 = vpack.c.b16 %v946, %v940
        %v1067 = vpack.c.b16 %v947, %v941
        %v1068 = vpack.c.b16 %v948, %v942
        %v1069 = vpack.c.b16 %v949, %v943
        %v1070 = vpack.c.b16 %v956, %v950
        %v1071 = vpack.c.b16 %v957, %v951
        %v1072 = vpack.c.b16 %v958, %v952
        %v1073 = vpack.c.b16 %v959, %v953
        %v1074 = vpack.c.b16 %v960, %v954
        %v1075 = vpack.c.b16 %v961, %v955
        %v1076 = vpack.c.b16 %v968, %v962
        %v1077 = vpack.c.b16 %v969, %v963
        %v1078 = vpack.c.b16 %v970, %v964
        %v1079 = vpack.c.b16 %v971, %v965
        %v1080 = vpack.c.b16 %v972, %v966
        %v1081 = vpack.c.b16 %v973, %v967
        %v1082 = vpack.c.b16 %v980, %v974
        %v1083 = vpack.c.b16 %v981, %v975
        %v1084 = vpack.c.b16 %v982, %v976
        %v1085 = vpack.c.b16 %v983, %v977
        %v1086 = vpack.c.b16 %v984, %v978
        %v1087 = vpack.c.b16 %v985, %v979
        %v1088 = vpack.c.b16 %v992, %v986
        %v1089 = vpack.c.b16 %v993, %v987
        %v1090 = vpack.c.b16 %v994, %v988
        %v1091 = vpack.c.b16 %v995, %v989
        %v1092 = vpack.c.b16 %v996, %v990
        %v1093 = vpack.c.b16 %v997, %v991
        %1190 = vmatpush.bf16.msra.mxu0 %v1040
        %1191 = vmatpush.bf16.msra.mxu0 %v1034
        %1192 = vmatpush.bf16.msra.mxu0 %v1028
        %1193 = vmatpush.bf16.msra.mxu0 %v1022
        %1194 = vmatpush.bf16.msra.mxu0 %v1016
        %1195 = vmatpush.bf16.msra.mxu0 %v1010
        %1196 = vmatpush.bf16.msra.mxu0 %v1004
        %1197 = vmatpush.bf16.msra.mxu0 %v998
        %1198 = vmatmul.bf16.gmra.mxu0 %v598
        %v1199 = vpop.f32.mrf.mxu0
        %v1200 = vadd.f32 %v698, %v1199
        %v1201 = vpop.f32.mrf.mxu0
        %1202 = vdwg.mxu0
        %1203 = vmatpush.bf16.msra.mxu0 %v1088
        %1204 = vmatpush.bf16.msra.mxu0 %v1082
        %1205 = vmatpush.bf16.msra.mxu0 %v1076
        %1206 = vmatpush.bf16.msra.mxu0 %v1070
        %1207 = vmatpush.bf16.msra.mxu0 %v1064
        %1208 = vmatpush.bf16.msra.mxu0 %v1058
        %1209 = vmatpush.bf16.msra.mxu0 %v1052
        %1210 = vmatpush.bf16.msra.mxu0 %v1046
        %1211 = vmatmul.bf16.gmra.mxu0 %v599
        %v1212 = vpop.f32.mrf.mxu0
        %v1213 = vadd.f32 %v1200, %v1212
        %v1214 = vpop.f32.mrf.mxu0
        %1215 = vdwg.mxu0
        %1216 = vmatpush.bf16.msra.mxu0 %v1041
        %1217 = vmatpush.bf16.msra.mxu0 %v1035
        %1218 = vmatpush.bf16.msra.mxu0 %v1029
        %1219 = vmatpush.bf16.msra.mxu0 %v1023
        %1220 = vmatpush.bf16.msra.mxu0 %v1017
        %1221 = vmatpush.bf16.msra.mxu0 %v1011
        %1222 = vmatpush.bf16.msra.mxu0 %v1005
        %1223 = vmatpush.bf16.msra.mxu0 %v999
        %1224 = vmatmul.bf16.gmra.mxu0 %v598
        %v1225 = vpop.f32.mrf.mxu0
        %v1226 = vadd.f32 %v699, %v1225
        %v1227 = vpop.f32.mrf.mxu0
        %1228 = vdwg.mxu0
        %1229 = vmatpush.bf16.msra.mxu0 %v1089
        %1230 = vmatpush.bf16.msra.mxu0 %v1083
        %1231 = vmatpush.bf16.msra.mxu0 %v1077
        %1232 = vmatpush.bf16.msra.mxu0 %v1071
        %1233 = vmatpush.bf16.msra.mxu0 %v1065
        %1234 = vmatpush.bf16.msra.mxu0 %v1059
        %1235 = vmatpush.bf16.msra.mxu0 %v1053
        %1236 = vmatpush.bf16.msra.mxu0 %v1047
        %1237 = vmatmul.bf16.gmra.mxu0 %v599
        %v1238 = vpop.f32.mrf.mxu0
        %v1239 = vadd.f32 %v1226, %v1238
        %v1240 = vpop.f32.mrf.mxu0
        %1241 = vdwg.mxu0
        %1242 = vmatpush.bf16.msra.mxu0 %v1042
        %1243 = vmatpush.bf16.msra.mxu0 %v1036
        %1244 = vmatpush.bf16.msra.mxu0 %v1030
        %1245 = vmatpush.bf16.msra.mxu0 %v1024
        %1246 = vmatpush.bf16.msra.mxu0 %v1018
        %1247 = vmatpush.bf16.msra.mxu0 %v1012
        %1248 = vmatpush.bf16.msra.mxu0 %v1006
        %1249 = vmatpush.bf16.msra.mxu0 %v1000
        %1250 = vmatmul.bf16.gmra.mxu0 %v598
        %v1251 = vpop.f32.mrf.mxu0
        %v1252 = vadd.f32 %v700, %v1251
        %v1253 = vpop.f32.mrf.mxu0
        %1254 = vdwg.mxu0
        %1255 = vmatpush.bf16.msra.mxu0 %v1090
        %1256 = vmatpush.bf16.msra.mxu0 %v1084
        %1257 = vmatpush.bf16.msra.mxu0 %v1078
        %1258 = vmatpush.bf16.msra.mxu0 %v1072
        %1259 = vmatpush.bf16.msra.mxu0 %v1066
        %1260 = vmatpush.bf16.msra.mxu0 %v1060
        %1261 = vmatpush.bf16.msra.mxu0 %v1054
        %1262 = vmatpush.bf16.msra.mxu0 %v1048
        %1263 = vmatmul.bf16.gmra.mxu0 %v599
        %v1264 = vpop.f32.mrf.mxu0
        %v1265 = vadd.f32 %v1252, %v1264
        %v1266 = vpop.f32.mrf.mxu0
        %1267 = vdwg.mxu0
        %1268 = vmatpush.bf16.msra.mxu0 %v1043
        %1269 = vmatpush.bf16.msra.mxu0 %v1037
        %1270 = vmatpush.bf16.msra.mxu0 %v1031
        %1271 = vmatpush.bf16.msra.mxu0 %v1025
        %1272 = vmatpush.bf16.msra.mxu0 %v1019
        %1273 = vmatpush.bf16.msra.mxu0 %v1013
        %1274 = vmatpush.bf16.msra.mxu0 %v1007
        %1275 = vmatpush.bf16.msra.mxu0 %v1001
        %1276 = vmatmul.bf16.gmra.mxu0 %v598
        %v1277 = vpop.f32.mrf.mxu0
        %v1278 = vadd.f32 %v701, %v1277
        %v1279 = vpop.f32.mrf.mxu0
        %1280 = vdwg.mxu0
        %1281 = vmatpush.bf16.msra.mxu0 %v1091
        %1282 = vmatpush.bf16.msra.mxu0 %v1085
        %1283 = vmatpush.bf16.msra.mxu0 %v1079
        %1284 = vmatpush.bf16.msra.mxu0 %v1073
        %1285 = vmatpush.bf16.msra.mxu0 %v1067
        %1286 = vmatpush.bf16.msra.mxu0 %v1061
        %1287 = vmatpush.bf16.msra.mxu0 %v1055
        %1288 = vmatpush.bf16.msra.mxu0 %v1049
        %1289 = vmatmul.bf16.gmra.mxu0 %v599
        %v1290 = vpop.f32.mrf.mxu0
        %v1291 = vadd.f32 %v1278, %v1290
        %v1292 = vpop.f32.mrf.mxu0
        %1293 = vdwg.mxu0
        %1294 = vmatpush.bf16.msra.mxu0 %v1044
        %1295 = vmatpush.bf16.msra.mxu0 %v1038
        %1296 = vmatpush.bf16.msra.mxu0 %v1032
        %1297 = vmatpush.bf16.msra.mxu0 %v1026
        %1298 = vmatpush.bf16.msra.mxu0 %v1020
        %1299 = vmatpush.bf16.msra.mxu0 %v1014
        %1300 = vmatpush.bf16.msra.mxu0 %v1008
        %1301 = vmatpush.bf16.msra.mxu0 %v1002
        %1302 = vmatmul.bf16.gmra.mxu0 %v598
        %v1303 = vpop.f32.mrf.mxu0
        %v1304 = vadd.f32 %v702, %v1303
        %v1305 = vpop.f32.mrf.mxu0
        %1306 = vdwg.mxu0
        %1307 = vmatpush.bf16.msra.mxu0 %v1092
        %1308 = vmatpush.bf16.msra.mxu0 %v1086
        %1309 = vmatpush.bf16.msra.mxu0 %v1080
        %1310 = vmatpush.bf16.msra.mxu0 %v1074
        %1311 = vmatpush.bf16.msra.mxu0 %v1068
        %1312 = vmatpush.bf16.msra.mxu0 %v1062
        %1313 = vmatpush.bf16.msra.mxu0 %v1056
        %1314 = vmatpush.bf16.msra.mxu0 %v1050
        %1315 = vmatmul.bf16.gmra.mxu0 %v599
        %v1316 = vpop.f32.mrf.mxu0
        %v1317 = vadd.f32 %v1304, %v1316
        %v1318 = vpop.f32.mrf.mxu0
        %1319 = vdwg.mxu0
        %1320 = vmatpush.bf16.msra.mxu0 %v1045
        %1321 = vmatpush.bf16.msra.mxu0 %v1039
        %1322 = vmatpush.bf16.msra.mxu0 %v1033
        %1323 = vmatpush.bf16.msra.mxu0 %v1027
        %1324 = vmatpush.bf16.msra.mxu0 %v1021
        %1325 = vmatpush.bf16.msra.mxu0 %v1015
        %1326 = vmatpush.bf16.msra.mxu0 %v1009
        %1327 = vmatpush.bf16.msra.mxu0 %v1003
        %1328 = vmatmul.bf16.gmra.mxu0 %v598
        %v1329 = vpop.f32.mrf.mxu0
        %v1330 = vadd.f32 %v703, %v1329
        %v1331 = vpop.f32.mrf.mxu0
        %1332 = vdwg.mxu0
        %1333 = vmatpush.bf16.msra.mxu0 %v1093
        %1334 = vmatpush.bf16.msra.mxu0 %v1087
        %1335 = vmatpush.bf16.msra.mxu0 %v1081
        %1336 = vmatpush.bf16.msra.mxu0 %v1075
        %1337 = vmatpush.bf16.msra.mxu0 %v1069
        %1338 = vmatpush.bf16.msra.mxu0 %v1063
        %1339 = vmatpush.bf16.msra.mxu0 %v1057
        %1340 = vmatpush.bf16.msra.mxu0 %v1051
        %1341 = vmatmul.bf16.gmra.mxu0 %v599
        %v1342 = vpop.f32.mrf.mxu0
        %v1343 = vadd.f32 %v1330, %v1342
        %v1344 = vpop.f32.mrf.mxu0
        %1345 = vdwg.mxu0
        %1346 = vst [vmem:[#allocation2] sm:$0xff] %v1213
        %1347 = vst [vmem:[#allocation2 + $0x8] sm:$0xff] %v1239
        %1348 = vst [vmem:[#allocation2 + $0x10] sm:$0xff] %v1265
        %1349 = vst [vmem:[#allocation2 + $0x18] sm:$0xff] %v1291
        %1350 = vst [vmem:[#allocation2 + $0x20] sm:$0xff] %v1317
        %1351 = vst [vmem:[#allocation2 + $0x28] sm:$0xff] %v1343
        %v1352 = vlaneseq
        %v1353 = vand.u32 %v1352, 127
        %vm1354 = vcmp.lt.s32.totalorder %v1353, 5
        %v1355 = vsel %vm1354, 0.0, -1e+30
        %v1356 = vld [vmem:[#allocation2] sm:$0xff]
        %v1357 = vpack.c.bf16 %v1356, %v1356
        %v1358 = vld [vmem:[#allocation2 + $0x10] sm:$0xff]
        %v1359 = vpack.c.bf16 %v1358, %v1358
        %v1360 = vld [vmem:[#allocation2 + $0x20] sm:$0xff]
        %v1361 = vpack.c.bf16 %v1360, %v1360
        %1362 = vmatpush.bf16.xpose.msra.mxu0 0
        %1363 = vmatpush.bf16.xpose.msra.mxu0 0
        %1364 = vmatpush.bf16.xpose.msra.mxu0 0
        %1365 = vmatpush.bf16.xpose.msra.mxu0 0
        %1366 = vmatpush.bf16.xpose.msra.mxu0 0
        %1367 = vmatpush.bf16.xpose.msra.mxu0 0
        %1368 = vmatpush.bf16.xpose.msra.mxu0 0
        %1369 = vmatpush.bf16.xpose.msra.mxu0 %v1359
        %1370 = vmatmul.bf16.gmra.mxu0 %v1357
        %v1371 = vpop.f32.mrf.mxu0
        %v1372 = vadd.f32 0.0, %v1371
        %v1373 = vpop.f32.mrf.mxu0
        %1374 = vdwg.mxu0
        %v1375 = vmul.f32 %v1372, 0.088388346
        %v1376 = vadd.f32 %v1375, %v1355
        %vm1377 = vcmask 64512
        %v1378 = vsel %vm1377, %v1376, -inf
        %1379 = vmax.xlane.f32.xlu0 %v1378
        %v1380 = vpop.xlane.xlu0 %1379
        %v1381 = vsub.f32 %v1376, %v1380
        %v1382 = vmul.f32 %v1381, 1.442695
        %v1383 = vpow.pop %v1382
        %v1384 = vsel %vm1377, %v1383, 0.0
        %1385 = vadd.xlane.f32.xlu0 %v1384
        %v1386 = vpop.xlane.xlu0 %1385
        %v1387 = vrcp.pop %v1386
        %v1388 = vmul.f32 %v1386, %v1387
        %v1389 = vsub.f32 1.0, %v1388
        %v1390 = vmul.f32 %v1387, %v1389
        %v1391 = vadd.f32 %v1387, %v1390
        %vm1392 = vweird.f32 %v1386
        %vm1393 = vweird.f32 %v1387
        %vm1394 = vmor %vm1392, %vm1393
        %v1395 = vsel %vm1394, %v1387, %v1391
        %v1396 = vand.u32 2147483647, %v1386
        %vm1397 = vcmp.eq.f32.partialorder %v1396, 8.507059e+37
        %v1398 = vand.u32 %v1386, 2147483648
        %v1399 = vor.u32 1.1754944e-38, %v1398
        %v1400 = vsel %vm1397, %v1399, %v1395
        %v1401 = vmul.f32 %v1383, %v1400
        %v1402 = vpack.c.bf16 %v1401, %v1401
        %v1404 = vsel %vm1377, %v1402, 0
        %vm1406 = vcmask 1043456
        %v1408 = vsel %vm1406, %v1361, 0
        %1410 = vmatpush.bf16.msra.mxu0 0
        %1411 = vmatpush.bf16.msra.mxu0 0
        %1412 = vmatpush.bf16.msra.mxu0 0
        %1413 = vmatpush.bf16.msra.mxu0 0
        %1414 = vmatpush.bf16.msra.mxu0 0
        %1415 = vmatpush.bf16.msra.mxu0 0
        %1416 = vmatpush.bf16.msra.mxu0 0
        %1417 = vmatpush.bf16.msra.mxu0 %v1408
        %1418 = vmatmul.bf16.gmra.mxu0 %v1404
        %v1419 = vpop.f32.mrf.mxu0
        %v1420 = vadd.f32 0.0, %v1419
        %v1421 = vpop.f32.mrf.mxu0
        %1422 = vdwg.mxu0
        %1423 = vst [vmem:[#allocation3] sm:$0xff] %v1420
        %v1424 = vld [vmem:[#allocation2 + $0x8] sm:$0xff]
        %v1425 = vpack.c.bf16 %v1424, %v1424
        %v1426 = vld [vmem:[#allocation2 + $0x18] sm:$0xff]
        %v1427 = vpack.c.bf16 %v1426, %v1426
        %v1428 = vld [vmem:[#allocation2 + $0x28] sm:$0xff]
        %v1429 = vpack.c.bf16 %v1428, %v1428
        %1430 = vmatpush.bf16.xpose.msra.mxu0 0
        %1431 = vmatpush.bf16.xpose.msra.mxu0 0
        %1432 = vmatpush.bf16.xpose.msra.mxu0 0
        %1433 = vmatpush.bf16.xpose.msra.mxu0 0
        %1434 = vmatpush.bf16.xpose.msra.mxu0 0
        %1435 = vmatpush.bf16.xpose.msra.mxu0 0
        %1436 = vmatpush.bf16.xpose.msra.mxu0 0
        %1437 = vmatpush.bf16.xpose.msra.mxu0 %v1427
        %1438 = vmatmul.bf16.gmra.mxu0 %v1425
        %v1439 = vpop.f32.mrf.mxu0
        %v1440 = vadd.f32 0.0, %v1439
        %v1441 = vpop.f32.mrf.mxu0
        %1442 = vdwg.mxu0
        %v1443 = vmul.f32 %v1440, 0.088388346
        %v1444 = vadd.f32 %v1443, %v1355
        %v1445 = vsel %vm1377, %v1444, -inf
        %1446 = vmax.xlane.f32.xlu0 %v1445
        %v1447 = vpop.xlane.xlu0 %1446
        %v1448 = vsub.f32 %v1444, %v1447
        %v1449 = vmul.f32 %v1448, 1.442695
        %v1450 = vpow.pop %v1449
        %v1451 = vsel %vm1377, %v1450, 0.0
        %1452 = vadd.xlane.f32.xlu0 %v1451
        %v1453 = vpop.xlane.xlu0 %1452
        %v1454 = vrcp.pop %v1453
        %v1455 = vmul.f32 %v1453, %v1454
        %v1456 = vsub.f32 1.0, %v1455
        %v1457 = vmul.f32 %v1454, %v1456
        %v1458 = vadd.f32 %v1454, %v1457
        %vm1459 = vweird.f32 %v1453
        %vm1460 = vweird.f32 %v1454
        %vm1461 = vmor %vm1459, %vm1460
        %v1462 = vsel %vm1461, %v1454, %v1458
        %v1463 = vand.u32 2147483647, %v1453
        %vm1464 = vcmp.eq.f32.partialorder %v1463, 8.507059e+37
        %v1465 = vand.u32 %v1453, 2147483648
        %v1466 = vor.u32 1.1754944e-38, %v1465
        %v1467 = vsel %vm1464, %v1466, %v1462
        %v1468 = vmul.f32 %v1450, %v1467
        %v1469 = vpack.c.bf16 %v1468, %v1468
        %v1471 = vsel %vm1377, %v1469, 0
        %v1474 = vsel %vm1406, %v1429, 0
        %1476 = vmatpush.bf16.msra.mxu0 0
        %1477 = vmatpush.bf16.msra.mxu0 0
        %1478 = vmatpush.bf16.msra.mxu0 0
        %1479 = vmatpush.bf16.msra.mxu0 0
        %1480 = vmatpush.bf16.msra.mxu0 0
        %1481 = vmatpush.bf16.msra.mxu0 0
        %1482 = vmatpush.bf16.msra.mxu0 0
        %1483 = vmatpush.bf16.msra.mxu0 %v1474
        %1484 = vmatmul.bf16.gmra.mxu0 %v1471
        %v1485 = vpop.f32.mrf.mxu0
        %v1486 = vadd.f32 0.0, %v1485
        %v1487 = vpop.f32.mrf.mxu0
        %1488 = vdwg.mxu0
        %1489 = vst [vmem:[#allocation3 + $0x8] sm:$0xff] %v1486
        %v1490 = vld [vmem:[#allocation3] sm:$0xff]
        %v1491 = vld [vmem:[#allocation3 + $0x8] sm:$0xff]
        %v1492 = vpack.c.bf16 %v1490, %v1490
        %v1493 = vpack.c.bf16 %v1491, %v1491
        %v1494 = vld [vmem:[#allocation6] sm:$0xff]
        %v1495 = vld [vmem:[#allocation6 + $0x8] sm:$0xff]
        %v1496 = vld [vmem:[#allocation6 + $0x10] sm:$0xff]
        %v1497 = vld [vmem:[#allocation6 + $0x18] sm:$0xff]
        %v1498 = vld [vmem:[#allocation6 + $0x20] sm:$0xff]
        %v1499 = vld [vmem:[#allocation6 + $0x28] sm:$0xff]
        %v1500 = vld [vmem:[#allocation6 + $0x30] sm:$0xff]
        %v1501 = vld [vmem:[#allocation6 + $0x38] sm:$0xff]
        %v1502 = vld [vmem:[#allocation6 + $0x40] sm:$0xff]
        %v1503 = vld [vmem:[#allocation6 + $0x48] sm:$0xff]
        %v1504 = vld [vmem:[#allocation6 + $0x50] sm:$0xff]
        %v1505 = vld [vmem:[#allocation6 + $0x58] sm:$0xff]
        %v1506 = vld [vmem:[#allocation6 + $0x60] sm:$0xff]
        %v1507 = vld [vmem:[#allocation6 + $0x68] sm:$0xff]
        %v1508 = vld [vmem:[#allocation6 + $0x70] sm:$0xff]
        %v1509 = vld [vmem:[#allocation6 + $0x78] sm:$0xff]
        %v1510 = vld [vmem:[#allocation6 + $0x80] sm:$0xff]
        %v1511 = vld [vmem:[#allocation6 + $0x88] sm:$0xff]
        %v1512 = vld [vmem:[#allocation6 + $0x90] sm:$0xff]
        %v1513 = vld [vmem:[#allocation6 + $0x98] sm:$0xff]
        %v1514 = vld [vmem:[#allocation6 + $0xa0] sm:$0xff]
        %v1515 = vld [vmem:[#allocation6 + $0xa8] sm:$0xff]
        %v1516 = vld [vmem:[#allocation6 + $0xb0] sm:$0xff]
        %v1517 = vld [vmem:[#allocation6 + $0xb8] sm:$0xff]
        %v1518 = vld [vmem:[#allocation6 + $0xc0] sm:$0xff]
        %v1519 = vld [vmem:[#allocation6 + $0xc8] sm:$0xff]
        %v1520 = vld [vmem:[#allocation6 + $0xd0] sm:$0xff]
        %v1521 = vld [vmem:[#allocation6 + $0xd8] sm:$0xff]
        %v1522 = vld [vmem:[#allocation6 + $0xe0] sm:$0xff]
        %v1523 = vld [vmem:[#allocation6 + $0xe8] sm:$0xff]
        %v1524 = vld [vmem:[#allocation6 + $0xf0] sm:$0xff]
        %v1525 = vld [vmem:[#allocation6 + $0xf8] sm:$0xff]
        %v1526 = vld [vmem:[%s6] sm:$0x3]
        %v1528 = vperm.slane %v1526, 0
        %v1529 = vperm.slane %v1526, 1
        %v1564 = vunpack.c.l.b16 %v1494
        %v1565 = vunpack.c.h.b16 %v1494
        %v1566 = vunpack.c.l.b16 %v1495
        %v1567 = vunpack.c.h.b16 %v1495
        %v1568 = vunpack.c.l.b16 %v1496
        %v1569 = vunpack.c.h.b16 %v1496
        %v1570 = vunpack.c.l.b16 %v1497
        %v1571 = vunpack.c.h.b16 %v1497
        %v1572 = vunpack.c.l.b16 %v1498
        %v1573 = vunpack.c.h.b16 %v1498
        %v1574 = vunpack.c.l.b16 %v1499
        %v1575 = vunpack.c.h.b16 %v1499
        %v1576 = vunpack.c.l.b16 %v1500
        %v1577 = vunpack.c.h.b16 %v1500
        %v1578 = vunpack.c.l.b16 %v1501
        %v1579 = vunpack.c.h.b16 %v1501
        %v1580 = vunpack.c.l.b16 %v1502
        %v1581 = vunpack.c.h.b16 %v1502
        %v1582 = vunpack.c.l.b16 %v1503
        %v1583 = vunpack.c.h.b16 %v1503
        %v1584 = vunpack.c.l.b16 %v1504
        %v1585 = vunpack.c.h.b16 %v1504
        %v1586 = vunpack.c.l.b16 %v1505
        %v1587 = vunpack.c.h.b16 %v1505
        %v1588 = vunpack.c.l.b16 %v1506
        %v1589 = vunpack.c.h.b16 %v1506
        %v1590 = vunpack.c.l.b16 %v1507
        %v1591 = vunpack.c.h.b16 %v1507
        %v1592 = vunpack.c.l.b16 %v1508
        %v1593 = vunpack.c.h.b16 %v1508
        %v1594 = vunpack.c.l.b16 %v1509
        %v1595 = vunpack.c.h.b16 %v1509
        %v1596 = vunpack.c.l.b16 %v1510
        %v1597 = vunpack.c.h.b16 %v1510
        %v1598 = vunpack.c.l.b16 %v1511
        %v1599 = vunpack.c.h.b16 %v1511
        %v1600 = vunpack.c.l.b16 %v1512
        %v1601 = vunpack.c.h.b16 %v1512
        %v1602 = vunpack.c.l.b16 %v1513
        %v1603 = vunpack.c.h.b16 %v1513
        %v1604 = vunpack.c.l.b16 %v1514
        %v1605 = vunpack.c.h.b16 %v1514
        %v1606 = vunpack.c.l.b16 %v1515
        %v1607 = vunpack.c.h.b16 %v1515
        %v1608 = vunpack.c.l.b16 %v1516
        %v1609 = vunpack.c.h.b16 %v1516
        %v1610 = vunpack.c.l.b16 %v1517
        %v1611 = vunpack.c.h.b16 %v1517
        %v1612 = vunpack.c.l.b16 %v1518
        %v1613 = vunpack.c.h.b16 %v1518
        %v1614 = vunpack.c.l.b16 %v1519
        %v1615 = vunpack.c.h.b16 %v1519
        %v1616 = vunpack.c.l.b16 %v1520
        %v1617 = vunpack.c.h.b16 %v1520
        %v1618 = vunpack.c.l.b16 %v1521
        %v1619 = vunpack.c.h.b16 %v1521
        %v1620 = vunpack.c.l.b16 %v1522
        %v1621 = vunpack.c.h.b16 %v1522
        %v1622 = vunpack.c.l.b16 %v1523
        %v1623 = vunpack.c.h.b16 %v1523
        %v1624 = vunpack.c.l.b16 %v1524
        %v1625 = vunpack.c.h.b16 %v1524
        %v1626 = vunpack.c.l.b16 %v1525
        %v1627 = vunpack.c.h.b16 %v1525
        %v1628 = vpack.c.b16 %v1566, %v1564
        %v1629 = vpack.c.b16 %v1567, %v1565
        %v1630 = vpack.c.b16 %v1570, %v1568
        %v1631 = vpack.c.b16 %v1571, %v1569
        %v1632 = vpack.c.b16 %v1574, %v1572
        %v1633 = vpack.c.b16 %v1575, %v1573
        %v1634 = vpack.c.b16 %v1578, %v1576
        %v1635 = vpack.c.b16 %v1579, %v1577
        %v1636 = vpack.c.b16 %v1582, %v1580
        %v1637 = vpack.c.b16 %v1583, %v1581
        %v1638 = vpack.c.b16 %v1586, %v1584
        %v1639 = vpack.c.b16 %v1587, %v1585
        %v1640 = vpack.c.b16 %v1590, %v1588
        %v1641 = vpack.c.b16 %v1591, %v1589
        %v1642 = vpack.c.b16 %v1594, %v1592
        %v1643 = vpack.c.b16 %v1595, %v1593
        %v1644 = vpack.c.b16 %v1598, %v1596
        %v1645 = vpack.c.b16 %v1599, %v1597
        %v1646 = vpack.c.b16 %v1602, %v1600
        %v1647 = vpack.c.b16 %v1603, %v1601
        %v1648 = vpack.c.b16 %v1606, %v1604
        %v1649 = vpack.c.b16 %v1607, %v1605
        %v1650 = vpack.c.b16 %v1610, %v1608
        %v1651 = vpack.c.b16 %v1611, %v1609
        %v1652 = vpack.c.b16 %v1614, %v1612
        %v1653 = vpack.c.b16 %v1615, %v1613
        %v1654 = vpack.c.b16 %v1618, %v1616
        %v1655 = vpack.c.b16 %v1619, %v1617
        %v1656 = vpack.c.b16 %v1622, %v1620
        %v1657 = vpack.c.b16 %v1623, %v1621
        %v1658 = vpack.c.b16 %v1626, %v1624
        %v1659 = vpack.c.b16 %v1627, %v1625
        %1692 = vmatpush.bf16.msra.mxu0 %v1642
        %1693 = vmatpush.bf16.msra.mxu0 %v1640
        %1694 = vmatpush.bf16.msra.mxu0 %v1638
        %1695 = vmatpush.bf16.msra.mxu0 %v1636
        %1696 = vmatpush.bf16.msra.mxu0 %v1634
        %1697 = vmatpush.bf16.msra.mxu0 %v1632
        %1698 = vmatpush.bf16.msra.mxu0 %v1630
        %1699 = vmatpush.bf16.msra.mxu0 %v1628
        %1700 = vmatmul.bf16.gmra.mxu0 %v1492
        %v1701 = vpop.f32.mrf.mxu0
        %v1702 = vadd.f32 %v1528, %v1701
        %v1703 = vpop.f32.mrf.mxu0
        %1704 = vdwg.mxu0
        %1705 = vmatpush.bf16.msra.mxu0 %v1658
        %1706 = vmatpush.bf16.msra.mxu0 %v1656
        %1707 = vmatpush.bf16.msra.mxu0 %v1654
        %1708 = vmatpush.bf16.msra.mxu0 %v1652
        %1709 = vmatpush.bf16.msra.mxu0 %v1650
        %1710 = vmatpush.bf16.msra.mxu0 %v1648
        %1711 = vmatpush.bf16.msra.mxu0 %v1646
        %1712 = vmatpush.bf16.msra.mxu0 %v1644
        %1713 = vmatmul.bf16.gmra.mxu0 %v1493
        %v1714 = vpop.f32.mrf.mxu0
        %v1715 = vadd.f32 %v1702, %v1714
        %v1716 = vpop.f32.mrf.mxu0
        %1717 = vdwg.mxu0
        %1718 = vmatpush.bf16.msra.mxu0 %v1643
        %1719 = vmatpush.bf16.msra.mxu0 %v1641
        %1720 = vmatpush.bf16.msra.mxu0 %v1639
        %1721 = vmatpush.bf16.msra.mxu0 %v1637
        %1722 = vmatpush.bf16.msra.mxu0 %v1635
        %1723 = vmatpush.bf16.msra.mxu0 %v1633
        %1724 = vmatpush.bf16.msra.mxu0 %v1631
        %1725 = vmatpush.bf16.msra.mxu0 %v1629
        %1726 = vmatmul.bf16.gmra.mxu0 %v1492
        %v1727 = vpop.f32.mrf.mxu0
        %v1728 = vadd.f32 %v1529, %v1727
        %v1729 = vpop.f32.mrf.mxu0
        %1730 = vdwg.mxu0
        %1731 = vmatpush.bf16.msra.mxu0 %v1659
        %1732 = vmatpush.bf16.msra.mxu0 %v1657
        %1733 = vmatpush.bf16.msra.mxu0 %v1655
        %1734 = vmatpush.bf16.msra.mxu0 %v1653
        %1735 = vmatpush.bf16.msra.mxu0 %v1651
        %1736 = vmatpush.bf16.msra.mxu0 %v1649
        %1737 = vmatpush.bf16.msra.mxu0 %v1647
        %1738 = vmatpush.bf16.msra.mxu0 %v1645
        %1739 = vmatmul.bf16.gmra.mxu0 %v1493
        %v1740 = vpop.f32.mrf.mxu0
        %v1741 = vadd.f32 %v1728, %v1740
        %v1742 = vpop.f32.mrf.mxu0
        %1743 = vdwg.mxu0
        %v1744 = vld [vmem:[%s7] sm:$0x3]
        %v1746 = vperm.slane %v1744, 0
        %v1747 = vperm.slane %v1744, 1
        %v1750 = vmul.f32 %v1715, %v1746
        %v1751 = vmul.f32 %v1741, %v1747
        %v1752 = vadd.f32 %v546, %v1750
        %v1753 = vadd.f32 %v547, %v1751
        %v1754 = vld [vmem:[%s8] sm:$0x3]
        %v1755 = vld [vmem:[%s9] sm:$0x3]
        %v1756 = vadd.f32 %v1752, %v1753
        %1757 = vadd.xlane.f32.xlu0 %v1756
        %v1758 = vpop.xlane.xlu0 %1757
        %v1759 = vmul.f32 %v1758, %v559
        %v1760 = vmul.f32 %v1752, %v1752
        %v1761 = vmul.f32 %v1753, %v1753
        %v1762 = vadd.f32 %v1760, %v1761
        %1763 = vadd.xlane.f32.xlu0 %v1762
        %v1764 = vpop.xlane.xlu0 %1763
        %v1765 = vmul.f32 %v1764, %v559
        %v1766 = vmul.f32 %v1759, %v1759
        %v1767 = vsub.f32 %v1765, %v1766
        %v1768 = vsub.f32 %v1752, %v1759
        %v1769 = vsub.f32 %v1753, %v1759
        %v1770 = vadd.f32 %v1767, 1e-06
        %v1771 = vrsqrt.pop %v1770
        %v1772 = vmul.f32 %v1771, %v1770
        %v1773 = vmul.f32 %v1772, %v1771
        %v1774 = vmul.f32 0.5, %v1773
        %v1775 = vsub.f32 1.5, %v1774
        %v1776 = vmul.f32 %v1771, %v1775
        %vm1777 = vweird.f32 %v1770
        %vm1778 = vweird.f32 %v1771
        %vm1779 = vmor %vm1777, %vm1778
        %v1780 = vsel %vm1779, %v1771, %v1776
        %v1781 = vmul.f32 %v1768, %v1780
        %v1782 = vmul.f32 %v1769, %v1780
        %v1784 = vperm.slane %v1754, 0
        %v1785 = vperm.slane %v1754, 1
        %v1788 = vmul.f32 %v1781, %v1784
        %v1789 = vmul.f32 %v1782, %v1785
        %v1791 = vperm.slane %v1755, 0
        %v1792 = vperm.slane %v1755, 1
        %v1795 = vadd.f32 %v1788, %v1791
        %v1796 = vadd.f32 %v1789, %v1792
        %v1797 = vpack.c.bf16 %v1795, %v1795
        %v1798 = vpack.c.bf16 %v1796, %v1796
        %v1799 = vld [vmem:[%s10] sm:$0xff]
        %v1800 = vld [vmem:[%s10 + $0x8] sm:$0xff]
        %v1801 = vld [vmem:[%s10 + $0x10] sm:$0xff]
        %v1802 = vld [vmem:[%s10 + $0x18] sm:$0xff]
        %v1803 = vld [vmem:[%s10 + $0x20] sm:$0xff]
        %v1804 = vld [vmem:[%s10 + $0x28] sm:$0xff]
        %v1805 = vld [vmem:[%s10 + $0x30] sm:$0xff]
        %v1806 = vld [vmem:[%s10 + $0x38] sm:$0xff]
        %v1807 = vld [vmem:[%s10 + $0x40] sm:$0xff]
        %v1808 = vld [vmem:[%s10 + $0x48] sm:$0xff]
        %v1809 = vld [vmem:[%s10 + $0x50] sm:$0xff]
        %v1810 = vld [vmem:[%s10 + $0x58] sm:$0xff]
        %v1811 = vld [vmem:[%s10 + $0x60] sm:$0xff]
        %v1812 = vld [vmem:[%s10 + $0x68] sm:$0xff]
        %v1813 = vld [vmem:[%s10 + $0x70] sm:$0xff]
        %v1814 = vld [vmem:[%s10 + $0x78] sm:$0xff]
        %v1815 = vld [vmem:[%s10 + $0x80] sm:$0xff]
        %v1816 = vld [vmem:[%s10 + $0x88] sm:$0xff]
        %v1817 = vld [vmem:[%s10 + $0x90] sm:$0xff]
        %v1818 = vld [vmem:[%s10 + $0x98] sm:$0xff]
        %v1819 = vld [vmem:[%s10 + $0xa0] sm:$0xff]
        %v1820 = vld [vmem:[%s10 + $0xa8] sm:$0xff]
        %v1821 = vld [vmem:[%s10 + $0xb0] sm:$0xff]
        %v1822 = vld [vmem:[%s10 + $0xb8] sm:$0xff]
        %v1823 = vld [vmem:[%s10 + $0xc0] sm:$0xff]
        %v1824 = vld [vmem:[%s10 + $0xc8] sm:$0xff]
        %v1825 = vld [vmem:[%s10 + $0xd0] sm:$0xff]
        %v1826 = vld [vmem:[%s10 + $0xd8] sm:$0xff]
        %v1827 = vld [vmem:[%s10 + $0xe0] sm:$0xff]
        %v1828 = vld [vmem:[%s10 + $0xe8] sm:$0xff]
        %v1829 = vld [vmem:[%s10 + $0xf0] sm:$0xff]
        %v1830 = vld [vmem:[%s10 + $0xf8] sm:$0xff]
        %v1831 = vld [vmem:[%s10 + $0x100] sm:$0xff]
        %v1832 = vld [vmem:[%s10 + $0x108] sm:$0xff]
        %v1833 = vld [vmem:[%s10 + $0x110] sm:$0xff]
        %v1834 = vld [vmem:[%s10 + $0x118] sm:$0xff]
        %v1835 = vld [vmem:[%s10 + $0x120] sm:$0xff]
        %v1836 = vld [vmem:[%s10 + $0x128] sm:$0xff]
        %v1837 = vld [vmem:[%s10 + $0x130] sm:$0xff]
        %v1838 = vld [vmem:[%s10 + $0x138] sm:$0xff]
        %v1839 = vld [vmem:[%s10 + $0x140] sm:$0xff]
        %v1840 = vld [vmem:[%s10 + $0x148] sm:$0xff]
        %v1841 = vld [vmem:[%s10 + $0x150] sm:$0xff]
        %v1842 = vld [vmem:[%s10 + $0x158] sm:$0xff]
        %v1843 = vld [vmem:[%s10 + $0x160] sm:$0xff]
        %v1844 = vld [vmem:[%s10 + $0x168] sm:$0xff]
        %v1845 = vld [vmem:[%s10 + $0x170] sm:$0xff]
        %v1846 = vld [vmem:[%s10 + $0x178] sm:$0xff]
        %v1847 = vld [vmem:[%s10 + $0x180] sm:$0xff]
        %v1848 = vld [vmem:[%s10 + $0x188] sm:$0xff]
        %v1849 = vld [vmem:[%s10 + $0x190] sm:$0xff]
        %v1850 = vld [vmem:[%s10 + $0x198] sm:$0xff]
        %v1851 = vld [vmem:[%s10 + $0x1a0] sm:$0xff]
        %v1852 = vld [vmem:[%s10 + $0x1a8] sm:$0xff]
        %v1853 = vld [vmem:[%s10 + $0x1b0] sm:$0xff]
        %v1854 = vld [vmem:[%s10 + $0x1b8] sm:$0xff]
        %v1855 = vld [vmem:[%s10 + $0x1c0] sm:$0xff]
        %v1856 = vld [vmem:[%s10 + $0x1c8] sm:$0xff]
        %v1857 = vld [vmem:[%s10 + $0x1d0] sm:$0xff]
        %v1858 = vld [vmem:[%s10 + $0x1d8] sm:$0xff]
        %v1859 = vld [vmem:[%s10 + $0x1e0] sm:$0xff]
        %v1860 = vld [vmem:[%s10 + $0x1e8] sm:$0xff]
        %v1861 = vld [vmem:[%s10 + $0x1f0] sm:$0xff]
        %v1862 = vld [vmem:[%s10 + $0x1f8] sm:$0xff]
        %v1863 = vld [vmem:[%s10 + $0x200] sm:$0xff]
        %v1864 = vld [vmem:[%s10 + $0x208] sm:$0xff]
        %v1865 = vld [vmem:[%s10 + $0x210] sm:$0xff]
        %v1866 = vld [vmem:[%s10 + $0x218] sm:$0xff]
        %v1867 = vld [vmem:[%s10 + $0x220] sm:$0xff]
        %v1868 = vld [vmem:[%s10 + $0x228] sm:$0xff]
        %v1869 = vld [vmem:[%s10 + $0x230] sm:$0xff]
        %v1870 = vld [vmem:[%s10 + $0x238] sm:$0xff]
        %v1871 = vld [vmem:[%s10 + $0x240] sm:$0xff]
        %v1872 = vld [vmem:[%s10 + $0x248] sm:$0xff]
        %v1873 = vld [vmem:[%s10 + $0x250] sm:$0xff]
        %v1874 = vld [vmem:[%s10 + $0x258] sm:$0xff]
        %v1875 = vld [vmem:[%s10 + $0x260] sm:$0xff]
        %v1876 = vld [vmem:[%s10 + $0x268] sm:$0xff]
        %v1877 = vld [vmem:[%s10 + $0x270] sm:$0xff]
        %v1878 = vld [vmem:[%s10 + $0x278] sm:$0xff]
        %v1879 = vld [vmem:[%s10 + $0x280] sm:$0xff]
        %v1880 = vld [vmem:[%s10 + $0x288] sm:$0xff]
        %v1881 = vld [vmem:[%s10 + $0x290] sm:$0xff]
        %v1882 = vld [vmem:[%s10 + $0x298] sm:$0xff]
        %v1883 = vld [vmem:[%s10 + $0x2a0] sm:$0xff]
        %v1884 = vld [vmem:[%s10 + $0x2a8] sm:$0xff]
        %v1885 = vld [vmem:[%s10 + $0x2b0] sm:$0xff]
        %v1886 = vld [vmem:[%s10 + $0x2b8] sm:$0xff]
        %v1887 = vld [vmem:[%s10 + $0x2c0] sm:$0xff]
        %v1888 = vld [vmem:[%s10 + $0x2c8] sm:$0xff]
        %v1889 = vld [vmem:[%s10 + $0x2d0] sm:$0xff]
        %v1890 = vld [vmem:[%s10 + $0x2d8] sm:$0xff]
        %v1891 = vld [vmem:[%s10 + $0x2e0] sm:$0xff]
        %v1892 = vld [vmem:[%s10 + $0x2e8] sm:$0xff]
        %v1893 = vld [vmem:[%s10 + $0x2f0] sm:$0xff]
        %v1894 = vld [vmem:[%s10 + $0x2f8] sm:$0xff]
        %v1895 = vld [vmem:[%s10 + $0x300] sm:$0xff]
        %v1896 = vld [vmem:[%s10 + $0x308] sm:$0xff]
        %v1897 = vld [vmem:[%s10 + $0x310] sm:$0xff]
        %v1898 = vld [vmem:[%s10 + $0x318] sm:$0xff]
        %v1899 = vld [vmem:[%s10 + $0x320] sm:$0xff]
        %v1900 = vld [vmem:[%s10 + $0x328] sm:$0xff]
        %v1901 = vld [vmem:[%s10 + $0x330] sm:$0xff]
        %v1902 = vld [vmem:[%s10 + $0x338] sm:$0xff]
        %v1903 = vld [vmem:[%s10 + $0x340] sm:$0xff]
        %v1904 = vld [vmem:[%s10 + $0x348] sm:$0xff]
        %v1905 = vld [vmem:[%s10 + $0x350] sm:$0xff]
        %v1906 = vld [vmem:[%s10 + $0x358] sm:$0xff]
        %v1907 = vld [vmem:[%s10 + $0x360] sm:$0xff]
        %v1908 = vld [vmem:[%s10 + $0x368] sm:$0xff]
        %v1909 = vld [vmem:[%s10 + $0x370] sm:$0xff]
        %v1910 = vld [vmem:[%s10 + $0x378] sm:$0xff]
        %v1911 = vld [vmem:[%s10 + $0x380] sm:$0xff]
        %v1912 = vld [vmem:[%s10 + $0x388] sm:$0xff]
        %v1913 = vld [vmem:[%s10 + $0x390] sm:$0xff]
        %v1914 = vld [vmem:[%s10 + $0x398] sm:$0xff]
        %v1915 = vld [vmem:[%s10 + $0x3a0] sm:$0xff]
        %v1916 = vld [vmem:[%s10 + $0x3a8] sm:$0xff]
        %v1917 = vld [vmem:[%s10 + $0x3b0] sm:$0xff]
        %v1918 = vld [vmem:[%s10 + $0x3b8] sm:$0xff]
        %v1919 = vld [vmem:[%s10 + $0x3c0] sm:$0xff]
        %v1920 = vld [vmem:[%s10 + $0x3c8] sm:$0xff]
        %v1921 = vld [vmem:[%s10 + $0x3d0] sm:$0xff]
        %v1922 = vld [vmem:[%s10 + $0x3d8] sm:$0xff]
        %v1923 = vld [vmem:[%s10 + $0x3e0] sm:$0xff]
        %v1924 = vld [vmem:[%s10 + $0x3e8] sm:$0xff]
        %v1925 = vld [vmem:[%s10 + $0x3f0] sm:$0xff]
        %v1926 = vld [vmem:[%s10 + $0x3f8] sm:$0xff]
        %v1927 = vld [vmem:[%s11] sm:$0xff]
        %v1929 = vperm.slane %v1927, 0
        %v1930 = vperm.slane %v1927, 1
        %v1931 = vperm.slane %v1927, 2
        %v1932 = vperm.slane %v1927, 3
        %v1933 = vperm.slane %v1927, 4
        %v1934 = vperm.slane %v1927, 5
        %v1935 = vperm.slane %v1927, 6
        %v1936 = vperm.slane %v1927, 7
        %v2073 = vunpack.c.l.b16 %v1799
        %v2074 = vunpack.c.h.b16 %v1799
        %v2075 = vunpack.c.l.b16 %v1800
        %v2076 = vunpack.c.h.b16 %v1800
        %v2077 = vunpack.c.l.b16 %v1801
        %v2078 = vunpack.c.h.b16 %v1801
        %v2079 = vunpack.c.l.b16 %v1802
        %v2080 = vunpack.c.h.b16 %v1802
        %v2081 = vunpack.c.l.b16 %v1803
        %v2082 = vunpack.c.h.b16 %v1803
        %v2083 = vunpack.c.l.b16 %v1804
        %v2084 = vunpack.c.h.b16 %v1804
        %v2085 = vunpack.c.l.b16 %v1805
        %v2086 = vunpack.c.h.b16 %v1805
        %v2087 = vunpack.c.l.b16 %v1806
        %v2088 = vunpack.c.h.b16 %v1806
        %v2089 = vunpack.c.l.b16 %v1807
        %v2090 = vunpack.c.h.b16 %v1807
        %v2091 = vunpack.c.l.b16 %v1808
        %v2092 = vunpack.c.h.b16 %v1808
        %v2093 = vunpack.c.l.b16 %v1809
        %v2094 = vunpack.c.h.b16 %v1809
        %v2095 = vunpack.c.l.b16 %v1810
        %v2096 = vunpack.c.h.b16 %v1810
        %v2097 = vunpack.c.l.b16 %v1811
        %v2098 = vunpack.c.h.b16 %v1811
        %v2099 = vunpack.c.l.b16 %v1812
        %v2100 = vunpack.c.h.b16 %v1812
        %v2101 = vunpack.c.l.b16 %v1813
        %v2102 = vunpack.c.h.b16 %v1813
        %v2103 = vunpack.c.l.b16 %v1814
        %v2104 = vunpack.c.h.b16 %v1814
        %v2105 = vunpack.c.l.b16 %v1815
        %v2106 = vunpack.c.h.b16 %v1815
        %v2107 = vunpack.c.l.b16 %v1816
        %v2108 = vunpack.c.h.b16 %v1816
        %v2109 = vunpack.c.l.b16 %v1817
        %v2110 = vunpack.c.h.b16 %v1817
        %v2111 = vunpack.c.l.b16 %v1818
        %v2112 = vunpack.c.h.b16 %v1818
        %v2113 = vunpack.c.l.b16 %v1819
        %v2114 = vunpack.c.h.b16 %v1819
        %v2115 = vunpack.c.l.b16 %v1820
        %v2116 = vunpack.c.h.b16 %v1820
        %v2117 = vunpack.c.l.b16 %v1821
        %v2118 = vunpack.c.h.b16 %v1821
        %v2119 = vunpack.c.l.b16 %v1822
        %v2120 = vunpack.c.h.b16 %v1822
        %v2121 = vunpack.c.l.b16 %v1823
        %v2122 = vunpack.c.h.b16 %v1823
        %v2123 = vunpack.c.l.b16 %v1824
        %v2124 = vunpack.c.h.b16 %v1824
        %v2125 = vunpack.c.l.b16 %v1825
        %v2126 = vunpack.c.h.b16 %v1825
        %v2127 = vunpack.c.l.b16 %v1826
        %v2128 = vunpack.c.h.b16 %v1826
        %v2129 = vunpack.c.l.b16 %v1827
        %v2130 = vunpack.c.h.b16 %v1827
        %v2131 = vunpack.c.l.b16 %v1828
        %v2132 = vunpack.c.h.b16 %v1828
        %v2133 = vunpack.c.l.b16 %v1829
        %v2134 = vunpack.c.h.b16 %v1829
        %v2135 = vunpack.c.l.b16 %v1830
        %v2136 = vunpack.c.h.b16 %v1830
        %v2137 = vunpack.c.l.b16 %v1831
        %v2138 = vunpack.c.h.b16 %v1831
        %v2139 = vunpack.c.l.b16 %v1832
        %v2140 = vunpack.c.h.b16 %v1832
        %v2141 = vunpack.c.l.b16 %v1833
        %v2142 = vunpack.c.h.b16 %v1833
        %v2143 = vunpack.c.l.b16 %v1834
        %v2144 = vunpack.c.h.b16 %v1834
        %v2145 = vunpack.c.l.b16 %v1835
        %v2146 = vunpack.c.h.b16 %v1835
        %v2147 = vunpack.c.l.b16 %v1836
        %v2148 = vunpack.c.h.b16 %v1836
        %v2149 = vunpack.c.l.b16 %v1837
        %v2150 = vunpack.c.h.b16 %v1837
        %v2151 = vunpack.c.l.b16 %v1838
        %v2152 = vunpack.c.h.b16 %v1838
        %v2153 = vunpack.c.l.b16 %v1839
        %v2154 = vunpack.c.h.b16 %v1839
        %v2155 = vunpack.c.l.b16 %v1840
        %v2156 = vunpack.c.h.b16 %v1840
        %v2157 = vunpack.c.l.b16 %v1841
        %v2158 = vunpack.c.h.b16 %v1841
        %v2159 = vunpack.c.l.b16 %v1842
        %v2160 = vunpack.c.h.b16 %v1842
        %v2161 = vunpack.c.l.b16 %v1843
        %v2162 = vunpack.c.h.b16 %v1843
        %v2163 = vunpack.c.l.b16 %v1844
        %v2164 = vunpack.c.h.b16 %v1844
        %v2165 = vunpack.c.l.b16 %v1845
        %v2166 = vunpack.c.h.b16 %v1845
        %v2167 = vunpack.c.l.b16 %v1846
        %v2168 = vunpack.c.h.b16 %v1846
        %v2169 = vunpack.c.l.b16 %v1847
        %v2170 = vunpack.c.h.b16 %v1847
        %v2171 = vunpack.c.l.b16 %v1848
        %v2172 = vunpack.c.h.b16 %v1848
        %v2173 = vunpack.c.l.b16 %v1849
        %v2174 = vunpack.c.h.b16 %v1849
        %v2175 = vunpack.c.l.b16 %v1850
        %v2176 = vunpack.c.h.b16 %v1850
        %v2177 = vunpack.c.l.b16 %v1851
        %v2178 = vunpack.c.h.b16 %v1851
        %v2179 = vunpack.c.l.b16 %v1852
        %v2180 = vunpack.c.h.b16 %v1852
        %v2181 = vunpack.c.l.b16 %v1853
        %v2182 = vunpack.c.h.b16 %v1853
        %v2183 = vunpack.c.l.b16 %v1854
        %v2184 = vunpack.c.h.b16 %v1854
        %v2185 = vunpack.c.l.b16 %v1855
        %v2186 = vunpack.c.h.b16 %v1855
        %v2187 = vunpack.c.l.b16 %v1856
        %v2188 = vunpack.c.h.b16 %v1856
        %v2189 = vunpack.c.l.b16 %v1857
        %v2190 = vunpack.c.h.b16 %v1857
        %v2191 = vunpack.c.l.b16 %v1858
        %v2192 = vunpack.c.h.b16 %v1858
        %v2193 = vunpack.c.l.b16 %v1859
        %v2194 = vunpack.c.h.b16 %v1859
        %v2195 = vunpack.c.l.b16 %v1860
        %v2196 = vunpack.c.h.b16 %v1860
        %v2197 = vunpack.c.l.b16 %v1861
        %v2198 = vunpack.c.h.b16 %v1861
        %v2199 = vunpack.c.l.b16 %v1862
        %v2200 = vunpack.c.h.b16 %v1862
        %v2201 = vunpack.c.l.b16 %v1863
        %v2202 = vunpack.c.h.b16 %v1863
        %v2203 = vunpack.c.l.b16 %v1864
        %v2204 = vunpack.c.h.b16 %v1864
        %v2205 = vunpack.c.l.b16 %v1865
        %v2206 = vunpack.c.h.b16 %v1865
        %v2207 = vunpack.c.l.b16 %v1866
        %v2208 = vunpack.c.h.b16 %v1866
        %v2209 = vunpack.c.l.b16 %v1867
        %v2210 = vunpack.c.h.b16 %v1867
        %v2211 = vunpack.c.l.b16 %v1868
        %v2212 = vunpack.c.h.b16 %v1868
        %v2213 = vunpack.c.l.b16 %v1869
        %v2214 = vunpack.c.h.b16 %v1869
        %v2215 = vunpack.c.l.b16 %v1870
        %v2216 = vunpack.c.h.b16 %v1870
        %v2217 = vunpack.c.l.b16 %v1871
        %v2218 = vunpack.c.h.b16 %v1871
        %v2219 = vunpack.c.l.b16 %v1872
        %v2220 = vunpack.c.h.b16 %v1872
        %v2221 = vunpack.c.l.b16 %v1873
        %v2222 = vunpack.c.h.b16 %v1873
        %v2223 = vunpack.c.l.b16 %v1874
        %v2224 = vunpack.c.h.b16 %v1874
        %v2225 = vunpack.c.l.b16 %v1875
        %v2226 = vunpack.c.h.b16 %v1875
        %v2227 = vunpack.c.l.b16 %v1876
        %v2228 = vunpack.c.h.b16 %v1876
        %v2229 = vunpack.c.l.b16 %v1877
        %v2230 = vunpack.c.h.b16 %v1877
        %v2231 = vunpack.c.l.b16 %v1878
        %v2232 = vunpack.c.h.b16 %v1878
        %v2233 = vunpack.c.l.b16 %v1879
        %v2234 = vunpack.c.h.b16 %v1879
        %v2235 = vunpack.c.l.b16 %v1880
        %v2236 = vunpack.c.h.b16 %v1880
        %v2237 = vunpack.c.l.b16 %v1881
        %v2238 = vunpack.c.h.b16 %v1881
        %v2239 = vunpack.c.l.b16 %v1882
        %v2240 = vunpack.c.h.b16 %v1882
        %v2241 = vunpack.c.l.b16 %v1883
        %v2242 = vunpack.c.h.b16 %v1883
        %v2243 = vunpack.c.l.b16 %v1884
        %v2244 = vunpack.c.h.b16 %v1884
        %v2245 = vunpack.c.l.b16 %v1885
        %v2246 = vunpack.c.h.b16 %v1885
        %v2247 = vunpack.c.l.b16 %v1886
        %v2248 = vunpack.c.h.b16 %v1886
        %v2249 = vunpack.c.l.b16 %v1887
        %v2250 = vunpack.c.h.b16 %v1887
        %v2251 = vunpack.c.l.b16 %v1888
        %v2252 = vunpack.c.h.b16 %v1888
        %v2253 = vunpack.c.l.b16 %v1889
        %v2254 = vunpack.c.h.b16 %v1889
        %v2255 = vunpack.c.l.b16 %v1890
        %v2256 = vunpack.c.h.b16 %v1890
        %v2257 = vunpack.c.l.b16 %v1891
        %v2258 = vunpack.c.h.b16 %v1891
        %v2259 = vunpack.c.l.b16 %v1892
        %v2260 = vunpack.c.h.b16 %v1892
        %v2261 = vunpack.c.l.b16 %v1893
        %v2262 = vunpack.c.h.b16 %v1893
        %v2263 = vunpack.c.l.b16 %v1894
        %v2264 = vunpack.c.h.b16 %v1894
        %v2265 = vunpack.c.l.b16 %v1895
        %v2266 = vunpack.c.h.b16 %v1895
        %v2267 = vunpack.c.l.b16 %v1896
        %v2268 = vunpack.c.h.b16 %v1896
        %v2269 = vunpack.c.l.b16 %v1897
        %v2270 = vunpack.c.h.b16 %v1897
        %v2271 = vunpack.c.l.b16 %v1898
        %v2272 = vunpack.c.h.b16 %v1898
        %v2273 = vunpack.c.l.b16 %v1899
        %v2274 = vunpack.c.h.b16 %v1899
        %v2275 = vunpack.c.l.b16 %v1900
        %v2276 = vunpack.c.h.b16 %v1900
        %v2277 = vunpack.c.l.b16 %v1901
        %v2278 = vunpack.c.h.b16 %v1901
        %v2279 = vunpack.c.l.b16 %v1902
        %v2280 = vunpack.c.h.b16 %v1902
        %v2281 = vunpack.c.l.b16 %v1903
        %v2282 = vunpack.c.h.b16 %v1903
        %v2283 = vunpack.c.l.b16 %v1904
        %v2284 = vunpack.c.h.b16 %v1904
        %v2285 = vunpack.c.l.b16 %v1905
        %v2286 = vunpack.c.h.b16 %v1905
        %v2287 = vunpack.c.l.b16 %v1906
        %v2288 = vunpack.c.h.b16 %v1906
        %v2289 = vunpack.c.l.b16 %v1907
        %v2290 = vunpack.c.h.b16 %v1907
        %v2291 = vunpack.c.l.b16 %v1908
        %v2292 = vunpack.c.h.b16 %v1908
        %v2293 = vunpack.c.l.b16 %v1909
        %v2294 = vunpack.c.h.b16 %v1909
        %v2295 = vunpack.c.l.b16 %v1910
        %v2296 = vunpack.c.h.b16 %v1910
        %v2297 = vunpack.c.l.b16 %v1911
        %v2298 = vunpack.c.h.b16 %v1911
        %v2299 = vunpack.c.l.b16 %v1912
        %v2300 = vunpack.c.h.b16 %v1912
        %v2301 = vunpack.c.l.b16 %v1913
        %v2302 = vunpack.c.h.b16 %v1913
        %v2303 = vunpack.c.l.b16 %v1914
        %v2304 = vunpack.c.h.b16 %v1914
        %v2305 = vunpack.c.l.b16 %v1915
        %v2306 = vunpack.c.h.b16 %v1915
        %v2307 = vunpack.c.l.b16 %v1916
        %v2308 = vunpack.c.h.b16 %v1916
        %v2309 = vunpack.c.l.b16 %v1917
        %v2310 = vunpack.c.h.b16 %v1917
        %v2311 = vunpack.c.l.b16 %v1918
        %v2312 = vunpack.c.h.b16 %v1918
        %v2313 = vunpack.c.l.b16 %v1919
        %v2314 = vunpack.c.h.b16 %v1919
        %v2315 = vunpack.c.l.b16 %v1920
        %v2316 = vunpack.c.h.b16 %v1920
        %v2317 = vunpack.c.l.b16 %v1921
        %v2318 = vunpack.c.h.b16 %v1921
        %v2319 = vunpack.c.l.b16 %v1922
        %v2320 = vunpack.c.h.b16 %v1922
        %v2321 = vunpack.c.l.b16 %v1923
        %v2322 = vunpack.c.h.b16 %v1923
        %v2323 = vunpack.c.l.b16 %v1924
        %v2324 = vunpack.c.h.b16 %v1924
        %v2325 = vunpack.c.l.b16 %v1925
        %v2326 = vunpack.c.h.b16 %v1925
        %v2327 = vunpack.c.l.b16 %v1926
        %v2328 = vunpack.c.h.b16 %v1926
        %v2329 = vpack.c.b16 %v2081, %v2073
        %v2330 = vpack.c.b16 %v2082, %v2074
        %v2331 = vpack.c.b16 %v2083, %v2075
        %v2332 = vpack.c.b16 %v2084, %v2076
        %v2333 = vpack.c.b16 %v2085, %v2077
        %v2334 = vpack.c.b16 %v2086, %v2078
        %v2335 = vpack.c.b16 %v2087, %v2079
        %v2336 = vpack.c.b16 %v2088, %v2080
        %v2337 = vpack.c.b16 %v2097, %v2089
        %v2338 = vpack.c.b16 %v2098, %v2090
        %v2339 = vpack.c.b16 %v2099, %v2091
        %v2340 = vpack.c.b16 %v2100, %v2092
        %v2341 = vpack.c.b16 %v2101, %v2093
        %v2342 = vpack.c.b16 %v2102, %v2094
        %v2343 = vpack.c.b16 %v2103, %v2095
        %v2344 = vpack.c.b16 %v2104, %v2096
        %v2345 = vpack.c.b16 %v2113, %v2105
        %v2346 = vpack.c.b16 %v2114, %v2106
        %v2347 = vpack.c.b16 %v2115, %v2107
        %v2348 = vpack.c.b16 %v2116, %v2108
        %v2349 = vpack.c.b16 %v2117, %v2109
        %v2350 = vpack.c.b16 %v2118, %v2110
        %v2351 = vpack.c.b16 %v2119, %v2111
        %v2352 = vpack.c.b16 %v2120, %v2112
        %v2353 = vpack.c.b16 %v2129, %v2121
        %v2354 = vpack.c.b16 %v2130, %v2122
        %v2355 = vpack.c.b16 %v2131, %v2123
        %v2356 = vpack.c.b16 %v2132, %v2124
        %v2357 = vpack.c.b16 %v2133, %v2125
        %v2358 = vpack.c.b16 %v2134, %v2126
        %v2359 = vpack.c.b16 %v2135, %v2127
        %v2360 = vpack.c.b16 %v2136, %v2128
        %v2361 = vpack.c.b16 %v2145, %v2137
        %v2362 = vpack.c.b16 %v2146, %v2138
        %v2363 = vpack.c.b16 %v2147, %v2139
        %v2364 = vpack.c.b16 %v2148, %v2140
        %v2365 = vpack.c.b16 %v2149, %v2141
        %v2366 = vpack.c.b16 %v2150, %v2142
        %v2367 = vpack.c.b16 %v2151, %v2143
        %v2368 = vpack.c.b16 %v2152, %v2144
        %v2369 = vpack.c.b16 %v2161, %v2153
        %v2370 = vpack.c.b16 %v2162, %v2154
        %v2371 = vpack.c.b16 %v2163, %v2155
        %v2372 = vpack.c.b16 %v2164, %v2156
        %v2373 = vpack.c.b16 %v2165, %v2157
        %v2374 = vpack.c.b16 %v2166, %v2158
        %v2375 = vpack.c.b16 %v2167, %v2159
        %v2376 = vpack.c.b16 %v2168, %v2160
        %v2377 = vpack.c.b16 %v2177, %v2169
        %v2378 = vpack.c.b16 %v2178, %v2170
        %v2379 = vpack.c.b16 %v2179, %v2171
        %v2380 = vpack.c.b16 %v2180, %v2172
        %v2381 = vpack.c.b16 %v2181, %v2173
        %v2382 = vpack.c.b16 %v2182, %v2174
        %v2383 = vpack.c.b16 %v2183, %v2175
        %v2384 = vpack.c.b16 %v2184, %v2176
        %v2385 = vpack.c.b16 %v2193, %v2185
        %v2386 = vpack.c.b16 %v2194, %v2186
        %v2387 = vpack.c.b16 %v2195, %v2187
        %v2388 = vpack.c.b16 %v2196, %v2188
        %v2389 = vpack.c.b16 %v2197, %v2189
        %v2390 = vpack.c.b16 %v2198, %v2190
        %v2391 = vpack.c.b16 %v2199, %v2191
        %v2392 = vpack.c.b16 %v2200, %v2192
        %v2393 = vpack.c.b16 %v2209, %v2201
        %v2394 = vpack.c.b16 %v2210, %v2202
        %v2395 = vpack.c.b16 %v2211, %v2203
        %v2396 = vpack.c.b16 %v2212, %v2204
        %v2397 = vpack.c.b16 %v2213, %v2205
        %v2398 = vpack.c.b16 %v2214, %v2206
        %v2399 = vpack.c.b16 %v2215, %v2207
        %v2400 = vpack.c.b16 %v2216, %v2208
        %v2401 = vpack.c.b16 %v2225, %v2217
        %v2402 = vpack.c.b16 %v2226, %v2218
        %v2403 = vpack.c.b16 %v2227, %v2219
        %v2404 = vpack.c.b16 %v2228, %v2220
        %v2405 = vpack.c.b16 %v2229, %v2221
        %v2406 = vpack.c.b16 %v2230, %v2222
        %v2407 = vpack.c.b16 %v2231, %v2223
        %v2408 = vpack.c.b16 %v2232, %v2224
        %v2409 = vpack.c.b16 %v2241, %v2233
        %v2410 = vpack.c.b16 %v2242, %v2234
        %v2411 = vpack.c.b16 %v2243, %v2235
        %v2412 = vpack.c.b16 %v2244, %v2236
        %v2413 = vpack.c.b16 %v2245, %v2237
        %v2414 = vpack.c.b16 %v2246, %v2238
        %v2415 = vpack.c.b16 %v2247, %v2239
        %v2416 = vpack.c.b16 %v2248, %v2240
        %v2417 = vpack.c.b16 %v2257, %v2249
        %v2418 = vpack.c.b16 %v2258, %v2250
        %v2419 = vpack.c.b16 %v2259, %v2251
        %v2420 = vpack.c.b16 %v2260, %v2252
        %v2421 = vpack.c.b16 %v2261, %v2253
        %v2422 = vpack.c.b16 %v2262, %v2254
        %v2423 = vpack.c.b16 %v2263, %v2255
        %v2424 = vpack.c.b16 %v2264, %v2256
        %v2425 = vpack.c.b16 %v2273, %v2265
        %v2426 = vpack.c.b16 %v2274, %v2266
        %v2427 = vpack.c.b16 %v2275, %v2267
        %v2428 = vpack.c.b16 %v2276, %v2268
        %v2429 = vpack.c.b16 %v2277, %v2269
        %v2430 = vpack.c.b16 %v2278, %v2270
        %v2431 = vpack.c.b16 %v2279, %v2271
        %v2432 = vpack.c.b16 %v2280, %v2272
        %v2433 = vpack.c.b16 %v2289, %v2281
        %v2434 = vpack.c.b16 %v2290, %v2282
        %v2435 = vpack.c.b16 %v2291, %v2283
        %v2436 = vpack.c.b16 %v2292, %v2284
        %v2437 = vpack.c.b16 %v2293, %v2285
        %v2438 = vpack.c.b16 %v2294, %v2286
        %v2439 = vpack.c.b16 %v2295, %v2287
        %v2440 = vpack.c.b16 %v2296, %v2288
        %v2441 = vpack.c.b16 %v2305, %v2297
        %v2442 = vpack.c.b16 %v2306, %v2298
        %v2443 = vpack.c.b16 %v2307, %v2299
        %v2444 = vpack.c.b16 %v2308, %v2300
        %v2445 = vpack.c.b16 %v2309, %v2301
        %v2446 = vpack.c.b16 %v2310, %v2302
        %v2447 = vpack.c.b16 %v2311, %v2303
        %v2448 = vpack.c.b16 %v2312, %v2304
        %v2449 = vpack.c.b16 %v2321, %v2313
        %v2450 = vpack.c.b16 %v2322, %v2314
        %v2451 = vpack.c.b16 %v2323, %v2315
        %v2452 = vpack.c.b16 %v2324, %v2316
        %v2453 = vpack.c.b16 %v2325, %v2317
        %v2454 = vpack.c.b16 %v2326, %v2318
        %v2455 = vpack.c.b16 %v2327, %v2319
        %v2456 = vpack.c.b16 %v2328, %v2320
        %2585 = vmatpush.bf16.msra.mxu0 %v2385
        %2586 = vmatpush.bf16.msra.mxu0 %v2377
        %2587 = vmatpush.bf16.msra.mxu0 %v2369
        %2588 = vmatpush.bf16.msra.mxu0 %v2361
        %2589 = vmatpush.bf16.msra.mxu0 %v2353
        %2590 = vmatpush.bf16.msra.mxu0 %v2345
        %2591 = vmatpush.bf16.msra.mxu0 %v2337
        %2592 = vmatpush.bf16.msra.mxu0 %v2329
        %2593 = vmatmul.bf16.gmra.mxu0 %v1797
        %v2594 = vpop.f32.mrf.mxu0
        %v2595 = vadd.f32 %v1929, %v2594
        %v2596 = vpop.f32.mrf.mxu0
        %2597 = vdwg.mxu0
        %2598 = vmatpush.bf16.msra.mxu0 %v2449
        %2599 = vmatpush.bf16.msra.mxu0 %v2441
        %2600 = vmatpush.bf16.msra.mxu0 %v2433
        %2601 = vmatpush.bf16.msra.mxu0 %v2425
        %2602 = vmatpush.bf16.msra.mxu0 %v2417
        %2603 = vmatpush.bf16.msra.mxu0 %v2409
        %2604 = vmatpush.bf16.msra.mxu0 %v2401
        %2605 = vmatpush.bf16.msra.mxu0 %v2393
        %2606 = vmatmul.bf16.gmra.mxu0 %v1798
        %v2607 = vpop.f32.mrf.mxu0
        %v2608 = vadd.f32 %v2595, %v2607
        %v2609 = vpop.f32.mrf.mxu0
        %2610 = vdwg.mxu0
        %2611 = vmatpush.bf16.msra.mxu0 %v2386
        %2612 = vmatpush.bf16.msra.mxu0 %v2378
        %2613 = vmatpush.bf16.msra.mxu0 %v2370
        %2614 = vmatpush.bf16.msra.mxu0 %v2362
        %2615 = vmatpush.bf16.msra.mxu0 %v2354
        %2616 = vmatpush.bf16.msra.mxu0 %v2346
        %2617 = vmatpush.bf16.msra.mxu0 %v2338
        %2618 = vmatpush.bf16.msra.mxu0 %v2330
        %2619 = vmatmul.bf16.gmra.mxu0 %v1797
        %v2620 = vpop.f32.mrf.mxu0
        %v2621 = vadd.f32 %v1930, %v2620
        %v2622 = vpop.f32.mrf.mxu0
        %2623 = vdwg.mxu0
        %2624 = vmatpush.bf16.msra.mxu0 %v2450
        %2625 = vmatpush.bf16.msra.mxu0 %v2442
        %2626 = vmatpush.bf16.msra.mxu0 %v2434
        %2627 = vmatpush.bf16.msra.mxu0 %v2426
        %2628 = vmatpush.bf16.msra.mxu0 %v2418
        %2629 = vmatpush.bf16.msra.mxu0 %v2410
        %2630 = vmatpush.bf16.msra.mxu0 %v2402
        %2631 = vmatpush.bf16.msra.mxu0 %v2394
        %2632 = vmatmul.bf16.gmra.mxu0 %v1798
        %v2633 = vpop.f32.mrf.mxu0
        %v2634 = vadd.f32 %v2621, %v2633
        %v2635 = vpop.f32.mrf.mxu0
        %2636 = vdwg.mxu0
        %2637 = vmatpush.bf16.msra.mxu0 %v2387
        %2638 = vmatpush.bf16.msra.mxu0 %v2379
        %2639 = vmatpush.bf16.msra.mxu0 %v2371
        %2640 = vmatpush.bf16.msra.mxu0 %v2363
        %2641 = vmatpush.bf16.msra.mxu0 %v2355
        %2642 = vmatpush.bf16.msra.mxu0 %v2347
        %2643 = vmatpush.bf16.msra.mxu0 %v2339
        %2644 = vmatpush.bf16.msra.mxu0 %v2331
        %2645 = vmatmul.bf16.gmra.mxu0 %v1797
        %v2646 = vpop.f32.mrf.mxu0
        %v2647 = vadd.f32 %v1931, %v2646
        %v2648 = vpop.f32.mrf.mxu0
        %2649 = vdwg.mxu0
        %2650 = vmatpush.bf16.msra.mxu0 %v2451
        %2651 = vmatpush.bf16.msra.mxu0 %v2443
        %2652 = vmatpush.bf16.msra.mxu0 %v2435
        %2653 = vmatpush.bf16.msra.mxu0 %v2427
        %2654 = vmatpush.bf16.msra.mxu0 %v2419
        %2655 = vmatpush.bf16.msra.mxu0 %v2411
        %2656 = vmatpush.bf16.msra.mxu0 %v2403
        %2657 = vmatpush.bf16.msra.mxu0 %v2395
        %2658 = vmatmul.bf16.gmra.mxu0 %v1798
        %v2659 = vpop.f32.mrf.mxu0
        %v2660 = vadd.f32 %v2647, %v2659
        %v2661 = vpop.f32.mrf.mxu0
        %2662 = vdwg.mxu0
        %2663 = vmatpush.bf16.msra.mxu0 %v2388
        %2664 = vmatpush.bf16.msra.mxu0 %v2380
        %2665 = vmatpush.bf16.msra.mxu0 %v2372
        %2666 = vmatpush.bf16.msra.mxu0 %v2364
        %2667 = vmatpush.bf16.msra.mxu0 %v2356
        %2668 = vmatpush.bf16.msra.mxu0 %v2348
        %2669 = vmatpush.bf16.msra.mxu0 %v2340
        %2670 = vmatpush.bf16.msra.mxu0 %v2332
        %2671 = vmatmul.bf16.gmra.mxu0 %v1797
        %v2672 = vpop.f32.mrf.mxu0
        %v2673 = vadd.f32 %v1932, %v2672
        %v2674 = vpop.f32.mrf.mxu0
        %2675 = vdwg.mxu0
        %2676 = vmatpush.bf16.msra.mxu0 %v2452
        %2677 = vmatpush.bf16.msra.mxu0 %v2444
        %2678 = vmatpush.bf16.msra.mxu0 %v2436
        %2679 = vmatpush.bf16.msra.mxu0 %v2428
        %2680 = vmatpush.bf16.msra.mxu0 %v2420
        %2681 = vmatpush.bf16.msra.mxu0 %v2412
        %2682 = vmatpush.bf16.msra.mxu0 %v2404
        %2683 = vmatpush.bf16.msra.mxu0 %v2396
        %2684 = vmatmul.bf16.gmra.mxu0 %v1798
        %v2685 = vpop.f32.mrf.mxu0
        %v2686 = vadd.f32 %v2673, %v2685
        %v2687 = vpop.f32.mrf.mxu0
        %2688 = vdwg.mxu0
        %2689 = vmatpush.bf16.msra.mxu0 %v2389
        %2690 = vmatpush.bf16.msra.mxu0 %v2381
        %2691 = vmatpush.bf16.msra.mxu0 %v2373
        %2692 = vmatpush.bf16.msra.mxu0 %v2365
        %2693 = vmatpush.bf16.msra.mxu0 %v2357
        %2694 = vmatpush.bf16.msra.mxu0 %v2349
        %2695 = vmatpush.bf16.msra.mxu0 %v2341
        %2696 = vmatpush.bf16.msra.mxu0 %v2333
        %2697 = vmatmul.bf16.gmra.mxu0 %v1797
        %v2698 = vpop.f32.mrf.mxu0
        %v2699 = vadd.f32 %v1933, %v2698
        %v2700 = vpop.f32.mrf.mxu0
        %2701 = vdwg.mxu0
        %2702 = vmatpush.bf16.msra.mxu0 %v2453
        %2703 = vmatpush.bf16.msra.mxu0 %v2445
        %2704 = vmatpush.bf16.msra.mxu0 %v2437
        %2705 = vmatpush.bf16.msra.mxu0 %v2429
        %2706 = vmatpush.bf16.msra.mxu0 %v2421
        %2707 = vmatpush.bf16.msra.mxu0 %v2413
        %2708 = vmatpush.bf16.msra.mxu0 %v2405
        %2709 = vmatpush.bf16.msra.mxu0 %v2397
        %2710 = vmatmul.bf16.gmra.mxu0 %v1798
        %v2711 = vpop.f32.mrf.mxu0
        %v2712 = vadd.f32 %v2699, %v2711
        %v2713 = vpop.f32.mrf.mxu0
        %2714 = vdwg.mxu0
        %2715 = vmatpush.bf16.msra.mxu0 %v2390
        %2716 = vmatpush.bf16.msra.mxu0 %v2382
        %2717 = vmatpush.bf16.msra.mxu0 %v2374
        %2718 = vmatpush.bf16.msra.mxu0 %v2366
        %2719 = vmatpush.bf16.msra.mxu0 %v2358
        %2720 = vmatpush.bf16.msra.mxu0 %v2350
        %2721 = vmatpush.bf16.msra.mxu0 %v2342
        %2722 = vmatpush.bf16.msra.mxu0 %v2334
        %2723 = vmatmul.bf16.gmra.mxu0 %v1797
        %v2724 = vpop.f32.mrf.mxu0
        %v2725 = vadd.f32 %v1934, %v2724
        %v2726 = vpop.f32.mrf.mxu0
        %2727 = vdwg.mxu0
        %2728 = vmatpush.bf16.msra.mxu0 %v2454
        %2729 = vmatpush.bf16.msra.mxu0 %v2446
        %2730 = vmatpush.bf16.msra.mxu0 %v2438
        %2731 = vmatpush.bf16.msra.mxu0 %v2430
        %2732 = vmatpush.bf16.msra.mxu0 %v2422
        %2733 = vmatpush.bf16.msra.mxu0 %v2414
        %2734 = vmatpush.bf16.msra.mxu0 %v2406
        %2735 = vmatpush.bf16.msra.mxu0 %v2398
        %2736 = vmatmul.bf16.gmra.mxu0 %v1798
        %v2737 = vpop.f32.mrf.mxu0
        %v2738 = vadd.f32 %v2725, %v2737
        %v2739 = vpop.f32.mrf.mxu0
        %2740 = vdwg.mxu0
        %2741 = vmatpush.bf16.msra.mxu0 %v2391
        %2742 = vmatpush.bf16.msra.mxu0 %v2383
        %2743 = vmatpush.bf16.msra.mxu0 %v2375
        %2744 = vmatpush.bf16.msra.mxu0 %v2367
        %2745 = vmatpush.bf16.msra.mxu0 %v2359
        %2746 = vmatpush.bf16.msra.mxu0 %v2351
        %2747 = vmatpush.bf16.msra.mxu0 %v2343
        %2748 = vmatpush.bf16.msra.mxu0 %v2335
        %2749 = vmatmul.bf16.gmra.mxu0 %v1797
        %v2750 = vpop.f32.mrf.mxu0
        %v2751 = vadd.f32 %v1935, %v2750
        %v2752 = vpop.f32.mrf.mxu0
        %2753 = vdwg.mxu0
        %2754 = vmatpush.bf16.msra.mxu0 %v2455
        %2755 = vmatpush.bf16.msra.mxu0 %v2447
        %2756 = vmatpush.bf16.msra.mxu0 %v2439
        %2757 = vmatpush.bf16.msra.mxu0 %v2431
        %2758 = vmatpush.bf16.msra.mxu0 %v2423
        %2759 = vmatpush.bf16.msra.mxu0 %v2415
        %2760 = vmatpush.bf16.msra.mxu0 %v2407
        %2761 = vmatpush.bf16.msra.mxu0 %v2399
        %2762 = vmatmul.bf16.gmra.mxu0 %v1798
        %v2763 = vpop.f32.mrf.mxu0
        %v2764 = vadd.f32 %v2751, %v2763
        %v2765 = vpop.f32.mrf.mxu0
        %2766 = vdwg.mxu0
        %2767 = vmatpush.bf16.msra.mxu0 %v2392
        %2768 = vmatpush.bf16.msra.mxu0 %v2384
        %2769 = vmatpush.bf16.msra.mxu0 %v2376
        %2770 = vmatpush.bf16.msra.mxu0 %v2368
        %2771 = vmatpush.bf16.msra.mxu0 %v2360
        %2772 = vmatpush.bf16.msra.mxu0 %v2352
        %2773 = vmatpush.bf16.msra.mxu0 %v2344
        %2774 = vmatpush.bf16.msra.mxu0 %v2336
        %2775 = vmatmul.bf16.gmra.mxu0 %v1797
        %v2776 = vpop.f32.mrf.mxu0
        %v2777 = vadd.f32 %v1936, %v2776
        %v2778 = vpop.f32.mrf.mxu0
        %2779 = vdwg.mxu0
        %2780 = vmatpush.bf16.msra.mxu0 %v2456
        %2781 = vmatpush.bf16.msra.mxu0 %v2448
        %2782 = vmatpush.bf16.msra.mxu0 %v2440
        %2783 = vmatpush.bf16.msra.mxu0 %v2432
        %2784 = vmatpush.bf16.msra.mxu0 %v2424
        %2785 = vmatpush.bf16.msra.mxu0 %v2416
        %2786 = vmatpush.bf16.msra.mxu0 %v2408
        %2787 = vmatpush.bf16.msra.mxu0 %v2400
        %2788 = vmatmul.bf16.gmra.mxu0 %v1798
        %v2789 = vpop.f32.mrf.mxu0
        %v2790 = vadd.f32 %v2777, %v2789
        %v2791 = vpop.f32.mrf.mxu0
        %2792 = vdwg.mxu0
        %v2793 = vmul.f32 %v2608, %v2608
        %v2794 = vmul.f32 %v2634, %v2634
        %v2795 = vmul.f32 %v2660, %v2660
        %v2796 = vmul.f32 %v2686, %v2686
        %v2797 = vmul.f32 %v2712, %v2712
        %v2798 = vmul.f32 %v2738, %v2738
        %v2799 = vmul.f32 %v2764, %v2764
        %v2800 = vmul.f32 %v2790, %v2790
        %v2801 = vmul.f32 %v2608, %v2793
        %v2802 = vmul.f32 %v2634, %v2794
        %v2803 = vmul.f32 %v2660, %v2795
        %v2804 = vmul.f32 %v2686, %v2796
        %v2805 = vmul.f32 %v2712, %v2797
        %v2806 = vmul.f32 %v2738, %v2798
        %v2807 = vmul.f32 %v2764, %v2799
        %v2808 = vmul.f32 %v2790, %v2800
        %v2809 = vmul.f32 %v2801, 0.044715
        %v2810 = vmul.f32 %v2802, 0.044715
        %v2811 = vmul.f32 %v2803, 0.044715
        %v2812 = vmul.f32 %v2804, 0.044715
        %v2813 = vmul.f32 %v2805, 0.044715
        %v2814 = vmul.f32 %v2806, 0.044715
        %v2815 = vmul.f32 %v2807, 0.044715
        %v2816 = vmul.f32 %v2808, 0.044715
        %v2817 = vadd.f32 %v2608, %v2809
        %v2818 = vadd.f32 %v2634, %v2810
        %v2819 = vadd.f32 %v2660, %v2811
        %v2820 = vadd.f32 %v2686, %v2812
        %v2821 = vadd.f32 %v2712, %v2813
        %v2822 = vadd.f32 %v2738, %v2814
        %v2823 = vadd.f32 %v2764, %v2815
        %v2824 = vadd.f32 %v2790, %v2816
        %v2825 = vmul.f32 %v2817, 0.7978846
        %v2826 = vmul.f32 %v2818, 0.7978846
        %v2827 = vmul.f32 %v2819, 0.7978846
        %v2828 = vmul.f32 %v2820, 0.7978846
        %v2829 = vmul.f32 %v2821, 0.7978846
        %v2830 = vmul.f32 %v2822, 0.7978846
        %v2831 = vmul.f32 %v2823, 0.7978846
        %v2832 = vmul.f32 %v2824, 0.7978846
        %v2833 = vtanh.pop %v2825
        %v2834 = vtanh.pop %v2826
        %v2835 = vtanh.pop %v2827
        %v2836 = vtanh.pop %v2828
        %v2837 = vtanh.pop %v2829
        %v2838 = vtanh.pop %v2830
        %v2839 = vtanh.pop %v2831
        %v2840 = vtanh.pop %v2832
        %v2841 = vadd.f32 %v2833, 1.0
        %v2842 = vadd.f32 %v2834, 1.0
        %v2843 = vadd.f32 %v2835, 1.0
        %v2844 = vadd.f32 %v2836, 1.0
        %v2845 = vadd.f32 %v2837, 1.0
        %v2846 = vadd.f32 %v2838, 1.0
        %v2847 = vadd.f32 %v2839, 1.0
        %v2848 = vadd.f32 %v2840, 1.0
        %v2849 = vmul.f32 %v2841, 0.5
        %v2850 = vmul.f32 %v2842, 0.5
        %v2851 = vmul.f32 %v2843, 0.5
        %v2852 = vmul.f32 %v2844, 0.5
        %v2853 = vmul.f32 %v2845, 0.5
        %v2854 = vmul.f32 %v2846, 0.5
        %v2855 = vmul.f32 %v2847, 0.5
        %v2856 = vmul.f32 %v2848, 0.5
        %v2857 = vmul.f32 %v2608, %v2849
        %v2858 = vmul.f32 %v2634, %v2850
        %v2859 = vmul.f32 %v2660, %v2851
        %v2860 = vmul.f32 %v2686, %v2852
        %v2861 = vmul.f32 %v2712, %v2853
        %v2862 = vmul.f32 %v2738, %v2854
        %v2863 = vmul.f32 %v2764, %v2855
        %v2864 = vmul.f32 %v2790, %v2856
        %v2865 = vpack.c.bf16 %v2857, %v2857
        %v2866 = vpack.c.bf16 %v2858, %v2858
        %v2867 = vpack.c.bf16 %v2859, %v2859
        %v2868 = vpack.c.bf16 %v2860, %v2860
        %v2869 = vpack.c.bf16 %v2861, %v2861
        %v2870 = vpack.c.bf16 %v2862, %v2862
        %v2871 = vpack.c.bf16 %v2863, %v2863
        %v2872 = vpack.c.bf16 %v2864, %v2864
        %v2873 = vld [vmem:[#allocation8] sm:$0xff]
        %v2874 = vld [vmem:[#allocation8 + $0x8] sm:$0xff]
        %v2875 = vld [vmem:[#allocation8 + $0x10] sm:$0xff]
        %v2876 = vld [vmem:[#allocation8 + $0x18] sm:$0xff]
        %v2877 = vld [vmem:[#allocation8 + $0x20] sm:$0xff]
        %v2878 = vld [vmem:[#allocation8 + $0x28] sm:$0xff]
        %v2879 = vld [vmem:[#allocation8 + $0x30] sm:$0xff]
        %v2880 = vld [vmem:[#allocation8 + $0x38] sm:$0xff]
        %v2881 = vld [vmem:[#allocation8 + $0x40] sm:$0xff]
        %v2882 = vld [vmem:[#allocation8 + $0x48] sm:$0xff]
        %v2883 = vld [vmem:[#allocation8 + $0x50] sm:$0xff]
        %v2884 = vld [vmem:[#allocation8 + $0x58] sm:$0xff]
        %v2885 = vld [vmem:[#allocation8 + $0x60] sm:$0xff]
        %v2886 = vld [vmem:[#allocation8 + $0x68] sm:$0xff]
        %v2887 = vld [vmem:[#allocation8 + $0x70] sm:$0xff]
        %v2888 = vld [vmem:[#allocation8 + $0x78] sm:$0xff]
        %v2889 = vld [vmem:[#allocation8 + $0x80] sm:$0xff]
        %v2890 = vld [vmem:[#allocation8 + $0x88] sm:$0xff]
        %v2891 = vld [vmem:[#allocation8 + $0x90] sm:$0xff]
        %v2892 = vld [vmem:[#allocation8 + $0x98] sm:$0xff]
        %v2893 = vld [vmem:[#allocation8 + $0xa0] sm:$0xff]
        %v2894 = vld [vmem:[#allocation8 + $0xa8] sm:$0xff]
        %v2895 = vld [vmem:[#allocation8 + $0xb0] sm:$0xff]
        %v2896 = vld [vmem:[#allocation8 + $0xb8] sm:$0xff]
        %v2897 = vld [vmem:[#allocation8 + $0xc0] sm:$0xff]
        %v2898 = vld [vmem:[#allocation8 + $0xc8] sm:$0xff]
        %v2899 = vld [vmem:[#allocation8 + $0xd0] sm:$0xff]
        %v2900 = vld [vmem:[#allocation8 + $0xd8] sm:$0xff]
        %v2901 = vld [vmem:[#allocation8 + $0xe0] sm:$0xff]
        %v2902 = vld [vmem:[#allocation8 + $0xe8] sm:$0xff]
        %v2903 = vld [vmem:[#allocation8 + $0xf0] sm:$0xff]
        %v2904 = vld [vmem:[#allocation8 + $0xf8] sm:$0xff]
        %v2905 = vld [vmem:[#allocation8 + $0x100] sm:$0xff]
        %v2906 = vld [vmem:[#allocation8 + $0x108] sm:$0xff]
        %v2907 = vld [vmem:[#allocation8 + $0x110] sm:$0xff]
        %v2908 = vld [vmem:[#allocation8 + $0x118] sm:$0xff]
        %v2909 = vld [vmem:[#allocation8 + $0x120] sm:$0xff]
        %v2910 = vld [vmem:[#allocation8 + $0x128] sm:$0xff]
        %v2911 = vld [vmem:[#allocation8 + $0x130] sm:$0xff]
        %v2912 = vld [vmem:[#allocation8 + $0x138] sm:$0xff]
        %v2913 = vld [vmem:[#allocation8 + $0x140] sm:$0xff]
        %v2914 = vld [vmem:[#allocation8 + $0x148] sm:$0xff]
        %v2915 = vld [vmem:[#allocation8 + $0x150] sm:$0xff]
        %v2916 = vld [vmem:[#allocation8 + $0x158] sm:$0xff]
        %v2917 = vld [vmem:[#allocation8 + $0x160] sm:$0xff]
        %v2918 = vld [vmem:[#allocation8 + $0x168] sm:$0xff]
        %v2919 = vld [vmem:[#allocation8 + $0x170] sm:$0xff]
        %v2920 = vld [vmem:[#allocation8 + $0x178] sm:$0xff]
        %v2921 = vld [vmem:[#allocation8 + $0x180] sm:$0xff]
        %v2922 = vld [vmem:[#allocation8 + $0x188] sm:$0xff]
        %v2923 = vld [vmem:[#allocation8 + $0x190] sm:$0xff]
        %v2924 = vld [vmem:[#allocation8 + $0x198] sm:$0xff]
        %v2925 = vld [vmem:[#allocation8 + $0x1a0] sm:$0xff]
        %v2926 = vld [vmem:[#allocation8 + $0x1a8] sm:$0xff]
        %v2927 = vld [vmem:[#allocation8 + $0x1b0] sm:$0xff]
        %v2928 = vld [vmem:[#allocation8 + $0x1b8] sm:$0xff]
        %v2929 = vld [vmem:[#allocation8 + $0x1c0] sm:$0xff]
        %v2930 = vld [vmem:[#allocation8 + $0x1c8] sm:$0xff]
        %v2931 = vld [vmem:[#allocation8 + $0x1d0] sm:$0xff]
        %v2932 = vld [vmem:[#allocation8 + $0x1d8] sm:$0xff]
        %v2933 = vld [vmem:[#allocation8 + $0x1e0] sm:$0xff]
        %v2934 = vld [vmem:[#allocation8 + $0x1e8] sm:$0xff]
        %v2935 = vld [vmem:[#allocation8 + $0x1f0] sm:$0xff]
        %v2936 = vld [vmem:[#allocation8 + $0x1f8] sm:$0xff]
        %v2937 = vld [vmem:[#allocation8 + $0x200] sm:$0xff]
        %v2938 = vld [vmem:[#allocation8 + $0x208] sm:$0xff]
        %v2939 = vld [vmem:[#allocation8 + $0x210] sm:$0xff]
        %v2940 = vld [vmem:[#allocation8 + $0x218] sm:$0xff]
        %v2941 = vld [vmem:[#allocation8 + $0x220] sm:$0xff]
        %v2942 = vld [vmem:[#allocation8 + $0x228] sm:$0xff]
        %v2943 = vld [vmem:[#allocation8 + $0x230] sm:$0xff]
        %v2944 = vld [vmem:[#allocation8 + $0x238] sm:$0xff]
        %v2945 = vld [vmem:[#allocation8 + $0x240] sm:$0xff]
        %v2946 = vld [vmem:[#allocation8 + $0x248] sm:$0xff]
        %v2947 = vld [vmem:[#allocation8 + $0x250] sm:$0xff]
        %v2948 = vld [vmem:[#allocation8 + $0x258] sm:$0xff]
        %v2949 = vld [vmem:[#allocation8 + $0x260] sm:$0xff]
        %v2950 = vld [vmem:[#allocation8 + $0x268] sm:$0xff]
        %v2951 = vld [vmem:[#allocation8 + $0x270] sm:$0xff]
        %v2952 = vld [vmem:[#allocation8 + $0x278] sm:$0xff]
        %v2953 = vld [vmem:[#allocation8 + $0x280] sm:$0xff]
        %v2954 = vld [vmem:[#allocation8 + $0x288] sm:$0xff]
        %v2955 = vld [vmem:[#allocation8 + $0x290] sm:$0xff]
        %v2956 = vld [vmem:[#allocation8 + $0x298] sm:$0xff]
        %v2957 = vld [vmem:[#allocation8 + $0x2a0] sm:$0xff]
        %v2958 = vld [vmem:[#allocation8 + $0x2a8] sm:$0xff]
        %v2959 = vld [vmem:[#allocation8 + $0x2b0] sm:$0xff]
        %v2960 = vld [vmem:[#allocation8 + $0x2b8] sm:$0xff]
        %v2961 = vld [vmem:[#allocation8 + $0x2c0] sm:$0xff]
        %v2962 = vld [vmem:[#allocation8 + $0x2c8] sm:$0xff]
        %v2963 = vld [vmem:[#allocation8 + $0x2d0] sm:$0xff]
        %v2964 = vld [vmem:[#allocation8 + $0x2d8] sm:$0xff]
        %v2965 = vld [vmem:[#allocation8 + $0x2e0] sm:$0xff]
        %v2966 = vld [vmem:[#allocation8 + $0x2e8] sm:$0xff]
        %v2967 = vld [vmem:[#allocation8 + $0x2f0] sm:$0xff]
        %v2968 = vld [vmem:[#allocation8 + $0x2f8] sm:$0xff]
        %v2969 = vld [vmem:[#allocation8 + $0x300] sm:$0xff]
        %v2970 = vld [vmem:[#allocation8 + $0x308] sm:$0xff]
        %v2971 = vld [vmem:[#allocation8 + $0x310] sm:$0xff]
        %v2972 = vld [vmem:[#allocation8 + $0x318] sm:$0xff]
        %v2973 = vld [vmem:[#allocation8 + $0x320] sm:$0xff]
        %v2974 = vld [vmem:[#allocation8 + $0x328] sm:$0xff]
        %v2975 = vld [vmem:[#allocation8 + $0x330] sm:$0xff]
        %v2976 = vld [vmem:[#allocation8 + $0x338] sm:$0xff]
        %v2977 = vld [vmem:[#allocation8 + $0x340] sm:$0xff]
        %v2978 = vld [vmem:[#allocation8 + $0x348] sm:$0xff]
        %v2979 = vld [vmem:[#allocation8 + $0x350] sm:$0xff]
        %v2980 = vld [vmem:[#allocation8 + $0x358] sm:$0xff]
        %v2981 = vld [vmem:[#allocation8 + $0x360] sm:$0xff]
        %v2982 = vld [vmem:[#allocation8 + $0x368] sm:$0xff]
        %v2983 = vld [vmem:[#allocation8 + $0x370] sm:$0xff]
        %v2984 = vld [vmem:[#allocation8 + $0x378] sm:$0xff]
        %v2985 = vld [vmem:[#allocation8 + $0x380] sm:$0xff]
        %v2986 = vld [vmem:[#allocation8 + $0x388] sm:$0xff]
        %v2987 = vld [vmem:[#allocation8 + $0x390] sm:$0xff]
        %v2988 = vld [vmem:[#allocation8 + $0x398] sm:$0xff]
        %v2989 = vld [vmem:[#allocation8 + $0x3a0] sm:$0xff]
        %v2990 = vld [vmem:[#allocation8 + $0x3a8] sm:$0xff]
        %v2991 = vld [vmem:[#allocation8 + $0x3b0] sm:$0xff]
        %v2992 = vld [vmem:[#allocation8 + $0x3b8] sm:$0xff]
        %v2993 = vld [vmem:[#allocation8 + $0x3c0] sm:$0xff]
        %v2994 = vld [vmem:[#allocation8 + $0x3c8] sm:$0xff]
        %v2995 = vld [vmem:[#allocation8 + $0x3d0] sm:$0xff]
        %v2996 = vld [vmem:[#allocation8 + $0x3d8] sm:$0xff]
        %v2997 = vld [vmem:[#allocation8 + $0x3e0] sm:$0xff]
        %v2998 = vld [vmem:[#allocation8 + $0x3e8] sm:$0xff]
        %v2999 = vld [vmem:[#allocation8 + $0x3f0] sm:$0xff]
        %v3000 = vld [vmem:[#allocation8 + $0x3f8] sm:$0xff]
        %v3001 = vld [vmem:[%s13] sm:$0x3]
        %v3003 = vperm.slane %v3001, 0
        %v3004 = vperm.slane %v3001, 1
        %v3135 = vunpack.c.l.b16 %v2873
        %v3136 = vunpack.c.h.b16 %v2873
        %v3137 = vunpack.c.l.b16 %v2874
        %v3138 = vunpack.c.h.b16 %v2874
        %v3139 = vunpack.c.l.b16 %v2875
        %v3140 = vunpack.c.h.b16 %v2875
        %v3141 = vunpack.c.l.b16 %v2876
        %v3142 = vunpack.c.h.b16 %v2876
        %v3143 = vunpack.c.l.b16 %v2877
        %v3144 = vunpack.c.h.b16 %v2877
        %v3145 = vunpack.c.l.b16 %v2878
        %v3146 = vunpack.c.h.b16 %v2878
        %v3147 = vunpack.c.l.b16 %v2879
        %v3148 = vunpack.c.h.b16 %v2879
        %v3149 = vunpack.c.l.b16 %v2880
        %v3150 = vunpack.c.h.b16 %v2880
        %v3151 = vunpack.c.l.b16 %v2881
        %v3152 = vunpack.c.h.b16 %v2881
        %v3153 = vunpack.c.l.b16 %v2882
        %v3154 = vunpack.c.h.b16 %v2882
        %v3155 = vunpack.c.l.b16 %v2883
        %v3156 = vunpack.c.h.b16 %v2883
        %v3157 = vunpack.c.l.b16 %v2884
        %v3158 = vunpack.c.h.b16 %v2884
        %v3159 = vunpack.c.l.b16 %v2885
        %v3160 = vunpack.c.h.b16 %v2885
        %v3161 = vunpack.c.l.b16 %v2886
        %v3162 = vunpack.c.h.b16 %v2886
        %v3163 = vunpack.c.l.b16 %v2887
        %v3164 = vunpack.c.h.b16 %v2887
        %v3165 = vunpack.c.l.b16 %v2888
        %v3166 = vunpack.c.h.b16 %v2888
        %v3167 = vunpack.c.l.b16 %v2889
        %v3168 = vunpack.c.h.b16 %v2889
        %v3169 = vunpack.c.l.b16 %v2890
        %v3170 = vunpack.c.h.b16 %v2890
        %v3171 = vunpack.c.l.b16 %v2891
        %v3172 = vunpack.c.h.b16 %v2891
        %v3173 = vunpack.c.l.b16 %v2892
        %v3174 = vunpack.c.h.b16 %v2892
        %v3175 = vunpack.c.l.b16 %v2893
        %v3176 = vunpack.c.h.b16 %v2893
        %v3177 = vunpack.c.l.b16 %v2894
        %v3178 = vunpack.c.h.b16 %v2894
        %v3179 = vunpack.c.l.b16 %v2895
        %v3180 = vunpack.c.h.b16 %v2895
        %v3181 = vunpack.c.l.b16 %v2896
        %v3182 = vunpack.c.h.b16 %v2896
        %v3183 = vunpack.c.l.b16 %v2897
        %v3184 = vunpack.c.h.b16 %v2897
        %v3185 = vunpack.c.l.b16 %v2898
        %v3186 = vunpack.c.h.b16 %v2898
        %v3187 = vunpack.c.l.b16 %v2899
        %v3188 = vunpack.c.h.b16 %v2899
        %v3189 = vunpack.c.l.b16 %v2900
        %v3190 = vunpack.c.h.b16 %v2900
        %v3191 = vunpack.c.l.b16 %v2901
        %v3192 = vunpack.c.h.b16 %v2901
        %v3193 = vunpack.c.l.b16 %v2902
        %v3194 = vunpack.c.h.b16 %v2902
        %v3195 = vunpack.c.l.b16 %v2903
        %v3196 = vunpack.c.h.b16 %v2903
        %v3197 = vunpack.c.l.b16 %v2904
        %v3198 = vunpack.c.h.b16 %v2904
        %v3199 = vunpack.c.l.b16 %v2905
        %v3200 = vunpack.c.h.b16 %v2905
        %v3201 = vunpack.c.l.b16 %v2906
        %v3202 = vunpack.c.h.b16 %v2906
        %v3203 = vunpack.c.l.b16 %v2907
        %v3204 = vunpack.c.h.b16 %v2907
        %v3205 = vunpack.c.l.b16 %v2908
        %v3206 = vunpack.c.h.b16 %v2908
        %v3207 = vunpack.c.l.b16 %v2909
        %v3208 = vunpack.c.h.b16 %v2909
        %v3209 = vunpack.c.l.b16 %v2910
        %v3210 = vunpack.c.h.b16 %v2910
        %v3211 = vunpack.c.l.b16 %v2911
        %v3212 = vunpack.c.h.b16 %v2911
        %v3213 = vunpack.c.l.b16 %v2912
        %v3214 = vunpack.c.h.b16 %v2912
        %v3215 = vunpack.c.l.b16 %v2913
        %v3216 = vunpack.c.h.b16 %v2913
        %v3217 = vunpack.c.l.b16 %v2914
        %v3218 = vunpack.c.h.b16 %v2914
        %v3219 = vunpack.c.l.b16 %v2915
        %v3220 = vunpack.c.h.b16 %v2915
        %v3221 = vunpack.c.l.b16 %v2916
        %v3222 = vunpack.c.h.b16 %v2916
        %v3223 = vunpack.c.l.b16 %v2917
        %v3224 = vunpack.c.h.b16 %v2917
        %v3225 = vunpack.c.l.b16 %v2918
        %v3226 = vunpack.c.h.b16 %v2918
        %v3227 = vunpack.c.l.b16 %v2919
        %v3228 = vunpack.c.h.b16 %v2919
        %v3229 = vunpack.c.l.b16 %v2920
        %v3230 = vunpack.c.h.b16 %v2920
        %v3231 = vunpack.c.l.b16 %v2921
        %v3232 = vunpack.c.h.b16 %v2921
        %v3233 = vunpack.c.l.b16 %v2922
        %v3234 = vunpack.c.h.b16 %v2922
        %v3235 = vunpack.c.l.b16 %v2923
        %v3236 = vunpack.c.h.b16 %v2923
        %v3237 = vunpack.c.l.b16 %v2924
        %v3238 = vunpack.c.h.b16 %v2924
        %v3239 = vunpack.c.l.b16 %v2925
        %v3240 = vunpack.c.h.b16 %v2925
        %v3241 = vunpack.c.l.b16 %v2926
        %v3242 = vunpack.c.h.b16 %v2926
        %v3243 = vunpack.c.l.b16 %v2927
        %v3244 = vunpack.c.h.b16 %v2927
        %v3245 = vunpack.c.l.b16 %v2928
        %v3246 = vunpack.c.h.b16 %v2928
        %v3247 = vunpack.c.l.b16 %v2929
        %v3248 = vunpack.c.h.b16 %v2929
        %v3249 = vunpack.c.l.b16 %v2930
        %v3250 = vunpack.c.h.b16 %v2930
        %v3251 = vunpack.c.l.b16 %v2931
        %v3252 = vunpack.c.h.b16 %v2931
        %v3253 = vunpack.c.l.b16 %v2932
        %v3254 = vunpack.c.h.b16 %v2932
        %v3255 = vunpack.c.l.b16 %v2933
        %v3256 = vunpack.c.h.b16 %v2933
        %v3257 = vunpack.c.l.b16 %v2934
        %v3258 = vunpack.c.h.b16 %v2934
        %v3259 = vunpack.c.l.b16 %v2935
        %v3260 = vunpack.c.h.b16 %v2935
        %v3261 = vunpack.c.l.b16 %v2936
        %v3262 = vunpack.c.h.b16 %v2936
        %v3263 = vunpack.c.l.b16 %v2937
        %v3264 = vunpack.c.h.b16 %v2937
        %v3265 = vunpack.c.l.b16 %v2938
        %v3266 = vunpack.c.h.b16 %v2938
        %v3267 = vunpack.c.l.b16 %v2939
        %v3268 = vunpack.c.h.b16 %v2939
        %v3269 = vunpack.c.l.b16 %v2940
        %v3270 = vunpack.c.h.b16 %v2940
        %v3271 = vunpack.c.l.b16 %v2941
        %v3272 = vunpack.c.h.b16 %v2941
        %v3273 = vunpack.c.l.b16 %v2942
        %v3274 = vunpack.c.h.b16 %v2942
        %v3275 = vunpack.c.l.b16 %v2943
        %v3276 = vunpack.c.h.b16 %v2943
        %v3277 = vunpack.c.l.b16 %v2944
        %v3278 = vunpack.c.h.b16 %v2944
        %v3279 = vunpack.c.l.b16 %v2945
        %v3280 = vunpack.c.h.b16 %v2945
        %v3281 = vunpack.c.l.b16 %v2946
        %v3282 = vunpack.c.h.b16 %v2946
        %v3283 = vunpack.c.l.b16 %v2947
        %v3284 = vunpack.c.h.b16 %v2947
        %v3285 = vunpack.c.l.b16 %v2948
        %v3286 = vunpack.c.h.b16 %v2948
        %v3287 = vunpack.c.l.b16 %v2949
        %v3288 = vunpack.c.h.b16 %v2949
        %v3289 = vunpack.c.l.b16 %v2950
        %v3290 = vunpack.c.h.b16 %v2950
        %v3291 = vunpack.c.l.b16 %v2951
        %v3292 = vunpack.c.h.b16 %v2951
        %v3293 = vunpack.c.l.b16 %v2952
        %v3294 = vunpack.c.h.b16 %v2952
        %v3295 = vunpack.c.l.b16 %v2953
        %v3296 = vunpack.c.h.b16 %v2953
        %v3297 = vunpack.c.l.b16 %v2954
        %v3298 = vunpack.c.h.b16 %v2954
        %v3299 = vunpack.c.l.b16 %v2955
        %v3300 = vunpack.c.h.b16 %v2955
        %v3301 = vunpack.c.l.b16 %v2956
        %v3302 = vunpack.c.h.b16 %v2956
        %v3303 = vunpack.c.l.b16 %v2957
        %v3304 = vunpack.c.h.b16 %v2957
        %v3305 = vunpack.c.l.b16 %v2958
        %v3306 = vunpack.c.h.b16 %v2958
        %v3307 = vunpack.c.l.b16 %v2959
        %v3308 = vunpack.c.h.b16 %v2959
        %v3309 = vunpack.c.l.b16 %v2960
        %v3310 = vunpack.c.h.b16 %v2960
        %v3311 = vunpack.c.l.b16 %v2961
        %v3312 = vunpack.c.h.b16 %v2961
        %v3313 = vunpack.c.l.b16 %v2962
        %v3314 = vunpack.c.h.b16 %v2962
        %v3315 = vunpack.c.l.b16 %v2963
        %v3316 = vunpack.c.h.b16 %v2963
        %v3317 = vunpack.c.l.b16 %v2964
        %v3318 = vunpack.c.h.b16 %v2964
        %v3319 = vunpack.c.l.b16 %v2965
        %v3320 = vunpack.c.h.b16 %v2965
        %v3321 = vunpack.c.l.b16 %v2966
        %v3322 = vunpack.c.h.b16 %v2966
        %v3323 = vunpack.c.l.b16 %v2967
        %v3324 = vunpack.c.h.b16 %v2967
        %v3325 = vunpack.c.l.b16 %v2968
        %v3326 = vunpack.c.h.b16 %v2968
        %v3327 = vunpack.c.l.b16 %v2969
        %v3328 = vunpack.c.h.b16 %v2969
        %v3329 = vunpack.c.l.b16 %v2970
        %v3330 = vunpack.c.h.b16 %v2970
        %v3331 = vunpack.c.l.b16 %v2971
        %v3332 = vunpack.c.h.b16 %v2971
        %v3333 = vunpack.c.l.b16 %v2972
        %v3334 = vunpack.c.h.b16 %v2972
        %v3335 = vunpack.c.l.b16 %v2973
        %v3336 = vunpack.c.h.b16 %v2973
        %v3337 = vunpack.c.l.b16 %v2974
        %v3338 = vunpack.c.h.b16 %v2974
        %v3339 = vunpack.c.l.b16 %v2975
        %v3340 = vunpack.c.h.b16 %v2975
        %v3341 = vunpack.c.l.b16 %v2976
        %v3342 = vunpack.c.h.b16 %v2976
        %v3343 = vunpack.c.l.b16 %v2977
        %v3344 = vunpack.c.h.b16 %v2977
        %v3345 = vunpack.c.l.b16 %v2978
        %v3346 = vunpack.c.h.b16 %v2978
        %v3347 = vunpack.c.l.b16 %v2979
        %v3348 = vunpack.c.h.b16 %v2979
        %v3349 = vunpack.c.l.b16 %v2980
        %v3350 = vunpack.c.h.b16 %v2980
        %v3351 = vunpack.c.l.b16 %v2981
        %v3352 = vunpack.c.h.b16 %v2981
        %v3353 = vunpack.c.l.b16 %v2982
        %v3354 = vunpack.c.h.b16 %v2982
        %v3355 = vunpack.c.l.b16 %v2983
        %v3356 = vunpack.c.h.b16 %v2983
        %v3357 = vunpack.c.l.b16 %v2984
        %v3358 = vunpack.c.h.b16 %v2984
        %v3359 = vunpack.c.l.b16 %v2985
        %v3360 = vunpack.c.h.b16 %v2985
        %v3361 = vunpack.c.l.b16 %v2986
        %v3362 = vunpack.c.h.b16 %v2986
        %v3363 = vunpack.c.l.b16 %v2987
        %v3364 = vunpack.c.h.b16 %v2987
        %v3365 = vunpack.c.l.b16 %v2988
        %v3366 = vunpack.c.h.b16 %v2988
        %v3367 = vunpack.c.l.b16 %v2989
        %v3368 = vunpack.c.h.b16 %v2989
        %v3369 = vunpack.c.l.b16 %v2990
        %v3370 = vunpack.c.h.b16 %v2990
        %v3371 = vunpack.c.l.b16 %v2991
        %v3372 = vunpack.c.h.b16 %v2991
        %v3373 = vunpack.c.l.b16 %v2992
        %v3374 = vunpack.c.h.b16 %v2992
        %v3375 = vunpack.c.l.b16 %v2993
        %v3376 = vunpack.c.h.b16 %v2993
        %v3377 = vunpack.c.l.b16 %v2994
        %v3378 = vunpack.c.h.b16 %v2994
        %v3379 = vunpack.c.l.b16 %v2995
        %v3380 = vunpack.c.h.b16 %v2995
        %v3381 = vunpack.c.l.b16 %v2996
        %v3382 = vunpack.c.h.b16 %v2996
        %v3383 = vunpack.c.l.b16 %v2997
        %v3384 = vunpack.c.h.b16 %v2997
        %v3385 = vunpack.c.l.b16 %v2998
        %v3386 = vunpack.c.h.b16 %v2998
        %v3387 = vunpack.c.l.b16 %v2999
        %v3388 = vunpack.c.h.b16 %v2999
        %v3389 = vunpack.c.l.b16 %v3000
        %v3390 = vunpack.c.h.b16 %v3000
        %v3391 = vpack.c.b16 %v3137, %v3135
        %v3392 = vpack.c.b16 %v3138, %v3136
        %v3393 = vpack.c.b16 %v3141, %v3139
        %v3394 = vpack.c.b16 %v3142, %v3140
        %v3395 = vpack.c.b16 %v3145, %v3143
        %v3396 = vpack.c.b16 %v3146, %v3144
        %v3397 = vpack.c.b16 %v3149, %v3147
        %v3398 = vpack.c.b16 %v3150, %v3148
        %v3399 = vpack.c.b16 %v3153, %v3151
        %v3400 = vpack.c.b16 %v3154, %v3152
        %v3401 = vpack.c.b16 %v3157, %v3155
        %v3402 = vpack.c.b16 %v3158, %v3156
        %v3403 = vpack.c.b16 %v3161, %v3159
        %v3404 = vpack.c.b16 %v3162, %v3160
        %v3405 = vpack.c.b16 %v3165, %v3163
        %v3406 = vpack.c.b16 %v3166, %v3164
        %v3407 = vpack.c.b16 %v3169, %v3167
        %v3408 = vpack.c.b16 %v3170, %v3168
        %v3409 = vpack.c.b16 %v3173, %v3171
        %v3410 = vpack.c.b16 %v3174, %v3172
        %v3411 = vpack.c.b16 %v3177, %v3175
        %v3412 = vpack.c.b16 %v3178, %v3176
        %v3413 = vpack.c.b16 %v3181, %v3179
        %v3414 = vpack.c.b16 %v3182, %v3180
        %v3415 = vpack.c.b16 %v3185, %v3183
        %v3416 = vpack.c.b16 %v3186, %v3184
        %v3417 = vpack.c.b16 %v3189, %v3187
        %v3418 = vpack.c.b16 %v3190, %v3188
        %v3419 = vpack.c.b16 %v3193, %v3191
        %v3420 = vpack.c.b16 %v3194, %v3192
        %v3421 = vpack.c.b16 %v3197, %v3195
        %v3422 = vpack.c.b16 %v3198, %v3196
        %v3423 = vpack.c.b16 %v3201, %v3199
        %v3424 = vpack.c.b16 %v3202, %v3200
        %v3425 = vpack.c.b16 %v3205, %v3203
        %v3426 = vpack.c.b16 %v3206, %v3204
        %v3427 = vpack.c.b16 %v3209, %v3207
        %v3428 = vpack.c.b16 %v3210, %v3208
        %v3429 = vpack.c.b16 %v3213, %v3211
        %v3430 = vpack.c.b16 %v3214, %v3212
        %v3431 = vpack.c.b16 %v3217, %v3215
        %v3432 = vpack.c.b16 %v3218, %v3216
        %v3433 = vpack.c.b16 %v3221, %v3219
        %v3434 = vpack.c.b16 %v3222, %v3220
        %v3435 = vpack.c.b16 %v3225, %v3223
        %v3436 = vpack.c.b16 %v3226, %v3224
        %v3437 = vpack.c.b16 %v3229, %v3227
        %v3438 = vpack.c.b16 %v3230, %v3228
        %v3439 = vpack.c.b16 %v3233, %v3231
        %v3440 = vpack.c.b16 %v3234, %v3232
        %v3441 = vpack.c.b16 %v3237, %v3235
        %v3442 = vpack.c.b16 %v3238, %v3236
        %v3443 = vpack.c.b16 %v3241, %v3239
        %v3444 = vpack.c.b16 %v3242, %v3240
        %v3445 = vpack.c.b16 %v3245, %v3243
        %v3446 = vpack.c.b16 %v3246, %v3244
        %v3447 = vpack.c.b16 %v3249, %v3247
        %v3448 = vpack.c.b16 %v3250, %v3248
        %v3449 = vpack.c.b16 %v3253, %v3251
        %v3450 = vpack.c.b16 %v3254, %v3252
        %v3451 = vpack.c.b16 %v3257, %v3255
        %v3452 = vpack.c.b16 %v3258, %v3256
        %v3453 = vpack.c.b16 %v3261, %v3259
        %v3454 = vpack.c.b16 %v3262, %v3260
        %v3455 = vpack.c.b16 %v3265, %v3263
        %v3456 = vpack.c.b16 %v3266, %v3264
        %v3457 = vpack.c.b16 %v3269, %v3267
        %v3458 = vpack.c.b16 %v3270, %v3268
        %v3459 = vpack.c.b16 %v3273, %v3271
        %v3460 = vpack.c.b16 %v3274, %v3272
        %v3461 = vpack.c.b16 %v3277, %v3275
        %v3462 = vpack.c.b16 %v3278, %v3276
        %v3463 = vpack.c.b16 %v3281, %v3279
        %v3464 = vpack.c.b16 %v3282, %v3280
        %v3465 = vpack.c.b16 %v3285, %v3283
        %v3466 = vpack.c.b16 %v3286, %v3284
        %v3467 = vpack.c.b16 %v3289, %v3287
        %v3468 = vpack.c.b16 %v3290, %v3288
        %v3469 = vpack.c.b16 %v3293, %v3291
        %v3470 = vpack.c.b16 %v3294, %v3292
        %v3471 = vpack.c.b16 %v3297, %v3295
        %v3472 = vpack.c.b16 %v3298, %v3296
        %v3473 = vpack.c.b16 %v3301, %v3299
        %v3474 = vpack.c.b16 %v3302, %v3300
        %v3475 = vpack.c.b16 %v3305, %v3303
        %v3476 = vpack.c.b16 %v3306, %v3304
        %v3477 = vpack.c.b16 %v3309, %v3307
        %v3478 = vpack.c.b16 %v3310, %v3308
        %v3479 = vpack.c.b16 %v3313, %v3311
        %v3480 = vpack.c.b16 %v3314, %v3312
        %v3481 = vpack.c.b16 %v3317, %v3315
        %v3482 = vpack.c.b16 %v3318, %v3316
        %v3483 = vpack.c.b16 %v3321, %v3319
        %v3484 = vpack.c.b16 %v3322, %v3320
        %v3485 = vpack.c.b16 %v3325, %v3323
        %v3486 = vpack.c.b16 %v3326, %v3324
        %v3487 = vpack.c.b16 %v3329, %v3327
        %v3488 = vpack.c.b16 %v3330, %v3328
        %v3489 = vpack.c.b16 %v3333, %v3331
        %v3490 = vpack.c.b16 %v3334, %v3332
        %v3491 = vpack.c.b16 %v3337, %v3335
        %v3492 = vpack.c.b16 %v3338, %v3336
        %v3493 = vpack.c.b16 %v3341, %v3339
        %v3494 = vpack.c.b16 %v3342, %v3340
        %v3495 = vpack.c.b16 %v3345, %v3343
        %v3496 = vpack.c.b16 %v3346, %v3344
        %v3497 = vpack.c.b16 %v3349, %v3347
        %v3498 = vpack.c.b16 %v3350, %v3348
        %v3499 = vpack.c.b16 %v3353, %v3351
        %v3500 = vpack.c.b16 %v3354, %v3352
        %v3501 = vpack.c.b16 %v3357, %v3355
        %v3502 = vpack.c.b16 %v3358, %v3356
        %v3503 = vpack.c.b16 %v3361, %v3359
        %v3504 = vpack.c.b16 %v3362, %v3360
        %v3505 = vpack.c.b16 %v3365, %v3363
        %v3506 = vpack.c.b16 %v3366, %v3364
        %v3507 = vpack.c.b16 %v3369, %v3367
        %v3508 = vpack.c.b16 %v3370, %v3368
        %v3509 = vpack.c.b16 %v3373, %v3371
        %v3510 = vpack.c.b16 %v3374, %v3372
        %v3511 = vpack.c.b16 %v3377, %v3375
        %v3512 = vpack.c.b16 %v3378, %v3376
        %v3513 = vpack.c.b16 %v3381, %v3379
        %v3514 = vpack.c.b16 %v3382, %v3380
        %v3515 = vpack.c.b16 %v3385, %v3383
        %v3516 = vpack.c.b16 %v3386, %v3384
        %v3517 = vpack.c.b16 %v3389, %v3387
        %v3518 = vpack.c.b16 %v3390, %v3388
        %3647 = vmatpush.bf16.msra.mxu0 %v3405
        %3648 = vmatpush.bf16.msra.mxu0 %v3403
        %3649 = vmatpush.bf16.msra.mxu0 %v3401
        %3650 = vmatpush.bf16.msra.mxu0 %v3399
        %3651 = vmatpush.bf16.msra.mxu0 %v3397
        %3652 = vmatpush.bf16.msra.mxu0 %v3395
        %3653 = vmatpush.bf16.msra.mxu0 %v3393
        %3654 = vmatpush.bf16.msra.mxu0 %v3391
        %3655 = vmatmul.bf16.gmra.mxu0 %v2865
        %v3656 = vpop.f32.mrf.mxu0
        %v3657 = vadd.f32 %v3003, %v3656
        %v3658 = vpop.f32.mrf.mxu0
        %3659 = vdwg.mxu0
        %3660 = vmatpush.bf16.msra.mxu0 %v3421
        %3661 = vmatpush.bf16.msra.mxu0 %v3419
        %3662 = vmatpush.bf16.msra.mxu0 %v3417
        %3663 = vmatpush.bf16.msra.mxu0 %v3415
        %3664 = vmatpush.bf16.msra.mxu0 %v3413
        %3665 = vmatpush.bf16.msra.mxu0 %v3411
        %3666 = vmatpush.bf16.msra.mxu0 %v3409
        %3667 = vmatpush.bf16.msra.mxu0 %v3407
        %3668 = vmatmul.bf16.gmra.mxu0 %v2866
        %v3669 = vpop.f32.mrf.mxu0
        %v3670 = vadd.f32 %v3657, %v3669
        %v3671 = vpop.f32.mrf.mxu0
        %3672 = vdwg.mxu0
        %3673 = vmatpush.bf16.msra.mxu0 %v3437
        %3674 = vmatpush.bf16.msra.mxu0 %v3435
        %3675 = vmatpush.bf16.msra.mxu0 %v3433
        %3676 = vmatpush.bf16.msra.mxu0 %v3431
        %3677 = vmatpush.bf16.msra.mxu0 %v3429
        %3678 = vmatpush.bf16.msra.mxu0 %v3427
        %3679 = vmatpush.bf16.msra.mxu0 %v3425
        %3680 = vmatpush.bf16.msra.mxu0 %v3423
        %3681 = vmatmul.bf16.gmra.mxu0 %v2867
        %v3682 = vpop.f32.mrf.mxu0
        %v3683 = vadd.f32 %v3670, %v3682
        %v3684 = vpop.f32.mrf.mxu0
        %3685 = vdwg.mxu0
        %3686 = vmatpush.bf16.msra.mxu0 %v3453
        %3687 = vmatpush.bf16.msra.mxu0 %v3451
        %3688 = vmatpush.bf16.msra.mxu0 %v3449
        %3689 = vmatpush.bf16.msra.mxu0 %v3447
        %3690 = vmatpush.bf16.msra.mxu0 %v3445
        %3691 = vmatpush.bf16.msra.mxu0 %v3443
        %3692 = vmatpush.bf16.msra.mxu0 %v3441
        %3693 = vmatpush.bf16.msra.mxu0 %v3439
        %3694 = vmatmul.bf16.gmra.mxu0 %v2868
        %v3695 = vpop.f32.mrf.mxu0
        %v3696 = vadd.f32 %v3683, %v3695
        %v3697 = vpop.f32.mrf.mxu0
        %3698 = vdwg.mxu0
        %3699 = vmatpush.bf16.msra.mxu0 %v3469
        %3700 = vmatpush.bf16.msra.mxu0 %v3467
        %3701 = vmatpush.bf16.msra.mxu0 %v3465
        %3702 = vmatpush.bf16.msra.mxu0 %v3463
        %3703 = vmatpush.bf16.msra.mxu0 %v3461
        %3704 = vmatpush.bf16.msra.mxu0 %v3459
        %3705 = vmatpush.bf16.msra.mxu0 %v3457
        %3706 = vmatpush.bf16.msra.mxu0 %v3455
        %3707 = vmatmul.bf16.gmra.mxu0 %v2869
        %v3708 = vpop.f32.mrf.mxu0
        %v3709 = vadd.f32 %v3696, %v3708
        %v3710 = vpop.f32.mrf.mxu0
        %3711 = vdwg.mxu0
        %3712 = vmatpush.bf16.msra.mxu0 %v3485
        %3713 = vmatpush.bf16.msra.mxu0 %v3483
        %3714 = vmatpush.bf16.msra.mxu0 %v3481
        %3715 = vmatpush.bf16.msra.mxu0 %v3479
        %3716 = vmatpush.bf16.msra.mxu0 %v3477
        %3717 = vmatpush.bf16.msra.mxu0 %v3475
        %3718 = vmatpush.bf16.msra.mxu0 %v3473
        %3719 = vmatpush.bf16.msra.mxu0 %v3471
        %3720 = vmatmul.bf16.gmra.mxu0 %v2870
        %v3721 = vpop.f32.mrf.mxu0
        %v3722 = vadd.f32 %v3709, %v3721
        %v3723 = vpop.f32.mrf.mxu0
        %3724 = vdwg.mxu0
        %3725 = vmatpush.bf16.msra.mxu0 %v3501
        %3726 = vmatpush.bf16.msra.mxu0 %v3499
        %3727 = vmatpush.bf16.msra.mxu0 %v3497
        %3728 = vmatpush.bf16.msra.mxu0 %v3495
        %3729 = vmatpush.bf16.msra.mxu0 %v3493
        %3730 = vmatpush.bf16.msra.mxu0 %v3491
        %3731 = vmatpush.bf16.msra.mxu0 %v3489
        %3732 = vmatpush.bf16.msra.mxu0 %v3487
        %3733 = vmatmul.bf16.gmra.mxu0 %v2871
        %v3734 = vpop.f32.mrf.mxu0
        %v3735 = vadd.f32 %v3722, %v3734
        %v3736 = vpop.f32.mrf.mxu0
        %3737 = vdwg.mxu0
        %3738 = vmatpush.bf16.msra.mxu0 %v3517
        %3739 = vmatpush.bf16.msra.mxu0 %v3515
        %3740 = vmatpush.bf16.msra.mxu0 %v3513
        %3741 = vmatpush.bf16.msra.mxu0 %v3511
        %3742 = vmatpush.bf16.msra.mxu0 %v3509
        %3743 = vmatpush.bf16.msra.mxu0 %v3507
        %3744 = vmatpush.bf16.msra.mxu0 %v3505
        %3745 = vmatpush.bf16.msra.mxu0 %v3503
        %3746 = vmatmul.bf16.gmra.mxu0 %v2872
        %v3747 = vpop.f32.mrf.mxu0
        %v3748 = vadd.f32 %v3735, %v3747
        %v3749 = vpop.f32.mrf.mxu0
        %3750 = vdwg.mxu0
        %3751 = vmatpush.bf16.msra.mxu0 %v3406
        %3752 = vmatpush.bf16.msra.mxu0 %v3404
        %3753 = vmatpush.bf16.msra.mxu0 %v3402
        %3754 = vmatpush.bf16.msra.mxu0 %v3400
        %3755 = vmatpush.bf16.msra.mxu0 %v3398
        %3756 = vmatpush.bf16.msra.mxu0 %v3396
        %3757 = vmatpush.bf16.msra.mxu0 %v3394
        %3758 = vmatpush.bf16.msra.mxu0 %v3392
        %3759 = vmatmul.bf16.gmra.mxu0 %v2865
        %v3760 = vpop.f32.mrf.mxu0
        %v3761 = vadd.f32 %v3004, %v3760
        %v3762 = vpop.f32.mrf.mxu0
        %3763 = vdwg.mxu0
        %3764 = vmatpush.bf16.msra.mxu0 %v3422
        %3765 = vmatpush.bf16.msra.mxu0 %v3420
        %3766 = vmatpush.bf16.msra.mxu0 %v3418
        %3767 = vmatpush.bf16.msra.mxu0 %v3416
        %3768 = vmatpush.bf16.msra.mxu0 %v3414
        %3769 = vmatpush.bf16.msra.mxu0 %v3412
        %3770 = vmatpush.bf16.msra.mxu0 %v3410
        %3771 = vmatpush.bf16.msra.mxu0 %v3408
        %3772 = vmatmul.bf16.gmra.mxu0 %v2866
        %v3773 = vpop.f32.mrf.mxu0
        %v3774 = vadd.f32 %v3761, %v3773
        %v3775 = vpop.f32.mrf.mxu0
        %3776 = vdwg.mxu0
        %3777 = vmatpush.bf16.msra.mxu0 %v3438
        %3778 = vmatpush.bf16.msra.mxu0 %v3436
        %3779 = vmatpush.bf16.msra.mxu0 %v3434
        %3780 = vmatpush.bf16.msra.mxu0 %v3432
        %3781 = vmatpush.bf16.msra.mxu0 %v3430
        %3782 = vmatpush.bf16.msra.mxu0 %v3428
        %3783 = vmatpush.bf16.msra.mxu0 %v3426
        %3784 = vmatpush.bf16.msra.mxu0 %v3424
        %3785 = vmatmul.bf16.gmra.mxu0 %v2867
        %v3786 = vpop.f32.mrf.mxu0
        %v3787 = vadd.f32 %v3774, %v3786
        %v3788 = vpop.f32.mrf.mxu0
        %3789 = vdwg.mxu0
        %3790 = vmatpush.bf16.msra.mxu0 %v3454
        %3791 = vmatpush.bf16.msra.mxu0 %v3452
        %3792 = vmatpush.bf16.msra.mxu0 %v3450
        %3793 = vmatpush.bf16.msra.mxu0 %v3448
        %3794 = vmatpush.bf16.msra.mxu0 %v3446
        %3795 = vmatpush.bf16.msra.mxu0 %v3444
        %3796 = vmatpush.bf16.msra.mxu0 %v3442
        %3797 = vmatpush.bf16.msra.mxu0 %v3440
        %3798 = vmatmul.bf16.gmra.mxu0 %v2868
        %v3799 = vpop.f32.mrf.mxu0
        %v3800 = vadd.f32 %v3787, %v3799
        %v3801 = vpop.f32.mrf.mxu0
        %3802 = vdwg.mxu0
        %3803 = vmatpush.bf16.msra.mxu0 %v3470
        %3804 = vmatpush.bf16.msra.mxu0 %v3468
        %3805 = vmatpush.bf16.msra.mxu0 %v3466
        %3806 = vmatpush.bf16.msra.mxu0 %v3464
        %3807 = vmatpush.bf16.msra.mxu0 %v3462
        %3808 = vmatpush.bf16.msra.mxu0 %v3460
        %3809 = vmatpush.bf16.msra.mxu0 %v3458
        %3810 = vmatpush.bf16.msra.mxu0 %v3456
        %3811 = vmatmul.bf16.gmra.mxu0 %v2869
        %v3812 = vpop.f32.mrf.mxu0
        %v3813 = vadd.f32 %v3800, %v3812
        %v3814 = vpop.f32.mrf.mxu0
        %3815 = vdwg.mxu0
        %3816 = vmatpush.bf16.msra.mxu0 %v3486
        %3817 = vmatpush.bf16.msra.mxu0 %v3484
        %3818 = vmatpush.bf16.msra.mxu0 %v3482
        %3819 = vmatpush.bf16.msra.mxu0 %v3480
        %3820 = vmatpush.bf16.msra.mxu0 %v3478
        %3821 = vmatpush.bf16.msra.mxu0 %v3476
        %3822 = vmatpush.bf16.msra.mxu0 %v3474
        %3823 = vmatpush.bf16.msra.mxu0 %v3472
        %3824 = vmatmul.bf16.gmra.mxu0 %v2870
        %v3825 = vpop.f32.mrf.mxu0
        %v3826 = vadd.f32 %v3813, %v3825
        %v3827 = vpop.f32.mrf.mxu0
        %3828 = vdwg.mxu0
        %3829 = vmatpush.bf16.msra.mxu0 %v3502
        %3830 = vmatpush.bf16.msra.mxu0 %v3500
        %3831 = vmatpush.bf16.msra.mxu0 %v3498
        %3832 = vmatpush.bf16.msra.mxu0 %v3496
        %3833 = vmatpush.bf16.msra.mxu0 %v3494
        %3834 = vmatpush.bf16.msra.mxu0 %v3492
        %3835 = vmatpush.bf16.msra.mxu0 %v3490
        %3836 = vmatpush.bf16.msra.mxu0 %v3488
        %3837 = vmatmul.bf16.gmra.mxu0 %v2871
        %v3838 = vpop.f32.mrf.mxu0
        %v3839 = vadd.f32 %v3826, %v3838
        %v3840 = vpop.f32.mrf.mxu0
        %3841 = vdwg.mxu0
        %3842 = vmatpush.bf16.msra.mxu0 %v3518
        %3843 = vmatpush.bf16.msra.mxu0 %v3516
        %3844 = vmatpush.bf16.msra.mxu0 %v3514
        %3845 = vmatpush.bf16.msra.mxu0 %v3512
        %3846 = vmatpush.bf16.msra.mxu0 %v3510
        %3847 = vmatpush.bf16.msra.mxu0 %v3508
        %3848 = vmatpush.bf16.msra.mxu0 %v3506
        %3849 = vmatpush.bf16.msra.mxu0 %v3504
        %3850 = vmatmul.bf16.gmra.mxu0 %v2872
        %v3851 = vpop.f32.mrf.mxu0
        %v3852 = vadd.f32 %v3839, %v3851
        %v3853 = vpop.f32.mrf.mxu0
        %3854 = vdwg.mxu0
        %v3855 = vld [vmem:[%s14] sm:$0x3]
        %v3857 = vperm.slane %v3855, 0
        %v3858 = vperm.slane %v3855, 1
        %v3861 = vmul.f32 %v3748, %v3857
        %v3862 = vmul.f32 %v3852, %v3858
        %v3863 = vadd.f32 %v1752, %v3861
        %v3864 = vadd.f32 %v1753, %v3862
        %3865 = vst [vmem:[%s544] sm:$0xff] %v3863
        %3866 = vst [vmem:[%s544 + $0x8] sm:$0xff] %v3864
        %p3867 = scmp.lt.s32.totalorder %s28, 1
        %s3868 = scalar_select %p3867, %s28, 1
        %s3869 = smul.addr %s3868, 2
        %s3870 = smul.addr %s3869, 8
        %s3871 = scalar_lea.vmem %s15, %s3870
        // Predicated region
        $region93: #{dino_features_forward.5} parent=79 // pred_check
          %p3872 = pneg %p366
        $region94: #{dino_features_forward.5} parent=79 // pred_check_branch
          %3874 = sbr.rel (%p3872) target = $region96
        $region95: #{dino_features_forward.5} parent=79 // pred_region
          _
        $region96: #{dino_features_forward.5} parent=79 // pred_fallthru
          _
      $region80: #{dino_features_forward.5} parent=5 // pred_fallthru
        _
      %p3875 = scmp.le.s32.totalorder 2, %s23
      // Predicated region
      $region97: #{dino_features_forward.5} parent=5 // pred_check
        %p3876 = pneg %p3875
      $region98: #{dino_features_forward.5} parent=5 // pred_check_branch
        %3878 = sbr.rel (%p3876) target = $region100
      $region99: #{dino_features_forward.5} parent=5 // pred_region
        %s3879 = ssub.s32 %s23, 2
        // Predicated region
        $region101: #{dino_features_forward.5} parent=99 // pred_check
          %p3880 = pneg %p372
        $region102: #{dino_features_forward.5} parent=99 // pred_check_branch
          %3882 = sbr.rel (%p3880) target = $region104
        $region103: #{dino_features_forward.5} parent=99 // pred_region
          %p3883 = scmp.lt.s32.totalorder %s29, 1
          %s3884 = scalar_select %p3883, %s29, 1
          %s3885 = smul.addr %s3884, 2
          %s3886 = smul.addr %s3885, 8
          %s3887 = scalar_lea.vmem %s15, %s3886
        $region104: #{dino_features_forward.5} parent=99 // pred_fallthru
          _
      $region100: #{dino_features_forward.5} parent=5 // pred_fallthru
        _
    $region6: #{dino_features_forward.5} parent=1 // loop_footer
      %s27 = sadd.s32 1, %s23
    $region7: #{dino_features_forward.5} parent=1 // loop_footer_branch
      %22 = sbr.rel target = $region3
    $region8: #{dino_features_forward.5} parent=1 // loop_exit
      _
    %3888 = vsyncpa [#allocation5], 1
    %s3889 = scalar_lea.sflag [#allocation5], 1
    %3890 = vsyncpa %s3889, 1
    %3891 = vsyncpa [#allocation7], 1

</llo_original>
